<compile_context>
chip_gen: v7x
topology: tpu7x:2x2x1
jax: 0.10.0
libtpu: 0.0.40
codegen_flags: <defaults>
</compile_context>

<pallas_src>
import functools

import jax
import jax.numpy as jnp
from jax import lax
from jax.experimental import pallas as pl
from jax.experimental.pallas import tpu as pltpu


# --------------------------------- kernel ------------------------------------

def _attention_kernel(x_ref, wq_ref, wk_ref, wv_ref, wo_ref, b_ref, o_ref,
                      *, heads, dim_head, n_tokens, tq):
    f32, bf16 = jnp.float32, jnp.bfloat16
    n_pad, _ = x_ref.shape
    inner = heads * dim_head

    qi = pl.program_id(1)
    q_start = pl.multiple_of(qi * tq, tq)

    x_all = x_ref[...]                                  # (n_pad, D) bf16, full sequence
    x_q = x_ref[pl.ds(q_start, tq), :]                  # (tq, D) query token tile

    # Wide projections: output width = inner (full MXU lane fill), bf16 operands,
    # f32 accumulation, results held in bf16 (halves VMEM / vreg pressure).
    # Attention scale is already folded into wq.
    q = jnp.dot(x_q, wq_ref[...], preferred_element_type=f32).astype(bf16)    # (tq, inner)
    k = jnp.dot(x_all, wk_ref[...], preferred_element_type=f32).astype(bf16)  # (n_pad, inner)
    v = jnp.dot(x_all, wv_ref[...], preferred_element_type=f32).astype(bf16)  # (n_pad, inner)

    # Head-major views -> leading-batch batched matmuls (the form Mosaic lowers natively).
    qh = q.reshape(tq, heads, dim_head).transpose(1, 0, 2)      # (H, tq, K)
    kh = k.reshape(n_pad, heads, dim_head).transpose(1, 0, 2)   # (H, n_pad, K)
    vh = v.reshape(n_pad, heads, dim_head).transpose(1, 0, 2)   # (H, n_pad, K)

    scores = jnp.einsum('hqk,hnk->hqn', qh, kh,
                        preferred_element_type=f32)             # (H, tq, n_pad) f32

    if n_tokens < n_pad:  # static: mask padded key columns before softmax
        col = lax.broadcasted_iota(jnp.int32, (1, 1, n_pad), 2)
        scores = jnp.where(col < n_tokens, scores, jnp.float32(-1e30))

    # Numerically-stable softmax in f32; denominator reciprocal on the EUP.
    m = jnp.max(scores, axis=-1, keepdims=True)
    e = jnp.exp(scores - m)
    attn = (e * pl.reciprocal(jnp.sum(e, axis=-1, keepdims=True), approx=True)
            ).astype(bf16)

    oh = jnp.einsum('hqn,hnk->hqk', attn, vh,
                    preferred_element_type=f32)                 # (H, tq, K)
    o_inner = oh.transpose(1, 0, 2).reshape(tq, inner).astype(bf16)

    # Output projection: single contraction over inner = (head, dim_head).
    out = jnp.dot(o_inner, wo_ref[...], preferred_element_type=f32) + b_ref[...]
    o_ref[...] = out.astype(o_ref.dtype)


# -------------------------------- wrapper -------------------------------------

def attention_pallas(x, w_qkv, w_out, b_out, *, heads, dim_head, tq=None):
    """x: (B, N, dim) float32. Weights in PyTorch layout:
       w_qkv: (3*inner, dim)  [to_qkv.weight, no bias]
       w_out: (dim, inner), b_out: (dim,)  [to_out[0].weight / .bias]"""
    B, N, D = x.shape
    inner = heads * dim_head
    assert w_qkv.shape == (3 * inner, D) and w_out.shape == (D, inner)
    scale = dim_head ** -0.5
    bf16 = jnp.bfloat16

    wq_t, wk_t, wv_t = jnp.split(w_qkv, 3, axis=0)             # (inner, D) each
    wq = (wq_t * scale).T.astype(bf16)                          # (D, inner), scale folded
    wk = wk_t.T.astype(bf16)                                    # (D, inner)
    wv = wv_t.T.astype(bf16)                                    # (D, inner)
    wo = w_out.T.astype(bf16)                                   # (inner, D)
    b = b_out.reshape(1, D).astype(jnp.float32)

    # Pad tokens to a multiple of 128 (lane-dense, (8,128)-tile friendly);
    # padded keys are masked inside the kernel, padded query rows sliced off.
    n_pad = max(128, pl.cdiv(N, 128) * 128)
    if tq is None:
        tq = min(n_pad, 256)
    assert n_pad % tq == 0
    x_pad = jnp.pad(x, ((0, 0), (0, n_pad - N), (0, 0))).astype(bf16)

    grid = (B, n_pad // tq)
    kernel = functools.partial(_attention_kernel, heads=heads, dim_head=dim_head,
                               n_tokens=N, tq=tq)

    const2 = lambda b_, qi: (0, 0)                              # weights resident across grid
    out = pl.pallas_call(
        kernel,
        out_shape=jax.ShapeDtypeStruct((B, n_pad, D), jnp.float32),
        grid=grid,
        in_specs=[
            pl.BlockSpec((None, n_pad, D), lambda b_, qi: (b_, 0, 0)),  # x (K/V source, resident per batch)
            pl.BlockSpec((D, inner), const2),                           # wq (scale folded)
            pl.BlockSpec((D, inner), const2),                           # wk
            pl.BlockSpec((D, inner), const2),                           # wv
            pl.BlockSpec((inner, D), const2),                           # wo
            pl.BlockSpec((1, D), const2),                               # bias
        ],
        out_specs=pl.BlockSpec((None, tq, D), lambda b_, qi: (b_, qi, 0)),
        compiler_params=pltpu.CompilerParams(
            dimension_semantics=("parallel", "arbitrary"),
            vmem_limit_bytes=48 * 1024 * 1024),
    )(x_pad, wq, wk, wv, wo, b)
    return out[:, :N, :]


# ----------------------------- pure-JAX reference ------------------------------

def attention_reference(x, w_qkv, w_out, b_out, *, heads, dim_head):
    B, N, D = x.shape
    inner = heads * dim_head
    scale = dim_head ** -0.5
    qkv = x @ w_qkv.T                                           # (B, N, 3*inner)
    q, k, v = jnp.split(qkv, 3, axis=-1)
    sp = lambda t: t.reshape(B, N, heads, dim_head).transpose(0, 2, 1, 3)
    q, k, v = sp(q), sp(k), sp(v)
    dots = jnp.einsum('bhnd,bhmd->bhnm', q, k) * scale
    attn = jax.nn.softmax(dots, axis=-1)
    o = jnp.einsum('bhnm,bhmd->bhnd', attn, v)
    o = o.transpose(0, 2, 1, 3).reshape(B, N, inner)
    return o @ w_out.T + b_out                                  # Dropout(p=0) == identity


# ----------------------------------- main --------------------------------------

if __name__ == "__main__":
    B, N = 2, 8
    dim, heads, dim_head = 32, 4, 8
    inner = heads * dim_head

    key = jax.random.PRNGKey(0)
    kx, kqkv, kout, kb = jax.random.split(key, 4)
    x = jax.random.normal(kx, (B, N, dim), jnp.float32)
    # PyTorch-layout parameters (out_features, in_features).
    w_qkv = 0.1 * jax.random.normal(kqkv, (3 * inner, dim), jnp.float32)
    w_out = 0.1 * jax.random.normal(kout, (dim, inner), jnp.float32)
    b_out = 0.1 * jax.random.normal(kb, (dim,), jnp.float32)

    out = attention_pallas(x, w_qkv, w_out, b_out, heads=heads, dim_head=dim_head)
    out = jax.block_until_ready(out)

    ref = attention_reference(x, w_qkv, w_out, b_out, heads=heads, dim_head=dim_head)
    assert out.shape == (B, N, dim)
    max_diff = jnp.max(jnp.abs(out - ref))
    # Tolerance accounts for bf16 MXU operands (f32 accumulation) + approx reciprocal.
    assert jnp.allclose(out, ref, atol=2e-2, rtol=5e-2), f"max abs diff {max_diff}"
    print("KERNEL_OK")
</pallas_src>

<mosaic_0001>
module attributes {stable_mosaic.version = 11 : i64} {
  func.func @_attention_kernel(%arg0: i32, %arg1: i32, %arg2: memref<1x128x32xbf16, #tpu.memory_space<vmem>>, %arg3: memref<32x32xbf16, #tpu.memory_space<vmem>>, %arg4: memref<32x32xbf16, #tpu.memory_space<vmem>>, %arg5: memref<32x32xbf16, #tpu.memory_space<vmem>>, %arg6: memref<32x32xbf16, #tpu.memory_space<vmem>>, %arg7: memref<1x32xf32, #tpu.memory_space<vmem>>, %arg8: memref<1x128x32xf32, #tpu.memory_space<vmem>>) attributes {dimension_semantics = [#tpu.dimension_semantics<parallel>, #tpu.dimension_semantics<arbitrary>], iteration_bounds = array<i64: 2, 1>, scalar_prefetch = 0 : i64, scratch_operands = 0 : i64, tpu.core_type = #tpu.core_type<tc>, window_params = [{transform_indices = @transform_0, window_bounds = array<i64: 1, 128, 32>}, {pipeline_mode = #tpu.pipeline_mode<synchronous>, transform_indices = @transform_1, window_bounds = array<i64: 32, 32>}, {pipeline_mode = #tpu.pipeline_mode<synchronous>, transform_indices = @transform_2, window_bounds = array<i64: 32, 32>}, {pipeline_mode = #tpu.pipeline_mode<synchronous>, transform_indices = @transform_3, window_bounds = array<i64: 32, 32>}, {pipeline_mode = #tpu.pipeline_mode<synchronous>, transform_indices = @transform_4, window_bounds = array<i64: 32, 32>}, {pipeline_mode = #tpu.pipeline_mode<synchronous>, transform_indices = @transform_5, window_bounds = array<i64: 1, 32>}, {transform_indices = @transform_6, window_bounds = array<i64: 1, 128, 32>}]} {
    %c128_i32 = arith.constant 128 : i32
    %0 = arith.muli %arg1, %c128_i32 : i32
    %1 = tpu.assume_multiple %0, 128 : i32
    %c0 = arith.constant 0 : index
    %c0_0 = arith.constant 0 : index
    %c0_1 = arith.constant 0 : index
    %2 = vector.load %arg2[%c0, %c0_0, %c0_1] : memref<1x128x32xbf16, #tpu.memory_space<vmem>>, vector<1x128x32xbf16>
    %3 = vector.shape_cast %2 : vector<1x128x32xbf16> to vector<128x32xbf16>
    %c0_2 = arith.constant 0 : index
    %4 = arith.index_cast %1 : i32 to index
    %c0_3 = arith.constant 0 : index
    %5 = vector.load %arg2[%c0_2, %4, %c0_3] : memref<1x128x32xbf16, #tpu.memory_space<vmem>>, vector<1x128x32xbf16>
    %6 = vector.shape_cast %5 : vector<1x128x32xbf16> to vector<128x32xbf16>
    %c0_4 = arith.constant 0 : index
    %c0_5 = arith.constant 0 : index
    %7 = vector.load %arg3[%c0_4, %c0_5] : memref<32x32xbf16, #tpu.memory_space<vmem>>, vector<32x32xbf16>
    %cst = arith.constant dense<0.000000e+00> : vector<128x32xf32>
    %8 = tpu.matmul %6, %7, %cst {dimension_numbers = #tpu.dot_dimension_numbers<[1], [0], [0], [1], [0, 0, 1, 1], [], []>} : vector<128x32xbf16>, vector<32x32xbf16>, vector<128x32xf32> -> vector<128x32xf32>
    %9 = arith.truncf %8 : vector<128x32xf32> to vector<128x32xbf16>
    %c0_6 = arith.constant 0 : index
    %c0_7 = arith.constant 0 : index
    %10 = vector.load %arg4[%c0_6, %c0_7] : memref<32x32xbf16, #tpu.memory_space<vmem>>, vector<32x32xbf16>
    %cst_8 = arith.constant dense<0.000000e+00> : vector<128x32xf32>
    %11 = tpu.matmul %3, %10, %cst_8 {dimension_numbers = #tpu.dot_dimension_numbers<[1], [0], [0], [1], [0, 0, 1, 1], [], []>} : vector<128x32xbf16>, vector<32x32xbf16>, vector<128x32xf32> -> vector<128x32xf32>
    %12 = arith.truncf %11 : vector<128x32xf32> to vector<128x32xbf16>
    %c0_9 = arith.constant 0 : index
    %c0_10 = arith.constant 0 : index
    %13 = vector.load %arg5[%c0_9, %c0_10] : memref<32x32xbf16, #tpu.memory_space<vmem>>, vector<32x32xbf16>
    %cst_11 = arith.constant dense<0.000000e+00> : vector<128x32xf32>
    %14 = tpu.matmul %3, %13, %cst_11 {dimension_numbers = #tpu.dot_dimension_numbers<[1], [0], [0], [1], [0, 0, 1, 1], [], []>} : vector<128x32xbf16>, vector<32x32xbf16>, vector<128x32xf32> -> vector<128x32xf32>
    %15 = arith.truncf %14 : vector<128x32xf32> to vector<128x32xbf16>
    %16 = vector.shape_cast %9 : vector<128x32xbf16> to vector<128x4x8xbf16>
    %17 = tpu.transpose %16, [1, 0, 2] : vector<128x4x8xbf16> -> vector<4x128x8xbf16>
    %18 = vector.shape_cast %12 : vector<128x32xbf16> to vector<128x4x8xbf16>
    %19 = tpu.transpose %18, [1, 0, 2] : vector<128x4x8xbf16> -> vector<4x128x8xbf16>
    %20 = vector.shape_cast %15 : vector<128x32xbf16> to vector<128x4x8xbf16>
    %21 = tpu.transpose %20, [1, 0, 2] : vector<128x4x8xbf16> -> vector<4x128x8xbf16>
    "tpu.trace_start"() <{level = 10 : i32, message = "hqk,hnk->hqn"}> : () -> ()
    %cst_12 = arith.constant dense<0.000000e+00> : vector<4x128x128xf32>
    %22 = tpu.matmul %17, %19, %cst_12 {dimension_numbers = #tpu.dot_dimension_numbers<[2], [2], [1], [1], [0, 0, 0, 1, 1, 1], [0], [0]>} : vector<4x128x8xbf16>, vector<4x128x8xbf16>, vector<4x128x128xf32> -> vector<4x128x128xf32>
    "tpu.trace_stop"() : () -> ()
    %23 = tpu.iota {dimensions = array<i32: 2>} : vector<1x1x128xi32>
    %c8_i32 = arith.constant 8 : i32
    %24 = vector.broadcast %c8_i32 : i32 to vector<1x1x128xi32>
    %25 = arith.cmpi slt, %23, %24 : vector<1x1x128xi32>
    %cst_13 = arith.constant -1.000000e+30 : f32
    %26 = vector.shape_cast %25 : vector<1x1x128xi1> to vector<1x1x128xi1>
    %27 = vector.broadcast %26 : vector<1x1x128xi1> to vector<4x128x128xi1>
    %28 = vector.broadcast %cst_13 : f32 to vector<4x128x128xf32>
    %29 = arith.select %27, %22, %28 : vector<4x128x128xi1>, vector<4x128x128xf32>
    %cst_14 = arith.constant dense<0xFF800000> : vector<4x128xf32>
    %30 = vector.multi_reduction <maximumf>, %29, %cst_14 [2] : vector<4x128x128xf32> to vector<4x128xf32>
    %31 = vector.shape_cast %30 : vector<4x128xf32> to vector<4x128x1xf32>
    %32 = vector.broadcast %31 : vector<4x128x1xf32> to vector<4x128x128xf32>
    %33 = arith.subf %29, %32 : vector<4x128x128xf32>
    %34 = math.exp %33 : vector<4x128x128xf32>
    %cst_15 = arith.constant dense<0.000000e+00> : vector<4x128xf32>
    %35 = vector.multi_reduction <add>, %34, %cst_15 [2] : vector<4x128x128xf32> to vector<4x128xf32>
    %36 = vector.shape_cast %35 : vector<4x128xf32> to vector<4x128x1xf32>
    %37 = tpu.reciprocal %36 {approx = true} : vector<4x128x1xf32> -> vector<4x128x1xf32>
    %38 = vector.broadcast %37 : vector<4x128x1xf32> to vector<4x128x128xf32>
    %39 = arith.mulf %34, %38 : vector<4x128x128xf32>
    %40 = arith.truncf %39 : vector<4x128x128xf32> to vector<4x128x128xbf16>
    "tpu.trace_start"() <{level = 10 : i32, message = "hqn,hnk->hqk"}> : () -> ()
    %cst_16 = arith.constant dense<0.000000e+00> : vector<4x128x8xf32>
    %41 = tpu.matmul %40, %21, %cst_16 {dimension_numbers = #tpu.dot_dimension_numbers<[2], [1], [1], [2], [0, 0, 0, 1, 1, 2], [0], [0]>} : vector<4x128x128xbf16>, vector<4x128x8xbf16>, vector<4x128x8xf32> -> vector<4x128x8xf32>
    "tpu.trace_stop"() : () -> ()
    %42 = tpu.transpose %41, [1, 0, 2] : vector<4x128x8xf32> -> vector<128x4x8xf32>
    %43 = vector.shape_cast %42 : vector<128x4x8xf32> to vector<128x32xf32>
    %44 = arith.truncf %43 : vector<128x32xf32> to vector<128x32xbf16>
    %c0_17 = arith.constant 0 : index
    %c0_18 = arith.constant 0 : index
    %45 = vector.load %arg6[%c0_17, %c0_18] : memref<32x32xbf16, #tpu.memory_space<vmem>>, vector<32x32xbf16>
    %cst_19 = arith.constant dense<0.000000e+00> : vector<128x32xf32>
    %46 = tpu.matmul %44, %45, %cst_19 {dimension_numbers = #tpu.dot_dimension_numbers<[1], [0], [0], [1], [0, 0, 1, 1], [], []>} : vector<128x32xbf16>, vector<32x32xbf16>, vector<128x32xf32> -> vector<128x32xf32>
    %c0_20 = arith.constant 0 : index
    %c0_21 = arith.constant 0 : index
    %47 = vector.load %arg7[%c0_20, %c0_21] : memref<1x32xf32, #tpu.memory_space<vmem>>, vector<1x32xf32>
    %48 = vector.broadcast %47 : vector<1x32xf32> to vector<128x32xf32>
    %49 = arith.addf %46, %48 : vector<128x32xf32>
    %c0_22 = arith.constant 0 : index
    %c0_23 = arith.constant 0 : index
    %c0_24 = arith.constant 0 : index
    %50 = vector.load %arg8[%c0_22, %c0_23, %c0_24] : memref<1x128x32xf32, #tpu.memory_space<vmem>>, vector<1x128x32xf32>
    %51 = vector.shape_cast %50 : vector<1x128x32xf32> to vector<128x32xf32>
    %52 = vector.shape_cast %49 : vector<128x32xf32> to vector<1x128x32xf32>
    tpu.vector_store %arg8[%c0_22, %c0_23, %c0_24], %52 {strides = array<i32>} : memref<1x128x32xf32, #tpu.memory_space<vmem>>, vector<1x128x32xf32>,
    return
  }
  func.func @transform_0(%arg0: i32, %arg1: i32) -> (i32, i32, i32) {
    %c0_i32 = arith.constant 0 : i32
    %c0_i32_0 = arith.constant 0 : i32
    %c0_i32_1 = arith.constant 0 : i32
    return %arg0, %c0_i32, %c0_i32_0 : i32, i32, i32
  }
  func.func @transform_1(%arg0: i32, %arg1: i32) -> (i32, i32) {
    %c0_i32 = arith.constant 0 : i32
    %c0_i32_0 = arith.constant 0 : i32
    %c0_i32_1 = arith.constant 0 : i32
    return %c0_i32, %c0_i32_0 : i32, i32
  }
  func.func @transform_2(%arg0: i32, %arg1: i32) -> (i32, i32) {
    %c0_i32 = arith.constant 0 : i32
    %c0_i32_0 = arith.constant 0 : i32
    %c0_i32_1 = arith.constant 0 : i32
    return %c0_i32, %c0_i32_0 : i32, i32
  }
  func.func @transform_3(%arg0: i32, %arg1: i32) -> (i32, i32) {
    %c0_i32 = arith.constant 0 : i32
    %c0_i32_0 = arith.constant 0 : i32
    %c0_i32_1 = arith.constant 0 : i32
    return %c0_i32, %c0_i32_0 : i32, i32
  }
  func.func @transform_4(%arg0: i32, %arg1: i32) -> (i32, i32) {
    %c0_i32 = arith.constant 0 : i32
    %c0_i32_0 = arith.constant 0 : i32
    %c0_i32_1 = arith.constant 0 : i32
    return %c0_i32, %c0_i32_0 : i32, i32
  }
  func.func @transform_5(%arg0: i32, %arg1: i32) -> (i32, i32) {
    %c0_i32 = arith.constant 0 : i32
    %c0_i32_0 = arith.constant 0 : i32
    %c0_i32_1 = arith.constant 0 : i32
    return %c0_i32, %c0_i32_0 : i32, i32
  }
  func.func @transform_6(%arg0: i32, %arg1: i32) -> (i32, i32, i32) {
    %c0_i32 = arith.constant 0 : i32
    %c0_i32_0 = arith.constant 0 : i32
    return %arg0, %arg1, %c0_i32 : i32, i32, i32
  }
}

</mosaic_0001>

<llo_original>
// kernel: tpu_custom_call.1
$region0: #{tpu_custom_call.1}
  #allocation0 [shape = 'u32[]', space=smem, size = 0x4, offset = 0x4, fixed_abs, tag = 'smem constant byte address 0x4 - core index']
  #allocation1 [shape = 'u32[144,128]{1,0:T(1,128)}', space=vmem, size = 0x12000, scoped, tag = 'internal scratch']
  %s0 = inlined_call_operand.vmem [shape: bf16[2,128,32], index: 0, kind: input, shape index: {}]
  %s1 = inlined_call_operand.vmem [shape: bf16[32,32], index: 1, kind: input, shape index: {}]
  %s2 = inlined_call_operand.vmem [shape: bf16[32,32], index: 2, kind: input, shape index: {}]
  %s3 = inlined_call_operand.vmem [shape: bf16[32,32], index: 3, kind: input, shape index: {}]
  %s4 = inlined_call_operand.vmem [shape: bf16[32,32], index: 4, kind: input, shape index: {}]
  %s5 = inlined_call_operand.vmem [shape: f32[1,32], index: 5, kind: input, shape index: {}]
  %s6 = inlined_call_operand.vmem [shape: f32[2,128,32], index: 6, kind: output, shape index: {}]
  %s7 = sld [smem:[#allocation0]]
  $region57: #{tpu_custom_call.1} parent=0
    _
  %s9 = ssub.s32 1, %s7
  %s10 = scalar_select 0, %s9, %s7
  loop: start=0, step=1, limit=4
  $region2: #{tpu_custom_call.1} parent=0 // loop_pre_header
    _
  $region3: #{tpu_custom_call.1} parent=0 // loop_header
    %s12 = sphi 0, %s16
    %p13 = scmp.ge.s32.totalorder %s12, 4
    %s19 = sphi 0, %s31
    %s20 = sphi 0, %s27
    %s21 = sphi 0, %s19
    %s22 = sphi 0, %s20
    %s23 = sphi 0, %s21
    %s24 = sphi 0, %s22
    %s34 = sphi 0, %s36
    %s37 = sphi 0, %s34
    %s38 = sphi 0, %s37
    %s54 = sphi 0, %s38
    %s58 = sphi 0, %s58
    %s60 = sphi 0, %s58
    %s61 = sphi 0, %s60
    %s75 = sphi 0, %s61
    %s79 = sphi 0, %s79
    %s81 = sphi 0, %s79
    %s82 = sphi 0, %s81
    %s96 = sphi 0, %s82
    %s100 = sphi 0, %s100
    %s102 = sphi 0, %s100
    %s103 = sphi 0, %s102
    %s117 = sphi 0, %s103
    %s121 = sphi 0, %s121
    %s123 = sphi 0, %s121
    %s124 = sphi 0, %s123
    %s138 = sphi 0, %s124
    %s142 = sphi 0, %s142
    %s144 = sphi 0, %s142
    %s145 = sphi 0, %s144
    %s159 = sphi 0, %s145
    %s167 = sphi 0, %s169
    %s170 = sphi 0, %s167
    %s171 = sphi 0, %s170
    %s187 = sphi 0, %s171
  $region4: #{tpu_custom_call.1} parent=0 // loop_header_branch
    %15 = sbr.rel (%p13) target = $region8
  $region5: #{tpu_custom_call.1} parent=0 // loop_body
    %s17 = ssub.s32 %s12, 1
    %s18 = ssub.s32 %s12, 2
    %s25 = sadd.s32 1, %s20
    %p26 = scmp.ge.s32.totalorder %s25, 1
    %s27 = scalar_select %p26, 0, %s25
    %s28 = sadd.s32 1, %s19
    %s29 = scalar_select %p26, %s28, %s19
    %p30 = scmp.ge.s32.totalorder %s29, 2
    %s31 = scalar_select %p30, 0, %s29
    %s32 = ssub.s32 %s19, %s31
    %p33 = scmp.eq.s32.totalorder %s32, 0
    %s35 = sadd.s32 %s34, 1
    %s36 = scalar_select %p33, %s34, %s35
    %p39 = pneg %p33
    %p40 = scmp.eq.s32.totalorder %s12, 1
    %p41 = por %p39, %p40
    %p42 = scmp.ne.s32.totalorder %s34, %s37
    %p43 = scmp.eq.s32.totalorder %s12, 0
    %p44 = por %p42, %p43
    %p45 = scmp.ne.s32.totalorder %s34, %s37
    %p46 = scmp.eq.s32.totalorder %s17, 1
    %p47 = por %p45, %p46
    %p48 = scmp.ne.s32.totalorder %s37, %s38
    %p49 = scmp.eq.s32.totalorder %s17, 0
    %p50 = por %p48, %p49
    %p51 = scmp.ne.s32.totalorder %s37, %s38
    %p52 = scmp.eq.s32.totalorder %s18, 1
    %p53 = por %p51, %p52
    %p55 = scmp.ne.s32.totalorder %s38, %s54
    %p56 = scmp.eq.s32.totalorder %s18, 0
    %p57 = por %p55, %p56
    %s59 = sadd.s32 %s58, 1
    %p62 = scmp.eq.s32.totalorder %s12, 1
    %p63 = scmp.ne.s32.totalorder %s58, %s60
    %p64 = scmp.eq.s32.totalorder %s12, 0
    %p65 = por %p63, %p64
    %p66 = scmp.ne.s32.totalorder %s58, %s60
    %p67 = scmp.eq.s32.totalorder %s17, 1
    %p68 = por %p66, %p67
    %p69 = scmp.ne.s32.totalorder %s60, %s61
    %p70 = scmp.eq.s32.totalorder %s17, 0
    %p71 = por %p69, %p70
    %p72 = scmp.ne.s32.totalorder %s60, %s61
    %p73 = scmp.eq.s32.totalorder %s18, 1
    %p74 = por %p72, %p73
    %p76 = scmp.ne.s32.totalorder %s61, %s75
    %p77 = scmp.eq.s32.totalorder %s18, 0
    %p78 = por %p76, %p77
    %s80 = sadd.s32 %s79, 1
    %p83 = scmp.eq.s32.totalorder %s12, 1
    %p84 = scmp.ne.s32.totalorder %s79, %s81
    %p85 = scmp.eq.s32.totalorder %s12, 0
    %p86 = por %p84, %p85
    %p87 = scmp.ne.s32.totalorder %s79, %s81
    %p88 = scmp.eq.s32.totalorder %s17, 1
    %p89 = por %p87, %p88
    %p90 = scmp.ne.s32.totalorder %s81, %s82
    %p91 = scmp.eq.s32.totalorder %s17, 0
    %p92 = por %p90, %p91
    %p93 = scmp.ne.s32.totalorder %s81, %s82
    %p94 = scmp.eq.s32.totalorder %s18, 1
    %p95 = por %p93, %p94
    %p97 = scmp.ne.s32.totalorder %s82, %s96
    %p98 = scmp.eq.s32.totalorder %s18, 0
    %p99 = por %p97, %p98
    %s101 = sadd.s32 %s100, 1
    %p104 = scmp.eq.s32.totalorder %s12, 1
    %p105 = scmp.ne.s32.totalorder %s100, %s102
    %p106 = scmp.eq.s32.totalorder %s12, 0
    %p107 = por %p105, %p106
    %p108 = scmp.ne.s32.totalorder %s100, %s102
    %p109 = scmp.eq.s32.totalorder %s17, 1
    %p110 = por %p108, %p109
    %p111 = scmp.ne.s32.totalorder %s102, %s103
    %p112 = scmp.eq.s32.totalorder %s17, 0
    %p113 = por %p111, %p112
    %p114 = scmp.ne.s32.totalorder %s102, %s103
    %p115 = scmp.eq.s32.totalorder %s18, 1
    %p116 = por %p114, %p115
    %p118 = scmp.ne.s32.totalorder %s103, %s117
    %p119 = scmp.eq.s32.totalorder %s18, 0
    %p120 = por %p118, %p119
    %s122 = sadd.s32 %s121, 1
    %p125 = scmp.eq.s32.totalorder %s12, 1
    %p126 = scmp.ne.s32.totalorder %s121, %s123
    %p127 = scmp.eq.s32.totalorder %s12, 0
    %p128 = por %p126, %p127
    %p129 = scmp.ne.s32.totalorder %s121, %s123
    %p130 = scmp.eq.s32.totalorder %s17, 1
    %p131 = por %p129, %p130
    %p132 = scmp.ne.s32.totalorder %s123, %s124
    %p133 = scmp.eq.s32.totalorder %s17, 0
    %p134 = por %p132, %p133
    %p135 = scmp.ne.s32.totalorder %s123, %s124
    %p136 = scmp.eq.s32.totalorder %s18, 1
    %p137 = por %p135, %p136
    %p139 = scmp.ne.s32.totalorder %s124, %s138
    %p140 = scmp.eq.s32.totalorder %s18, 0
    %p141 = por %p139, %p140
    %s143 = sadd.s32 %s142, 1
    %p146 = scmp.eq.s32.totalorder %s12, 1
    %p147 = scmp.ne.s32.totalorder %s142, %s144
    %p148 = scmp.eq.s32.totalorder %s12, 0
    %p149 = por %p147, %p148
    %p150 = scmp.ne.s32.totalorder %s142, %s144
    %p151 = scmp.eq.s32.totalorder %s17, 1
    %p152 = por %p150, %p151
    %p153 = scmp.ne.s32.totalorder %s144, %s145
    %p154 = scmp.eq.s32.totalorder %s17, 0
    %p155 = por %p153, %p154
    %p156 = scmp.ne.s32.totalorder %s144, %s145
    %p157 = scmp.eq.s32.totalorder %s18, 1
    %p158 = por %p156, %p157
    %p160 = scmp.ne.s32.totalorder %s145, %s159
    %p161 = scmp.eq.s32.totalorder %s18, 0
    %p162 = por %p160, %p161
    %s163 = ssub.s32 %s19, %s31
    %s164 = ssub.s32 %s20, %s27
    %s165 = sor.u32 %s163, %s164
    %p166 = scmp.eq.s32.totalorder %s165, 0
    %s168 = sadd.s32 %s167, 1
    %s169 = scalar_select %p166, %s167, %s168
    %p172 = pneg %p166
    %p173 = scmp.eq.s32.totalorder %s12, 1
    %p174 = por %p172, %p173
    %p175 = scmp.ne.s32.totalorder %s167, %s170
    %p176 = scmp.eq.s32.totalorder %s12, 0
    %p177 = por %p175, %p176
    %p178 = scmp.ne.s32.totalorder %s167, %s170
    %p179 = scmp.eq.s32.totalorder %s17, 1
    %p180 = por %p178, %p179
    %p181 = scmp.ne.s32.totalorder %s170, %s171
    %p182 = scmp.eq.s32.totalorder %s17, 0
    %p183 = por %p181, %p182
    %p184 = scmp.ne.s32.totalorder %s170, %s171
    %p185 = scmp.eq.s32.totalorder %s18, 1
    %p186 = por %p184, %p185
    %p188 = scmp.ne.s32.totalorder %s171, %s187
    %p189 = scmp.eq.s32.totalorder %s18, 0
    %p190 = por %p188, %p189
    %p191 = scmp.le.s32.totalorder 1, %s12
    %p192 = scmp.lt.s32.totalorder %s12, 3
    %p193 = pnand %p191, %p192
    %p194 = pneg %p193
    // Predicated region
    $region9: #{tpu_custom_call.1} parent=5 // pred_check
      _
    $region10: #{tpu_custom_call.1} parent=5 // pred_check_branch
      %196 = sbr.rel (%p193) target = $region12
    $region11: #{tpu_custom_call.1} parent=5 // pred_region
      %s197 = ssub.s32 %s12, 1
      // Predicated region
      $region13: #{tpu_custom_call.1} parent=11 // pred_check
        %p198 = pneg %p71
      $region14: #{tpu_custom_call.1} parent=11 // pred_check_branch
        %200 = sbr.rel (%p198) target = $region16
      $region15: #{tpu_custom_call.1} parent=11 // pred_region
        _
      $region16: #{tpu_custom_call.1} parent=11 // pred_fallthru
        _
      // Predicated region
      $region17: #{tpu_custom_call.1} parent=11 // pred_check
        %p201 = pneg %p92
      $region18: #{tpu_custom_call.1} parent=11 // pred_check_branch
        %203 = sbr.rel (%p201) target = $region20
      $region19: #{tpu_custom_call.1} parent=11 // pred_region
        _
      $region20: #{tpu_custom_call.1} parent=11 // pred_fallthru
        _
      // Predicated region
      $region21: #{tpu_custom_call.1} parent=11 // pred_check
        %p204 = pneg %p113
      $region22: #{tpu_custom_call.1} parent=11 // pred_check_branch
        %206 = sbr.rel (%p204) target = $region24
      $region23: #{tpu_custom_call.1} parent=11 // pred_region
        _
      $region24: #{tpu_custom_call.1} parent=11 // pred_fallthru
        _
      // Predicated region
      $region25: #{tpu_custom_call.1} parent=11 // pred_check
        %p207 = pneg %p134
      $region26: #{tpu_custom_call.1} parent=11 // pred_check_branch
        %209 = sbr.rel (%p207) target = $region28
      $region27: #{tpu_custom_call.1} parent=11 // pred_region
        _
      $region28: #{tpu_custom_call.1} parent=11 // pred_fallthru
        _
      // Predicated region
      $region29: #{tpu_custom_call.1} parent=11 // pred_check
        %p210 = pneg %p155
      $region30: #{tpu_custom_call.1} parent=11 // pred_check_branch
        %212 = sbr.rel (%p210) target = $region32
      $region31: #{tpu_custom_call.1} parent=11 // pred_region
        _
      $region32: #{tpu_custom_call.1} parent=11 // pred_fallthru
        _
    $region12: #{tpu_custom_call.1} parent=5 // pred_fallthru
      _
    %p213 = scmp.lt.s32.totalorder %s12, 2
    // Predicated region
    $region33: #{tpu_custom_call.1} parent=5 // pred_check
      %p214 = pneg %p213
    $region34: #{tpu_custom_call.1} parent=5 // pred_check_branch
      %216 = sbr.rel (%p214) target = $region36
    $region35: #{tpu_custom_call.1} parent=5 // pred_region
      // Predicated region
      $region37: #{tpu_custom_call.1} parent=35 // pred_check
        %p217 = pneg %p44
      $region38: #{tpu_custom_call.1} parent=35 // pred_check_branch
        %219 = sbr.rel (%p217) target = $region40
      $region39: #{tpu_custom_call.1} parent=35 // pred_region
        %p220 = scmp.lt.s32.totalorder %s19, 1
        %s221 = scalar_select %p220, %s19, 1
        %s222 = smul.addr %s221, 16
        %s223 = smul.addr %s222, 4
        %s224 = scalar_lea.vmem %s0, %s223
      $region40: #{tpu_custom_call.1} parent=35 // pred_fallthru
        _
    $region36: #{tpu_custom_call.1} parent=5 // pred_fallthru
      _
    %p225 = scmp.le.s32.totalorder 1, %s12
    %p226 = scmp.lt.s32.totalorder %s12, 3
    %p227 = pnand %p225, %p226
    %p228 = pneg %p227
    // Predicated region
    $region41: #{tpu_custom_call.1} parent=5 // pred_check
      _
    $region42: #{tpu_custom_call.1} parent=5 // pred_check_branch
      %230 = sbr.rel (%p227) target = $region44
    $region43: #{tpu_custom_call.1} parent=5 // pred_region
      %s231 = ssub.s32 %s12, 1
      %p232 = scmp.lt.s32.totalorder %s21, 1
      %s233 = scalar_select %p232, %s21, 1
      %s234 = smul.addr %s233, 16
      %s235 = smul.addr %s234, 4
      %s236 = scalar_lea.vmem %s0, %s235
      %p237 = pneg %p50
      %p238 = pneg %p47
      %p239 = pneg %p71
      %p240 = pneg %p68
      %p241 = pneg %p92
      %p242 = pneg %p89
      %p243 = pneg %p113
      %p244 = pneg %p110
      %p245 = pneg %p134
      %p246 = pneg %p131
      %p247 = pneg %p155
      %p248 = pneg %p152
      %p249 = pneg %p183
      %p250 = pneg %p180
      %s251 = smul.u32 16, %s22
      %p252 = scmp.lt.s32.totalorder %s21, 1
      %s253 = scalar_select %p252, %s21, 1
      %p254 = scmp.lt.s32.totalorder %s251, 15
      %s255 = scalar_select %p254, %s251, 15
      %s256 = smul.addr %s253, 16
      %s257 = sadd.s32 %s255, %s256
      %s258 = smul.addr %s257, 8
      %s259 = scalar_lea.vmem %s6, %s258
      %p260 = scmp.lt.s32.totalorder %s21, 1
      %s261 = scalar_select %p260, %s21, 1
      %s262 = smul.addr %s261, 16
      %s263 = smul.addr %s262, 4
      %s264 = scalar_lea.vmem %s0, %s263
      %s265 = smul.u32 16, %s22
      %p266 = scmp.lt.s32.totalorder %s21, 1
      %s267 = scalar_select %p266, %s21, 1
      %p268 = scmp.lt.s32.totalorder %s265, 15
      %s269 = scalar_select %p268, %s265, 15
      %s270 = smul.addr %s267, 16
      %s271 = sadd.s32 %s269, %s270
      %s272 = smul.addr %s271, 8
      %s273 = scalar_lea.vmem %s6, %s272
      %s274 = smul.u32 16, %s22
      %s276 = smul.u32 %s22, 128
      %v277 = vld [vmem:[%s264] sm:$0xf]
      %v278 = vld [vmem:[%s264 + $0x4] sm:$0xf]
      %v279 = vld [vmem:[%s264 + $0x8] sm:$0xf]
      %v280 = vld [vmem:[%s264 + $0xc] sm:$0xf]
      %v281 = vld [vmem:[%s264 + $0x10] sm:$0xf]
      %v282 = vld [vmem:[%s264 + $0x14] sm:$0xf]
      %v283 = vld [vmem:[%s264 + $0x18] sm:$0xf]
      %v284 = vld [vmem:[%s264 + $0x1c] sm:$0xf]
      %v285 = vld [vmem:[%s264 + $0x20] sm:$0xf]
      %v286 = vld [vmem:[%s264 + $0x24] sm:$0xf]
      %v287 = vld [vmem:[%s264 + $0x28] sm:$0xf]
      %v288 = vld [vmem:[%s264 + $0x2c] sm:$0xf]
      %v289 = vld [vmem:[%s264 + $0x30] sm:$0xf]
      %v290 = vld [vmem:[%s264 + $0x34] sm:$0xf]
      %v291 = vld [vmem:[%s264 + $0x38] sm:$0xf]
      %v292 = vld [vmem:[%s264 + $0x3c] sm:$0xf]
      %s293 = sshra.s32 %s276, 3
      %s294 = sand.u32 %s276, 7
      %s295 = smul.addr %s293, 4
      %s296 = scalar_lea.vmem %s264, %s295
      %v297 = vld [vmem:[%s296] sm:$0xf]
      %v298 = vld [vmem:[%s296 + $0x4] sm:$0xf]
      %v299 = vld [vmem:[%s296 + $0x8] sm:$0xf]
      %v300 = vld [vmem:[%s296 + $0xc] sm:$0xf]
      %v301 = vld [vmem:[%s296 + $0x10] sm:$0xf]
      %v302 = vld [vmem:[%s296 + $0x14] sm:$0xf]
      %v303 = vld [vmem:[%s296 + $0x18] sm:$0xf]
      %v304 = vld [vmem:[%s296 + $0x1c] sm:$0xf]
      %v305 = vld [vmem:[%s296 + $0x20] sm:$0xf]
      %v306 = vld [vmem:[%s296 + $0x24] sm:$0xf]
      %v307 = vld [vmem:[%s296 + $0x28] sm:$0xf]
      %v308 = vld [vmem:[%s296 + $0x2c] sm:$0xf]
      %v309 = vld [vmem:[%s296 + $0x30] sm:$0xf]
      %v310 = vld [vmem:[%s296 + $0x34] sm:$0xf]
      %v311 = vld [vmem:[%s296 + $0x38] sm:$0xf]
      %v312 = vld [vmem:[%s296 + $0x3c] sm:$0xf]
      %v313 = vld [vmem:[%s1] sm:$0xf]
      %v314 = vld [vmem:[%s1 + $0x4] sm:$0xf]
      %v315 = vld [vmem:[%s1 + $0x8] sm:$0xf]
      %v316 = vld [vmem:[%s1 + $0xc] sm:$0xf]
      %v333 = vunpack.c.l.b16 %v297
      %v334 = vunpack.c.l.b16 %v298
      %v335 = vunpack.c.l.b16 %v299
      %v336 = vunpack.c.l.b16 %v300
      %v337 = vunpack.c.l.b16 %v301
      %v338 = vunpack.c.l.b16 %v302
      %v339 = vunpack.c.l.b16 %v303
      %v340 = vunpack.c.l.b16 %v304
      %v341 = vunpack.c.l.b16 %v305
      %v342 = vunpack.c.l.b16 %v306
      %v343 = vunpack.c.l.b16 %v307
      %v344 = vunpack.c.l.b16 %v308
      %v345 = vunpack.c.l.b16 %v309
      %v346 = vunpack.c.l.b16 %v310
      %v347 = vunpack.c.l.b16 %v311
      %v348 = vunpack.c.l.b16 %v312
      %v349 = vpack.c.b16 %v334, %v333
      %v350 = vpack.c.b16 %v336, %v335
      %v351 = vpack.c.b16 %v338, %v337
      %v352 = vpack.c.b16 %v340, %v339
      %v353 = vpack.c.b16 %v342, %v341
      %v354 = vpack.c.b16 %v344, %v343
      %v355 = vpack.c.b16 %v346, %v345
      %v356 = vpack.c.b16 %v348, %v347
      %v361 = vunpack.c.l.b16 %v313
      %v362 = vunpack.c.l.b16 %v314
      %v363 = vunpack.c.l.b16 %v315
      %v364 = vunpack.c.l.b16 %v316
      %v365 = vpack.c.b16 %v362, %v361
      %v366 = vpack.c.b16 %v364, %v363
      %vm369 = vcmask 261120
      %v371 = vsel %vm369, %v349, 0
      %v374 = vsel %vm369, %v350, 0
      %v377 = vsel %vm369, %v351, 0
      %v380 = vsel %vm369, %v352, 0
      %v383 = vsel %vm369, %v353, 0
      %v386 = vsel %vm369, %v354, 0
      %v389 = vsel %vm369, %v355, 0
      %v392 = vsel %vm369, %v356, 0
      %394 = vmatprep.subr.bf16.mxu0 0
      %395 = vmatpush1.bf16.msra.mxu0 %v365
      %396 = vmatprep.subr.bf16.mxu0 0
      %397 = vmatpush1.bf16.msra.mxu0 %v366
      %398 = vmatprep.subr.bf16.mxu0 0
      %399 = vmatpush1.bf16.msra.mxu0 0
      %400 = vmatprep.subr.bf16.mxu0 0
      %401 = vmatpush1.bf16.msra.mxu0 0
      %402 = vmatprep.subr.bf16.mxu0 0
      %403 = vmatpush1.bf16.msra.mxu0 0
      %404 = vmatprep.subr.bf16.mxu0 0
      %405 = vmatpush1.bf16.msra.mxu0 0
      %406 = vmatprep.subr.bf16.mxu0 0
      %407 = vmatpush1.bf16.msra.mxu0 0
      %408 = vmatprep.subr.bf16.mxu0 0
      %409 = vmatpush1.bf16.msra.mxu0 0
      %410 = vmatprep.subr.bf16.mxu0 0
      %411 = vmatpush1.bf16.msra.mxu0 0
      %412 = vmatprep.subr.bf16.mxu0 0
      %413 = vmatpush1.bf16.msra.mxu0 0
      %414 = vmatprep.subr.bf16.mxu0 0
      %415 = vmatpush1.bf16.msra.mxu0 0
      %416 = vmatprep.subr.bf16.mxu0 0
      %417 = vmatpush1.bf16.msra.mxu0 0
      %418 = vmatprep.subr.bf16.mxu0 0
      %419 = vmatpush1.bf16.msra.mxu0 0
      %420 = vmatprep.subr.bf16.mxu0 0
      %421 = vmatpush1.bf16.msra.mxu0 0
      %422 = vmatprep.subr.bf16.mxu0 0
      %423 = vmatpush1.bf16.msra.mxu0 0
      %424 = vmatprep.subr.bf16.mxu0 0
      %425 = vmatpush1.bf16.msra.mxu0 0
      %426 = vmatprep.mubr.bf16.mxu0 0
      %427 = vmatmul.mubr.bf16.gmra.mrb[0].mxu0 %v371
      %v428 = vpop.f32.mrb[0].mxu0
      %v429 = vadd.f32 0.0, %v428
      %v430 = vpop.f32.mrb[0].mxu0
      %v431 = vpop.f32.mrb[0].mxu0
      %v432 = vadd.f32 0.0, %v431
      %v433 = vpop.f32.mrb[0].mxu0
      %434 = vmatprep.mubr.bf16.mxu0 0
      %435 = vmatmul.mubr.bf16.gmra.mrb[0].mxu0 %v374
      %v436 = vpop.f32.mrb[0].mxu0
      %v437 = vadd.f32 0.0, %v436
      %v438 = vpop.f32.mrb[0].mxu0
      %v439 = vpop.f32.mrb[0].mxu0
      %v440 = vadd.f32 0.0, %v439
      %v441 = vpop.f32.mrb[0].mxu0
      %442 = vmatprep.mubr.bf16.mxu0 0
      %443 = vmatmul.mubr.bf16.gmra.mrb[0].mxu0 %v377
      %v444 = vpop.f32.mrb[0].mxu0
      %v445 = vadd.f32 0.0, %v444
      %v446 = vpop.f32.mrb[0].mxu0
      %v447 = vpop.f32.mrb[0].mxu0
      %v448 = vadd.f32 0.0, %v447
      %v449 = vpop.f32.mrb[0].mxu0
      %450 = vmatprep.mubr.bf16.mxu0 0
      %451 = vmatmul.mubr.bf16.gmra.mrb[0].mxu0 %v380
      %v452 = vpop.f32.mrb[0].mxu0
      %v453 = vadd.f32 0.0, %v452
      %v454 = vpop.f32.mrb[0].mxu0
      %v455 = vpop.f32.mrb[0].mxu0
      %v456 = vadd.f32 0.0, %v455
      %v457 = vpop.f32.mrb[0].mxu0
      %458 = vmatprep.mubr.bf16.mxu0 0
      %459 = vmatmul.mubr.bf16.gmra.mrb[0].mxu0 %v383
      %v460 = vpop.f32.mrb[0].mxu0
      %v461 = vadd.f32 0.0, %v460
      %v462 = vpop.f32.mrb[0].mxu0
      %v463 = vpop.f32.mrb[0].mxu0
      %v464 = vadd.f32 0.0, %v463
      %v465 = vpop.f32.mrb[0].mxu0
      %466 = vmatprep.mubr.bf16.mxu0 0
      %467 = vmatmul.mubr.bf16.gmra.mrb[0].mxu0 %v386
      %v468 = vpop.f32.mrb[0].mxu0
      %v469 = vadd.f32 0.0, %v468
      %v470 = vpop.f32.mrb[0].mxu0
      %v471 = vpop.f32.mrb[0].mxu0
      %v472 = vadd.f32 0.0, %v471
      %v473 = vpop.f32.mrb[0].mxu0
      %474 = vmatprep.mubr.bf16.mxu0 0
      %475 = vmatmul.mubr.bf16.gmra.mrb[0].mxu0 %v389
      %v476 = vpop.f32.mrb[0].mxu0
      %v477 = vadd.f32 0.0, %v476
      %v478 = vpop.f32.mrb[0].mxu0
      %v479 = vpop.f32.mrb[0].mxu0
      %v480 = vadd.f32 0.0, %v479
      %v481 = vpop.f32.mrb[0].mxu0
      %482 = vmatprep.mubr.bf16.mxu0 0
      %483 = vmatmul.mubr.bf16.gmra.mrb[0].mxu0 %v392
      %v484 = vpop.f32.mrb[0].mxu0
      %v485 = vadd.f32 0.0, %v484
      %v486 = vpop.f32.mrb[0].mxu0
      %v487 = vpop.f32.mrb[0].mxu0
      %v488 = vadd.f32 0.0, %v487
      %v489 = vpop.f32.mrb[0].mxu0
      %490 = vdwg.mxu0
      %v491 = vpack.c.bf16 %v432, %v429
      %v492 = vpack.c.bf16 %v440, %v437
      %v493 = vpack.c.bf16 %v448, %v445
      %v494 = vpack.c.bf16 %v456, %v453
      %v495 = vpack.c.bf16 %v464, %v461
      %v496 = vpack.c.bf16 %v472, %v469
      %v497 = vpack.c.bf16 %v480, %v477
      %v498 = vpack.c.bf16 %v488, %v485
      %v499 = vld [vmem:[%s2] sm:$0xf]
      %v500 = vld [vmem:[%s2 + $0x4] sm:$0xf]
      %v501 = vld [vmem:[%s2 + $0x8] sm:$0xf]
      %v502 = vld [vmem:[%s2 + $0xc] sm:$0xf]
      %v519 = vunpack.c.l.b16 %v277
      %v520 = vunpack.c.l.b16 %v278
      %v521 = vunpack.c.l.b16 %v279
      %v522 = vunpack.c.l.b16 %v280
      %v523 = vunpack.c.l.b16 %v281
      %v524 = vunpack.c.l.b16 %v282
      %v525 = vunpack.c.l.b16 %v283
      %v526 = vunpack.c.l.b16 %v284
      %v527 = vunpack.c.l.b16 %v285
      %v528 = vunpack.c.l.b16 %v286
      %v529 = vunpack.c.l.b16 %v287
      %v530 = vunpack.c.l.b16 %v288
      %v531 = vunpack.c.l.b16 %v289
      %v532 = vunpack.c.l.b16 %v290
      %v533 = vunpack.c.l.b16 %v291
      %v534 = vunpack.c.l.b16 %v292
      %v535 = vpack.c.b16 %v520, %v519
      %v536 = vpack.c.b16 %v522, %v521
      %v537 = vpack.c.b16 %v524, %v523
      %v538 = vpack.c.b16 %v526, %v525
      %v539 = vpack.c.b16 %v528, %v527
      %v540 = vpack.c.b16 %v530, %v529
      %v541 = vpack.c.b16 %v532, %v531
      %v542 = vpack.c.b16 %v534, %v533
      %v547 = vunpack.c.l.b16 %v499
      %v548 = vunpack.c.l.b16 %v500
      %v549 = vunpack.c.l.b16 %v501
      %v550 = vunpack.c.l.b16 %v502
      %v551 = vpack.c.b16 %v548, %v547
      %v552 = vpack.c.b16 %v550, %v549
      %v556 = vsel %vm369, %v535, 0
      %v559 = vsel %vm369, %v536, 0
      %v562 = vsel %vm369, %v537, 0
      %v565 = vsel %vm369, %v538, 0
      %v568 = vsel %vm369, %v539, 0
      %v571 = vsel %vm369, %v540, 0
      %v574 = vsel %vm369, %v541, 0
      %v577 = vsel %vm369, %v542, 0
      %579 = vmatprep.subr.bf16.mxu0 0
      %580 = vmatpush1.bf16.msra.mxu0 %v551
      %581 = vmatprep.subr.bf16.mxu0 0
      %582 = vmatpush1.bf16.msra.mxu0 %v552
      %583 = vmatprep.subr.bf16.mxu0 0
      %584 = vmatpush1.bf16.msra.mxu0 0
      %585 = vmatprep.subr.bf16.mxu0 0
      %586 = vmatpush1.bf16.msra.mxu0 0
      %587 = vmatprep.subr.bf16.mxu0 0
      %588 = vmatpush1.bf16.msra.mxu0 0
      %589 = vmatprep.subr.bf16.mxu0 0
      %590 = vmatpush1.bf16.msra.mxu0 0
      %591 = vmatprep.subr.bf16.mxu0 0
      %592 = vmatpush1.bf16.msra.mxu0 0
      %593 = vmatprep.subr.bf16.mxu0 0
      %594 = vmatpush1.bf16.msra.mxu0 0
      %595 = vmatprep.subr.bf16.mxu0 0
      %596 = vmatpush1.bf16.msra.mxu0 0
      %597 = vmatprep.subr.bf16.mxu0 0
      %598 = vmatpush1.bf16.msra.mxu0 0
      %599 = vmatprep.subr.bf16.mxu0 0
      %600 = vmatpush1.bf16.msra.mxu0 0
      %601 = vmatprep.subr.bf16.mxu0 0
      %602 = vmatpush1.bf16.msra.mxu0 0
      %603 = vmatprep.subr.bf16.mxu0 0
      %604 = vmatpush1.bf16.msra.mxu0 0
      %605 = vmatprep.subr.bf16.mxu0 0
      %606 = vmatpush1.bf16.msra.mxu0 0
      %607 = vmatprep.subr.bf16.mxu0 0
      %608 = vmatpush1.bf16.msra.mxu0 0
      %609 = vmatprep.subr.bf16.mxu0 0
      %610 = vmatpush1.bf16.msra.mxu0 0
      %611 = vmatprep.mubr.bf16.mxu0 0
      %612 = vmatmul.mubr.bf16.gmra.mrb[0].mxu0 %v556
      %v613 = vpop.f32.mrb[0].mxu0
      %v614 = vadd.f32 0.0, %v613
      %v615 = vpop.f32.mrb[0].mxu0
      %v616 = vpop.f32.mrb[0].mxu0
      %v617 = vadd.f32 0.0, %v616
      %v618 = vpop.f32.mrb[0].mxu0
      %619 = vmatprep.mubr.bf16.mxu0 0
      %620 = vmatmul.mubr.bf16.gmra.mrb[0].mxu0 %v559
      %v621 = vpop.f32.mrb[0].mxu0
      %v622 = vadd.f32 0.0, %v621
      %v623 = vpop.f32.mrb[0].mxu0
      %v624 = vpop.f32.mrb[0].mxu0
      %v625 = vadd.f32 0.0, %v624
      %v626 = vpop.f32.mrb[0].mxu0
      %627 = vmatprep.mubr.bf16.mxu0 0
      %628 = vmatmul.mubr.bf16.gmra.mrb[0].mxu0 %v562
      %v629 = vpop.f32.mrb[0].mxu0
      %v630 = vadd.f32 0.0, %v629
      %v631 = vpop.f32.mrb[0].mxu0
      %v632 = vpop.f32.mrb[0].mxu0
      %v633 = vadd.f32 0.0, %v632
      %v634 = vpop.f32.mrb[0].mxu0
      %635 = vmatprep.mubr.bf16.mxu0 0
      %636 = vmatmul.mubr.bf16.gmra.mrb[0].mxu0 %v565
      %v637 = vpop.f32.mrb[0].mxu0
      %v638 = vadd.f32 0.0, %v637
      %v639 = vpop.f32.mrb[0].mxu0
      %v640 = vpop.f32.mrb[0].mxu0
      %v641 = vadd.f32 0.0, %v640
      %v642 = vpop.f32.mrb[0].mxu0
      %643 = vmatprep.mubr.bf16.mxu0 0
      %644 = vmatmul.mubr.bf16.gmra.mrb[0].mxu0 %v568
      %v645 = vpop.f32.mrb[0].mxu0
      %v646 = vadd.f32 0.0, %v645
      %v647 = vpop.f32.mrb[0].mxu0
      %v648 = vpop.f32.mrb[0].mxu0
      %v649 = vadd.f32 0.0, %v648
      %v650 = vpop.f32.mrb[0].mxu0
      %651 = vmatprep.mubr.bf16.mxu0 0
      %652 = vmatmul.mubr.bf16.gmra.mrb[0].mxu0 %v571
      %v653 = vpop.f32.mrb[0].mxu0
      %v654 = vadd.f32 0.0, %v653
      %v655 = vpop.f32.mrb[0].mxu0
      %v656 = vpop.f32.mrb[0].mxu0
      %v657 = vadd.f32 0.0, %v656
      %v658 = vpop.f32.mrb[0].mxu0
      %659 = vmatprep.mubr.bf16.mxu0 0
      %660 = vmatmul.mubr.bf16.gmra.mrb[0].mxu0 %v574
      %v661 = vpop.f32.mrb[0].mxu0
      %v662 = vadd.f32 0.0, %v661
      %v663 = vpop.f32.mrb[0].mxu0
      %v664 = vpop.f32.mrb[0].mxu0
      %v665 = vadd.f32 0.0, %v664
      %v666 = vpop.f32.mrb[0].mxu0
      %667 = vmatprep.mubr.bf16.mxu0 0
      %668 = vmatmul.mubr.bf16.gmra.mrb[0].mxu0 %v577
      %v669 = vpop.f32.mrb[0].mxu0
      %v670 = vadd.f32 0.0, %v669
      %v671 = vpop.f32.mrb[0].mxu0
      %v672 = vpop.f32.mrb[0].mxu0
      %v673 = vadd.f32 0.0, %v672
      %v674 = vpop.f32.mrb[0].mxu0
      %675 = vdwg.mxu0
      %v676 = vpack.c.bf16 %v617, %v614
      %v677 = vpack.c.bf16 %v625, %v622
      %v678 = vpack.c.bf16 %v633, %v630
      %v679 = vpack.c.bf16 %v641, %v638
      %v680 = vpack.c.bf16 %v649, %v646
      %v681 = vpack.c.bf16 %v657, %v654
      %v682 = vpack.c.bf16 %v665, %v662
      %v683 = vpack.c.bf16 %v673, %v670
      %v684 = vld [vmem:[%s3] sm:$0xf]
      %v685 = vld [vmem:[%s3 + $0x4] sm:$0xf]
      %v686 = vld [vmem:[%s3 + $0x8] sm:$0xf]
      %v687 = vld [vmem:[%s3 + $0xc] sm:$0xf]
      %v692 = vunpack.c.l.b16 %v684
      %v693 = vunpack.c.l.b16 %v685
      %v694 = vunpack.c.l.b16 %v686
      %v695 = vunpack.c.l.b16 %v687
      %v696 = vpack.c.b16 %v693, %v692
      %v697 = vpack.c.b16 %v695, %v694
      %700 = vmatprep.subr.bf16.mxu0 0
      %701 = vmatpush1.bf16.msra.mxu0 %v696
      %702 = vmatprep.subr.bf16.mxu0 0
      %703 = vmatpush1.bf16.msra.mxu0 %v697
      %704 = vmatprep.subr.bf16.mxu0 0
      %705 = vmatpush1.bf16.msra.mxu0 0
      %706 = vmatprep.subr.bf16.mxu0 0
      %707 = vmatpush1.bf16.msra.mxu0 0
      %708 = vmatprep.subr.bf16.mxu0 0
      %709 = vmatpush1.bf16.msra.mxu0 0
      %710 = vmatprep.subr.bf16.mxu0 0
      %711 = vmatpush1.bf16.msra.mxu0 0
      %712 = vmatprep.subr.bf16.mxu0 0
      %713 = vmatpush1.bf16.msra.mxu0 0
      %714 = vmatprep.subr.bf16.mxu0 0
      %715 = vmatpush1.bf16.msra.mxu0 0
      %716 = vmatprep.subr.bf16.mxu0 0
      %717 = vmatpush1.bf16.msra.mxu0 0
      %718 = vmatprep.subr.bf16.mxu0 0
      %719 = vmatpush1.bf16.msra.mxu0 0
      %720 = vmatprep.subr.bf16.mxu0 0
      %721 = vmatpush1.bf16.msra.mxu0 0
      %722 = vmatprep.subr.bf16.mxu0 0
      %723 = vmatpush1.bf16.msra.mxu0 0
      %724 = vmatprep.subr.bf16.mxu0 0
      %725 = vmatpush1.bf16.msra.mxu0 0
      %726 = vmatprep.subr.bf16.mxu0 0
      %727 = vmatpush1.bf16.msra.mxu0 0
      %728 = vmatprep.subr.bf16.mxu0 0
      %729 = vmatpush1.bf16.msra.mxu0 0
      %730 = vmatprep.subr.bf16.mxu0 0
      %731 = vmatpush1.bf16.msra.mxu0 0
      %732 = vmatprep.mubr.bf16.mxu0 0
      %733 = vmatmul.mubr.bf16.gmra.mrb[0].mxu0 %v556
      %v734 = vpop.f32.mrb[0].mxu0
      %v735 = vadd.f32 0.0, %v734
      %v736 = vpop.f32.mrb[0].mxu0
      %v737 = vpop.f32.mrb[0].mxu0
      %v738 = vadd.f32 0.0, %v737
      %v739 = vpop.f32.mrb[0].mxu0
      %740 = vmatprep.mubr.bf16.mxu0 0
      %741 = vmatmul.mubr.bf16.gmra.mrb[0].mxu0 %v559
      %v742 = vpop.f32.mrb[0].mxu0
      %v743 = vadd.f32 0.0, %v742
      %v744 = vpop.f32.mrb[0].mxu0
      %v745 = vpop.f32.mrb[0].mxu0
      %v746 = vadd.f32 0.0, %v745
      %v747 = vpop.f32.mrb[0].mxu0
      %748 = vmatprep.mubr.bf16.mxu0 0
      %749 = vmatmul.mubr.bf16.gmra.mrb[0].mxu0 %v562
      %v750 = vpop.f32.mrb[0].mxu0
      %v751 = vadd.f32 0.0, %v750
      %v752 = vpop.f32.mrb[0].mxu0
      %v753 = vpop.f32.mrb[0].mxu0
      %v754 = vadd.f32 0.0, %v753
      %v755 = vpop.f32.mrb[0].mxu0
      %756 = vmatprep.mubr.bf16.mxu0 0
      %757 = vmatmul.mubr.bf16.gmra.mrb[0].mxu0 %v565
      %v758 = vpop.f32.mrb[0].mxu0
      %v759 = vadd.f32 0.0, %v758
      %v760 = vpop.f32.mrb[0].mxu0
      %v761 = vpop.f32.mrb[0].mxu0
      %v762 = vadd.f32 0.0, %v761
      %v763 = vpop.f32.mrb[0].mxu0
      %764 = vmatprep.mubr.bf16.mxu0 0
      %765 = vmatmul.mubr.bf16.gmra.mrb[0].mxu0 %v568
      %v766 = vpop.f32.mrb[0].mxu0
      %v767 = vadd.f32 0.0, %v766
      %v768 = vpop.f32.mrb[0].mxu0
      %v769 = vpop.f32.mrb[0].mxu0
      %v770 = vadd.f32 0.0, %v769
      %v771 = vpop.f32.mrb[0].mxu0
      %772 = vmatprep.mubr.bf16.mxu0 0
      %773 = vmatmul.mubr.bf16.gmra.mrb[0].mxu0 %v571
      %v774 = vpop.f32.mrb[0].mxu0
      %v775 = vadd.f32 0.0, %v774
      %v776 = vpop.f32.mrb[0].mxu0
      %v777 = vpop.f32.mrb[0].mxu0
      %v778 = vadd.f32 0.0, %v777
      %v779 = vpop.f32.mrb[0].mxu0
      %780 = vmatprep.mubr.bf16.mxu0 0
      %781 = vmatmul.mubr.bf16.gmra.mrb[0].mxu0 %v574
      %v782 = vpop.f32.mrb[0].mxu0
      %v783 = vadd.f32 0.0, %v782
      %v784 = vpop.f32.mrb[0].mxu0
      %v785 = vpop.f32.mrb[0].mxu0
      %v786 = vadd.f32 0.0, %v785
      %v787 = vpop.f32.mrb[0].mxu0
      %788 = vmatprep.mubr.bf16.mxu0 0
      %789 = vmatmul.mubr.bf16.gmra.mrb[0].mxu0 %v577
      %v790 = vpop.f32.mrb[0].mxu0
      %v791 = vadd.f32 0.0, %v790
      %v792 = vpop.f32.mrb[0].mxu0
      %v793 = vpop.f32.mrb[0].mxu0
      %v794 = vadd.f32 0.0, %v793
      %v795 = vpop.f32.mrb[0].mxu0
      %796 = vdwg.mxu0
      %v797 = vpack.c.bf16 %v738, %v735
      %v798 = vpack.c.bf16 %v746, %v743
      %v799 = vpack.c.bf16 %v754, %v751
      %v800 = vpack.c.bf16 %v762, %v759
      %v801 = vpack.c.bf16 %v770, %v767
      %v802 = vpack.c.bf16 %v778, %v775
      %v803 = vpack.c.bf16 %v786, %v783
      %v804 = vpack.c.bf16 %v794, %v791
      %813 = vrot.lane.b32.xlu0 %v491, 120
      %v814 = vpop.permute.xlu0 %813
      %815 = vrot.lane.b32.xlu0 %v492, 120
      %v816 = vpop.permute.xlu0 %815
      %817 = vrot.lane.b32.xlu0 %v493, 120
      %v818 = vpop.permute.xlu0 %817
      %819 = vrot.lane.b32.xlu0 %v494, 120
      %v820 = vpop.permute.xlu0 %819
      %821 = vrot.lane.b32.xlu0 %v495, 120
      %v822 = vpop.permute.xlu0 %821
      %823 = vrot.lane.b32.xlu0 %v496, 120
      %v824 = vpop.permute.xlu0 %823
      %825 = vrot.lane.b32.xlu0 %v497, 120
      %v826 = vpop.permute.xlu0 %825
      %827 = vrot.lane.b32.xlu0 %v498, 120
      %v828 = vpop.permute.xlu0 %827
      %829 = vrot.lane.b32.xlu0 %v491, 112
      %v830 = vpop.permute.xlu0 %829
      %831 = vrot.lane.b32.xlu0 %v492, 112
      %v832 = vpop.permute.xlu0 %831
      %833 = vrot.lane.b32.xlu0 %v493, 112
      %v834 = vpop.permute.xlu0 %833
      %835 = vrot.lane.b32.xlu0 %v494, 112
      %v836 = vpop.permute.xlu0 %835
      %837 = vrot.lane.b32.xlu0 %v495, 112
      %v838 = vpop.permute.xlu0 %837
      %839 = vrot.lane.b32.xlu0 %v496, 112
      %v840 = vpop.permute.xlu0 %839
      %841 = vrot.lane.b32.xlu0 %v497, 112
      %v842 = vpop.permute.xlu0 %841
      %843 = vrot.lane.b32.xlu0 %v498, 112
      %v844 = vpop.permute.xlu0 %843
      %845 = vrot.lane.b32.xlu0 %v491, 104
      %v846 = vpop.permute.xlu0 %845
      %847 = vrot.lane.b32.xlu0 %v492, 104
      %v848 = vpop.permute.xlu0 %847
      %849 = vrot.lane.b32.xlu0 %v493, 104
      %v850 = vpop.permute.xlu0 %849
      %851 = vrot.lane.b32.xlu0 %v494, 104
      %v852 = vpop.permute.xlu0 %851
      %853 = vrot.lane.b32.xlu0 %v495, 104
      %v854 = vpop.permute.xlu0 %853
      %855 = vrot.lane.b32.xlu0 %v496, 104
      %v856 = vpop.permute.xlu0 %855
      %857 = vrot.lane.b32.xlu0 %v497, 104
      %v858 = vpop.permute.xlu0 %857
      %859 = vrot.lane.b32.xlu0 %v498, 104
      %v860 = vpop.permute.xlu0 %859
      %v863 = vpack.i.b16 %v814, %v491
      %v865 = vshrl.u32 %v491, 16
      %v866 = vshrl.u32 %v814, 16
      %v867 = vpack.i.b16 %v866, %v865
      %v871 = vpack.i.b16 %v846, %v830
      %v873 = vshrl.u32 %v830, 16
      %v874 = vshrl.u32 %v846, 16
      %v875 = vpack.i.b16 %v874, %v873
      %v878 = vpack.i.b16 0, 0
      %v880 = vshrl.u32 0, 16
      %v881 = vpack.i.b16 %v880, %v880
      %v885 = vpack.i.b16 %v816, %v492
      %v887 = vshrl.u32 %v492, 16
      %v888 = vshrl.u32 %v816, 16
      %v889 = vpack.i.b16 %v888, %v887
      %v893 = vpack.i.b16 %v848, %v832
      %v895 = vshrl.u32 %v832, 16
      %v896 = vshrl.u32 %v848, 16
      %v897 = vpack.i.b16 %v896, %v895
      %v901 = vpack.i.b16 %v818, %v493
      %v903 = vshrl.u32 %v493, 16
      %v904 = vshrl.u32 %v818, 16
      %v905 = vpack.i.b16 %v904, %v903
      %v909 = vpack.i.b16 %v850, %v834
      %v911 = vshrl.u32 %v834, 16
      %v912 = vshrl.u32 %v850, 16
      %v913 = vpack.i.b16 %v912, %v911
      %v917 = vpack.i.b16 %v820, %v494
      %v919 = vshrl.u32 %v494, 16
      %v920 = vshrl.u32 %v820, 16
      %v921 = vpack.i.b16 %v920, %v919
      %v925 = vpack.i.b16 %v852, %v836
      %v927 = vshrl.u32 %v836, 16
      %v928 = vshrl.u32 %v852, 16
      %v929 = vpack.i.b16 %v928, %v927
      %v933 = vpack.i.b16 %v822, %v495
      %v935 = vshrl.u32 %v495, 16
      %v936 = vshrl.u32 %v822, 16
      %v937 = vpack.i.b16 %v936, %v935
      %v941 = vpack.i.b16 %v854, %v838
      %v943 = vshrl.u32 %v838, 16
      %v944 = vshrl.u32 %v854, 16
      %v945 = vpack.i.b16 %v944, %v943
      %v949 = vpack.i.b16 %v824, %v496
      %v951 = vshrl.u32 %v496, 16
      %v952 = vshrl.u32 %v824, 16
      %v953 = vpack.i.b16 %v952, %v951
      %v957 = vpack.i.b16 %v856, %v840
      %v959 = vshrl.u32 %v840, 16
      %v960 = vshrl.u32 %v856, 16
      %v961 = vpack.i.b16 %v960, %v959
      %v965 = vpack.i.b16 %v826, %v497
      %v967 = vshrl.u32 %v497, 16
      %v968 = vshrl.u32 %v826, 16
      %v969 = vpack.i.b16 %v968, %v967
      %v973 = vpack.i.b16 %v858, %v842
      %v975 = vshrl.u32 %v842, 16
      %v976 = vshrl.u32 %v858, 16
      %v977 = vpack.i.b16 %v976, %v975
      %v981 = vpack.i.b16 %v828, %v498
      %v983 = vshrl.u32 %v498, 16
      %v984 = vshrl.u32 %v828, 16
      %v985 = vpack.i.b16 %v984, %v983
      %v989 = vpack.i.b16 %v860, %v844
      %v991 = vshrl.u32 %v844, 16
      %v992 = vshrl.u32 %v860, 16
      %v993 = vpack.i.b16 %v992, %v991
      %v995 = vcombine.high %v863, %v878
      %v997 = vunpack.c.l.s4 1983009808
      %v998 = vunpack.c.0.s8 %v997
      %v999 = vlaneseq
      %v1000 = vshrl.u32 %v999, 7
      %v1001 = vsub.s32 %v998, %v1000
      %v1002 = vrot.slane %v863, %v1001
      %v1004 = vunpack.c.l.s4 1983009808
      %v1005 = vunpack.c.0.s8 %v1004
      %v1006 = vlaneseq
      %v1007 = vshrl.u32 %v1006, 7
      %v1008 = vsub.s32 %v1005, %v1007
      %v1009 = vrot.slane %v995, %v1008
      %v1010 = vcombine.high %v871, %v878
      %v1012 = vunpack.c.l.s4 1983009808
      %v1013 = vunpack.c.0.s8 %v1012
      %v1014 = vlaneseq
      %v1015 = vshrl.u32 %v1014, 7
      %v1016 = vsub.s32 %v1013, %v1015
      %v1017 = vrot.slane %v871, %v1016
      %v1019 = vunpack.c.l.s4 1983009808
      %v1020 = vunpack.c.0.s8 %v1019
      %v1021 = vlaneseq
      %v1022 = vshrl.u32 %v1021, 7
      %v1023 = vsub.s32 %v1020, %v1022
      %v1024 = vrot.slane %v1010, %v1023
      %v1025 = vcombine.low %v1002, %v1017
      %v1026 = vcombine.high %v1002, %v1017
      %v1028 = vunpack.c.l.s4 1934713408
      %v1029 = vunpack.c.0.s8 %v1028
      %v1030 = vlaneseq
      %v1031 = vshrl.u32 %v1030, 7
      %v1032 = vsub.s32 %v1029, %v1031
      %v1033 = vrot.slane %v1025, %v1032
      %v1035 = vunpack.c.l.s4 1934713408
      %v1036 = vunpack.c.0.s8 %v1035
      %v1037 = vlaneseq
      %v1038 = vshrl.u32 %v1037, 7
      %v1039 = vsub.s32 %v1036, %v1038
      %v1040 = vrot.slane %v1026, %v1039
      %v1041 = vcombine.low %v1009, %v1024
      %v1042 = vcombine.high %v1009, %v1024
      %v1044 = vunpack.c.l.s4 1934713408
      %v1045 = vunpack.c.0.s8 %v1044
      %v1046 = vlaneseq
      %v1047 = vshrl.u32 %v1046, 7
      %v1048 = vsub.s32 %v1045, %v1047
      %v1049 = vrot.slane %v1041, %v1048
      %v1051 = vunpack.c.l.s4 1934713408
      %v1052 = vunpack.c.0.s8 %v1051
      %v1053 = vlaneseq
      %v1054 = vshrl.u32 %v1053, 7
      %v1055 = vsub.s32 %v1052, %v1054
      %v1056 = vrot.slane %v1042, %v1055
      %v1057 = vcombine.high %v1033, 0
      %v1058 = vcombine.high %v1040, 0
      %v1059 = vcombine.high %v1049, 0
      %v1060 = vcombine.high %v1056, 0
      %v1061 = vcombine.high %v867, %v881
      %v1063 = vunpack.c.l.s4 1983009808
      %v1064 = vunpack.c.0.s8 %v1063
      %v1065 = vlaneseq
      %v1066 = vshrl.u32 %v1065, 7
      %v1067 = vsub.s32 %v1064, %v1066
      %v1068 = vrot.slane %v867, %v1067
      %v1070 = vunpack.c.l.s4 1983009808
      %v1071 = vunpack.c.0.s8 %v1070
      %v1072 = vlaneseq
      %v1073 = vshrl.u32 %v1072, 7
      %v1074 = vsub.s32 %v1071, %v1073
      %v1075 = vrot.slane %v1061, %v1074
      %v1076 = vcombine.high %v875, %v881
      %v1078 = vunpack.c.l.s4 1983009808
      %v1079 = vunpack.c.0.s8 %v1078
      %v1080 = vlaneseq
      %v1081 = vshrl.u32 %v1080, 7
      %v1082 = vsub.s32 %v1079, %v1081
      %v1083 = vrot.slane %v875, %v1082
      %v1085 = vunpack.c.l.s4 1983009808
      %v1086 = vunpack.c.0.s8 %v1085
      %v1087 = vlaneseq
      %v1088 = vshrl.u32 %v1087, 7
      %v1089 = vsub.s32 %v1086, %v1088
      %v1090 = vrot.slane %v1076, %v1089
      %v1091 = vcombine.low %v1068, %v1083
      %v1092 = vcombine.high %v1068, %v1083
      %v1094 = vunpack.c.l.s4 1934713408
      %v1095 = vunpack.c.0.s8 %v1094
      %v1096 = vlaneseq
      %v1097 = vshrl.u32 %v1096, 7
      %v1098 = vsub.s32 %v1095, %v1097
      %v1099 = vrot.slane %v1091, %v1098
      %v1101 = vunpack.c.l.s4 1934713408
      %v1102 = vunpack.c.0.s8 %v1101
      %v1103 = vlaneseq
      %v1104 = vshrl.u32 %v1103, 7
      %v1105 = vsub.s32 %v1102, %v1104
      %v1106 = vrot.slane %v1092, %v1105
      %v1107 = vcombine.low %v1075, %v1090
      %v1108 = vcombine.high %v1075, %v1090
      %v1110 = vunpack.c.l.s4 1934713408
      %v1111 = vunpack.c.0.s8 %v1110
      %v1112 = vlaneseq
      %v1113 = vshrl.u32 %v1112, 7
      %v1114 = vsub.s32 %v1111, %v1113
      %v1115 = vrot.slane %v1107, %v1114
      %v1117 = vunpack.c.l.s4 1934713408
      %v1118 = vunpack.c.0.s8 %v1117
      %v1119 = vlaneseq
      %v1120 = vshrl.u32 %v1119, 7
      %v1121 = vsub.s32 %v1118, %v1120
      %v1122 = vrot.slane %v1108, %v1121
      %v1123 = vcombine.high %v1099, 0
      %v1124 = vcombine.high %v1106, 0
      %v1125 = vcombine.high %v1115, 0
      %v1126 = vcombine.high %v1122, 0
      %v1127 = vcombine.high %v885, %v878
      %v1129 = vunpack.c.l.s4 1983009808
      %v1130 = vunpack.c.0.s8 %v1129
      %v1131 = vlaneseq
      %v1132 = vshrl.u32 %v1131, 7
      %v1133 = vsub.s32 %v1130, %v1132
      %v1134 = vrot.slane %v885, %v1133
      %v1136 = vunpack.c.l.s4 1983009808
      %v1137 = vunpack.c.0.s8 %v1136
      %v1138 = vlaneseq
      %v1139 = vshrl.u32 %v1138, 7
      %v1140 = vsub.s32 %v1137, %v1139
      %v1141 = vrot.slane %v1127, %v1140
      %v1142 = vcombine.high %v893, %v878
      %v1144 = vunpack.c.l.s4 1983009808
      %v1145 = vunpack.c.0.s8 %v1144
      %v1146 = vlaneseq
      %v1147 = vshrl.u32 %v1146, 7
      %v1148 = vsub.s32 %v1145, %v1147
      %v1149 = vrot.slane %v893, %v1148
      %v1151 = vunpack.c.l.s4 1983009808
      %v1152 = vunpack.c.0.s8 %v1151
      %v1153 = vlaneseq
      %v1154 = vshrl.u32 %v1153, 7
      %v1155 = vsub.s32 %v1152, %v1154
      %v1156 = vrot.slane %v1142, %v1155
      %v1157 = vcombine.low %v1134, %v1149
      %v1158 = vcombine.high %v1134, %v1149
      %v1160 = vunpack.c.l.s4 1934713408
      %v1161 = vunpack.c.0.s8 %v1160
      %v1162 = vlaneseq
      %v1163 = vshrl.u32 %v1162, 7
      %v1164 = vsub.s32 %v1161, %v1163
      %v1165 = vrot.slane %v1157, %v1164
      %v1167 = vunpack.c.l.s4 1934713408
      %v1168 = vunpack.c.0.s8 %v1167
      %v1169 = vlaneseq
      %v1170 = vshrl.u32 %v1169, 7
      %v1171 = vsub.s32 %v1168, %v1170
      %v1172 = vrot.slane %v1158, %v1171
      %v1173 = vcombine.low %v1141, %v1156
      %v1174 = vcombine.high %v1141, %v1156
      %v1176 = vunpack.c.l.s4 1934713408
      %v1177 = vunpack.c.0.s8 %v1176
      %v1178 = vlaneseq
      %v1179 = vshrl.u32 %v1178, 7
      %v1180 = vsub.s32 %v1177, %v1179
      %v1181 = vrot.slane %v1173, %v1180
      %v1183 = vunpack.c.l.s4 1934713408
      %v1184 = vunpack.c.0.s8 %v1183
      %v1185 = vlaneseq
      %v1186 = vshrl.u32 %v1185, 7
      %v1187 = vsub.s32 %v1184, %v1186
      %v1188 = vrot.slane %v1174, %v1187
      %v1189 = vcombine.high %v1165, 0
      %v1190 = vcombine.high %v1172, 0
      %v1191 = vcombine.high %v1181, 0
      %v1192 = vcombine.high %v1188, 0
      %v1193 = vcombine.high %v889, %v881
      %v1195 = vunpack.c.l.s4 1983009808
      %v1196 = vunpack.c.0.s8 %v1195
      %v1197 = vlaneseq
      %v1198 = vshrl.u32 %v1197, 7
      %v1199 = vsub.s32 %v1196, %v1198
      %v1200 = vrot.slane %v889, %v1199
      %v1202 = vunpack.c.l.s4 1983009808
      %v1203 = vunpack.c.0.s8 %v1202
      %v1204 = vlaneseq
      %v1205 = vshrl.u32 %v1204, 7
      %v1206 = vsub.s32 %v1203, %v1205
      %v1207 = vrot.slane %v1193, %v1206
      %v1208 = vcombine.high %v897, %v881
      %v1210 = vunpack.c.l.s4 1983009808
      %v1211 = vunpack.c.0.s8 %v1210
      %v1212 = vlaneseq
      %v1213 = vshrl.u32 %v1212, 7
      %v1214 = vsub.s32 %v1211, %v1213
      %v1215 = vrot.slane %v897, %v1214
      %v1217 = vunpack.c.l.s4 1983009808
      %v1218 = vunpack.c.0.s8 %v1217
      %v1219 = vlaneseq
      %v1220 = vshrl.u32 %v1219, 7
      %v1221 = vsub.s32 %v1218, %v1220
      %v1222 = vrot.slane %v1208, %v1221
      %v1223 = vcombine.low %v1200, %v1215
      %v1224 = vcombine.high %v1200, %v1215
      %v1226 = vunpack.c.l.s4 1934713408
      %v1227 = vunpack.c.0.s8 %v1226
      %v1228 = vlaneseq
      %v1229 = vshrl.u32 %v1228, 7
      %v1230 = vsub.s32 %v1227, %v1229
      %v1231 = vrot.slane %v1223, %v1230
      %v1233 = vunpack.c.l.s4 1934713408
      %v1234 = vunpack.c.0.s8 %v1233
      %v1235 = vlaneseq
      %v1236 = vshrl.u32 %v1235, 7
      %v1237 = vsub.s32 %v1234, %v1236
      %v1238 = vrot.slane %v1224, %v1237
      %v1239 = vcombine.low %v1207, %v1222
      %v1240 = vcombine.high %v1207, %v1222
      %v1242 = vunpack.c.l.s4 1934713408
      %v1243 = vunpack.c.0.s8 %v1242
      %v1244 = vlaneseq
      %v1245 = vshrl.u32 %v1244, 7
      %v1246 = vsub.s32 %v1243, %v1245
      %v1247 = vrot.slane %v1239, %v1246
      %v1249 = vunpack.c.l.s4 1934713408
      %v1250 = vunpack.c.0.s8 %v1249
      %v1251 = vlaneseq
      %v1252 = vshrl.u32 %v1251, 7
      %v1253 = vsub.s32 %v1250, %v1252
      %v1254 = vrot.slane %v1240, %v1253
      %v1255 = vcombine.high %v1231, 0
      %v1256 = vcombine.high %v1238, 0
      %v1257 = vcombine.high %v1247, 0
      %v1258 = vcombine.high %v1254, 0
      %v1259 = vcombine.high %v901, %v878
      %v1261 = vunpack.c.l.s4 1983009808
      %v1262 = vunpack.c.0.s8 %v1261
      %v1263 = vlaneseq
      %v1264 = vshrl.u32 %v1263, 7
      %v1265 = vsub.s32 %v1262, %v1264
      %v1266 = vrot.slane %v901, %v1265
      %v1268 = vunpack.c.l.s4 1983009808
      %v1269 = vunpack.c.0.s8 %v1268
      %v1270 = vlaneseq
      %v1271 = vshrl.u32 %v1270, 7
      %v1272 = vsub.s32 %v1269, %v1271
      %v1273 = vrot.slane %v1259, %v1272
      %v1274 = vcombine.high %v909, %v878
      %v1276 = vunpack.c.l.s4 1983009808
      %v1277 = vunpack.c.0.s8 %v1276
      %v1278 = vlaneseq
      %v1279 = vshrl.u32 %v1278, 7
      %v1280 = vsub.s32 %v1277, %v1279
      %v1281 = vrot.slane %v909, %v1280
      %v1283 = vunpack.c.l.s4 1983009808
      %v1284 = vunpack.c.0.s8 %v1283
      %v1285 = vlaneseq
      %v1286 = vshrl.u32 %v1285, 7
      %v1287 = vsub.s32 %v1284, %v1286
      %v1288 = vrot.slane %v1274, %v1287
      %v1289 = vcombine.low %v1266, %v1281
      %v1290 = vcombine.high %v1266, %v1281
      %v1292 = vunpack.c.l.s4 1934713408
      %v1293 = vunpack.c.0.s8 %v1292
      %v1294 = vlaneseq
      %v1295 = vshrl.u32 %v1294, 7
      %v1296 = vsub.s32 %v1293, %v1295
      %v1297 = vrot.slane %v1289, %v1296
      %v1299 = vunpack.c.l.s4 1934713408
      %v1300 = vunpack.c.0.s8 %v1299
      %v1301 = vlaneseq
      %v1302 = vshrl.u32 %v1301, 7
      %v1303 = vsub.s32 %v1300, %v1302
      %v1304 = vrot.slane %v1290, %v1303
      %v1305 = vcombine.low %v1273, %v1288
      %v1306 = vcombine.high %v1273, %v1288
      %v1308 = vunpack.c.l.s4 1934713408
      %v1309 = vunpack.c.0.s8 %v1308
      %v1310 = vlaneseq
      %v1311 = vshrl.u32 %v1310, 7
      %v1312 = vsub.s32 %v1309, %v1311
      %v1313 = vrot.slane %v1305, %v1312
      %v1315 = vunpack.c.l.s4 1934713408
      %v1316 = vunpack.c.0.s8 %v1315
      %v1317 = vlaneseq
      %v1318 = vshrl.u32 %v1317, 7
      %v1319 = vsub.s32 %v1316, %v1318
      %v1320 = vrot.slane %v1306, %v1319
      %v1321 = vcombine.high %v1297, 0
      %v1322 = vcombine.high %v1304, 0
      %v1323 = vcombine.high %v1313, 0
      %v1324 = vcombine.high %v1320, 0
      %v1325 = vcombine.high %v905, %v881
      %v1327 = vunpack.c.l.s4 1983009808
      %v1328 = vunpack.c.0.s8 %v1327
      %v1329 = vlaneseq
      %v1330 = vshrl.u32 %v1329, 7
      %v1331 = vsub.s32 %v1328, %v1330
      %v1332 = vrot.slane %v905, %v1331
      %v1334 = vunpack.c.l.s4 1983009808
      %v1335 = vunpack.c.0.s8 %v1334
      %v1336 = vlaneseq
      %v1337 = vshrl.u32 %v1336, 7
      %v1338 = vsub.s32 %v1335, %v1337
      %v1339 = vrot.slane %v1325, %v1338
      %v1340 = vcombine.high %v913, %v881
      %v1342 = vunpack.c.l.s4 1983009808
      %v1343 = vunpack.c.0.s8 %v1342
      %v1344 = vlaneseq
      %v1345 = vshrl.u32 %v1344, 7
      %v1346 = vsub.s32 %v1343, %v1345
      %v1347 = vrot.slane %v913, %v1346
      %v1349 = vunpack.c.l.s4 1983009808
      %v1350 = vunpack.c.0.s8 %v1349
      %v1351 = vlaneseq
      %v1352 = vshrl.u32 %v1351, 7
      %v1353 = vsub.s32 %v1350, %v1352
      %v1354 = vrot.slane %v1340, %v1353
      %v1355 = vcombine.low %v1332, %v1347
      %v1356 = vcombine.high %v1332, %v1347
      %v1358 = vunpack.c.l.s4 1934713408
      %v1359 = vunpack.c.0.s8 %v1358
      %v1360 = vlaneseq
      %v1361 = vshrl.u32 %v1360, 7
      %v1362 = vsub.s32 %v1359, %v1361
      %v1363 = vrot.slane %v1355, %v1362
      %v1365 = vunpack.c.l.s4 1934713408
      %v1366 = vunpack.c.0.s8 %v1365
      %v1367 = vlaneseq
      %v1368 = vshrl.u32 %v1367, 7
      %v1369 = vsub.s32 %v1366, %v1368
      %v1370 = vrot.slane %v1356, %v1369
      %v1371 = vcombine.low %v1339, %v1354
      %v1372 = vcombine.high %v1339, %v1354
      %v1374 = vunpack.c.l.s4 1934713408
      %v1375 = vunpack.c.0.s8 %v1374
      %v1376 = vlaneseq
      %v1377 = vshrl.u32 %v1376, 7
      %v1378 = vsub.s32 %v1375, %v1377
      %v1379 = vrot.slane %v1371, %v1378
      %v1381 = vunpack.c.l.s4 1934713408
      %v1382 = vunpack.c.0.s8 %v1381
      %v1383 = vlaneseq
      %v1384 = vshrl.u32 %v1383, 7
      %v1385 = vsub.s32 %v1382, %v1384
      %v1386 = vrot.slane %v1372, %v1385
      %v1387 = vcombine.high %v1363, 0
      %v1388 = vcombine.high %v1370, 0
      %v1389 = vcombine.high %v1379, 0
      %v1390 = vcombine.high %v1386, 0
      %v1391 = vcombine.high %v917, %v878
      %v1393 = vunpack.c.l.s4 1983009808
      %v1394 = vunpack.c.0.s8 %v1393
      %v1395 = vlaneseq
      %v1396 = vshrl.u32 %v1395, 7
      %v1397 = vsub.s32 %v1394, %v1396
      %v1398 = vrot.slane %v917, %v1397
      %v1400 = vunpack.c.l.s4 1983009808
      %v1401 = vunpack.c.0.s8 %v1400
      %v1402 = vlaneseq
      %v1403 = vshrl.u32 %v1402, 7
      %v1404 = vsub.s32 %v1401, %v1403
      %v1405 = vrot.slane %v1391, %v1404
      %v1406 = vcombine.high %v925, %v878
      %v1408 = vunpack.c.l.s4 1983009808
      %v1409 = vunpack.c.0.s8 %v1408
      %v1410 = vlaneseq
      %v1411 = vshrl.u32 %v1410, 7
      %v1412 = vsub.s32 %v1409, %v1411
      %v1413 = vrot.slane %v925, %v1412
      %v1415 = vunpack.c.l.s4 1983009808
      %v1416 = vunpack.c.0.s8 %v1415
      %v1417 = vlaneseq
      %v1418 = vshrl.u32 %v1417, 7
      %v1419 = vsub.s32 %v1416, %v1418
      %v1420 = vrot.slane %v1406, %v1419
      %v1421 = vcombine.low %v1398, %v1413
      %v1422 = vcombine.high %v1398, %v1413
      %v1424 = vunpack.c.l.s4 1934713408
      %v1425 = vunpack.c.0.s8 %v1424
      %v1426 = vlaneseq
      %v1427 = vshrl.u32 %v1426, 7
      %v1428 = vsub.s32 %v1425, %v1427
      %v1429 = vrot.slane %v1421, %v1428
      %v1431 = vunpack.c.l.s4 1934713408
      %v1432 = vunpack.c.0.s8 %v1431
      %v1433 = vlaneseq
      %v1434 = vshrl.u32 %v1433, 7
      %v1435 = vsub.s32 %v1432, %v1434
      %v1436 = vrot.slane %v1422, %v1435
      %v1437 = vcombine.low %v1405, %v1420
      %v1438 = vcombine.high %v1405, %v1420
      %v1440 = vunpack.c.l.s4 1934713408
      %v1441 = vunpack.c.0.s8 %v1440
      %v1442 = vlaneseq
      %v1443 = vshrl.u32 %v1442, 7
      %v1444 = vsub.s32 %v1441, %v1443
      %v1445 = vrot.slane %v1437, %v1444
      %v1447 = vunpack.c.l.s4 1934713408
      %v1448 = vunpack.c.0.s8 %v1447
      %v1449 = vlaneseq
      %v1450 = vshrl.u32 %v1449, 7
      %v1451 = vsub.s32 %v1448, %v1450
      %v1452 = vrot.slane %v1438, %v1451
      %v1453 = vcombine.high %v1429, 0
      %v1454 = vcombine.high %v1436, 0
      %v1455 = vcombine.high %v1445, 0
      %v1456 = vcombine.high %v1452, 0
      %v1457 = vcombine.high %v921, %v881
      %v1459 = vunpack.c.l.s4 1983009808
      %v1460 = vunpack.c.0.s8 %v1459
      %v1461 = vlaneseq
      %v1462 = vshrl.u32 %v1461, 7
      %v1463 = vsub.s32 %v1460, %v1462
      %v1464 = vrot.slane %v921, %v1463
      %v1466 = vunpack.c.l.s4 1983009808
      %v1467 = vunpack.c.0.s8 %v1466
      %v1468 = vlaneseq
      %v1469 = vshrl.u32 %v1468, 7
      %v1470 = vsub.s32 %v1467, %v1469
      %v1471 = vrot.slane %v1457, %v1470
      %v1472 = vcombine.high %v929, %v881
      %v1474 = vunpack.c.l.s4 1983009808
      %v1475 = vunpack.c.0.s8 %v1474
      %v1476 = vlaneseq
      %v1477 = vshrl.u32 %v1476, 7
      %v1478 = vsub.s32 %v1475, %v1477
      %v1479 = vrot.slane %v929, %v1478
      %v1481 = vunpack.c.l.s4 1983009808
      %v1482 = vunpack.c.0.s8 %v1481
      %v1483 = vlaneseq
      %v1484 = vshrl.u32 %v1483, 7
      %v1485 = vsub.s32 %v1482, %v1484
      %v1486 = vrot.slane %v1472, %v1485
      %v1487 = vcombine.low %v1464, %v1479
      %v1488 = vcombine.high %v1464, %v1479
      %v1490 = vunpack.c.l.s4 1934713408
      %v1491 = vunpack.c.0.s8 %v1490
      %v1492 = vlaneseq
      %v1493 = vshrl.u32 %v1492, 7
      %v1494 = vsub.s32 %v1491, %v1493
      %v1495 = vrot.slane %v1487, %v1494
      %v1497 = vunpack.c.l.s4 1934713408
      %v1498 = vunpack.c.0.s8 %v1497
      %v1499 = vlaneseq
      %v1500 = vshrl.u32 %v1499, 7
      %v1501 = vsub.s32 %v1498, %v1500
      %v1502 = vrot.slane %v1488, %v1501
      %v1503 = vcombine.low %v1471, %v1486
      %v1504 = vcombine.high %v1471, %v1486
      %v1506 = vunpack.c.l.s4 1934713408
      %v1507 = vunpack.c.0.s8 %v1506
      %v1508 = vlaneseq
      %v1509 = vshrl.u32 %v1508, 7
      %v1510 = vsub.s32 %v1507, %v1509
      %v1511 = vrot.slane %v1503, %v1510
      %v1513 = vunpack.c.l.s4 1934713408
      %v1514 = vunpack.c.0.s8 %v1513
      %v1515 = vlaneseq
      %v1516 = vshrl.u32 %v1515, 7
      %v1517 = vsub.s32 %v1514, %v1516
      %v1518 = vrot.slane %v1504, %v1517
      %v1519 = vcombine.high %v1495, 0
      %v1520 = vcombine.high %v1502, 0
      %v1521 = vcombine.high %v1511, 0
      %v1522 = vcombine.high %v1518, 0
      %v1523 = vcombine.high %v933, %v878
      %v1525 = vunpack.c.l.s4 1983009808
      %v1526 = vunpack.c.0.s8 %v1525
      %v1527 = vlaneseq
      %v1528 = vshrl.u32 %v1527, 7
      %v1529 = vsub.s32 %v1526, %v1528
      %v1530 = vrot.slane %v933, %v1529
      %v1532 = vunpack.c.l.s4 1983009808
      %v1533 = vunpack.c.0.s8 %v1532
      %v1534 = vlaneseq
      %v1535 = vshrl.u32 %v1534, 7
      %v1536 = vsub.s32 %v1533, %v1535
      %v1537 = vrot.slane %v1523, %v1536
      %v1538 = vcombine.high %v941, %v878
      %v1540 = vunpack.c.l.s4 1983009808
      %v1541 = vunpack.c.0.s8 %v1540
      %v1542 = vlaneseq
      %v1543 = vshrl.u32 %v1542, 7
      %v1544 = vsub.s32 %v1541, %v1543
      %v1545 = vrot.slane %v941, %v1544
      %v1547 = vunpack.c.l.s4 1983009808
      %v1548 = vunpack.c.0.s8 %v1547
      %v1549 = vlaneseq
      %v1550 = vshrl.u32 %v1549, 7
      %v1551 = vsub.s32 %v1548, %v1550
      %v1552 = vrot.slane %v1538, %v1551
      %v1553 = vcombine.low %v1530, %v1545
      %v1554 = vcombine.high %v1530, %v1545
      %v1556 = vunpack.c.l.s4 1934713408
      %v1557 = vunpack.c.0.s8 %v1556
      %v1558 = vlaneseq
      %v1559 = vshrl.u32 %v1558, 7
      %v1560 = vsub.s32 %v1557, %v1559
      %v1561 = vrot.slane %v1553, %v1560
      %v1563 = vunpack.c.l.s4 1934713408
      %v1564 = vunpack.c.0.s8 %v1563
      %v1565 = vlaneseq
      %v1566 = vshrl.u32 %v1565, 7
      %v1567 = vsub.s32 %v1564, %v1566
      %v1568 = vrot.slane %v1554, %v1567
      %v1569 = vcombine.low %v1537, %v1552
      %v1570 = vcombine.high %v1537, %v1552
      %v1572 = vunpack.c.l.s4 1934713408
      %v1573 = vunpack.c.0.s8 %v1572
      %v1574 = vlaneseq
      %v1575 = vshrl.u32 %v1574, 7
      %v1576 = vsub.s32 %v1573, %v1575
      %v1577 = vrot.slane %v1569, %v1576
      %v1579 = vunpack.c.l.s4 1934713408
      %v1580 = vunpack.c.0.s8 %v1579
      %v1581 = vlaneseq
      %v1582 = vshrl.u32 %v1581, 7
      %v1583 = vsub.s32 %v1580, %v1582
      %v1584 = vrot.slane %v1570, %v1583
      %v1585 = vcombine.high %v1561, 0
      %v1586 = vcombine.high %v1568, 0
      %v1587 = vcombine.high %v1577, 0
      %v1588 = vcombine.high %v1584, 0
      %v1589 = vcombine.high %v937, %v881
      %v1591 = vunpack.c.l.s4 1983009808
      %v1592 = vunpack.c.0.s8 %v1591
      %v1593 = vlaneseq
      %v1594 = vshrl.u32 %v1593, 7
      %v1595 = vsub.s32 %v1592, %v1594
      %v1596 = vrot.slane %v937, %v1595
      %v1598 = vunpack.c.l.s4 1983009808
      %v1599 = vunpack.c.0.s8 %v1598
      %v1600 = vlaneseq
      %v1601 = vshrl.u32 %v1600, 7
      %v1602 = vsub.s32 %v1599, %v1601
      %v1603 = vrot.slane %v1589, %v1602
      %v1604 = vcombine.high %v945, %v881
      %v1606 = vunpack.c.l.s4 1983009808
      %v1607 = vunpack.c.0.s8 %v1606
      %v1608 = vlaneseq
      %v1609 = vshrl.u32 %v1608, 7
      %v1610 = vsub.s32 %v1607, %v1609
      %v1611 = vrot.slane %v945, %v1610
      %v1613 = vunpack.c.l.s4 1983009808
      %v1614 = vunpack.c.0.s8 %v1613
      %v1615 = vlaneseq
      %v1616 = vshrl.u32 %v1615, 7
      %v1617 = vsub.s32 %v1614, %v1616
      %v1618 = vrot.slane %v1604, %v1617
      %v1619 = vcombine.low %v1596, %v1611
      %v1620 = vcombine.high %v1596, %v1611
      %v1622 = vunpack.c.l.s4 1934713408
      %v1623 = vunpack.c.0.s8 %v1622
      %v1624 = vlaneseq
      %v1625 = vshrl.u32 %v1624, 7
      %v1626 = vsub.s32 %v1623, %v1625
      %v1627 = vrot.slane %v1619, %v1626
      %v1629 = vunpack.c.l.s4 1934713408
      %v1630 = vunpack.c.0.s8 %v1629
      %v1631 = vlaneseq
      %v1632 = vshrl.u32 %v1631, 7
      %v1633 = vsub.s32 %v1630, %v1632
      %v1634 = vrot.slane %v1620, %v1633
      %v1635 = vcombine.low %v1603, %v1618
      %v1636 = vcombine.high %v1603, %v1618
      %v1638 = vunpack.c.l.s4 1934713408
      %v1639 = vunpack.c.0.s8 %v1638
      %v1640 = vlaneseq
      %v1641 = vshrl.u32 %v1640, 7
      %v1642 = vsub.s32 %v1639, %v1641
      %v1643 = vrot.slane %v1635, %v1642
      %v1645 = vunpack.c.l.s4 1934713408
      %v1646 = vunpack.c.0.s8 %v1645
      %v1647 = vlaneseq
      %v1648 = vshrl.u32 %v1647, 7
      %v1649 = vsub.s32 %v1646, %v1648
      %v1650 = vrot.slane %v1636, %v1649
      %v1651 = vcombine.high %v1627, 0
      %v1652 = vcombine.high %v1634, 0
      %v1653 = vcombine.high %v1643, 0
      %v1654 = vcombine.high %v1650, 0
      %v1655 = vcombine.high %v949, %v878
      %v1657 = vunpack.c.l.s4 1983009808
      %v1658 = vunpack.c.0.s8 %v1657
      %v1659 = vlaneseq
      %v1660 = vshrl.u32 %v1659, 7
      %v1661 = vsub.s32 %v1658, %v1660
      %v1662 = vrot.slane %v949, %v1661
      %v1664 = vunpack.c.l.s4 1983009808
      %v1665 = vunpack.c.0.s8 %v1664
      %v1666 = vlaneseq
      %v1667 = vshrl.u32 %v1666, 7
      %v1668 = vsub.s32 %v1665, %v1667
      %v1669 = vrot.slane %v1655, %v1668
      %v1670 = vcombine.high %v957, %v878
      %v1672 = vunpack.c.l.s4 1983009808
      %v1673 = vunpack.c.0.s8 %v1672
      %v1674 = vlaneseq
      %v1675 = vshrl.u32 %v1674, 7
      %v1676 = vsub.s32 %v1673, %v1675
      %v1677 = vrot.slane %v957, %v1676
      %v1679 = vunpack.c.l.s4 1983009808
      %v1680 = vunpack.c.0.s8 %v1679
      %v1681 = vlaneseq
      %v1682 = vshrl.u32 %v1681, 7
      %v1683 = vsub.s32 %v1680, %v1682
      %v1684 = vrot.slane %v1670, %v1683
      %v1685 = vcombine.low %v1662, %v1677
      %v1686 = vcombine.high %v1662, %v1677
      %v1688 = vunpack.c.l.s4 1934713408
      %v1689 = vunpack.c.0.s8 %v1688
      %v1690 = vlaneseq
      %v1691 = vshrl.u32 %v1690, 7
      %v1692 = vsub.s32 %v1689, %v1691
      %v1693 = vrot.slane %v1685, %v1692
      %v1695 = vunpack.c.l.s4 1934713408
      %v1696 = vunpack.c.0.s8 %v1695
      %v1697 = vlaneseq
      %v1698 = vshrl.u32 %v1697, 7
      %v1699 = vsub.s32 %v1696, %v1698
      %v1700 = vrot.slane %v1686, %v1699
      %v1701 = vcombine.low %v1669, %v1684
      %v1702 = vcombine.high %v1669, %v1684
      %v1704 = vunpack.c.l.s4 1934713408
      %v1705 = vunpack.c.0.s8 %v1704
      %v1706 = vlaneseq
      %v1707 = vshrl.u32 %v1706, 7
      %v1708 = vsub.s32 %v1705, %v1707
      %v1709 = vrot.slane %v1701, %v1708
      %v1711 = vunpack.c.l.s4 1934713408
      %v1712 = vunpack.c.0.s8 %v1711
      %v1713 = vlaneseq
      %v1714 = vshrl.u32 %v1713, 7
      %v1715 = vsub.s32 %v1712, %v1714
      %v1716 = vrot.slane %v1702, %v1715
      %v1717 = vcombine.high %v1693, 0
      %v1718 = vcombine.high %v1700, 0
      %v1719 = vcombine.high %v1709, 0
      %v1720 = vcombine.high %v1716, 0
      %v1721 = vcombine.high %v953, %v881
      %v1723 = vunpack.c.l.s4 1983009808
      %v1724 = vunpack.c.0.s8 %v1723
      %v1725 = vlaneseq
      %v1726 = vshrl.u32 %v1725, 7
      %v1727 = vsub.s32 %v1724, %v1726
      %v1728 = vrot.slane %v953, %v1727
      %v1730 = vunpack.c.l.s4 1983009808
      %v1731 = vunpack.c.0.s8 %v1730
      %v1732 = vlaneseq
      %v1733 = vshrl.u32 %v1732, 7
      %v1734 = vsub.s32 %v1731, %v1733
      %v1735 = vrot.slane %v1721, %v1734
      %v1736 = vcombine.high %v961, %v881
      %v1738 = vunpack.c.l.s4 1983009808
      %v1739 = vunpack.c.0.s8 %v1738
      %v1740 = vlaneseq
      %v1741 = vshrl.u32 %v1740, 7
      %v1742 = vsub.s32 %v1739, %v1741
      %v1743 = vrot.slane %v961, %v1742
      %v1745 = vunpack.c.l.s4 1983009808
      %v1746 = vunpack.c.0.s8 %v1745
      %v1747 = vlaneseq
      %v1748 = vshrl.u32 %v1747, 7
      %v1749 = vsub.s32 %v1746, %v1748
      %v1750 = vrot.slane %v1736, %v1749
      %v1751 = vcombine.low %v1728, %v1743
      %v1752 = vcombine.high %v1728, %v1743
      %v1754 = vunpack.c.l.s4 1934713408
      %v1755 = vunpack.c.0.s8 %v1754
      %v1756 = vlaneseq
      %v1757 = vshrl.u32 %v1756, 7
      %v1758 = vsub.s32 %v1755, %v1757
      %v1759 = vrot.slane %v1751, %v1758
      %v1761 = vunpack.c.l.s4 1934713408
      %v1762 = vunpack.c.0.s8 %v1761
      %v1763 = vlaneseq
      %v1764 = vshrl.u32 %v1763, 7
      %v1765 = vsub.s32 %v1762, %v1764
      %v1766 = vrot.slane %v1752, %v1765
      %v1767 = vcombine.low %v1735, %v1750
      %v1768 = vcombine.high %v1735, %v1750
      %v1770 = vunpack.c.l.s4 1934713408
      %v1771 = vunpack.c.0.s8 %v1770
      %v1772 = vlaneseq
      %v1773 = vshrl.u32 %v1772, 7
      %v1774 = vsub.s32 %v1771, %v1773
      %v1775 = vrot.slane %v1767, %v1774
      %v1777 = vunpack.c.l.s4 1934713408
      %v1778 = vunpack.c.0.s8 %v1777
      %v1779 = vlaneseq
      %v1780 = vshrl.u32 %v1779, 7
      %v1781 = vsub.s32 %v1778, %v1780
      %v1782 = vrot.slane %v1768, %v1781
      %v1783 = vcombine.high %v1759, 0
      %v1784 = vcombine.high %v1766, 0
      %v1785 = vcombine.high %v1775, 0
      %v1786 = vcombine.high %v1782, 0
      %v1787 = vcombine.high %v965, %v878
      %v1789 = vunpack.c.l.s4 1983009808
      %v1790 = vunpack.c.0.s8 %v1789
      %v1791 = vlaneseq
      %v1792 = vshrl.u32 %v1791, 7
      %v1793 = vsub.s32 %v1790, %v1792
      %v1794 = vrot.slane %v965, %v1793
      %v1796 = vunpack.c.l.s4 1983009808
      %v1797 = vunpack.c.0.s8 %v1796
      %v1798 = vlaneseq
      %v1799 = vshrl.u32 %v1798, 7
      %v1800 = vsub.s32 %v1797, %v1799
      %v1801 = vrot.slane %v1787, %v1800
      %v1802 = vcombine.high %v973, %v878
      %v1804 = vunpack.c.l.s4 1983009808
      %v1805 = vunpack.c.0.s8 %v1804
      %v1806 = vlaneseq
      %v1807 = vshrl.u32 %v1806, 7
      %v1808 = vsub.s32 %v1805, %v1807
      %v1809 = vrot.slane %v973, %v1808
      %v1811 = vunpack.c.l.s4 1983009808
      %v1812 = vunpack.c.0.s8 %v1811
      %v1813 = vlaneseq
      %v1814 = vshrl.u32 %v1813, 7
      %v1815 = vsub.s32 %v1812, %v1814
      %v1816 = vrot.slane %v1802, %v1815
      %v1817 = vcombine.low %v1794, %v1809
      %v1818 = vcombine.high %v1794, %v1809
      %v1820 = vunpack.c.l.s4 1934713408
      %v1821 = vunpack.c.0.s8 %v1820
      %v1822 = vlaneseq
      %v1823 = vshrl.u32 %v1822, 7
      %v1824 = vsub.s32 %v1821, %v1823
      %v1825 = vrot.slane %v1817, %v1824
      %v1827 = vunpack.c.l.s4 1934713408
      %v1828 = vunpack.c.0.s8 %v1827
      %v1829 = vlaneseq
      %v1830 = vshrl.u32 %v1829, 7
      %v1831 = vsub.s32 %v1828, %v1830
      %v1832 = vrot.slane %v1818, %v1831
      %v1833 = vcombine.low %v1801, %v1816
      %v1834 = vcombine.high %v1801, %v1816
      %v1836 = vunpack.c.l.s4 1934713408
      %v1837 = vunpack.c.0.s8 %v1836
      %v1838 = vlaneseq
      %v1839 = vshrl.u32 %v1838, 7
      %v1840 = vsub.s32 %v1837, %v1839
      %v1841 = vrot.slane %v1833, %v1840
      %v1843 = vunpack.c.l.s4 1934713408
      %v1844 = vunpack.c.0.s8 %v1843
      %v1845 = vlaneseq
      %v1846 = vshrl.u32 %v1845, 7
      %v1847 = vsub.s32 %v1844, %v1846
      %v1848 = vrot.slane %v1834, %v1847
      %v1849 = vcombine.high %v1825, 0
      %v1850 = vcombine.high %v1832, 0
      %v1851 = vcombine.high %v1841, 0
      %v1852 = vcombine.high %v1848, 0
      %v1853 = vcombine.high %v969, %v881
      %v1855 = vunpack.c.l.s4 1983009808
      %v1856 = vunpack.c.0.s8 %v1855
      %v1857 = vlaneseq
      %v1858 = vshrl.u32 %v1857, 7
      %v1859 = vsub.s32 %v1856, %v1858
      %v1860 = vrot.slane %v969, %v1859
      %v1862 = vunpack.c.l.s4 1983009808
      %v1863 = vunpack.c.0.s8 %v1862
      %v1864 = vlaneseq
      %v1865 = vshrl.u32 %v1864, 7
      %v1866 = vsub.s32 %v1863, %v1865
      %v1867 = vrot.slane %v1853, %v1866
      %v1868 = vcombine.high %v977, %v881
      %v1870 = vunpack.c.l.s4 1983009808
      %v1871 = vunpack.c.0.s8 %v1870
      %v1872 = vlaneseq
      %v1873 = vshrl.u32 %v1872, 7
      %v1874 = vsub.s32 %v1871, %v1873
      %v1875 = vrot.slane %v977, %v1874
      %v1877 = vunpack.c.l.s4 1983009808
      %v1878 = vunpack.c.0.s8 %v1877
      %v1879 = vlaneseq
      %v1880 = vshrl.u32 %v1879, 7
      %v1881 = vsub.s32 %v1878, %v1880
      %v1882 = vrot.slane %v1868, %v1881
      %v1883 = vcombine.low %v1860, %v1875
      %v1884 = vcombine.high %v1860, %v1875
      %v1886 = vunpack.c.l.s4 1934713408
      %v1887 = vunpack.c.0.s8 %v1886
      %v1888 = vlaneseq
      %v1889 = vshrl.u32 %v1888, 7
      %v1890 = vsub.s32 %v1887, %v1889
      %v1891 = vrot.slane %v1883, %v1890
      %v1893 = vunpack.c.l.s4 1934713408
      %v1894 = vunpack.c.0.s8 %v1893
      %v1895 = vlaneseq
      %v1896 = vshrl.u32 %v1895, 7
      %v1897 = vsub.s32 %v1894, %v1896
      %v1898 = vrot.slane %v1884, %v1897
      %v1899 = vcombine.low %v1867, %v1882
      %v1900 = vcombine.high %v1867, %v1882
      %v1902 = vunpack.c.l.s4 1934713408
      %v1903 = vunpack.c.0.s8 %v1902
      %v1904 = vlaneseq
      %v1905 = vshrl.u32 %v1904, 7
      %v1906 = vsub.s32 %v1903, %v1905
      %v1907 = vrot.slane %v1899, %v1906
      %v1909 = vunpack.c.l.s4 1934713408
      %v1910 = vunpack.c.0.s8 %v1909
      %v1911 = vlaneseq
      %v1912 = vshrl.u32 %v1911, 7
      %v1913 = vsub.s32 %v1910, %v1912
      %v1914 = vrot.slane %v1900, %v1913
      %v1915 = vcombine.high %v1891, 0
      %v1916 = vcombine.high %v1898, 0
      %v1917 = vcombine.high %v1907, 0
      %v1918 = vcombine.high %v1914, 0
      %v1919 = vcombine.high %v981, %v878
      %v1921 = vunpack.c.l.s4 1983009808
      %v1922 = vunpack.c.0.s8 %v1921
      %v1923 = vlaneseq
      %v1924 = vshrl.u32 %v1923, 7
      %v1925 = vsub.s32 %v1922, %v1924
      %v1926 = vrot.slane %v981, %v1925
      %v1928 = vunpack.c.l.s4 1983009808
      %v1929 = vunpack.c.0.s8 %v1928
      %v1930 = vlaneseq
      %v1931 = vshrl.u32 %v1930, 7
      %v1932 = vsub.s32 %v1929, %v1931
      %v1933 = vrot.slane %v1919, %v1932
      %v1934 = vcombine.high %v989, %v878
      %v1936 = vunpack.c.l.s4 1983009808
      %v1937 = vunpack.c.0.s8 %v1936
      %v1938 = vlaneseq
      %v1939 = vshrl.u32 %v1938, 7
      %v1940 = vsub.s32 %v1937, %v1939
      %v1941 = vrot.slane %v989, %v1940
      %v1943 = vunpack.c.l.s4 1983009808
      %v1944 = vunpack.c.0.s8 %v1943
      %v1945 = vlaneseq
      %v1946 = vshrl.u32 %v1945, 7
      %v1947 = vsub.s32 %v1944, %v1946
      %v1948 = vrot.slane %v1934, %v1947
      %v1949 = vcombine.low %v1926, %v1941
      %v1950 = vcombine.high %v1926, %v1941
      %v1952 = vunpack.c.l.s4 1934713408
      %v1953 = vunpack.c.0.s8 %v1952
      %v1954 = vlaneseq
      %v1955 = vshrl.u32 %v1954, 7
      %v1956 = vsub.s32 %v1953, %v1955
      %v1957 = vrot.slane %v1949, %v1956
      %v1959 = vunpack.c.l.s4 1934713408
      %v1960 = vunpack.c.0.s8 %v1959
      %v1961 = vlaneseq
      %v1962 = vshrl.u32 %v1961, 7
      %v1963 = vsub.s32 %v1960, %v1962
      %v1964 = vrot.slane %v1950, %v1963
      %v1965 = vcombine.low %v1933, %v1948
      %v1966 = vcombine.high %v1933, %v1948
      %v1968 = vunpack.c.l.s4 1934713408
      %v1969 = vunpack.c.0.s8 %v1968
      %v1970 = vlaneseq
      %v1971 = vshrl.u32 %v1970, 7
      %v1972 = vsub.s32 %v1969, %v1971
      %v1973 = vrot.slane %v1965, %v1972
      %v1975 = vunpack.c.l.s4 1934713408
      %v1976 = vunpack.c.0.s8 %v1975
      %v1977 = vlaneseq
      %v1978 = vshrl.u32 %v1977, 7
      %v1979 = vsub.s32 %v1976, %v1978
      %v1980 = vrot.slane %v1966, %v1979
      %v1981 = vcombine.high %v1957, 0
      %v1982 = vcombine.high %v1964, 0
      %v1983 = vcombine.high %v1973, 0
      %v1984 = vcombine.high %v1980, 0
      %v1985 = vcombine.high %v985, %v881
      %v1987 = vunpack.c.l.s4 1983009808
      %v1988 = vunpack.c.0.s8 %v1987
      %v1989 = vlaneseq
      %v1990 = vshrl.u32 %v1989, 7
      %v1991 = vsub.s32 %v1988, %v1990
      %v1992 = vrot.slane %v985, %v1991
      %v1994 = vunpack.c.l.s4 1983009808
      %v1995 = vunpack.c.0.s8 %v1994
      %v1996 = vlaneseq
      %v1997 = vshrl.u32 %v1996, 7
      %v1998 = vsub.s32 %v1995, %v1997
      %v1999 = vrot.slane %v1985, %v1998
      %v2000 = vcombine.high %v993, %v881
      %v2002 = vunpack.c.l.s4 1983009808
      %v2003 = vunpack.c.0.s8 %v2002
      %v2004 = vlaneseq
      %v2005 = vshrl.u32 %v2004, 7
      %v2006 = vsub.s32 %v2003, %v2005
      %v2007 = vrot.slane %v993, %v2006
      %v2009 = vunpack.c.l.s4 1983009808
      %v2010 = vunpack.c.0.s8 %v2009
      %v2011 = vlaneseq
      %v2012 = vshrl.u32 %v2011, 7
      %v2013 = vsub.s32 %v2010, %v2012
      %v2014 = vrot.slane %v2000, %v2013
      %v2015 = vcombine.low %v1992, %v2007
      %v2016 = vcombine.high %v1992, %v2007
      %v2018 = vunpack.c.l.s4 1934713408
      %v2019 = vunpack.c.0.s8 %v2018
      %v2020 = vlaneseq
      %v2021 = vshrl.u32 %v2020, 7
      %v2022 = vsub.s32 %v2019, %v2021
      %v2023 = vrot.slane %v2015, %v2022
      %v2025 = vunpack.c.l.s4 1934713408
      %v2026 = vunpack.c.0.s8 %v2025
      %v2027 = vlaneseq
      %v2028 = vshrl.u32 %v2027, 7
      %v2029 = vsub.s32 %v2026, %v2028
      %v2030 = vrot.slane %v2016, %v2029
      %v2031 = vcombine.low %v1999, %v2014
      %v2032 = vcombine.high %v1999, %v2014
      %v2034 = vunpack.c.l.s4 1934713408
      %v2035 = vunpack.c.0.s8 %v2034
      %v2036 = vlaneseq
      %v2037 = vshrl.u32 %v2036, 7
      %v2038 = vsub.s32 %v2035, %v2037
      %v2039 = vrot.slane %v2031, %v2038
      %v2041 = vunpack.c.l.s4 1934713408
      %v2042 = vunpack.c.0.s8 %v2041
      %v2043 = vlaneseq
      %v2044 = vshrl.u32 %v2043, 7
      %v2045 = vsub.s32 %v2042, %v2044
      %v2046 = vrot.slane %v2032, %v2045
      %v2047 = vcombine.high %v2023, 0
      %v2048 = vcombine.high %v2030, 0
      %v2049 = vcombine.high %v2039, 0
      %v2050 = vcombine.high %v2046, 0
      %v2051 = vcombine.low %v1033, %v1040
      %v2053 = vunpack.c.l.s4 1983009808
      %v2054 = vunpack.c.0.s8 %v2053
      %v2055 = vlaneseq
      %v2056 = vshrl.u32 %v2055, 7
      %v2057 = vsub.s32 %v2054, %v2056
      %v2058 = vrot.slane %v2051, %v2057
      %v2059 = vcombine.low %v1057, %v1058
      %v2061 = vunpack.c.l.s4 1983009808
      %v2062 = vunpack.c.0.s8 %v2061
      %v2063 = vlaneseq
      %v2064 = vshrl.u32 %v2063, 7
      %v2065 = vsub.s32 %v2062, %v2064
      %v2066 = vrot.slane %v2059, %v2065
      %v2067 = vcombine.low %v1049, %v1056
      %v2069 = vunpack.c.l.s4 1983009808
      %v2070 = vunpack.c.0.s8 %v2069
      %v2071 = vlaneseq
      %v2072 = vshrl.u32 %v2071, 7
      %v2073 = vsub.s32 %v2070, %v2072
      %v2074 = vrot.slane %v2067, %v2073
      %v2075 = vcombine.low %v1059, %v1060
      %v2077 = vunpack.c.l.s4 1983009808
      %v2078 = vunpack.c.0.s8 %v2077
      %v2079 = vlaneseq
      %v2080 = vshrl.u32 %v2079, 7
      %v2081 = vsub.s32 %v2078, %v2080
      %v2082 = vrot.slane %v2075, %v2081
      %v2083 = vcombine.low %v2058, %v2066
      %v2085 = vunpack.c.l.s4 1934713408
      %v2086 = vunpack.c.0.s8 %v2085
      %v2087 = vlaneseq
      %v2088 = vshrl.u32 %v2087, 7
      %v2089 = vsub.s32 %v2086, %v2088
      %v2090 = vrot.slane %v2083, %v2089
      %v2091 = vcombine.low %v2074, %v2082
      %v2093 = vunpack.c.l.s4 1934713408
      %v2094 = vunpack.c.0.s8 %v2093
      %v2095 = vlaneseq
      %v2096 = vshrl.u32 %v2095, 7
      %v2097 = vsub.s32 %v2094, %v2096
      %v2098 = vrot.slane %v2091, %v2097
      %v2099 = vcombine.low %v2090, %v2098
      %v2100 = vcombine.high %v2090, %v2098
      %v2101 = vcombine.low %v1099, %v1106
      %v2103 = vunpack.c.l.s4 1983009808
      %v2104 = vunpack.c.0.s8 %v2103
      %v2105 = vlaneseq
      %v2106 = vshrl.u32 %v2105, 7
      %v2107 = vsub.s32 %v2104, %v2106
      %v2108 = vrot.slane %v2101, %v2107
      %v2109 = vcombine.low %v1123, %v1124
      %v2111 = vunpack.c.l.s4 1983009808
      %v2112 = vunpack.c.0.s8 %v2111
      %v2113 = vlaneseq
      %v2114 = vshrl.u32 %v2113, 7
      %v2115 = vsub.s32 %v2112, %v2114
      %v2116 = vrot.slane %v2109, %v2115
      %v2117 = vcombine.low %v1115, %v1122
      %v2119 = vunpack.c.l.s4 1983009808
      %v2120 = vunpack.c.0.s8 %v2119
      %v2121 = vlaneseq
      %v2122 = vshrl.u32 %v2121, 7
      %v2123 = vsub.s32 %v2120, %v2122
      %v2124 = vrot.slane %v2117, %v2123
      %v2125 = vcombine.low %v1125, %v1126
      %v2127 = vunpack.c.l.s4 1983009808
      %v2128 = vunpack.c.0.s8 %v2127
      %v2129 = vlaneseq
      %v2130 = vshrl.u32 %v2129, 7
      %v2131 = vsub.s32 %v2128, %v2130
      %v2132 = vrot.slane %v2125, %v2131
      %v2133 = vcombine.low %v2108, %v2116
      %v2135 = vunpack.c.l.s4 1934713408
      %v2136 = vunpack.c.0.s8 %v2135
      %v2137 = vlaneseq
      %v2138 = vshrl.u32 %v2137, 7
      %v2139 = vsub.s32 %v2136, %v2138
      %v2140 = vrot.slane %v2133, %v2139
      %v2141 = vcombine.low %v2124, %v2132
      %v2143 = vunpack.c.l.s4 1934713408
      %v2144 = vunpack.c.0.s8 %v2143
      %v2145 = vlaneseq
      %v2146 = vshrl.u32 %v2145, 7
      %v2147 = vsub.s32 %v2144, %v2146
      %v2148 = vrot.slane %v2141, %v2147
      %v2149 = vcombine.low %v2140, %v2148
      %v2150 = vcombine.high %v2140, %v2148
      %v2151 = vcombine.low %v1165, %v1172
      %v2153 = vunpack.c.l.s4 1983009808
      %v2154 = vunpack.c.0.s8 %v2153
      %v2155 = vlaneseq
      %v2156 = vshrl.u32 %v2155, 7
      %v2157 = vsub.s32 %v2154, %v2156
      %v2158 = vrot.slane %v2151, %v2157
      %v2159 = vcombine.low %v1189, %v1190
      %v2161 = vunpack.c.l.s4 1983009808
      %v2162 = vunpack.c.0.s8 %v2161
      %v2163 = vlaneseq
      %v2164 = vshrl.u32 %v2163, 7
      %v2165 = vsub.s32 %v2162, %v2164
      %v2166 = vrot.slane %v2159, %v2165
      %v2167 = vcombine.low %v1181, %v1188
      %v2169 = vunpack.c.l.s4 1983009808
      %v2170 = vunpack.c.0.s8 %v2169
      %v2171 = vlaneseq
      %v2172 = vshrl.u32 %v2171, 7
      %v2173 = vsub.s32 %v2170, %v2172
      %v2174 = vrot.slane %v2167, %v2173
      %v2175 = vcombine.low %v1191, %v1192
      %v2177 = vunpack.c.l.s4 1983009808
      %v2178 = vunpack.c.0.s8 %v2177
      %v2179 = vlaneseq
      %v2180 = vshrl.u32 %v2179, 7
      %v2181 = vsub.s32 %v2178, %v2180
      %v2182 = vrot.slane %v2175, %v2181
      %v2183 = vcombine.low %v2158, %v2166
      %v2185 = vunpack.c.l.s4 1934713408
      %v2186 = vunpack.c.0.s8 %v2185
      %v2187 = vlaneseq
      %v2188 = vshrl.u32 %v2187, 7
      %v2189 = vsub.s32 %v2186, %v2188
      %v2190 = vrot.slane %v2183, %v2189
      %v2191 = vcombine.low %v2174, %v2182
      %v2193 = vunpack.c.l.s4 1934713408
      %v2194 = vunpack.c.0.s8 %v2193
      %v2195 = vlaneseq
      %v2196 = vshrl.u32 %v2195, 7
      %v2197 = vsub.s32 %v2194, %v2196
      %v2198 = vrot.slane %v2191, %v2197
      %v2199 = vcombine.low %v2190, %v2198
      %v2200 = vcombine.high %v2190, %v2198
      %v2201 = vcombine.low %v1231, %v1238
      %v2203 = vunpack.c.l.s4 1983009808
      %v2204 = vunpack.c.0.s8 %v2203
      %v2205 = vlaneseq
      %v2206 = vshrl.u32 %v2205, 7
      %v2207 = vsub.s32 %v2204, %v2206
      %v2208 = vrot.slane %v2201, %v2207
      %v2209 = vcombine.low %v1255, %v1256
      %v2211 = vunpack.c.l.s4 1983009808
      %v2212 = vunpack.c.0.s8 %v2211
      %v2213 = vlaneseq
      %v2214 = vshrl.u32 %v2213, 7
      %v2215 = vsub.s32 %v2212, %v2214
      %v2216 = vrot.slane %v2209, %v2215
      %v2217 = vcombine.low %v1247, %v1254
      %v2219 = vunpack.c.l.s4 1983009808
      %v2220 = vunpack.c.0.s8 %v2219
      %v2221 = vlaneseq
      %v2222 = vshrl.u32 %v2221, 7
      %v2223 = vsub.s32 %v2220, %v2222
      %v2224 = vrot.slane %v2217, %v2223
      %v2225 = vcombine.low %v1257, %v1258
      %v2227 = vunpack.c.l.s4 1983009808
      %v2228 = vunpack.c.0.s8 %v2227
      %v2229 = vlaneseq
      %v2230 = vshrl.u32 %v2229, 7
      %v2231 = vsub.s32 %v2228, %v2230
      %v2232 = vrot.slane %v2225, %v2231
      %v2233 = vcombine.low %v2208, %v2216
      %v2235 = vunpack.c.l.s4 1934713408
      %v2236 = vunpack.c.0.s8 %v2235
      %v2237 = vlaneseq
      %v2238 = vshrl.u32 %v2237, 7
      %v2239 = vsub.s32 %v2236, %v2238
      %v2240 = vrot.slane %v2233, %v2239
      %v2241 = vcombine.low %v2224, %v2232
      %v2243 = vunpack.c.l.s4 1934713408
      %v2244 = vunpack.c.0.s8 %v2243
      %v2245 = vlaneseq
      %v2246 = vshrl.u32 %v2245, 7
      %v2247 = vsub.s32 %v2244, %v2246
      %v2248 = vrot.slane %v2241, %v2247
      %v2249 = vcombine.low %v2240, %v2248
      %v2250 = vcombine.high %v2240, %v2248
      %v2251 = vcombine.low %v1297, %v1304
      %v2253 = vunpack.c.l.s4 1983009808
      %v2254 = vunpack.c.0.s8 %v2253
      %v2255 = vlaneseq
      %v2256 = vshrl.u32 %v2255, 7
      %v2257 = vsub.s32 %v2254, %v2256
      %v2258 = vrot.slane %v2251, %v2257
      %v2259 = vcombine.low %v1321, %v1322
      %v2261 = vunpack.c.l.s4 1983009808
      %v2262 = vunpack.c.0.s8 %v2261
      %v2263 = vlaneseq
      %v2264 = vshrl.u32 %v2263, 7
      %v2265 = vsub.s32 %v2262, %v2264
      %v2266 = vrot.slane %v2259, %v2265
      %v2267 = vcombine.low %v1313, %v1320
      %v2269 = vunpack.c.l.s4 1983009808
      %v2270 = vunpack.c.0.s8 %v2269
      %v2271 = vlaneseq
      %v2272 = vshrl.u32 %v2271, 7
      %v2273 = vsub.s32 %v2270, %v2272
      %v2274 = vrot.slane %v2267, %v2273
      %v2275 = vcombine.low %v1323, %v1324
      %v2277 = vunpack.c.l.s4 1983009808
      %v2278 = vunpack.c.0.s8 %v2277
      %v2279 = vlaneseq
      %v2280 = vshrl.u32 %v2279, 7
      %v2281 = vsub.s32 %v2278, %v2280
      %v2282 = vrot.slane %v2275, %v2281
      %v2283 = vcombine.low %v2258, %v2266
      %v2285 = vunpack.c.l.s4 1934713408
      %v2286 = vunpack.c.0.s8 %v2285
      %v2287 = vlaneseq
      %v2288 = vshrl.u32 %v2287, 7
      %v2289 = vsub.s32 %v2286, %v2288
      %v2290 = vrot.slane %v2283, %v2289
      %v2291 = vcombine.low %v2274, %v2282
      %v2293 = vunpack.c.l.s4 1934713408
      %v2294 = vunpack.c.0.s8 %v2293
      %v2295 = vlaneseq
      %v2296 = vshrl.u32 %v2295, 7
      %v2297 = vsub.s32 %v2294, %v2296
      %v2298 = vrot.slane %v2291, %v2297
      %v2299 = vcombine.low %v2290, %v2298
      %v2300 = vcombine.high %v2290, %v2298
      %v2301 = vcombine.low %v1363, %v1370
      %v2303 = vunpack.c.l.s4 1983009808
      %v2304 = vunpack.c.0.s8 %v2303
      %v2305 = vlaneseq
      %v2306 = vshrl.u32 %v2305, 7
      %v2307 = vsub.s32 %v2304, %v2306
      %v2308 = vrot.slane %v2301, %v2307
      %v2309 = vcombine.low %v1387, %v1388
      %v2311 = vunpack.c.l.s4 1983009808
      %v2312 = vunpack.c.0.s8 %v2311
      %v2313 = vlaneseq
      %v2314 = vshrl.u32 %v2313, 7
      %v2315 = vsub.s32 %v2312, %v2314
      %v2316 = vrot.slane %v2309, %v2315
      %v2317 = vcombine.low %v1379, %v1386
      %v2319 = vunpack.c.l.s4 1983009808
      %v2320 = vunpack.c.0.s8 %v2319
      %v2321 = vlaneseq
      %v2322 = vshrl.u32 %v2321, 7
      %v2323 = vsub.s32 %v2320, %v2322
      %v2324 = vrot.slane %v2317, %v2323
      %v2325 = vcombine.low %v1389, %v1390
      %v2327 = vunpack.c.l.s4 1983009808
      %v2328 = vunpack.c.0.s8 %v2327
      %v2329 = vlaneseq
      %v2330 = vshrl.u32 %v2329, 7
      %v2331 = vsub.s32 %v2328, %v2330
      %v2332 = vrot.slane %v2325, %v2331
      %v2333 = vcombine.low %v2308, %v2316
      %v2335 = vunpack.c.l.s4 1934713408
      %v2336 = vunpack.c.0.s8 %v2335
      %v2337 = vlaneseq
      %v2338 = vshrl.u32 %v2337, 7
      %v2339 = vsub.s32 %v2336, %v2338
      %v2340 = vrot.slane %v2333, %v2339
      %v2341 = vcombine.low %v2324, %v2332
      %v2343 = vunpack.c.l.s4 1934713408
      %v2344 = vunpack.c.0.s8 %v2343
      %v2345 = vlaneseq
      %v2346 = vshrl.u32 %v2345, 7
      %v2347 = vsub.s32 %v2344, %v2346
      %v2348 = vrot.slane %v2341, %v2347
      %v2349 = vcombine.low %v2340, %v2348
      %v2350 = vcombine.high %v2340, %v2348
      %v2351 = vcombine.low %v1429, %v1436
      %v2353 = vunpack.c.l.s4 1983009808
      %v2354 = vunpack.c.0.s8 %v2353
      %v2355 = vlaneseq
      %v2356 = vshrl.u32 %v2355, 7
      %v2357 = vsub.s32 %v2354, %v2356
      %v2358 = vrot.slane %v2351, %v2357
      %v2359 = vcombine.low %v1453, %v1454
      %v2361 = vunpack.c.l.s4 1983009808
      %v2362 = vunpack.c.0.s8 %v2361
      %v2363 = vlaneseq
      %v2364 = vshrl.u32 %v2363, 7
      %v2365 = vsub.s32 %v2362, %v2364
      %v2366 = vrot.slane %v2359, %v2365
      %v2367 = vcombine.low %v1445, %v1452
      %v2369 = vunpack.c.l.s4 1983009808
      %v2370 = vunpack.c.0.s8 %v2369
      %v2371 = vlaneseq
      %v2372 = vshrl.u32 %v2371, 7
      %v2373 = vsub.s32 %v2370, %v2372
      %v2374 = vrot.slane %v2367, %v2373
      %v2375 = vcombine.low %v1455, %v1456
      %v2377 = vunpack.c.l.s4 1983009808
      %v2378 = vunpack.c.0.s8 %v2377
      %v2379 = vlaneseq
      %v2380 = vshrl.u32 %v2379, 7
      %v2381 = vsub.s32 %v2378, %v2380
      %v2382 = vrot.slane %v2375, %v2381
      %v2383 = vcombine.low %v2358, %v2366
      %v2385 = vunpack.c.l.s4 1934713408
      %v2386 = vunpack.c.0.s8 %v2385
      %v2387 = vlaneseq
      %v2388 = vshrl.u32 %v2387, 7
      %v2389 = vsub.s32 %v2386, %v2388
      %v2390 = vrot.slane %v2383, %v2389
      %v2391 = vcombine.low %v2374, %v2382
      %v2393 = vunpack.c.l.s4 1934713408
      %v2394 = vunpack.c.0.s8 %v2393
      %v2395 = vlaneseq
      %v2396 = vshrl.u32 %v2395, 7
      %v2397 = vsub.s32 %v2394, %v2396
      %v2398 = vrot.slane %v2391, %v2397
      %v2399 = vcombine.low %v2390, %v2398
      %v2400 = vcombine.high %v2390, %v2398
      %v2401 = vcombine.low %v1495, %v1502
      %v2403 = vunpack.c.l.s4 1983009808
      %v2404 = vunpack.c.0.s8 %v2403
      %v2405 = vlaneseq
      %v2406 = vshrl.u32 %v2405, 7
      %v2407 = vsub.s32 %v2404, %v2406
      %v2408 = vrot.slane %v2401, %v2407
      %v2409 = vcombine.low %v1519, %v1520
      %v2411 = vunpack.c.l.s4 1983009808
      %v2412 = vunpack.c.0.s8 %v2411
      %v2413 = vlaneseq
      %v2414 = vshrl.u32 %v2413, 7
      %v2415 = vsub.s32 %v2412, %v2414
      %v2416 = vrot.slane %v2409, %v2415
      %v2417 = vcombine.low %v1511, %v1518
      %v2419 = vunpack.c.l.s4 1983009808
      %v2420 = vunpack.c.0.s8 %v2419
      %v2421 = vlaneseq
      %v2422 = vshrl.u32 %v2421, 7
      %v2423 = vsub.s32 %v2420, %v2422
      %v2424 = vrot.slane %v2417, %v2423
      %v2425 = vcombine.low %v1521, %v1522
      %v2427 = vunpack.c.l.s4 1983009808
      %v2428 = vunpack.c.0.s8 %v2427
      %v2429 = vlaneseq
      %v2430 = vshrl.u32 %v2429, 7
      %v2431 = vsub.s32 %v2428, %v2430
      %v2432 = vrot.slane %v2425, %v2431
      %v2433 = vcombine.low %v2408, %v2416
      %v2435 = vunpack.c.l.s4 1934713408
      %v2436 = vunpack.c.0.s8 %v2435
      %v2437 = vlaneseq
      %v2438 = vshrl.u32 %v2437, 7
      %v2439 = vsub.s32 %v2436, %v2438
      %v2440 = vrot.slane %v2433, %v2439
      %v2441 = vcombine.low %v2424, %v2432
      %v2443 = vunpack.c.l.s4 1934713408
      %v2444 = vunpack.c.0.s8 %v2443
      %v2445 = vlaneseq
      %v2446 = vshrl.u32 %v2445, 7
      %v2447 = vsub.s32 %v2444, %v2446
      %v2448 = vrot.slane %v2441, %v2447
      %v2449 = vcombine.low %v2440, %v2448
      %v2450 = vcombine.high %v2440, %v2448
      %v2451 = vcombine.low %v1561, %v1568
      %v2453 = vunpack.c.l.s4 1983009808
      %v2454 = vunpack.c.0.s8 %v2453
      %v2455 = vlaneseq
      %v2456 = vshrl.u32 %v2455, 7
      %v2457 = vsub.s32 %v2454, %v2456
      %v2458 = vrot.slane %v2451, %v2457
      %v2459 = vcombine.low %v1585, %v1586
      %v2461 = vunpack.c.l.s4 1983009808
      %v2462 = vunpack.c.0.s8 %v2461
      %v2463 = vlaneseq
      %v2464 = vshrl.u32 %v2463, 7
      %v2465 = vsub.s32 %v2462, %v2464
      %v2466 = vrot.slane %v2459, %v2465
      %v2467 = vcombine.low %v1577, %v1584
      %v2469 = vunpack.c.l.s4 1983009808
      %v2470 = vunpack.c.0.s8 %v2469
      %v2471 = vlaneseq
      %v2472 = vshrl.u32 %v2471, 7
      %v2473 = vsub.s32 %v2470, %v2472
      %v2474 = vrot.slane %v2467, %v2473
      %v2475 = vcombine.low %v1587, %v1588
      %v2477 = vunpack.c.l.s4 1983009808
      %v2478 = vunpack.c.0.s8 %v2477
      %v2479 = vlaneseq
      %v2480 = vshrl.u32 %v2479, 7
      %v2481 = vsub.s32 %v2478, %v2480
      %v2482 = vrot.slane %v2475, %v2481
      %v2483 = vcombine.low %v2458, %v2466
      %v2485 = vunpack.c.l.s4 1934713408
      %v2486 = vunpack.c.0.s8 %v2485
      %v2487 = vlaneseq
      %v2488 = vshrl.u32 %v2487, 7
      %v2489 = vsub.s32 %v2486, %v2488
      %v2490 = vrot.slane %v2483, %v2489
      %v2491 = vcombine.low %v2474, %v2482
      %v2493 = vunpack.c.l.s4 1934713408
      %v2494 = vunpack.c.0.s8 %v2493
      %v2495 = vlaneseq
      %v2496 = vshrl.u32 %v2495, 7
      %v2497 = vsub.s32 %v2494, %v2496
      %v2498 = vrot.slane %v2491, %v2497
      %v2499 = vcombine.low %v2490, %v2498
      %v2500 = vcombine.high %v2490, %v2498
      %v2501 = vcombine.low %v1627, %v1634
      %v2503 = vunpack.c.l.s4 1983009808
      %v2504 = vunpack.c.0.s8 %v2503
      %v2505 = vlaneseq
      %v2506 = vshrl.u32 %v2505, 7
      %v2507 = vsub.s32 %v2504, %v2506
      %v2508 = vrot.slane %v2501, %v2507
      %v2509 = vcombine.low %v1651, %v1652
      %v2511 = vunpack.c.l.s4 1983009808
      %v2512 = vunpack.c.0.s8 %v2511
      %v2513 = vlaneseq
      %v2514 = vshrl.u32 %v2513, 7
      %v2515 = vsub.s32 %v2512, %v2514
      %v2516 = vrot.slane %v2509, %v2515
      %v2517 = vcombine.low %v1643, %v1650
      %v2519 = vunpack.c.l.s4 1983009808
      %v2520 = vunpack.c.0.s8 %v2519
      %v2521 = vlaneseq
      %v2522 = vshrl.u32 %v2521, 7
      %v2523 = vsub.s32 %v2520, %v2522
      %v2524 = vrot.slane %v2517, %v2523
      %v2525 = vcombine.low %v1653, %v1654
      %v2527 = vunpack.c.l.s4 1983009808
      %v2528 = vunpack.c.0.s8 %v2527
      %v2529 = vlaneseq
      %v2530 = vshrl.u32 %v2529, 7
      %v2531 = vsub.s32 %v2528, %v2530
      %v2532 = vrot.slane %v2525, %v2531
      %v2533 = vcombine.low %v2508, %v2516
      %v2535 = vunpack.c.l.s4 1934713408
      %v2536 = vunpack.c.0.s8 %v2535
      %v2537 = vlaneseq
      %v2538 = vshrl.u32 %v2537, 7
      %v2539 = vsub.s32 %v2536, %v2538
      %v2540 = vrot.slane %v2533, %v2539
      %v2541 = vcombine.low %v2524, %v2532
      %v2543 = vunpack.c.l.s4 1934713408
      %v2544 = vunpack.c.0.s8 %v2543
      %v2545 = vlaneseq
      %v2546 = vshrl.u32 %v2545, 7
      %v2547 = vsub.s32 %v2544, %v2546
      %v2548 = vrot.slane %v2541, %v2547
      %v2549 = vcombine.low %v2540, %v2548
      %v2550 = vcombine.high %v2540, %v2548
      %v2551 = vcombine.low %v1693, %v1700
      %v2553 = vunpack.c.l.s4 1983009808
      %v2554 = vunpack.c.0.s8 %v2553
      %v2555 = vlaneseq
      %v2556 = vshrl.u32 %v2555, 7
      %v2557 = vsub.s32 %v2554, %v2556
      %v2558 = vrot.slane %v2551, %v2557
      %v2559 = vcombine.low %v1717, %v1718
      %v2561 = vunpack.c.l.s4 1983009808
      %v2562 = vunpack.c.0.s8 %v2561
      %v2563 = vlaneseq
      %v2564 = vshrl.u32 %v2563, 7
      %v2565 = vsub.s32 %v2562, %v2564
      %v2566 = vrot.slane %v2559, %v2565
      %v2567 = vcombine.low %v1709, %v1716
      %v2569 = vunpack.c.l.s4 1983009808
      %v2570 = vunpack.c.0.s8 %v2569
      %v2571 = vlaneseq
      %v2572 = vshrl.u32 %v2571, 7
      %v2573 = vsub.s32 %v2570, %v2572
      %v2574 = vrot.slane %v2567, %v2573
      %v2575 = vcombine.low %v1719, %v1720
      %v2577 = vunpack.c.l.s4 1983009808
      %v2578 = vunpack.c.0.s8 %v2577
      %v2579 = vlaneseq
      %v2580 = vshrl.u32 %v2579, 7
      %v2581 = vsub.s32 %v2578, %v2580
      %v2582 = vrot.slane %v2575, %v2581
      %v2583 = vcombine.low %v2558, %v2566
      %v2585 = vunpack.c.l.s4 1934713408
      %v2586 = vunpack.c.0.s8 %v2585
      %v2587 = vlaneseq
      %v2588 = vshrl.u32 %v2587, 7
      %v2589 = vsub.s32 %v2586, %v2588
      %v2590 = vrot.slane %v2583, %v2589
      %v2591 = vcombine.low %v2574, %v2582
      %v2593 = vunpack.c.l.s4 1934713408
      %v2594 = vunpack.c.0.s8 %v2593
      %v2595 = vlaneseq
      %v2596 = vshrl.u32 %v2595, 7
      %v2597 = vsub.s32 %v2594, %v2596
      %v2598 = vrot.slane %v2591, %v2597
      %v2599 = vcombine.low %v2590, %v2598
      %v2600 = vcombine.high %v2590, %v2598
      %v2601 = vcombine.low %v1759, %v1766
      %v2603 = vunpack.c.l.s4 1983009808
      %v2604 = vunpack.c.0.s8 %v2603
      %v2605 = vlaneseq
      %v2606 = vshrl.u32 %v2605, 7
      %v2607 = vsub.s32 %v2604, %v2606
      %v2608 = vrot.slane %v2601, %v2607
      %v2609 = vcombine.low %v1783, %v1784
      %v2611 = vunpack.c.l.s4 1983009808
      %v2612 = vunpack.c.0.s8 %v2611
      %v2613 = vlaneseq
      %v2614 = vshrl.u32 %v2613, 7
      %v2615 = vsub.s32 %v2612, %v2614
      %v2616 = vrot.slane %v2609, %v2615
      %v2617 = vcombine.low %v1775, %v1782
      %v2619 = vunpack.c.l.s4 1983009808
      %v2620 = vunpack.c.0.s8 %v2619
      %v2621 = vlaneseq
      %v2622 = vshrl.u32 %v2621, 7
      %v2623 = vsub.s32 %v2620, %v2622
      %v2624 = vrot.slane %v2617, %v2623
      %v2625 = vcombine.low %v1785, %v1786
      %v2627 = vunpack.c.l.s4 1983009808
      %v2628 = vunpack.c.0.s8 %v2627
      %v2629 = vlaneseq
      %v2630 = vshrl.u32 %v2629, 7
      %v2631 = vsub.s32 %v2628, %v2630
      %v2632 = vrot.slane %v2625, %v2631
      %v2633 = vcombine.low %v2608, %v2616
      %v2635 = vunpack.c.l.s4 1934713408
      %v2636 = vunpack.c.0.s8 %v2635
      %v2637 = vlaneseq
      %v2638 = vshrl.u32 %v2637, 7
      %v2639 = vsub.s32 %v2636, %v2638
      %v2640 = vrot.slane %v2633, %v2639
      %v2641 = vcombine.low %v2624, %v2632
      %v2643 = vunpack.c.l.s4 1934713408
      %v2644 = vunpack.c.0.s8 %v2643
      %v2645 = vlaneseq
      %v2646 = vshrl.u32 %v2645, 7
      %v2647 = vsub.s32 %v2644, %v2646
      %v2648 = vrot.slane %v2641, %v2647
      %v2649 = vcombine.low %v2640, %v2648
      %v2650 = vcombine.high %v2640, %v2648
      %v2651 = vcombine.low %v1825, %v1832
      %v2653 = vunpack.c.l.s4 1983009808
      %v2654 = vunpack.c.0.s8 %v2653
      %v2655 = vlaneseq
      %v2656 = vshrl.u32 %v2655, 7
      %v2657 = vsub.s32 %v2654, %v2656
      %v2658 = vrot.slane %v2651, %v2657
      %v2659 = vcombine.low %v1849, %v1850
      %v2661 = vunpack.c.l.s4 1983009808
      %v2662 = vunpack.c.0.s8 %v2661
      %v2663 = vlaneseq
      %v2664 = vshrl.u32 %v2663, 7
      %v2665 = vsub.s32 %v2662, %v2664
      %v2666 = vrot.slane %v2659, %v2665
      %v2667 = vcombine.low %v1841, %v1848
      %v2669 = vunpack.c.l.s4 1983009808
      %v2670 = vunpack.c.0.s8 %v2669
      %v2671 = vlaneseq
      %v2672 = vshrl.u32 %v2671, 7
      %v2673 = vsub.s32 %v2670, %v2672
      %v2674 = vrot.slane %v2667, %v2673
      %v2675 = vcombine.low %v1851, %v1852
      %v2677 = vunpack.c.l.s4 1983009808
      %v2678 = vunpack.c.0.s8 %v2677
      %v2679 = vlaneseq
      %v2680 = vshrl.u32 %v2679, 7
      %v2681 = vsub.s32 %v2678, %v2680
      %v2682 = vrot.slane %v2675, %v2681
      %v2683 = vcombine.low %v2658, %v2666
      %v2685 = vunpack.c.l.s4 1934713408
      %v2686 = vunpack.c.0.s8 %v2685
      %v2687 = vlaneseq
      %v2688 = vshrl.u32 %v2687, 7
      %v2689 = vsub.s32 %v2686, %v2688
      %v2690 = vrot.slane %v2683, %v2689
      %v2691 = vcombine.low %v2674, %v2682
      %v2693 = vunpack.c.l.s4 1934713408
      %v2694 = vunpack.c.0.s8 %v2693
      %v2695 = vlaneseq
      %v2696 = vshrl.u32 %v2695, 7
      %v2697 = vsub.s32 %v2694, %v2696
      %v2698 = vrot.slane %v2691, %v2697
      %v2699 = vcombine.low %v2690, %v2698
      %v2700 = vcombine.high %v2690, %v2698
      %v2701 = vcombine.low %v1891, %v1898
      %v2703 = vunpack.c.l.s4 1983009808
      %v2704 = vunpack.c.0.s8 %v2703
      %v2705 = vlaneseq
      %v2706 = vshrl.u32 %v2705, 7
      %v2707 = vsub.s32 %v2704, %v2706
      %v2708 = vrot.slane %v2701, %v2707
      %v2709 = vcombine.low %v1915, %v1916
      %v2711 = vunpack.c.l.s4 1983009808
      %v2712 = vunpack.c.0.s8 %v2711
      %v2713 = vlaneseq
      %v2714 = vshrl.u32 %v2713, 7
      %v2715 = vsub.s32 %v2712, %v2714
      %v2716 = vrot.slane %v2709, %v2715
      %v2717 = vcombine.low %v1907, %v1914
      %v2719 = vunpack.c.l.s4 1983009808
      %v2720 = vunpack.c.0.s8 %v2719
      %v2721 = vlaneseq
      %v2722 = vshrl.u32 %v2721, 7
      %v2723 = vsub.s32 %v2720, %v2722
      %v2724 = vrot.slane %v2717, %v2723
      %v2725 = vcombine.low %v1917, %v1918
      %v2727 = vunpack.c.l.s4 1983009808
      %v2728 = vunpack.c.0.s8 %v2727
      %v2729 = vlaneseq
      %v2730 = vshrl.u32 %v2729, 7
      %v2731 = vsub.s32 %v2728, %v2730
      %v2732 = vrot.slane %v2725, %v2731
      %v2733 = vcombine.low %v2708, %v2716
      %v2735 = vunpack.c.l.s4 1934713408
      %v2736 = vunpack.c.0.s8 %v2735
      %v2737 = vlaneseq
      %v2738 = vshrl.u32 %v2737, 7
      %v2739 = vsub.s32 %v2736, %v2738
      %v2740 = vrot.slane %v2733, %v2739
      %v2741 = vcombine.low %v2724, %v2732
      %v2743 = vunpack.c.l.s4 1934713408
      %v2744 = vunpack.c.0.s8 %v2743
      %v2745 = vlaneseq
      %v2746 = vshrl.u32 %v2745, 7
      %v2747 = vsub.s32 %v2744, %v2746
      %v2748 = vrot.slane %v2741, %v2747
      %v2749 = vcombine.low %v2740, %v2748
      %v2750 = vcombine.high %v2740, %v2748
      %v2751 = vcombine.low %v1957, %v1964
      %v2753 = vunpack.c.l.s4 1983009808
      %v2754 = vunpack.c.0.s8 %v2753
      %v2755 = vlaneseq
      %v2756 = vshrl.u32 %v2755, 7
      %v2757 = vsub.s32 %v2754, %v2756
      %v2758 = vrot.slane %v2751, %v2757
      %v2759 = vcombine.low %v1981, %v1982
      %v2761 = vunpack.c.l.s4 1983009808
      %v2762 = vunpack.c.0.s8 %v2761
      %v2763 = vlaneseq
      %v2764 = vshrl.u32 %v2763, 7
      %v2765 = vsub.s32 %v2762, %v2764
      %v2766 = vrot.slane %v2759, %v2765
      %v2767 = vcombine.low %v1973, %v1980
      %v2769 = vunpack.c.l.s4 1983009808
      %v2770 = vunpack.c.0.s8 %v2769
      %v2771 = vlaneseq
      %v2772 = vshrl.u32 %v2771, 7
      %v2773 = vsub.s32 %v2770, %v2772
      %v2774 = vrot.slane %v2767, %v2773
      %v2775 = vcombine.low %v1983, %v1984
      %v2777 = vunpack.c.l.s4 1983009808
      %v2778 = vunpack.c.0.s8 %v2777
      %v2779 = vlaneseq
      %v2780 = vshrl.u32 %v2779, 7
      %v2781 = vsub.s32 %v2778, %v2780
      %v2782 = vrot.slane %v2775, %v2781
      %v2783 = vcombine.low %v2758, %v2766
      %v2785 = vunpack.c.l.s4 1934713408
      %v2786 = vunpack.c.0.s8 %v2785
      %v2787 = vlaneseq
      %v2788 = vshrl.u32 %v2787, 7
      %v2789 = vsub.s32 %v2786, %v2788
      %v2790 = vrot.slane %v2783, %v2789
      %v2791 = vcombine.low %v2774, %v2782
      %v2793 = vunpack.c.l.s4 1934713408
      %v2794 = vunpack.c.0.s8 %v2793
      %v2795 = vlaneseq
      %v2796 = vshrl.u32 %v2795, 7
      %v2797 = vsub.s32 %v2794, %v2796
      %v2798 = vrot.slane %v2791, %v2797
      %v2799 = vcombine.low %v2790, %v2798
      %v2800 = vcombine.high %v2790, %v2798
      %v2801 = vcombine.low %v2023, %v2030
      %v2803 = vunpack.c.l.s4 1983009808
      %v2804 = vunpack.c.0.s8 %v2803
      %v2805 = vlaneseq
      %v2806 = vshrl.u32 %v2805, 7
      %v2807 = vsub.s32 %v2804, %v2806
      %v2808 = vrot.slane %v2801, %v2807
      %v2809 = vcombine.low %v2047, %v2048
      %v2811 = vunpack.c.l.s4 1983009808
      %v2812 = vunpack.c.0.s8 %v2811
      %v2813 = vlaneseq
      %v2814 = vshrl.u32 %v2813, 7
      %v2815 = vsub.s32 %v2812, %v2814
      %v2816 = vrot.slane %v2809, %v2815
      %v2817 = vcombine.low %v2039, %v2046
      %v2819 = vunpack.c.l.s4 1983009808
      %v2820 = vunpack.c.0.s8 %v2819
      %v2821 = vlaneseq
      %v2822 = vshrl.u32 %v2821, 7
      %v2823 = vsub.s32 %v2820, %v2822
      %v2824 = vrot.slane %v2817, %v2823
      %v2825 = vcombine.low %v2049, %v2050
      %v2827 = vunpack.c.l.s4 1983009808
      %v2828 = vunpack.c.0.s8 %v2827
      %v2829 = vlaneseq
      %v2830 = vshrl.u32 %v2829, 7
      %v2831 = vsub.s32 %v2828, %v2830
      %v2832 = vrot.slane %v2825, %v2831
      %v2833 = vcombine.low %v2808, %v2816
      %v2835 = vunpack.c.l.s4 1934713408
      %v2836 = vunpack.c.0.s8 %v2835
      %v2837 = vlaneseq
      %v2838 = vshrl.u32 %v2837, 7
      %v2839 = vsub.s32 %v2836, %v2838
      %v2840 = vrot.slane %v2833, %v2839
      %v2841 = vcombine.low %v2824, %v2832
      %v2843 = vunpack.c.l.s4 1934713408
      %v2844 = vunpack.c.0.s8 %v2843
      %v2845 = vlaneseq
      %v2846 = vshrl.u32 %v2845, 7
      %v2847 = vsub.s32 %v2844, %v2846
      %v2848 = vrot.slane %v2841, %v2847
      %v2849 = vcombine.low %v2840, %v2848
      %v2850 = vcombine.high %v2840, %v2848
      %v2853 = vpack.i.b16 %v2149, %v2099
      %v2854 = vshrl.u32 %v2099, 16
      %v2855 = vshrl.u32 %v2149, 16
      %v2856 = vpack.i.b16 %v2855, %v2854
      %v2859 = vpack.i.b16 %v2150, %v2100
      %v2860 = vshrl.u32 %v2100, 16
      %v2861 = vshrl.u32 %v2150, 16
      %v2862 = vpack.i.b16 %v2861, %v2860
      %v2865 = vpack.i.b16 %v2249, %v2199
      %v2866 = vshrl.u32 %v2199, 16
      %v2867 = vshrl.u32 %v2249, 16
      %v2868 = vpack.i.b16 %v2867, %v2866
      %v2871 = vpack.i.b16 %v2250, %v2200
      %v2872 = vshrl.u32 %v2200, 16
      %v2873 = vshrl.u32 %v2250, 16
      %v2874 = vpack.i.b16 %v2873, %v2872
      %v2877 = vpack.i.b16 %v2349, %v2299
      %v2878 = vshrl.u32 %v2299, 16
      %v2879 = vshrl.u32 %v2349, 16
      %v2880 = vpack.i.b16 %v2879, %v2878
      %v2883 = vpack.i.b16 %v2350, %v2300
      %v2884 = vshrl.u32 %v2300, 16
      %v2885 = vshrl.u32 %v2350, 16
      %v2886 = vpack.i.b16 %v2885, %v2884
      %v2889 = vpack.i.b16 %v2449, %v2399
      %v2890 = vshrl.u32 %v2399, 16
      %v2891 = vshrl.u32 %v2449, 16
      %v2892 = vpack.i.b16 %v2891, %v2890
      %v2895 = vpack.i.b16 %v2450, %v2400
      %v2896 = vshrl.u32 %v2400, 16
      %v2897 = vshrl.u32 %v2450, 16
      %v2898 = vpack.i.b16 %v2897, %v2896
      %v2901 = vpack.i.b16 %v2549, %v2499
      %v2902 = vshrl.u32 %v2499, 16
      %v2903 = vshrl.u32 %v2549, 16
      %v2904 = vpack.i.b16 %v2903, %v2902
      %v2907 = vpack.i.b16 %v2550, %v2500
      %v2908 = vshrl.u32 %v2500, 16
      %v2909 = vshrl.u32 %v2550, 16
      %v2910 = vpack.i.b16 %v2909, %v2908
      %v2913 = vpack.i.b16 %v2649, %v2599
      %v2914 = vshrl.u32 %v2599, 16
      %v2915 = vshrl.u32 %v2649, 16
      %v2916 = vpack.i.b16 %v2915, %v2914
      %v2919 = vpack.i.b16 %v2650, %v2600
      %v2920 = vshrl.u32 %v2600, 16
      %v2921 = vshrl.u32 %v2650, 16
      %v2922 = vpack.i.b16 %v2921, %v2920
      %v2925 = vpack.i.b16 %v2749, %v2699
      %v2926 = vshrl.u32 %v2699, 16
      %v2927 = vshrl.u32 %v2749, 16
      %v2928 = vpack.i.b16 %v2927, %v2926
      %v2931 = vpack.i.b16 %v2750, %v2700
      %v2932 = vshrl.u32 %v2700, 16
      %v2933 = vshrl.u32 %v2750, 16
      %v2934 = vpack.i.b16 %v2933, %v2932
      %v2937 = vpack.i.b16 %v2849, %v2799
      %v2938 = vshrl.u32 %v2799, 16
      %v2939 = vshrl.u32 %v2849, 16
      %v2940 = vpack.i.b16 %v2939, %v2938
      %v2943 = vpack.i.b16 %v2850, %v2800
      %v2944 = vshrl.u32 %v2800, 16
      %v2945 = vshrl.u32 %v2850, 16
      %v2946 = vpack.i.b16 %v2945, %v2944
      %2955 = vrot.lane.b32.xlu0 %v676, 120
      %v2956 = vpop.permute.xlu0 %2955
      %2957 = vrot.lane.b32.xlu0 %v677, 120
      %v2958 = vpop.permute.xlu0 %2957
      %2959 = vrot.lane.b32.xlu0 %v678, 120
      %v2960 = vpop.permute.xlu0 %2959
      %2961 = vrot.lane.b32.xlu0 %v679, 120
      %v2962 = vpop.permute.xlu0 %2961
      %2963 = vrot.lane.b32.xlu0 %v680, 120
      %v2964 = vpop.permute.xlu0 %2963
      %2965 = vrot.lane.b32.xlu0 %v681, 120
      %v2966 = vpop.permute.xlu0 %2965
      %2967 = vrot.lane.b32.xlu0 %v682, 120
      %v2968 = vpop.permute.xlu0 %2967
      %2969 = vrot.lane.b32.xlu0 %v683, 120
      %v2970 = vpop.permute.xlu0 %2969
      %2971 = vrot.lane.b32.xlu0 %v676, 112
      %v2972 = vpop.permute.xlu0 %2971
      %2973 = vrot.lane.b32.xlu0 %v677, 112
      %v2974 = vpop.permute.xlu0 %2973
      %2975 = vrot.lane.b32.xlu0 %v678, 112
      %v2976 = vpop.permute.xlu0 %2975
      %2977 = vrot.lane.b32.xlu0 %v679, 112
      %v2978 = vpop.permute.xlu0 %2977
      %2979 = vrot.lane.b32.xlu0 %v680, 112
      %v2980 = vpop.permute.xlu0 %2979
      %2981 = vrot.lane.b32.xlu0 %v681, 112
      %v2982 = vpop.permute.xlu0 %2981
      %2983 = vrot.lane.b32.xlu0 %v682, 112
      %v2984 = vpop.permute.xlu0 %2983
      %2985 = vrot.lane.b32.xlu0 %v683, 112
      %v2986 = vpop.permute.xlu0 %2985
      %2987 = vrot.lane.b32.xlu0 %v676, 104
      %v2988 = vpop.permute.xlu0 %2987
      %2989 = vrot.lane.b32.xlu0 %v677, 104
      %v2990 = vpop.permute.xlu0 %2989
      %2991 = vrot.lane.b32.xlu0 %v678, 104
      %v2992 = vpop.permute.xlu0 %2991
      %2993 = vrot.lane.b32.xlu0 %v679, 104
      %v2994 = vpop.permute.xlu0 %2993
      %2995 = vrot.lane.b32.xlu0 %v680, 104
      %v2996 = vpop.permute.xlu0 %2995
      %2997 = vrot.lane.b32.xlu0 %v681, 104
      %v2998 = vpop.permute.xlu0 %2997
      %2999 = vrot.lane.b32.xlu0 %v682, 104
      %v3000 = vpop.permute.xlu0 %2999
      %3001 = vrot.lane.b32.xlu0 %v683, 104
      %v3002 = vpop.permute.xlu0 %3001
      %v3005 = vpack.i.b16 %v2956, %v676
      %v3007 = vshrl.u32 %v676, 16
      %v3008 = vshrl.u32 %v2956, 16
      %v3009 = vpack.i.b16 %v3008, %v3007
      %v3013 = vpack.i.b16 %v2988, %v2972
      %v3015 = vshrl.u32 %v2972, 16
      %v3016 = vshrl.u32 %v2988, 16
      %v3017 = vpack.i.b16 %v3016, %v3015
      %v3021 = vpack.i.b16 %v2958, %v677
      %v3023 = vshrl.u32 %v677, 16
      %v3024 = vshrl.u32 %v2958, 16
      %v3025 = vpack.i.b16 %v3024, %v3023
      %v3029 = vpack.i.b16 %v2990, %v2974
      %v3031 = vshrl.u32 %v2974, 16
      %v3032 = vshrl.u32 %v2990, 16
      %v3033 = vpack.i.b16 %v3032, %v3031
      %v3037 = vpack.i.b16 %v2960, %v678
      %v3039 = vshrl.u32 %v678, 16
      %v3040 = vshrl.u32 %v2960, 16
      %v3041 = vpack.i.b16 %v3040, %v3039
      %v3045 = vpack.i.b16 %v2992, %v2976
      %v3047 = vshrl.u32 %v2976, 16
      %v3048 = vshrl.u32 %v2992, 16
      %v3049 = vpack.i.b16 %v3048, %v3047
      %v3053 = vpack.i.b16 %v2962, %v679
      %v3055 = vshrl.u32 %v679, 16
      %v3056 = vshrl.u32 %v2962, 16
      %v3057 = vpack.i.b16 %v3056, %v3055
      %v3061 = vpack.i.b16 %v2994, %v2978
      %v3063 = vshrl.u32 %v2978, 16
      %v3064 = vshrl.u32 %v2994, 16
      %v3065 = vpack.i.b16 %v3064, %v3063
      %v3069 = vpack.i.b16 %v2964, %v680
      %v3071 = vshrl.u32 %v680, 16
      %v3072 = vshrl.u32 %v2964, 16
      %v3073 = vpack.i.b16 %v3072, %v3071
      %v3077 = vpack.i.b16 %v2996, %v2980
      %v3079 = vshrl.u32 %v2980, 16
      %v3080 = vshrl.u32 %v2996, 16
      %v3081 = vpack.i.b16 %v3080, %v3079
      %v3085 = vpack.i.b16 %v2966, %v681
      %v3087 = vshrl.u32 %v681, 16
      %v3088 = vshrl.u32 %v2966, 16
      %v3089 = vpack.i.b16 %v3088, %v3087
      %v3093 = vpack.i.b16 %v2998, %v2982
      %v3095 = vshrl.u32 %v2982, 16
      %v3096 = vshrl.u32 %v2998, 16
      %v3097 = vpack.i.b16 %v3096, %v3095
      %v3101 = vpack.i.b16 %v2968, %v682
      %v3103 = vshrl.u32 %v682, 16
      %v3104 = vshrl.u32 %v2968, 16
      %v3105 = vpack.i.b16 %v3104, %v3103
      %v3109 = vpack.i.b16 %v3000, %v2984
      %v3111 = vshrl.u32 %v2984, 16
      %v3112 = vshrl.u32 %v3000, 16
      %v3113 = vpack.i.b16 %v3112, %v3111
      %v3117 = vpack.i.b16 %v2970, %v683
      %v3119 = vshrl.u32 %v683, 16
      %v3120 = vshrl.u32 %v2970, 16
      %v3121 = vpack.i.b16 %v3120, %v3119
      %v3125 = vpack.i.b16 %v3002, %v2986
      %v3127 = vshrl.u32 %v2986, 16
      %v3128 = vshrl.u32 %v3002, 16
      %v3129 = vpack.i.b16 %v3128, %v3127
      %v3131 = vcombine.high %v3005, %v878
      %v3133 = vunpack.c.l.s4 1983009808
      %v3134 = vunpack.c.0.s8 %v3133
      %v3135 = vlaneseq
      %v3136 = vshrl.u32 %v3135, 7
      %v3137 = vsub.s32 %v3134, %v3136
      %v3138 = vrot.slane %v3005, %v3137
      %v3140 = vunpack.c.l.s4 1983009808
      %v3141 = vunpack.c.0.s8 %v3140
      %v3142 = vlaneseq
      %v3143 = vshrl.u32 %v3142, 7
      %v3144 = vsub.s32 %v3141, %v3143
      %v3145 = vrot.slane %v3131, %v3144
      %v3146 = vcombine.high %v3013, %v878
      %v3148 = vunpack.c.l.s4 1983009808
      %v3149 = vunpack.c.0.s8 %v3148
      %v3150 = vlaneseq
      %v3151 = vshrl.u32 %v3150, 7
      %v3152 = vsub.s32 %v3149, %v3151
      %v3153 = vrot.slane %v3013, %v3152
      %v3155 = vunpack.c.l.s4 1983009808
      %v3156 = vunpack.c.0.s8 %v3155
      %v3157 = vlaneseq
      %v3158 = vshrl.u32 %v3157, 7
      %v3159 = vsub.s32 %v3156, %v3158
      %v3160 = vrot.slane %v3146, %v3159
      %v3161 = vcombine.low %v3138, %v3153
      %v3162 = vcombine.high %v3138, %v3153
      %v3164 = vunpack.c.l.s4 1934713408
      %v3165 = vunpack.c.0.s8 %v3164
      %v3166 = vlaneseq
      %v3167 = vshrl.u32 %v3166, 7
      %v3168 = vsub.s32 %v3165, %v3167
      %v3169 = vrot.slane %v3161, %v3168
      %v3171 = vunpack.c.l.s4 1934713408
      %v3172 = vunpack.c.0.s8 %v3171
      %v3173 = vlaneseq
      %v3174 = vshrl.u32 %v3173, 7
      %v3175 = vsub.s32 %v3172, %v3174
      %v3176 = vrot.slane %v3162, %v3175
      %v3177 = vcombine.low %v3145, %v3160
      %v3178 = vcombine.high %v3145, %v3160
      %v3180 = vunpack.c.l.s4 1934713408
      %v3181 = vunpack.c.0.s8 %v3180
      %v3182 = vlaneseq
      %v3183 = vshrl.u32 %v3182, 7
      %v3184 = vsub.s32 %v3181, %v3183
      %v3185 = vrot.slane %v3177, %v3184
      %v3187 = vunpack.c.l.s4 1934713408
      %v3188 = vunpack.c.0.s8 %v3187
      %v3189 = vlaneseq
      %v3190 = vshrl.u32 %v3189, 7
      %v3191 = vsub.s32 %v3188, %v3190
      %v3192 = vrot.slane %v3178, %v3191
      %v3193 = vcombine.high %v3169, 0
      %v3194 = vcombine.high %v3176, 0
      %v3195 = vcombine.high %v3185, 0
      %v3196 = vcombine.high %v3192, 0
      %v3197 = vcombine.high %v3009, %v881
      %v3199 = vunpack.c.l.s4 1983009808
      %v3200 = vunpack.c.0.s8 %v3199
      %v3201 = vlaneseq
      %v3202 = vshrl.u32 %v3201, 7
      %v3203 = vsub.s32 %v3200, %v3202
      %v3204 = vrot.slane %v3009, %v3203
      %v3206 = vunpack.c.l.s4 1983009808
      %v3207 = vunpack.c.0.s8 %v3206
      %v3208 = vlaneseq
      %v3209 = vshrl.u32 %v3208, 7
      %v3210 = vsub.s32 %v3207, %v3209
      %v3211 = vrot.slane %v3197, %v3210
      %v3212 = vcombine.high %v3017, %v881
      %v3214 = vunpack.c.l.s4 1983009808
      %v3215 = vunpack.c.0.s8 %v3214
      %v3216 = vlaneseq
      %v3217 = vshrl.u32 %v3216, 7
      %v3218 = vsub.s32 %v3215, %v3217
      %v3219 = vrot.slane %v3017, %v3218
      %v3221 = vunpack.c.l.s4 1983009808
      %v3222 = vunpack.c.0.s8 %v3221
      %v3223 = vlaneseq
      %v3224 = vshrl.u32 %v3223, 7
      %v3225 = vsub.s32 %v3222, %v3224
      %v3226 = vrot.slane %v3212, %v3225
      %v3227 = vcombine.low %v3204, %v3219
      %v3228 = vcombine.high %v3204, %v3219
      %v3230 = vunpack.c.l.s4 1934713408
      %v3231 = vunpack.c.0.s8 %v3230
      %v3232 = vlaneseq
      %v3233 = vshrl.u32 %v3232, 7
      %v3234 = vsub.s32 %v3231, %v3233
      %v3235 = vrot.slane %v3227, %v3234
      %v3237 = vunpack.c.l.s4 1934713408
      %v3238 = vunpack.c.0.s8 %v3237
      %v3239 = vlaneseq
      %v3240 = vshrl.u32 %v3239, 7
      %v3241 = vsub.s32 %v3238, %v3240
      %v3242 = vrot.slane %v3228, %v3241
      %v3243 = vcombine.low %v3211, %v3226
      %v3244 = vcombine.high %v3211, %v3226
      %v3246 = vunpack.c.l.s4 1934713408
      %v3247 = vunpack.c.0.s8 %v3246
      %v3248 = vlaneseq
      %v3249 = vshrl.u32 %v3248, 7
      %v3250 = vsub.s32 %v3247, %v3249
      %v3251 = vrot.slane %v3243, %v3250
      %v3253 = vunpack.c.l.s4 1934713408
      %v3254 = vunpack.c.0.s8 %v3253
      %v3255 = vlaneseq
      %v3256 = vshrl.u32 %v3255, 7
      %v3257 = vsub.s32 %v3254, %v3256
      %v3258 = vrot.slane %v3244, %v3257
      %v3259 = vcombine.high %v3235, 0
      %v3260 = vcombine.high %v3242, 0
      %v3261 = vcombine.high %v3251, 0
      %v3262 = vcombine.high %v3258, 0
      %v3263 = vcombine.high %v3021, %v878
      %v3265 = vunpack.c.l.s4 1983009808
      %v3266 = vunpack.c.0.s8 %v3265
      %v3267 = vlaneseq
      %v3268 = vshrl.u32 %v3267, 7
      %v3269 = vsub.s32 %v3266, %v3268
      %v3270 = vrot.slane %v3021, %v3269
      %v3272 = vunpack.c.l.s4 1983009808
      %v3273 = vunpack.c.0.s8 %v3272
      %v3274 = vlaneseq
      %v3275 = vshrl.u32 %v3274, 7
      %v3276 = vsub.s32 %v3273, %v3275
      %v3277 = vrot.slane %v3263, %v3276
      %v3278 = vcombine.high %v3029, %v878
      %v3280 = vunpack.c.l.s4 1983009808
      %v3281 = vunpack.c.0.s8 %v3280
      %v3282 = vlaneseq
      %v3283 = vshrl.u32 %v3282, 7
      %v3284 = vsub.s32 %v3281, %v3283
      %v3285 = vrot.slane %v3029, %v3284
      %v3287 = vunpack.c.l.s4 1983009808
      %v3288 = vunpack.c.0.s8 %v3287
      %v3289 = vlaneseq
      %v3290 = vshrl.u32 %v3289, 7
      %v3291 = vsub.s32 %v3288, %v3290
      %v3292 = vrot.slane %v3278, %v3291
      %v3293 = vcombine.low %v3270, %v3285
      %v3294 = vcombine.high %v3270, %v3285
      %v3296 = vunpack.c.l.s4 1934713408
      %v3297 = vunpack.c.0.s8 %v3296
      %v3298 = vlaneseq
      %v3299 = vshrl.u32 %v3298, 7
      %v3300 = vsub.s32 %v3297, %v3299
      %v3301 = vrot.slane %v3293, %v3300
      %v3303 = vunpack.c.l.s4 1934713408
      %v3304 = vunpack.c.0.s8 %v3303
      %v3305 = vlaneseq
      %v3306 = vshrl.u32 %v3305, 7
      %v3307 = vsub.s32 %v3304, %v3306
      %v3308 = vrot.slane %v3294, %v3307
      %v3309 = vcombine.low %v3277, %v3292
      %v3310 = vcombine.high %v3277, %v3292
      %v3312 = vunpack.c.l.s4 1934713408
      %v3313 = vunpack.c.0.s8 %v3312
      %v3314 = vlaneseq
      %v3315 = vshrl.u32 %v3314, 7
      %v3316 = vsub.s32 %v3313, %v3315
      %v3317 = vrot.slane %v3309, %v3316
      %v3319 = vunpack.c.l.s4 1934713408
      %v3320 = vunpack.c.0.s8 %v3319
      %v3321 = vlaneseq
      %v3322 = vshrl.u32 %v3321, 7
      %v3323 = vsub.s32 %v3320, %v3322
      %v3324 = vrot.slane %v3310, %v3323
      %v3325 = vcombine.high %v3301, 0
      %v3326 = vcombine.high %v3308, 0
      %v3327 = vcombine.high %v3317, 0
      %v3328 = vcombine.high %v3324, 0
      %v3329 = vcombine.high %v3025, %v881
      %v3331 = vunpack.c.l.s4 1983009808
      %v3332 = vunpack.c.0.s8 %v3331
      %v3333 = vlaneseq
      %v3334 = vshrl.u32 %v3333, 7
      %v3335 = vsub.s32 %v3332, %v3334
      %v3336 = vrot.slane %v3025, %v3335
      %v3338 = vunpack.c.l.s4 1983009808
      %v3339 = vunpack.c.0.s8 %v3338
      %v3340 = vlaneseq
      %v3341 = vshrl.u32 %v3340, 7
      %v3342 = vsub.s32 %v3339, %v3341
      %v3343 = vrot.slane %v3329, %v3342
      %v3344 = vcombine.high %v3033, %v881
      %v3346 = vunpack.c.l.s4 1983009808
      %v3347 = vunpack.c.0.s8 %v3346
      %v3348 = vlaneseq
      %v3349 = vshrl.u32 %v3348, 7
      %v3350 = vsub.s32 %v3347, %v3349
      %v3351 = vrot.slane %v3033, %v3350
      %v3353 = vunpack.c.l.s4 1983009808
      %v3354 = vunpack.c.0.s8 %v3353
      %v3355 = vlaneseq
      %v3356 = vshrl.u32 %v3355, 7
      %v3357 = vsub.s32 %v3354, %v3356
      %v3358 = vrot.slane %v3344, %v3357
      %v3359 = vcombine.low %v3336, %v3351
      %v3360 = vcombine.high %v3336, %v3351
      %v3362 = vunpack.c.l.s4 1934713408
      %v3363 = vunpack.c.0.s8 %v3362
      %v3364 = vlaneseq
      %v3365 = vshrl.u32 %v3364, 7
      %v3366 = vsub.s32 %v3363, %v3365
      %v3367 = vrot.slane %v3359, %v3366
      %v3369 = vunpack.c.l.s4 1934713408
      %v3370 = vunpack.c.0.s8 %v3369
      %v3371 = vlaneseq
      %v3372 = vshrl.u32 %v3371, 7
      %v3373 = vsub.s32 %v3370, %v3372
      %v3374 = vrot.slane %v3360, %v3373
      %v3375 = vcombine.low %v3343, %v3358
      %v3376 = vcombine.high %v3343, %v3358
      %v3378 = vunpack.c.l.s4 1934713408
      %v3379 = vunpack.c.0.s8 %v3378
      %v3380 = vlaneseq
      %v3381 = vshrl.u32 %v3380, 7
      %v3382 = vsub.s32 %v3379, %v3381
      %v3383 = vrot.slane %v3375, %v3382
      %v3385 = vunpack.c.l.s4 1934713408
      %v3386 = vunpack.c.0.s8 %v3385
      %v3387 = vlaneseq
      %v3388 = vshrl.u32 %v3387, 7
      %v3389 = vsub.s32 %v3386, %v3388
      %v3390 = vrot.slane %v3376, %v3389
      %v3391 = vcombine.high %v3367, 0
      %v3392 = vcombine.high %v3374, 0
      %v3393 = vcombine.high %v3383, 0
      %v3394 = vcombine.high %v3390, 0
      %v3395 = vcombine.high %v3037, %v878
      %v3397 = vunpack.c.l.s4 1983009808
      %v3398 = vunpack.c.0.s8 %v3397
      %v3399 = vlaneseq
      %v3400 = vshrl.u32 %v3399, 7
      %v3401 = vsub.s32 %v3398, %v3400
      %v3402 = vrot.slane %v3037, %v3401
      %v3404 = vunpack.c.l.s4 1983009808
      %v3405 = vunpack.c.0.s8 %v3404
      %v3406 = vlaneseq
      %v3407 = vshrl.u32 %v3406, 7
      %v3408 = vsub.s32 %v3405, %v3407
      %v3409 = vrot.slane %v3395, %v3408
      %v3410 = vcombine.high %v3045, %v878
      %v3412 = vunpack.c.l.s4 1983009808
      %v3413 = vunpack.c.0.s8 %v3412
      %v3414 = vlaneseq
      %v3415 = vshrl.u32 %v3414, 7
      %v3416 = vsub.s32 %v3413, %v3415
      %v3417 = vrot.slane %v3045, %v3416
      %v3419 = vunpack.c.l.s4 1983009808
      %v3420 = vunpack.c.0.s8 %v3419
      %v3421 = vlaneseq
      %v3422 = vshrl.u32 %v3421, 7
      %v3423 = vsub.s32 %v3420, %v3422
      %v3424 = vrot.slane %v3410, %v3423
      %v3425 = vcombine.low %v3402, %v3417
      %v3426 = vcombine.high %v3402, %v3417
      %v3428 = vunpack.c.l.s4 1934713408
      %v3429 = vunpack.c.0.s8 %v3428
      %v3430 = vlaneseq
      %v3431 = vshrl.u32 %v3430, 7
      %v3432 = vsub.s32 %v3429, %v3431
      %v3433 = vrot.slane %v3425, %v3432
      %v3435 = vunpack.c.l.s4 1934713408
      %v3436 = vunpack.c.0.s8 %v3435
      %v3437 = vlaneseq
      %v3438 = vshrl.u32 %v3437, 7
      %v3439 = vsub.s32 %v3436, %v3438
      %v3440 = vrot.slane %v3426, %v3439
      %v3441 = vcombine.low %v3409, %v3424
      %v3442 = vcombine.high %v3409, %v3424
      %v3444 = vunpack.c.l.s4 1934713408
      %v3445 = vunpack.c.0.s8 %v3444
      %v3446 = vlaneseq
      %v3447 = vshrl.u32 %v3446, 7
      %v3448 = vsub.s32 %v3445, %v3447
      %v3449 = vrot.slane %v3441, %v3448
      %v3451 = vunpack.c.l.s4 1934713408
      %v3452 = vunpack.c.0.s8 %v3451
      %v3453 = vlaneseq
      %v3454 = vshrl.u32 %v3453, 7
      %v3455 = vsub.s32 %v3452, %v3454
      %v3456 = vrot.slane %v3442, %v3455
      %v3457 = vcombine.high %v3433, 0
      %v3458 = vcombine.high %v3440, 0
      %v3459 = vcombine.high %v3449, 0
      %v3460 = vcombine.high %v3456, 0
      %v3461 = vcombine.high %v3041, %v881
      %v3463 = vunpack.c.l.s4 1983009808
      %v3464 = vunpack.c.0.s8 %v3463
      %v3465 = vlaneseq
      %v3466 = vshrl.u32 %v3465, 7
      %v3467 = vsub.s32 %v3464, %v3466
      %v3468 = vrot.slane %v3041, %v3467
      %v3470 = vunpack.c.l.s4 1983009808
      %v3471 = vunpack.c.0.s8 %v3470
      %v3472 = vlaneseq
      %v3473 = vshrl.u32 %v3472, 7
      %v3474 = vsub.s32 %v3471, %v3473
      %v3475 = vrot.slane %v3461, %v3474
      %v3476 = vcombine.high %v3049, %v881
      %v3478 = vunpack.c.l.s4 1983009808
      %v3479 = vunpack.c.0.s8 %v3478
      %v3480 = vlaneseq
      %v3481 = vshrl.u32 %v3480, 7
      %v3482 = vsub.s32 %v3479, %v3481
      %v3483 = vrot.slane %v3049, %v3482
      %v3485 = vunpack.c.l.s4 1983009808
      %v3486 = vunpack.c.0.s8 %v3485
      %v3487 = vlaneseq
      %v3488 = vshrl.u32 %v3487, 7
      %v3489 = vsub.s32 %v3486, %v3488
      %v3490 = vrot.slane %v3476, %v3489
      %v3491 = vcombine.low %v3468, %v3483
      %v3492 = vcombine.high %v3468, %v3483
      %v3494 = vunpack.c.l.s4 1934713408
      %v3495 = vunpack.c.0.s8 %v3494
      %v3496 = vlaneseq
      %v3497 = vshrl.u32 %v3496, 7
      %v3498 = vsub.s32 %v3495, %v3497
      %v3499 = vrot.slane %v3491, %v3498
      %v3501 = vunpack.c.l.s4 1934713408
      %v3502 = vunpack.c.0.s8 %v3501
      %v3503 = vlaneseq
      %v3504 = vshrl.u32 %v3503, 7
      %v3505 = vsub.s32 %v3502, %v3504
      %v3506 = vrot.slane %v3492, %v3505
      %v3507 = vcombine.low %v3475, %v3490
      %v3508 = vcombine.high %v3475, %v3490
      %v3510 = vunpack.c.l.s4 1934713408
      %v3511 = vunpack.c.0.s8 %v3510
      %v3512 = vlaneseq
      %v3513 = vshrl.u32 %v3512, 7
      %v3514 = vsub.s32 %v3511, %v3513
      %v3515 = vrot.slane %v3507, %v3514
      %v3517 = vunpack.c.l.s4 1934713408
      %v3518 = vunpack.c.0.s8 %v3517
      %v3519 = vlaneseq
      %v3520 = vshrl.u32 %v3519, 7
      %v3521 = vsub.s32 %v3518, %v3520
      %v3522 = vrot.slane %v3508, %v3521
      %v3523 = vcombine.high %v3499, 0
      %v3524 = vcombine.high %v3506, 0
      %v3525 = vcombine.high %v3515, 0
      %v3526 = vcombine.high %v3522, 0
      %v3527 = vcombine.high %v3053, %v878
      %v3529 = vunpack.c.l.s4 1983009808
      %v3530 = vunpack.c.0.s8 %v3529
      %v3531 = vlaneseq
      %v3532 = vshrl.u32 %v3531, 7
      %v3533 = vsub.s32 %v3530, %v3532
      %v3534 = vrot.slane %v3053, %v3533
      %v3536 = vunpack.c.l.s4 1983009808
      %v3537 = vunpack.c.0.s8 %v3536
      %v3538 = vlaneseq
      %v3539 = vshrl.u32 %v3538, 7
      %v3540 = vsub.s32 %v3537, %v3539
      %v3541 = vrot.slane %v3527, %v3540
      %v3542 = vcombine.high %v3061, %v878
      %v3544 = vunpack.c.l.s4 1983009808
      %v3545 = vunpack.c.0.s8 %v3544
      %v3546 = vlaneseq
      %v3547 = vshrl.u32 %v3546, 7
      %v3548 = vsub.s32 %v3545, %v3547
      %v3549 = vrot.slane %v3061, %v3548
      %v3551 = vunpack.c.l.s4 1983009808
      %v3552 = vunpack.c.0.s8 %v3551
      %v3553 = vlaneseq
      %v3554 = vshrl.u32 %v3553, 7
      %v3555 = vsub.s32 %v3552, %v3554
      %v3556 = vrot.slane %v3542, %v3555
      %v3557 = vcombine.low %v3534, %v3549
      %v3558 = vcombine.high %v3534, %v3549
      %v3560 = vunpack.c.l.s4 1934713408
      %v3561 = vunpack.c.0.s8 %v3560
      %v3562 = vlaneseq
      %v3563 = vshrl.u32 %v3562, 7
      %v3564 = vsub.s32 %v3561, %v3563
      %v3565 = vrot.slane %v3557, %v3564
      %v3567 = vunpack.c.l.s4 1934713408
      %v3568 = vunpack.c.0.s8 %v3567
      %v3569 = vlaneseq
      %v3570 = vshrl.u32 %v3569, 7
      %v3571 = vsub.s32 %v3568, %v3570
      %v3572 = vrot.slane %v3558, %v3571
      %v3573 = vcombine.low %v3541, %v3556
      %v3574 = vcombine.high %v3541, %v3556
      %v3576 = vunpack.c.l.s4 1934713408
      %v3577 = vunpack.c.0.s8 %v3576
      %v3578 = vlaneseq
      %v3579 = vshrl.u32 %v3578, 7
      %v3580 = vsub.s32 %v3577, %v3579
      %v3581 = vrot.slane %v3573, %v3580
      %v3583 = vunpack.c.l.s4 1934713408
      %v3584 = vunpack.c.0.s8 %v3583
      %v3585 = vlaneseq
      %v3586 = vshrl.u32 %v3585, 7
      %v3587 = vsub.s32 %v3584, %v3586
      %v3588 = vrot.slane %v3574, %v3587
      %v3589 = vcombine.high %v3565, 0
      %v3590 = vcombine.high %v3572, 0
      %v3591 = vcombine.high %v3581, 0
      %v3592 = vcombine.high %v3588, 0
      %v3593 = vcombine.high %v3057, %v881
      %v3595 = vunpack.c.l.s4 1983009808
      %v3596 = vunpack.c.0.s8 %v3595
      %v3597 = vlaneseq
      %v3598 = vshrl.u32 %v3597, 7
      %v3599 = vsub.s32 %v3596, %v3598
      %v3600 = vrot.slane %v3057, %v3599
      %v3602 = vunpack.c.l.s4 1983009808
      %v3603 = vunpack.c.0.s8 %v3602
      %v3604 = vlaneseq
      %v3605 = vshrl.u32 %v3604, 7
      %v3606 = vsub.s32 %v3603, %v3605
      %v3607 = vrot.slane %v3593, %v3606
      %v3608 = vcombine.high %v3065, %v881
      %v3610 = vunpack.c.l.s4 1983009808
      %v3611 = vunpack.c.0.s8 %v3610
      %v3612 = vlaneseq
      %v3613 = vshrl.u32 %v3612, 7
      %v3614 = vsub.s32 %v3611, %v3613
      %v3615 = vrot.slane %v3065, %v3614
      %v3617 = vunpack.c.l.s4 1983009808
      %v3618 = vunpack.c.0.s8 %v3617
      %v3619 = vlaneseq
      %v3620 = vshrl.u32 %v3619, 7
      %v3621 = vsub.s32 %v3618, %v3620
      %v3622 = vrot.slane %v3608, %v3621
      %v3623 = vcombine.low %v3600, %v3615
      %v3624 = vcombine.high %v3600, %v3615
      %v3626 = vunpack.c.l.s4 1934713408
      %v3627 = vunpack.c.0.s8 %v3626
      %v3628 = vlaneseq
      %v3629 = vshrl.u32 %v3628, 7
      %v3630 = vsub.s32 %v3627, %v3629
      %v3631 = vrot.slane %v3623, %v3630
      %v3633 = vunpack.c.l.s4 1934713408
      %v3634 = vunpack.c.0.s8 %v3633
      %v3635 = vlaneseq
      %v3636 = vshrl.u32 %v3635, 7
      %v3637 = vsub.s32 %v3634, %v3636
      %v3638 = vrot.slane %v3624, %v3637
      %v3639 = vcombine.low %v3607, %v3622
      %v3640 = vcombine.high %v3607, %v3622
      %v3642 = vunpack.c.l.s4 1934713408
      %v3643 = vunpack.c.0.s8 %v3642
      %v3644 = vlaneseq
      %v3645 = vshrl.u32 %v3644, 7
      %v3646 = vsub.s32 %v3643, %v3645
      %v3647 = vrot.slane %v3639, %v3646
      %v3649 = vunpack.c.l.s4 1934713408
      %v3650 = vunpack.c.0.s8 %v3649
      %v3651 = vlaneseq
      %v3652 = vshrl.u32 %v3651, 7
      %v3653 = vsub.s32 %v3650, %v3652
      %v3654 = vrot.slane %v3640, %v3653
      %v3655 = vcombine.high %v3631, 0
      %v3656 = vcombine.high %v3638, 0
      %v3657 = vcombine.high %v3647, 0
      %v3658 = vcombine.high %v3654, 0
      %v3659 = vcombine.high %v3069, %v878
      %v3661 = vunpack.c.l.s4 1983009808
      %v3662 = vunpack.c.0.s8 %v3661
      %v3663 = vlaneseq
      %v3664 = vshrl.u32 %v3663, 7
      %v3665 = vsub.s32 %v3662, %v3664
      %v3666 = vrot.slane %v3069, %v3665
      %v3668 = vunpack.c.l.s4 1983009808
      %v3669 = vunpack.c.0.s8 %v3668
      %v3670 = vlaneseq
      %v3671 = vshrl.u32 %v3670, 7
      %v3672 = vsub.s32 %v3669, %v3671
      %v3673 = vrot.slane %v3659, %v3672
      %v3674 = vcombine.high %v3077, %v878
      %v3676 = vunpack.c.l.s4 1983009808
      %v3677 = vunpack.c.0.s8 %v3676
      %v3678 = vlaneseq
      %v3679 = vshrl.u32 %v3678, 7
      %v3680 = vsub.s32 %v3677, %v3679
      %v3681 = vrot.slane %v3077, %v3680
      %v3683 = vunpack.c.l.s4 1983009808
      %v3684 = vunpack.c.0.s8 %v3683
      %v3685 = vlaneseq
      %v3686 = vshrl.u32 %v3685, 7
      %v3687 = vsub.s32 %v3684, %v3686
      %v3688 = vrot.slane %v3674, %v3687
      %v3689 = vcombine.low %v3666, %v3681
      %v3690 = vcombine.high %v3666, %v3681
      %v3692 = vunpack.c.l.s4 1934713408
      %v3693 = vunpack.c.0.s8 %v3692
      %v3694 = vlaneseq
      %v3695 = vshrl.u32 %v3694, 7
      %v3696 = vsub.s32 %v3693, %v3695
      %v3697 = vrot.slane %v3689, %v3696
      %v3699 = vunpack.c.l.s4 1934713408
      %v3700 = vunpack.c.0.s8 %v3699
      %v3701 = vlaneseq
      %v3702 = vshrl.u32 %v3701, 7
      %v3703 = vsub.s32 %v3700, %v3702
      %v3704 = vrot.slane %v3690, %v3703
      %v3705 = vcombine.low %v3673, %v3688
      %v3706 = vcombine.high %v3673, %v3688
      %v3708 = vunpack.c.l.s4 1934713408
      %v3709 = vunpack.c.0.s8 %v3708
      %v3710 = vlaneseq
      %v3711 = vshrl.u32 %v3710, 7
      %v3712 = vsub.s32 %v3709, %v3711
      %v3713 = vrot.slane %v3705, %v3712
      %v3715 = vunpack.c.l.s4 1934713408
      %v3716 = vunpack.c.0.s8 %v3715
      %v3717 = vlaneseq
      %v3718 = vshrl.u32 %v3717, 7
      %v3719 = vsub.s32 %v3716, %v3718
      %v3720 = vrot.slane %v3706, %v3719
      %v3721 = vcombine.high %v3697, 0
      %v3722 = vcombine.high %v3704, 0
      %v3723 = vcombine.high %v3713, 0
      %v3724 = vcombine.high %v3720, 0
      %v3725 = vcombine.high %v3073, %v881
      %v3727 = vunpack.c.l.s4 1983009808
      %v3728 = vunpack.c.0.s8 %v3727
      %v3729 = vlaneseq
      %v3730 = vshrl.u32 %v3729, 7
      %v3731 = vsub.s32 %v3728, %v3730
      %v3732 = vrot.slane %v3073, %v3731
      %v3734 = vunpack.c.l.s4 1983009808
      %v3735 = vunpack.c.0.s8 %v3734
      %v3736 = vlaneseq
      %v3737 = vshrl.u32 %v3736, 7
      %v3738 = vsub.s32 %v3735, %v3737
      %v3739 = vrot.slane %v3725, %v3738
      %v3740 = vcombine.high %v3081, %v881
      %v3742 = vunpack.c.l.s4 1983009808
      %v3743 = vunpack.c.0.s8 %v3742
      %v3744 = vlaneseq
      %v3745 = vshrl.u32 %v3744, 7
      %v3746 = vsub.s32 %v3743, %v3745
      %v3747 = vrot.slane %v3081, %v3746
      %v3749 = vunpack.c.l.s4 1983009808
      %v3750 = vunpack.c.0.s8 %v3749
      %v3751 = vlaneseq
      %v3752 = vshrl.u32 %v3751, 7
      %v3753 = vsub.s32 %v3750, %v3752
      %v3754 = vrot.slane %v3740, %v3753
      %v3755 = vcombine.low %v3732, %v3747
      %v3756 = vcombine.high %v3732, %v3747
      %v3758 = vunpack.c.l.s4 1934713408
      %v3759 = vunpack.c.0.s8 %v3758
      %v3760 = vlaneseq
      %v3761 = vshrl.u32 %v3760, 7
      %v3762 = vsub.s32 %v3759, %v3761
      %v3763 = vrot.slane %v3755, %v3762
      %v3765 = vunpack.c.l.s4 1934713408
      %v3766 = vunpack.c.0.s8 %v3765
      %v3767 = vlaneseq
      %v3768 = vshrl.u32 %v3767, 7
      %v3769 = vsub.s32 %v3766, %v3768
      %v3770 = vrot.slane %v3756, %v3769
      %v3771 = vcombine.low %v3739, %v3754
      %v3772 = vcombine.high %v3739, %v3754
      %v3774 = vunpack.c.l.s4 1934713408
      %v3775 = vunpack.c.0.s8 %v3774
      %v3776 = vlaneseq
      %v3777 = vshrl.u32 %v3776, 7
      %v3778 = vsub.s32 %v3775, %v3777
      %v3779 = vrot.slane %v3771, %v3778
      %v3781 = vunpack.c.l.s4 1934713408
      %v3782 = vunpack.c.0.s8 %v3781
      %v3783 = vlaneseq
      %v3784 = vshrl.u32 %v3783, 7
      %v3785 = vsub.s32 %v3782, %v3784
      %v3786 = vrot.slane %v3772, %v3785
      %v3787 = vcombine.high %v3763, 0
      %v3788 = vcombine.high %v3770, 0
      %v3789 = vcombine.high %v3779, 0
      %v3790 = vcombine.high %v3786, 0
      %v3791 = vcombine.high %v3085, %v878
      %v3793 = vunpack.c.l.s4 1983009808
      %v3794 = vunpack.c.0.s8 %v3793
      %v3795 = vlaneseq
      %v3796 = vshrl.u32 %v3795, 7
      %v3797 = vsub.s32 %v3794, %v3796
      %v3798 = vrot.slane %v3085, %v3797
      %v3800 = vunpack.c.l.s4 1983009808
      %v3801 = vunpack.c.0.s8 %v3800
      %v3802 = vlaneseq
      %v3803 = vshrl.u32 %v3802, 7
      %v3804 = vsub.s32 %v3801, %v3803
      %v3805 = vrot.slane %v3791, %v3804
      %v3806 = vcombine.high %v3093, %v878
      %v3808 = vunpack.c.l.s4 1983009808
      %v3809 = vunpack.c.0.s8 %v3808
      %v3810 = vlaneseq
      %v3811 = vshrl.u32 %v3810, 7
      %v3812 = vsub.s32 %v3809, %v3811
      %v3813 = vrot.slane %v3093, %v3812
      %v3815 = vunpack.c.l.s4 1983009808
      %v3816 = vunpack.c.0.s8 %v3815
      %v3817 = vlaneseq
      %v3818 = vshrl.u32 %v3817, 7
      %v3819 = vsub.s32 %v3816, %v3818
      %v3820 = vrot.slane %v3806, %v3819
      %v3821 = vcombine.low %v3798, %v3813
      %v3822 = vcombine.high %v3798, %v3813
      %v3824 = vunpack.c.l.s4 1934713408
      %v3825 = vunpack.c.0.s8 %v3824
      %v3826 = vlaneseq
      %v3827 = vshrl.u32 %v3826, 7
      %v3828 = vsub.s32 %v3825, %v3827
      %v3829 = vrot.slane %v3821, %v3828
      %v3831 = vunpack.c.l.s4 1934713408
      %v3832 = vunpack.c.0.s8 %v3831
      %v3833 = vlaneseq
      %v3834 = vshrl.u32 %v3833, 7
      %v3835 = vsub.s32 %v3832, %v3834
      %v3836 = vrot.slane %v3822, %v3835
      %v3837 = vcombine.low %v3805, %v3820
      %v3838 = vcombine.high %v3805, %v3820
      %v3840 = vunpack.c.l.s4 1934713408
      %v3841 = vunpack.c.0.s8 %v3840
      %v3842 = vlaneseq
      %v3843 = vshrl.u32 %v3842, 7
      %v3844 = vsub.s32 %v3841, %v3843
      %v3845 = vrot.slane %v3837, %v3844
      %v3847 = vunpack.c.l.s4 1934713408
      %v3848 = vunpack.c.0.s8 %v3847
      %v3849 = vlaneseq
      %v3850 = vshrl.u32 %v3849, 7
      %v3851 = vsub.s32 %v3848, %v3850
      %v3852 = vrot.slane %v3838, %v3851
      %v3853 = vcombine.high %v3829, 0
      %v3854 = vcombine.high %v3836, 0
      %v3855 = vcombine.high %v3845, 0
      %v3856 = vcombine.high %v3852, 0
      %v3857 = vcombine.high %v3089, %v881
      %v3859 = vunpack.c.l.s4 1983009808
      %v3860 = vunpack.c.0.s8 %v3859
      %v3861 = vlaneseq
      %v3862 = vshrl.u32 %v3861, 7
      %v3863 = vsub.s32 %v3860, %v3862
      %v3864 = vrot.slane %v3089, %v3863
      %v3866 = vunpack.c.l.s4 1983009808
      %v3867 = vunpack.c.0.s8 %v3866
      %v3868 = vlaneseq
      %v3869 = vshrl.u32 %v3868, 7
      %v3870 = vsub.s32 %v3867, %v3869
      %v3871 = vrot.slane %v3857, %v3870
      %v3872 = vcombine.high %v3097, %v881
      %v3874 = vunpack.c.l.s4 1983009808
      %v3875 = vunpack.c.0.s8 %v3874
      %v3876 = vlaneseq
      %v3877 = vshrl.u32 %v3876, 7
      %v3878 = vsub.s32 %v3875, %v3877
      %v3879 = vrot.slane %v3097, %v3878
      %v3881 = vunpack.c.l.s4 1983009808
      %v3882 = vunpack.c.0.s8 %v3881
      %v3883 = vlaneseq
      %v3884 = vshrl.u32 %v3883, 7
      %v3885 = vsub.s32 %v3882, %v3884
      %v3886 = vrot.slane %v3872, %v3885
      %v3887 = vcombine.low %v3864, %v3879
      %v3888 = vcombine.high %v3864, %v3879
      %v3890 = vunpack.c.l.s4 1934713408
      %v3891 = vunpack.c.0.s8 %v3890
      %v3892 = vlaneseq
      %v3893 = vshrl.u32 %v3892, 7
      %v3894 = vsub.s32 %v3891, %v3893
      %v3895 = vrot.slane %v3887, %v3894
      %v3897 = vunpack.c.l.s4 1934713408
      %v3898 = vunpack.c.0.s8 %v3897
      %v3899 = vlaneseq
      %v3900 = vshrl.u32 %v3899, 7
      %v3901 = vsub.s32 %v3898, %v3900
      %v3902 = vrot.slane %v3888, %v3901
      %v3903 = vcombine.low %v3871, %v3886
      %v3904 = vcombine.high %v3871, %v3886
      %v3906 = vunpack.c.l.s4 1934713408
      %v3907 = vunpack.c.0.s8 %v3906
      %v3908 = vlaneseq
      %v3909 = vshrl.u32 %v3908, 7
      %v3910 = vsub.s32 %v3907, %v3909
      %v3911 = vrot.slane %v3903, %v3910
      %v3913 = vunpack.c.l.s4 1934713408
      %v3914 = vunpack.c.0.s8 %v3913
      %v3915 = vlaneseq
      %v3916 = vshrl.u32 %v3915, 7
      %v3917 = vsub.s32 %v3914, %v3916
      %v3918 = vrot.slane %v3904, %v3917
      %v3919 = vcombine.high %v3895, 0
      %v3920 = vcombine.high %v3902, 0
      %v3921 = vcombine.high %v3911, 0
      %v3922 = vcombine.high %v3918, 0
      %v3923 = vcombine.high %v3101, %v878
      %v3925 = vunpack.c.l.s4 1983009808
      %v3926 = vunpack.c.0.s8 %v3925
      %v3927 = vlaneseq
      %v3928 = vshrl.u32 %v3927, 7
      %v3929 = vsub.s32 %v3926, %v3928
      %v3930 = vrot.slane %v3101, %v3929
      %v3932 = vunpack.c.l.s4 1983009808
      %v3933 = vunpack.c.0.s8 %v3932
      %v3934 = vlaneseq
      %v3935 = vshrl.u32 %v3934, 7
      %v3936 = vsub.s32 %v3933, %v3935
      %v3937 = vrot.slane %v3923, %v3936
      %v3938 = vcombine.high %v3109, %v878
      %v3940 = vunpack.c.l.s4 1983009808
      %v3941 = vunpack.c.0.s8 %v3940
      %v3942 = vlaneseq
      %v3943 = vshrl.u32 %v3942, 7
      %v3944 = vsub.s32 %v3941, %v3943
      %v3945 = vrot.slane %v3109, %v3944
      %v3947 = vunpack.c.l.s4 1983009808
      %v3948 = vunpack.c.0.s8 %v3947
      %v3949 = vlaneseq
      %v3950 = vshrl.u32 %v3949, 7
      %v3951 = vsub.s32 %v3948, %v3950
      %v3952 = vrot.slane %v3938, %v3951
      %v3953 = vcombine.low %v3930, %v3945
      %v3954 = vcombine.high %v3930, %v3945
      %v3956 = vunpack.c.l.s4 1934713408
      %v3957 = vunpack.c.0.s8 %v3956
      %v3958 = vlaneseq
      %v3959 = vshrl.u32 %v3958, 7
      %v3960 = vsub.s32 %v3957, %v3959
      %v3961 = vrot.slane %v3953, %v3960
      %v3963 = vunpack.c.l.s4 1934713408
      %v3964 = vunpack.c.0.s8 %v3963
      %v3965 = vlaneseq
      %v3966 = vshrl.u32 %v3965, 7
      %v3967 = vsub.s32 %v3964, %v3966
      %v3968 = vrot.slane %v3954, %v3967
      %v3969 = vcombine.low %v3937, %v3952
      %v3970 = vcombine.high %v3937, %v3952
      %v3972 = vunpack.c.l.s4 1934713408
      %v3973 = vunpack.c.0.s8 %v3972
      %v3974 = vlaneseq
      %v3975 = vshrl.u32 %v3974, 7
      %v3976 = vsub.s32 %v3973, %v3975
      %v3977 = vrot.slane %v3969, %v3976
      %v3979 = vunpack.c.l.s4 1934713408
      %v3980 = vunpack.c.0.s8 %v3979
      %v3981 = vlaneseq
      %v3982 = vshrl.u32 %v3981, 7
      %v3983 = vsub.s32 %v3980, %v3982
      %v3984 = vrot.slane %v3970, %v3983
      %v3985 = vcombine.high %v3961, 0
      %v3986 = vcombine.high %v3968, 0
      %v3987 = vcombine.high %v3977, 0
      %v3988 = vcombine.high %v3984, 0
      %v3989 = vcombine.high %v3105, %v881
      %v3991 = vunpack.c.l.s4 1983009808
      %v3992 = vunpack.c.0.s8 %v3991
      %v3993 = vlaneseq
      %v3994 = vshrl.u32 %v3993, 7
      %v3995 = vsub.s32 %v3992, %v3994
      %v3996 = vrot.slane %v3105, %v3995
      %v3998 = vunpack.c.l.s4 1983009808
      %v3999 = vunpack.c.0.s8 %v3998
      %v4000 = vlaneseq
      %v4001 = vshrl.u32 %v4000, 7
      %v4002 = vsub.s32 %v3999, %v4001
      %v4003 = vrot.slane %v3989, %v4002
      %v4004 = vcombine.high %v3113, %v881
      %v4006 = vunpack.c.l.s4 1983009808
      %v4007 = vunpack.c.0.s8 %v4006
      %v4008 = vlaneseq
      %v4009 = vshrl.u32 %v4008, 7
      %v4010 = vsub.s32 %v4007, %v4009
      %v4011 = vrot.slane %v3113, %v4010
      %v4013 = vunpack.c.l.s4 1983009808
      %v4014 = vunpack.c.0.s8 %v4013
      %v4015 = vlaneseq
      %v4016 = vshrl.u32 %v4015, 7
      %v4017 = vsub.s32 %v4014, %v4016
      %v4018 = vrot.slane %v4004, %v4017
      %v4019 = vcombine.low %v3996, %v4011
      %v4020 = vcombine.high %v3996, %v4011
      %v4022 = vunpack.c.l.s4 1934713408
      %v4023 = vunpack.c.0.s8 %v4022
      %v4024 = vlaneseq
      %v4025 = vshrl.u32 %v4024, 7
      %v4026 = vsub.s32 %v4023, %v4025
      %v4027 = vrot.slane %v4019, %v4026
      %v4029 = vunpack.c.l.s4 1934713408
      %v4030 = vunpack.c.0.s8 %v4029
      %v4031 = vlaneseq
      %v4032 = vshrl.u32 %v4031, 7
      %v4033 = vsub.s32 %v4030, %v4032
      %v4034 = vrot.slane %v4020, %v4033
      %v4035 = vcombine.low %v4003, %v4018
      %v4036 = vcombine.high %v4003, %v4018
      %v4038 = vunpack.c.l.s4 1934713408
      %v4039 = vunpack.c.0.s8 %v4038
      %v4040 = vlaneseq
      %v4041 = vshrl.u32 %v4040, 7
      %v4042 = vsub.s32 %v4039, %v4041
      %v4043 = vrot.slane %v4035, %v4042
      %v4045 = vunpack.c.l.s4 1934713408
      %v4046 = vunpack.c.0.s8 %v4045
      %v4047 = vlaneseq
      %v4048 = vshrl.u32 %v4047, 7
      %v4049 = vsub.s32 %v4046, %v4048
      %v4050 = vrot.slane %v4036, %v4049
      %v4051 = vcombine.high %v4027, 0
      %v4052 = vcombine.high %v4034, 0
      %v4053 = vcombine.high %v4043, 0
      %v4054 = vcombine.high %v4050, 0
      %v4055 = vcombine.high %v3117, %v878
      %v4057 = vunpack.c.l.s4 1983009808
      %v4058 = vunpack.c.0.s8 %v4057
      %v4059 = vlaneseq
      %v4060 = vshrl.u32 %v4059, 7
      %v4061 = vsub.s32 %v4058, %v4060
      %v4062 = vrot.slane %v3117, %v4061
      %v4064 = vunpack.c.l.s4 1983009808
      %v4065 = vunpack.c.0.s8 %v4064
      %v4066 = vlaneseq
      %v4067 = vshrl.u32 %v4066, 7
      %v4068 = vsub.s32 %v4065, %v4067
      %v4069 = vrot.slane %v4055, %v4068
      %v4070 = vcombine.high %v3125, %v878
      %v4072 = vunpack.c.l.s4 1983009808
      %v4073 = vunpack.c.0.s8 %v4072
      %v4074 = vlaneseq
      %v4075 = vshrl.u32 %v4074, 7
      %v4076 = vsub.s32 %v4073, %v4075
      %v4077 = vrot.slane %v3125, %v4076
      %v4079 = vunpack.c.l.s4 1983009808
      %v4080 = vunpack.c.0.s8 %v4079
      %v4081 = vlaneseq
      %v4082 = vshrl.u32 %v4081, 7
      %v4083 = vsub.s32 %v4080, %v4082
      %v4084 = vrot.slane %v4070, %v4083
      %v4085 = vcombine.low %v4062, %v4077
      %v4086 = vcombine.high %v4062, %v4077
      %v4088 = vunpack.c.l.s4 1934713408
      %v4089 = vunpack.c.0.s8 %v4088
      %v4090 = vlaneseq
      %v4091 = vshrl.u32 %v4090, 7
      %v4092 = vsub.s32 %v4089, %v4091
      %v4093 = vrot.slane %v4085, %v4092
      %v4095 = vunpack.c.l.s4 1934713408
      %v4096 = vunpack.c.0.s8 %v4095
      %v4097 = vlaneseq
      %v4098 = vshrl.u32 %v4097, 7
      %v4099 = vsub.s32 %v4096, %v4098
      %v4100 = vrot.slane %v4086, %v4099
      %v4101 = vcombine.low %v4069, %v4084
      %v4102 = vcombine.high %v4069, %v4084
      %v4104 = vunpack.c.l.s4 1934713408
      %v4105 = vunpack.c.0.s8 %v4104
      %v4106 = vlaneseq
      %v4107 = vshrl.u32 %v4106, 7
      %v4108 = vsub.s32 %v4105, %v4107
      %v4109 = vrot.slane %v4101, %v4108
      %v4111 = vunpack.c.l.s4 1934713408
      %v4112 = vunpack.c.0.s8 %v4111
      %v4113 = vlaneseq
      %v4114 = vshrl.u32 %v4113, 7
      %v4115 = vsub.s32 %v4112, %v4114
      %v4116 = vrot.slane %v4102, %v4115
      %v4117 = vcombine.high %v4093, 0
      %v4118 = vcombine.high %v4100, 0
      %v4119 = vcombine.high %v4109, 0
      %v4120 = vcombine.high %v4116, 0
      %v4121 = vcombine.high %v3121, %v881
      %v4123 = vunpack.c.l.s4 1983009808
      %v4124 = vunpack.c.0.s8 %v4123
      %v4125 = vlaneseq
      %v4126 = vshrl.u32 %v4125, 7
      %v4127 = vsub.s32 %v4124, %v4126
      %v4128 = vrot.slane %v3121, %v4127
      %v4130 = vunpack.c.l.s4 1983009808
      %v4131 = vunpack.c.0.s8 %v4130
      %v4132 = vlaneseq
      %v4133 = vshrl.u32 %v4132, 7
      %v4134 = vsub.s32 %v4131, %v4133
      %v4135 = vrot.slane %v4121, %v4134
      %v4136 = vcombine.high %v3129, %v881
      %v4138 = vunpack.c.l.s4 1983009808
      %v4139 = vunpack.c.0.s8 %v4138
      %v4140 = vlaneseq
      %v4141 = vshrl.u32 %v4140, 7
      %v4142 = vsub.s32 %v4139, %v4141
      %v4143 = vrot.slane %v3129, %v4142
      %v4145 = vunpack.c.l.s4 1983009808
      %v4146 = vunpack.c.0.s8 %v4145
      %v4147 = vlaneseq
      %v4148 = vshrl.u32 %v4147, 7
      %v4149 = vsub.s32 %v4146, %v4148
      %v4150 = vrot.slane %v4136, %v4149
      %v4151 = vcombine.low %v4128, %v4143
      %v4152 = vcombine.high %v4128, %v4143
      %v4154 = vunpack.c.l.s4 1934713408
      %v4155 = vunpack.c.0.s8 %v4154
      %v4156 = vlaneseq
      %v4157 = vshrl.u32 %v4156, 7
      %v4158 = vsub.s32 %v4155, %v4157
      %v4159 = vrot.slane %v4151, %v4158
      %v4161 = vunpack.c.l.s4 1934713408
      %v4162 = vunpack.c.0.s8 %v4161
      %v4163 = vlaneseq
      %v4164 = vshrl.u32 %v4163, 7
      %v4165 = vsub.s32 %v4162, %v4164
      %v4166 = vrot.slane %v4152, %v4165
      %v4167 = vcombine.low %v4135, %v4150
      %v4168 = vcombine.high %v4135, %v4150
      %v4170 = vunpack.c.l.s4 1934713408
      %v4171 = vunpack.c.0.s8 %v4170
      %v4172 = vlaneseq
      %v4173 = vshrl.u32 %v4172, 7
      %v4174 = vsub.s32 %v4171, %v4173
      %v4175 = vrot.slane %v4167, %v4174
      %v4177 = vunpack.c.l.s4 1934713408
      %v4178 = vunpack.c.0.s8 %v4177
      %v4179 = vlaneseq
      %v4180 = vshrl.u32 %v4179, 7
      %v4181 = vsub.s32 %v4178, %v4180
      %v4182 = vrot.slane %v4168, %v4181
      %v4183 = vcombine.high %v4159, 0
      %v4184 = vcombine.high %v4166, 0
      %v4185 = vcombine.high %v4175, 0
      %v4186 = vcombine.high %v4182, 0
      %v4187 = vcombine.low %v3169, %v3176
      %v4189 = vunpack.c.l.s4 1983009808
      %v4190 = vunpack.c.0.s8 %v4189
      %v4191 = vlaneseq
      %v4192 = vshrl.u32 %v4191, 7
      %v4193 = vsub.s32 %v4190, %v4192
      %v4194 = vrot.slane %v4187, %v4193
      %v4195 = vcombine.low %v3193, %v3194
      %v4197 = vunpack.c.l.s4 1983009808
      %v4198 = vunpack.c.0.s8 %v4197
      %v4199 = vlaneseq
      %v4200 = vshrl.u32 %v4199, 7
      %v4201 = vsub.s32 %v4198, %v4200
      %v4202 = vrot.slane %v4195, %v4201
      %v4203 = vcombine.low %v3185, %v3192
      %v4205 = vunpack.c.l.s4 1983009808
      %v4206 = vunpack.c.0.s8 %v4205
      %v4207 = vlaneseq
      %v4208 = vshrl.u32 %v4207, 7
      %v4209 = vsub.s32 %v4206, %v4208
      %v4210 = vrot.slane %v4203, %v4209
      %v4211 = vcombine.low %v3195, %v3196
      %v4213 = vunpack.c.l.s4 1983009808
      %v4214 = vunpack.c.0.s8 %v4213
      %v4215 = vlaneseq
      %v4216 = vshrl.u32 %v4215, 7
      %v4217 = vsub.s32 %v4214, %v4216
      %v4218 = vrot.slane %v4211, %v4217
      %v4219 = vcombine.low %v4194, %v4202
      %v4221 = vunpack.c.l.s4 1934713408
      %v4222 = vunpack.c.0.s8 %v4221
      %v4223 = vlaneseq
      %v4224 = vshrl.u32 %v4223, 7
      %v4225 = vsub.s32 %v4222, %v4224
      %v4226 = vrot.slane %v4219, %v4225
      %v4227 = vcombine.low %v4210, %v4218
      %v4229 = vunpack.c.l.s4 1934713408
      %v4230 = vunpack.c.0.s8 %v4229
      %v4231 = vlaneseq
      %v4232 = vshrl.u32 %v4231, 7
      %v4233 = vsub.s32 %v4230, %v4232
      %v4234 = vrot.slane %v4227, %v4233
      %v4235 = vcombine.low %v4226, %v4234
      %v4236 = vcombine.high %v4226, %v4234
      %v4237 = vcombine.low %v3235, %v3242
      %v4239 = vunpack.c.l.s4 1983009808
      %v4240 = vunpack.c.0.s8 %v4239
      %v4241 = vlaneseq
      %v4242 = vshrl.u32 %v4241, 7
      %v4243 = vsub.s32 %v4240, %v4242
      %v4244 = vrot.slane %v4237, %v4243
      %v4245 = vcombine.low %v3259, %v3260
      %v4247 = vunpack.c.l.s4 1983009808
      %v4248 = vunpack.c.0.s8 %v4247
      %v4249 = vlaneseq
      %v4250 = vshrl.u32 %v4249, 7
      %v4251 = vsub.s32 %v4248, %v4250
      %v4252 = vrot.slane %v4245, %v4251
      %v4253 = vcombine.low %v3251, %v3258
      %v4255 = vunpack.c.l.s4 1983009808
      %v4256 = vunpack.c.0.s8 %v4255
      %v4257 = vlaneseq
      %v4258 = vshrl.u32 %v4257, 7
      %v4259 = vsub.s32 %v4256, %v4258
      %v4260 = vrot.slane %v4253, %v4259
      %v4261 = vcombine.low %v3261, %v3262
      %v4263 = vunpack.c.l.s4 1983009808
      %v4264 = vunpack.c.0.s8 %v4263
      %v4265 = vlaneseq
      %v4266 = vshrl.u32 %v4265, 7
      %v4267 = vsub.s32 %v4264, %v4266
      %v4268 = vrot.slane %v4261, %v4267
      %v4269 = vcombine.low %v4244, %v4252
      %v4271 = vunpack.c.l.s4 1934713408
      %v4272 = vunpack.c.0.s8 %v4271
      %v4273 = vlaneseq
      %v4274 = vshrl.u32 %v4273, 7
      %v4275 = vsub.s32 %v4272, %v4274
      %v4276 = vrot.slane %v4269, %v4275
      %v4277 = vcombine.low %v4260, %v4268
      %v4279 = vunpack.c.l.s4 1934713408
      %v4280 = vunpack.c.0.s8 %v4279
      %v4281 = vlaneseq
      %v4282 = vshrl.u32 %v4281, 7
      %v4283 = vsub.s32 %v4280, %v4282
      %v4284 = vrot.slane %v4277, %v4283
      %v4285 = vcombine.low %v4276, %v4284
      %v4286 = vcombine.high %v4276, %v4284
      %v4287 = vcombine.low %v3301, %v3308
      %v4289 = vunpack.c.l.s4 1983009808
      %v4290 = vunpack.c.0.s8 %v4289
      %v4291 = vlaneseq
      %v4292 = vshrl.u32 %v4291, 7
      %v4293 = vsub.s32 %v4290, %v4292
      %v4294 = vrot.slane %v4287, %v4293
      %v4295 = vcombine.low %v3325, %v3326
      %v4297 = vunpack.c.l.s4 1983009808
      %v4298 = vunpack.c.0.s8 %v4297
      %v4299 = vlaneseq
      %v4300 = vshrl.u32 %v4299, 7
      %v4301 = vsub.s32 %v4298, %v4300
      %v4302 = vrot.slane %v4295, %v4301
      %v4303 = vcombine.low %v3317, %v3324
      %v4305 = vunpack.c.l.s4 1983009808
      %v4306 = vunpack.c.0.s8 %v4305
      %v4307 = vlaneseq
      %v4308 = vshrl.u32 %v4307, 7
      %v4309 = vsub.s32 %v4306, %v4308
      %v4310 = vrot.slane %v4303, %v4309
      %v4311 = vcombine.low %v3327, %v3328
      %v4313 = vunpack.c.l.s4 1983009808
      %v4314 = vunpack.c.0.s8 %v4313
      %v4315 = vlaneseq
      %v4316 = vshrl.u32 %v4315, 7
      %v4317 = vsub.s32 %v4314, %v4316
      %v4318 = vrot.slane %v4311, %v4317
      %v4319 = vcombine.low %v4294, %v4302
      %v4321 = vunpack.c.l.s4 1934713408
      %v4322 = vunpack.c.0.s8 %v4321
      %v4323 = vlaneseq
      %v4324 = vshrl.u32 %v4323, 7
      %v4325 = vsub.s32 %v4322, %v4324
      %v4326 = vrot.slane %v4319, %v4325
      %v4327 = vcombine.low %v4310, %v4318
      %v4329 = vunpack.c.l.s4 1934713408
      %v4330 = vunpack.c.0.s8 %v4329
      %v4331 = vlaneseq
      %v4332 = vshrl.u32 %v4331, 7
      %v4333 = vsub.s32 %v4330, %v4332
      %v4334 = vrot.slane %v4327, %v4333
      %v4335 = vcombine.low %v4326, %v4334
      %v4336 = vcombine.high %v4326, %v4334
      %v4337 = vcombine.low %v3367, %v3374
      %v4339 = vunpack.c.l.s4 1983009808
      %v4340 = vunpack.c.0.s8 %v4339
      %v4341 = vlaneseq
      %v4342 = vshrl.u32 %v4341, 7
      %v4343 = vsub.s32 %v4340, %v4342
      %v4344 = vrot.slane %v4337, %v4343
      %v4345 = vcombine.low %v3391, %v3392
      %v4347 = vunpack.c.l.s4 1983009808
      %v4348 = vunpack.c.0.s8 %v4347
      %v4349 = vlaneseq
      %v4350 = vshrl.u32 %v4349, 7
      %v4351 = vsub.s32 %v4348, %v4350
      %v4352 = vrot.slane %v4345, %v4351
      %v4353 = vcombine.low %v3383, %v3390
      %v4355 = vunpack.c.l.s4 1983009808
      %v4356 = vunpack.c.0.s8 %v4355
      %v4357 = vlaneseq
      %v4358 = vshrl.u32 %v4357, 7
      %v4359 = vsub.s32 %v4356, %v4358
      %v4360 = vrot.slane %v4353, %v4359
      %v4361 = vcombine.low %v3393, %v3394
      %v4363 = vunpack.c.l.s4 1983009808
      %v4364 = vunpack.c.0.s8 %v4363
      %v4365 = vlaneseq
      %v4366 = vshrl.u32 %v4365, 7
      %v4367 = vsub.s32 %v4364, %v4366
      %v4368 = vrot.slane %v4361, %v4367
      %v4369 = vcombine.low %v4344, %v4352
      %v4371 = vunpack.c.l.s4 1934713408
      %v4372 = vunpack.c.0.s8 %v4371
      %v4373 = vlaneseq
      %v4374 = vshrl.u32 %v4373, 7
      %v4375 = vsub.s32 %v4372, %v4374
      %v4376 = vrot.slane %v4369, %v4375
      %v4377 = vcombine.low %v4360, %v4368
      %v4379 = vunpack.c.l.s4 1934713408
      %v4380 = vunpack.c.0.s8 %v4379
      %v4381 = vlaneseq
      %v4382 = vshrl.u32 %v4381, 7
      %v4383 = vsub.s32 %v4380, %v4382
      %v4384 = vrot.slane %v4377, %v4383
      %v4385 = vcombine.low %v4376, %v4384
      %v4386 = vcombine.high %v4376, %v4384
      %v4387 = vcombine.low %v3433, %v3440
      %v4389 = vunpack.c.l.s4 1983009808
      %v4390 = vunpack.c.0.s8 %v4389
      %v4391 = vlaneseq
      %v4392 = vshrl.u32 %v4391, 7
      %v4393 = vsub.s32 %v4390, %v4392
      %v4394 = vrot.slane %v4387, %v4393
      %v4395 = vcombine.low %v3457, %v3458
      %v4397 = vunpack.c.l.s4 1983009808
      %v4398 = vunpack.c.0.s8 %v4397
      %v4399 = vlaneseq
      %v4400 = vshrl.u32 %v4399, 7
      %v4401 = vsub.s32 %v4398, %v4400
      %v4402 = vrot.slane %v4395, %v4401
      %v4403 = vcombine.low %v3449, %v3456
      %v4405 = vunpack.c.l.s4 1983009808
      %v4406 = vunpack.c.0.s8 %v4405
      %v4407 = vlaneseq
      %v4408 = vshrl.u32 %v4407, 7
      %v4409 = vsub.s32 %v4406, %v4408
      %v4410 = vrot.slane %v4403, %v4409
      %v4411 = vcombine.low %v3459, %v3460
      %v4413 = vunpack.c.l.s4 1983009808
      %v4414 = vunpack.c.0.s8 %v4413
      %v4415 = vlaneseq
      %v4416 = vshrl.u32 %v4415, 7
      %v4417 = vsub.s32 %v4414, %v4416
      %v4418 = vrot.slane %v4411, %v4417
      %v4419 = vcombine.low %v4394, %v4402
      %v4421 = vunpack.c.l.s4 1934713408
      %v4422 = vunpack.c.0.s8 %v4421
      %v4423 = vlaneseq
      %v4424 = vshrl.u32 %v4423, 7
      %v4425 = vsub.s32 %v4422, %v4424
      %v4426 = vrot.slane %v4419, %v4425
      %v4427 = vcombine.low %v4410, %v4418
      %v4429 = vunpack.c.l.s4 1934713408
      %v4430 = vunpack.c.0.s8 %v4429
      %v4431 = vlaneseq
      %v4432 = vshrl.u32 %v4431, 7
      %v4433 = vsub.s32 %v4430, %v4432
      %v4434 = vrot.slane %v4427, %v4433
      %v4435 = vcombine.low %v4426, %v4434
      %v4436 = vcombine.high %v4426, %v4434
      %v4437 = vcombine.low %v3499, %v3506
      %v4439 = vunpack.c.l.s4 1983009808
      %v4440 = vunpack.c.0.s8 %v4439
      %v4441 = vlaneseq
      %v4442 = vshrl.u32 %v4441, 7
      %v4443 = vsub.s32 %v4440, %v4442
      %v4444 = vrot.slane %v4437, %v4443
      %v4445 = vcombine.low %v3523, %v3524
      %v4447 = vunpack.c.l.s4 1983009808
      %v4448 = vunpack.c.0.s8 %v4447
      %v4449 = vlaneseq
      %v4450 = vshrl.u32 %v4449, 7
      %v4451 = vsub.s32 %v4448, %v4450
      %v4452 = vrot.slane %v4445, %v4451
      %v4453 = vcombine.low %v3515, %v3522
      %v4455 = vunpack.c.l.s4 1983009808
      %v4456 = vunpack.c.0.s8 %v4455
      %v4457 = vlaneseq
      %v4458 = vshrl.u32 %v4457, 7
      %v4459 = vsub.s32 %v4456, %v4458
      %v4460 = vrot.slane %v4453, %v4459
      %v4461 = vcombine.low %v3525, %v3526
      %v4463 = vunpack.c.l.s4 1983009808
      %v4464 = vunpack.c.0.s8 %v4463
      %v4465 = vlaneseq
      %v4466 = vshrl.u32 %v4465, 7
      %v4467 = vsub.s32 %v4464, %v4466
      %v4468 = vrot.slane %v4461, %v4467
      %v4469 = vcombine.low %v4444, %v4452
      %v4471 = vunpack.c.l.s4 1934713408
      %v4472 = vunpack.c.0.s8 %v4471
      %v4473 = vlaneseq
      %v4474 = vshrl.u32 %v4473, 7
      %v4475 = vsub.s32 %v4472, %v4474
      %v4476 = vrot.slane %v4469, %v4475
      %v4477 = vcombine.low %v4460, %v4468
      %v4479 = vunpack.c.l.s4 1934713408
      %v4480 = vunpack.c.0.s8 %v4479
      %v4481 = vlaneseq
      %v4482 = vshrl.u32 %v4481, 7
      %v4483 = vsub.s32 %v4480, %v4482
      %v4484 = vrot.slane %v4477, %v4483
      %v4485 = vcombine.low %v4476, %v4484
      %v4486 = vcombine.high %v4476, %v4484
      %v4487 = vcombine.low %v3565, %v3572
      %v4489 = vunpack.c.l.s4 1983009808
      %v4490 = vunpack.c.0.s8 %v4489
      %v4491 = vlaneseq
      %v4492 = vshrl.u32 %v4491, 7
      %v4493 = vsub.s32 %v4490, %v4492
      %v4494 = vrot.slane %v4487, %v4493
      %v4495 = vcombine.low %v3589, %v3590
      %v4497 = vunpack.c.l.s4 1983009808
      %v4498 = vunpack.c.0.s8 %v4497
      %v4499 = vlaneseq
      %v4500 = vshrl.u32 %v4499, 7
      %v4501 = vsub.s32 %v4498, %v4500
      %v4502 = vrot.slane %v4495, %v4501
      %v4503 = vcombine.low %v3581, %v3588
      %v4505 = vunpack.c.l.s4 1983009808
      %v4506 = vunpack.c.0.s8 %v4505
      %v4507 = vlaneseq
      %v4508 = vshrl.u32 %v4507, 7
      %v4509 = vsub.s32 %v4506, %v4508
      %v4510 = vrot.slane %v4503, %v4509
      %v4511 = vcombine.low %v3591, %v3592
      %v4513 = vunpack.c.l.s4 1983009808
      %v4514 = vunpack.c.0.s8 %v4513
      %v4515 = vlaneseq
      %v4516 = vshrl.u32 %v4515, 7
      %v4517 = vsub.s32 %v4514, %v4516
      %v4518 = vrot.slane %v4511, %v4517
      %v4519 = vcombine.low %v4494, %v4502
      %v4521 = vunpack.c.l.s4 1934713408
      %v4522 = vunpack.c.0.s8 %v4521
      %v4523 = vlaneseq
      %v4524 = vshrl.u32 %v4523, 7
      %v4525 = vsub.s32 %v4522, %v4524
      %v4526 = vrot.slane %v4519, %v4525
      %v4527 = vcombine.low %v4510, %v4518
      %v4529 = vunpack.c.l.s4 1934713408
      %v4530 = vunpack.c.0.s8 %v4529
      %v4531 = vlaneseq
      %v4532 = vshrl.u32 %v4531, 7
      %v4533 = vsub.s32 %v4530, %v4532
      %v4534 = vrot.slane %v4527, %v4533
      %v4535 = vcombine.low %v4526, %v4534
      %v4536 = vcombine.high %v4526, %v4534
      %v4537 = vcombine.low %v3631, %v3638
      %v4539 = vunpack.c.l.s4 1983009808
      %v4540 = vunpack.c.0.s8 %v4539
      %v4541 = vlaneseq
      %v4542 = vshrl.u32 %v4541, 7
      %v4543 = vsub.s32 %v4540, %v4542
      %v4544 = vrot.slane %v4537, %v4543
      %v4545 = vcombine.low %v3655, %v3656
      %v4547 = vunpack.c.l.s4 1983009808
      %v4548 = vunpack.c.0.s8 %v4547
      %v4549 = vlaneseq
      %v4550 = vshrl.u32 %v4549, 7
      %v4551 = vsub.s32 %v4548, %v4550
      %v4552 = vrot.slane %v4545, %v4551
      %v4553 = vcombine.low %v3647, %v3654
      %v4555 = vunpack.c.l.s4 1983009808
      %v4556 = vunpack.c.0.s8 %v4555
      %v4557 = vlaneseq
      %v4558 = vshrl.u32 %v4557, 7
      %v4559 = vsub.s32 %v4556, %v4558
      %v4560 = vrot.slane %v4553, %v4559
      %v4561 = vcombine.low %v3657, %v3658
      %v4563 = vunpack.c.l.s4 1983009808
      %v4564 = vunpack.c.0.s8 %v4563
      %v4565 = vlaneseq
      %v4566 = vshrl.u32 %v4565, 7
      %v4567 = vsub.s32 %v4564, %v4566
      %v4568 = vrot.slane %v4561, %v4567
      %v4569 = vcombine.low %v4544, %v4552
      %v4571 = vunpack.c.l.s4 1934713408
      %v4572 = vunpack.c.0.s8 %v4571
      %v4573 = vlaneseq
      %v4574 = vshrl.u32 %v4573, 7
      %v4575 = vsub.s32 %v4572, %v4574
      %v4576 = vrot.slane %v4569, %v4575
      %v4577 = vcombine.low %v4560, %v4568
      %v4579 = vunpack.c.l.s4 1934713408
      %v4580 = vunpack.c.0.s8 %v4579
      %v4581 = vlaneseq
      %v4582 = vshrl.u32 %v4581, 7
      %v4583 = vsub.s32 %v4580, %v4582
      %v4584 = vrot.slane %v4577, %v4583
      %v4585 = vcombine.low %v4576, %v4584
      %v4586 = vcombine.high %v4576, %v4584
      %v4587 = vcombine.low %v3697, %v3704
      %v4589 = vunpack.c.l.s4 1983009808
      %v4590 = vunpack.c.0.s8 %v4589
      %v4591 = vlaneseq
      %v4592 = vshrl.u32 %v4591, 7
      %v4593 = vsub.s32 %v4590, %v4592
      %v4594 = vrot.slane %v4587, %v4593
      %v4595 = vcombine.low %v3721, %v3722
      %v4597 = vunpack.c.l.s4 1983009808
      %v4598 = vunpack.c.0.s8 %v4597
      %v4599 = vlaneseq
      %v4600 = vshrl.u32 %v4599, 7
      %v4601 = vsub.s32 %v4598, %v4600
      %v4602 = vrot.slane %v4595, %v4601
      %v4603 = vcombine.low %v3713, %v3720
      %v4605 = vunpack.c.l.s4 1983009808
      %v4606 = vunpack.c.0.s8 %v4605
      %v4607 = vlaneseq
      %v4608 = vshrl.u32 %v4607, 7
      %v4609 = vsub.s32 %v4606, %v4608
      %v4610 = vrot.slane %v4603, %v4609
      %v4611 = vcombine.low %v3723, %v3724
      %v4613 = vunpack.c.l.s4 1983009808
      %v4614 = vunpack.c.0.s8 %v4613
      %v4615 = vlaneseq
      %v4616 = vshrl.u32 %v4615, 7
      %v4617 = vsub.s32 %v4614, %v4616
      %v4618 = vrot.slane %v4611, %v4617
      %v4619 = vcombine.low %v4594, %v4602
      %v4621 = vunpack.c.l.s4 1934713408
      %v4622 = vunpack.c.0.s8 %v4621
      %v4623 = vlaneseq
      %v4624 = vshrl.u32 %v4623, 7
      %v4625 = vsub.s32 %v4622, %v4624
      %v4626 = vrot.slane %v4619, %v4625
      %v4627 = vcombine.low %v4610, %v4618
      %v4629 = vunpack.c.l.s4 1934713408
      %v4630 = vunpack.c.0.s8 %v4629
      %v4631 = vlaneseq
      %v4632 = vshrl.u32 %v4631, 7
      %v4633 = vsub.s32 %v4630, %v4632
      %v4634 = vrot.slane %v4627, %v4633
      %v4635 = vcombine.low %v4626, %v4634
      %v4636 = vcombine.high %v4626, %v4634
      %v4637 = vcombine.low %v3763, %v3770
      %v4639 = vunpack.c.l.s4 1983009808
      %v4640 = vunpack.c.0.s8 %v4639
      %v4641 = vlaneseq
      %v4642 = vshrl.u32 %v4641, 7
      %v4643 = vsub.s32 %v4640, %v4642
      %v4644 = vrot.slane %v4637, %v4643
      %v4645 = vcombine.low %v3787, %v3788
      %v4647 = vunpack.c.l.s4 1983009808
      %v4648 = vunpack.c.0.s8 %v4647
      %v4649 = vlaneseq
      %v4650 = vshrl.u32 %v4649, 7
      %v4651 = vsub.s32 %v4648, %v4650
      %v4652 = vrot.slane %v4645, %v4651
      %v4653 = vcombine.low %v3779, %v3786
      %v4655 = vunpack.c.l.s4 1983009808
      %v4656 = vunpack.c.0.s8 %v4655
      %v4657 = vlaneseq
      %v4658 = vshrl.u32 %v4657, 7
      %v4659 = vsub.s32 %v4656, %v4658
      %v4660 = vrot.slane %v4653, %v4659
      %v4661 = vcombine.low %v3789, %v3790
      %v4663 = vunpack.c.l.s4 1983009808
      %v4664 = vunpack.c.0.s8 %v4663
      %v4665 = vlaneseq
      %v4666 = vshrl.u32 %v4665, 7
      %v4667 = vsub.s32 %v4664, %v4666
      %v4668 = vrot.slane %v4661, %v4667
      %v4669 = vcombine.low %v4644, %v4652
      %v4671 = vunpack.c.l.s4 1934713408
      %v4672 = vunpack.c.0.s8 %v4671
      %v4673 = vlaneseq
      %v4674 = vshrl.u32 %v4673, 7
      %v4675 = vsub.s32 %v4672, %v4674
      %v4676 = vrot.slane %v4669, %v4675
      %v4677 = vcombine.low %v4660, %v4668
      %v4679 = vunpack.c.l.s4 1934713408
      %v4680 = vunpack.c.0.s8 %v4679
      %v4681 = vlaneseq
      %v4682 = vshrl.u32 %v4681, 7
      %v4683 = vsub.s32 %v4680, %v4682
      %v4684 = vrot.slane %v4677, %v4683
      %v4685 = vcombine.low %v4676, %v4684
      %v4686 = vcombine.high %v4676, %v4684
      %v4687 = vcombine.low %v3829, %v3836
      %v4689 = vunpack.c.l.s4 1983009808
      %v4690 = vunpack.c.0.s8 %v4689
      %v4691 = vlaneseq
      %v4692 = vshrl.u32 %v4691, 7
      %v4693 = vsub.s32 %v4690, %v4692
      %v4694 = vrot.slane %v4687, %v4693
      %v4695 = vcombine.low %v3853, %v3854
      %v4697 = vunpack.c.l.s4 1983009808
      %v4698 = vunpack.c.0.s8 %v4697
      %v4699 = vlaneseq
      %v4700 = vshrl.u32 %v4699, 7
      %v4701 = vsub.s32 %v4698, %v4700
      %v4702 = vrot.slane %v4695, %v4701
      %v4703 = vcombine.low %v3845, %v3852
      %v4705 = vunpack.c.l.s4 1983009808
      %v4706 = vunpack.c.0.s8 %v4705
      %v4707 = vlaneseq
      %v4708 = vshrl.u32 %v4707, 7
      %v4709 = vsub.s32 %v4706, %v4708
      %v4710 = vrot.slane %v4703, %v4709
      %v4711 = vcombine.low %v3855, %v3856
      %v4713 = vunpack.c.l.s4 1983009808
      %v4714 = vunpack.c.0.s8 %v4713
      %v4715 = vlaneseq
      %v4716 = vshrl.u32 %v4715, 7
      %v4717 = vsub.s32 %v4714, %v4716
      %v4718 = vrot.slane %v4711, %v4717
      %v4719 = vcombine.low %v4694, %v4702
      %v4721 = vunpack.c.l.s4 1934713408
      %v4722 = vunpack.c.0.s8 %v4721
      %v4723 = vlaneseq
      %v4724 = vshrl.u32 %v4723, 7
      %v4725 = vsub.s32 %v4722, %v4724
      %v4726 = vrot.slane %v4719, %v4725
      %v4727 = vcombine.low %v4710, %v4718
      %v4729 = vunpack.c.l.s4 1934713408
      %v4730 = vunpack.c.0.s8 %v4729
      %v4731 = vlaneseq
      %v4732 = vshrl.u32 %v4731, 7
      %v4733 = vsub.s32 %v4730, %v4732
      %v4734 = vrot.slane %v4727, %v4733
      %v4735 = vcombine.low %v4726, %v4734
      %v4736 = vcombine.high %v4726, %v4734
      %v4737 = vcombine.low %v3895, %v3902
      %v4739 = vunpack.c.l.s4 1983009808
      %v4740 = vunpack.c.0.s8 %v4739
      %v4741 = vlaneseq
      %v4742 = vshrl.u32 %v4741, 7
      %v4743 = vsub.s32 %v4740, %v4742
      %v4744 = vrot.slane %v4737, %v4743
      %v4745 = vcombine.low %v3919, %v3920
      %v4747 = vunpack.c.l.s4 1983009808
      %v4748 = vunpack.c.0.s8 %v4747
      %v4749 = vlaneseq
      %v4750 = vshrl.u32 %v4749, 7
      %v4751 = vsub.s32 %v4748, %v4750
      %v4752 = vrot.slane %v4745, %v4751
      %v4753 = vcombine.low %v3911, %v3918
      %v4755 = vunpack.c.l.s4 1983009808
      %v4756 = vunpack.c.0.s8 %v4755
      %v4757 = vlaneseq
      %v4758 = vshrl.u32 %v4757, 7
      %v4759 = vsub.s32 %v4756, %v4758
      %v4760 = vrot.slane %v4753, %v4759
      %v4761 = vcombine.low %v3921, %v3922
      %v4763 = vunpack.c.l.s4 1983009808
      %v4764 = vunpack.c.0.s8 %v4763
      %v4765 = vlaneseq
      %v4766 = vshrl.u32 %v4765, 7
      %v4767 = vsub.s32 %v4764, %v4766
      %v4768 = vrot.slane %v4761, %v4767
      %v4769 = vcombine.low %v4744, %v4752
      %v4771 = vunpack.c.l.s4 1934713408
      %v4772 = vunpack.c.0.s8 %v4771
      %v4773 = vlaneseq
      %v4774 = vshrl.u32 %v4773, 7
      %v4775 = vsub.s32 %v4772, %v4774
      %v4776 = vrot.slane %v4769, %v4775
      %v4777 = vcombine.low %v4760, %v4768
      %v4779 = vunpack.c.l.s4 1934713408
      %v4780 = vunpack.c.0.s8 %v4779
      %v4781 = vlaneseq
      %v4782 = vshrl.u32 %v4781, 7
      %v4783 = vsub.s32 %v4780, %v4782
      %v4784 = vrot.slane %v4777, %v4783
      %v4785 = vcombine.low %v4776, %v4784
      %v4786 = vcombine.high %v4776, %v4784
      %v4787 = vcombine.low %v3961, %v3968
      %v4789 = vunpack.c.l.s4 1983009808
      %v4790 = vunpack.c.0.s8 %v4789
      %v4791 = vlaneseq
      %v4792 = vshrl.u32 %v4791, 7
      %v4793 = vsub.s32 %v4790, %v4792
      %v4794 = vrot.slane %v4787, %v4793
      %v4795 = vcombine.low %v3985, %v3986
      %v4797 = vunpack.c.l.s4 1983009808
      %v4798 = vunpack.c.0.s8 %v4797
      %v4799 = vlaneseq
      %v4800 = vshrl.u32 %v4799, 7
      %v4801 = vsub.s32 %v4798, %v4800
      %v4802 = vrot.slane %v4795, %v4801
      %v4803 = vcombine.low %v3977, %v3984
      %v4805 = vunpack.c.l.s4 1983009808
      %v4806 = vunpack.c.0.s8 %v4805
      %v4807 = vlaneseq
      %v4808 = vshrl.u32 %v4807, 7
      %v4809 = vsub.s32 %v4806, %v4808
      %v4810 = vrot.slane %v4803, %v4809
      %v4811 = vcombine.low %v3987, %v3988
      %v4813 = vunpack.c.l.s4 1983009808
      %v4814 = vunpack.c.0.s8 %v4813
      %v4815 = vlaneseq
      %v4816 = vshrl.u32 %v4815, 7
      %v4817 = vsub.s32 %v4814, %v4816
      %v4818 = vrot.slane %v4811, %v4817
      %v4819 = vcombine.low %v4794, %v4802
      %v4821 = vunpack.c.l.s4 1934713408
      %v4822 = vunpack.c.0.s8 %v4821
      %v4823 = vlaneseq
      %v4824 = vshrl.u32 %v4823, 7
      %v4825 = vsub.s32 %v4822, %v4824
      %v4826 = vrot.slane %v4819, %v4825
      %v4827 = vcombine.low %v4810, %v4818
      %v4829 = vunpack.c.l.s4 1934713408
      %v4830 = vunpack.c.0.s8 %v4829
      %v4831 = vlaneseq
      %v4832 = vshrl.u32 %v4831, 7
      %v4833 = vsub.s32 %v4830, %v4832
      %v4834 = vrot.slane %v4827, %v4833
      %v4835 = vcombine.low %v4826, %v4834
      %v4836 = vcombine.high %v4826, %v4834
      %v4837 = vcombine.low %v4027, %v4034
      %v4839 = vunpack.c.l.s4 1983009808
      %v4840 = vunpack.c.0.s8 %v4839
      %v4841 = vlaneseq
      %v4842 = vshrl.u32 %v4841, 7
      %v4843 = vsub.s32 %v4840, %v4842
      %v4844 = vrot.slane %v4837, %v4843
      %v4845 = vcombine.low %v4051, %v4052
      %v4847 = vunpack.c.l.s4 1983009808
      %v4848 = vunpack.c.0.s8 %v4847
      %v4849 = vlaneseq
      %v4850 = vshrl.u32 %v4849, 7
      %v4851 = vsub.s32 %v4848, %v4850
      %v4852 = vrot.slane %v4845, %v4851
      %v4853 = vcombine.low %v4043, %v4050
      %v4855 = vunpack.c.l.s4 1983009808
      %v4856 = vunpack.c.0.s8 %v4855
      %v4857 = vlaneseq
      %v4858 = vshrl.u32 %v4857, 7
      %v4859 = vsub.s32 %v4856, %v4858
      %v4860 = vrot.slane %v4853, %v4859
      %v4861 = vcombine.low %v4053, %v4054
      %v4863 = vunpack.c.l.s4 1983009808
      %v4864 = vunpack.c.0.s8 %v4863
      %v4865 = vlaneseq
      %v4866 = vshrl.u32 %v4865, 7
      %v4867 = vsub.s32 %v4864, %v4866
      %v4868 = vrot.slane %v4861, %v4867
      %v4869 = vcombine.low %v4844, %v4852
      %v4871 = vunpack.c.l.s4 1934713408
      %v4872 = vunpack.c.0.s8 %v4871
      %v4873 = vlaneseq
      %v4874 = vshrl.u32 %v4873, 7
      %v4875 = vsub.s32 %v4872, %v4874
      %v4876 = vrot.slane %v4869, %v4875
      %v4877 = vcombine.low %v4860, %v4868
      %v4879 = vunpack.c.l.s4 1934713408
      %v4880 = vunpack.c.0.s8 %v4879
      %v4881 = vlaneseq
      %v4882 = vshrl.u32 %v4881, 7
      %v4883 = vsub.s32 %v4880, %v4882
      %v4884 = vrot.slane %v4877, %v4883
      %v4885 = vcombine.low %v4876, %v4884
      %v4886 = vcombine.high %v4876, %v4884
      %v4887 = vcombine.low %v4093, %v4100
      %v4889 = vunpack.c.l.s4 1983009808
      %v4890 = vunpack.c.0.s8 %v4889
      %v4891 = vlaneseq
      %v4892 = vshrl.u32 %v4891, 7
      %v4893 = vsub.s32 %v4890, %v4892
      %v4894 = vrot.slane %v4887, %v4893
      %v4895 = vcombine.low %v4117, %v4118
      %v4897 = vunpack.c.l.s4 1983009808
      %v4898 = vunpack.c.0.s8 %v4897
      %v4899 = vlaneseq
      %v4900 = vshrl.u32 %v4899, 7
      %v4901 = vsub.s32 %v4898, %v4900
      %v4902 = vrot.slane %v4895, %v4901
      %v4903 = vcombine.low %v4109, %v4116
      %v4905 = vunpack.c.l.s4 1983009808
      %v4906 = vunpack.c.0.s8 %v4905
      %v4907 = vlaneseq
      %v4908 = vshrl.u32 %v4907, 7
      %v4909 = vsub.s32 %v4906, %v4908
      %v4910 = vrot.slane %v4903, %v4909
      %v4911 = vcombine.low %v4119, %v4120
      %v4913 = vunpack.c.l.s4 1983009808
      %v4914 = vunpack.c.0.s8 %v4913
      %v4915 = vlaneseq
      %v4916 = vshrl.u32 %v4915, 7
      %v4917 = vsub.s32 %v4914, %v4916
      %v4918 = vrot.slane %v4911, %v4917
      %v4919 = vcombine.low %v4894, %v4902
      %v4921 = vunpack.c.l.s4 1934713408
      %v4922 = vunpack.c.0.s8 %v4921
      %v4923 = vlaneseq
      %v4924 = vshrl.u32 %v4923, 7
      %v4925 = vsub.s32 %v4922, %v4924
      %v4926 = vrot.slane %v4919, %v4925
      %v4927 = vcombine.low %v4910, %v4918
      %v4929 = vunpack.c.l.s4 1934713408
      %v4930 = vunpack.c.0.s8 %v4929
      %v4931 = vlaneseq
      %v4932 = vshrl.u32 %v4931, 7
      %v4933 = vsub.s32 %v4930, %v4932
      %v4934 = vrot.slane %v4927, %v4933
      %v4935 = vcombine.low %v4926, %v4934
      %v4936 = vcombine.high %v4926, %v4934
      %v4937 = vcombine.low %v4159, %v4166
      %v4939 = vunpack.c.l.s4 1983009808
      %v4940 = vunpack.c.0.s8 %v4939
      %v4941 = vlaneseq
      %v4942 = vshrl.u32 %v4941, 7
      %v4943 = vsub.s32 %v4940, %v4942
      %v4944 = vrot.slane %v4937, %v4943
      %v4945 = vcombine.low %v4183, %v4184
      %v4947 = vunpack.c.l.s4 1983009808
      %v4948 = vunpack.c.0.s8 %v4947
      %v4949 = vlaneseq
      %v4950 = vshrl.u32 %v4949, 7
      %v4951 = vsub.s32 %v4948, %v4950
      %v4952 = vrot.slane %v4945, %v4951
      %v4953 = vcombine.low %v4175, %v4182
      %v4955 = vunpack.c.l.s4 1983009808
      %v4956 = vunpack.c.0.s8 %v4955
      %v4957 = vlaneseq
      %v4958 = vshrl.u32 %v4957, 7
      %v4959 = vsub.s32 %v4956, %v4958
      %v4960 = vrot.slane %v4953, %v4959
      %v4961 = vcombine.low %v4185, %v4186
      %v4963 = vunpack.c.l.s4 1983009808
      %v4964 = vunpack.c.0.s8 %v4963
      %v4965 = vlaneseq
      %v4966 = vshrl.u32 %v4965, 7
      %v4967 = vsub.s32 %v4964, %v4966
      %v4968 = vrot.slane %v4961, %v4967
      %v4969 = vcombine.low %v4944, %v4952
      %v4971 = vunpack.c.l.s4 1934713408
      %v4972 = vunpack.c.0.s8 %v4971
      %v4973 = vlaneseq
      %v4974 = vshrl.u32 %v4973, 7
      %v4975 = vsub.s32 %v4972, %v4974
      %v4976 = vrot.slane %v4969, %v4975
      %v4977 = vcombine.low %v4960, %v4968
      %v4979 = vunpack.c.l.s4 1934713408
      %v4980 = vunpack.c.0.s8 %v4979
      %v4981 = vlaneseq
      %v4982 = vshrl.u32 %v4981, 7
      %v4983 = vsub.s32 %v4980, %v4982
      %v4984 = vrot.slane %v4977, %v4983
      %v4985 = vcombine.low %v4976, %v4984
      %v4986 = vcombine.high %v4976, %v4984
      %v4989 = vpack.i.b16 %v4285, %v4235
      %v4990 = vshrl.u32 %v4235, 16
      %v4991 = vshrl.u32 %v4285, 16
      %v4992 = vpack.i.b16 %v4991, %v4990
      %v4995 = vpack.i.b16 %v4286, %v4236
      %v4996 = vshrl.u32 %v4236, 16
      %v4997 = vshrl.u32 %v4286, 16
      %v4998 = vpack.i.b16 %v4997, %v4996
      %v5001 = vpack.i.b16 %v4385, %v4335
      %v5002 = vshrl.u32 %v4335, 16
      %v5003 = vshrl.u32 %v4385, 16
      %v5004 = vpack.i.b16 %v5003, %v5002
      %v5007 = vpack.i.b16 %v4386, %v4336
      %v5008 = vshrl.u32 %v4336, 16
      %v5009 = vshrl.u32 %v4386, 16
      %v5010 = vpack.i.b16 %v5009, %v5008
      %v5013 = vpack.i.b16 %v4485, %v4435
      %v5014 = vshrl.u32 %v4435, 16
      %v5015 = vshrl.u32 %v4485, 16
      %v5016 = vpack.i.b16 %v5015, %v5014
      %v5019 = vpack.i.b16 %v4486, %v4436
      %v5020 = vshrl.u32 %v4436, 16
      %v5021 = vshrl.u32 %v4486, 16
      %v5022 = vpack.i.b16 %v5021, %v5020
      %v5025 = vpack.i.b16 %v4585, %v4535
      %v5026 = vshrl.u32 %v4535, 16
      %v5027 = vshrl.u32 %v4585, 16
      %v5028 = vpack.i.b16 %v5027, %v5026
      %v5031 = vpack.i.b16 %v4586, %v4536
      %v5032 = vshrl.u32 %v4536, 16
      %v5033 = vshrl.u32 %v4586, 16
      %v5034 = vpack.i.b16 %v5033, %v5032
      %v5037 = vpack.i.b16 %v4685, %v4635
      %v5038 = vshrl.u32 %v4635, 16
      %v5039 = vshrl.u32 %v4685, 16
      %v5040 = vpack.i.b16 %v5039, %v5038
      %v5043 = vpack.i.b16 %v4686, %v4636
      %v5044 = vshrl.u32 %v4636, 16
      %v5045 = vshrl.u32 %v4686, 16
      %v5046 = vpack.i.b16 %v5045, %v5044
      %v5049 = vpack.i.b16 %v4785, %v4735
      %v5050 = vshrl.u32 %v4735, 16
      %v5051 = vshrl.u32 %v4785, 16
      %v5052 = vpack.i.b16 %v5051, %v5050
      %v5055 = vpack.i.b16 %v4786, %v4736
      %v5056 = vshrl.u32 %v4736, 16
      %v5057 = vshrl.u32 %v4786, 16
      %v5058 = vpack.i.b16 %v5057, %v5056
      %v5061 = vpack.i.b16 %v4885, %v4835
      %v5062 = vshrl.u32 %v4835, 16
      %v5063 = vshrl.u32 %v4885, 16
      %v5064 = vpack.i.b16 %v5063, %v5062
      %v5067 = vpack.i.b16 %v4886, %v4836
      %v5068 = vshrl.u32 %v4836, 16
      %v5069 = vshrl.u32 %v4886, 16
      %v5070 = vpack.i.b16 %v5069, %v5068
      %v5073 = vpack.i.b16 %v4985, %v4935
      %v5074 = vshrl.u32 %v4935, 16
      %v5075 = vshrl.u32 %v4985, 16
      %v5076 = vpack.i.b16 %v5075, %v5074
      %v5079 = vpack.i.b16 %v4986, %v4936
      %v5080 = vshrl.u32 %v4936, 16
      %v5081 = vshrl.u32 %v4986, 16
      %v5082 = vpack.i.b16 %v5081, %v5080
      %5091 = vrot.lane.b32.xlu0 %v797, 120
      %v5092 = vpop.permute.xlu0 %5091
      %5093 = vrot.lane.b32.xlu0 %v798, 120
      %v5094 = vpop.permute.xlu0 %5093
      %5095 = vrot.lane.b32.xlu0 %v799, 120
      %v5096 = vpop.permute.xlu0 %5095
      %5097 = vrot.lane.b32.xlu0 %v800, 120
      %v5098 = vpop.permute.xlu0 %5097
      %5099 = vrot.lane.b32.xlu0 %v801, 120
      %v5100 = vpop.permute.xlu0 %5099
      %5101 = vrot.lane.b32.xlu0 %v802, 120
      %v5102 = vpop.permute.xlu0 %5101
      %5103 = vrot.lane.b32.xlu0 %v803, 120
      %v5104 = vpop.permute.xlu0 %5103
      %5105 = vrot.lane.b32.xlu0 %v804, 120
      %v5106 = vpop.permute.xlu0 %5105
      %5107 = vrot.lane.b32.xlu0 %v797, 112
      %v5108 = vpop.permute.xlu0 %5107
      %5109 = vrot.lane.b32.xlu0 %v798, 112
      %v5110 = vpop.permute.xlu0 %5109
      %5111 = vrot.lane.b32.xlu0 %v799, 112
      %v5112 = vpop.permute.xlu0 %5111
      %5113 = vrot.lane.b32.xlu0 %v800, 112
      %v5114 = vpop.permute.xlu0 %5113
      %5115 = vrot.lane.b32.xlu0 %v801, 112
      %v5116 = vpop.permute.xlu0 %5115
      %5117 = vrot.lane.b32.xlu0 %v802, 112
      %v5118 = vpop.permute.xlu0 %5117
      %5119 = vrot.lane.b32.xlu0 %v803, 112
      %v5120 = vpop.permute.xlu0 %5119
      %5121 = vrot.lane.b32.xlu0 %v804, 112
      %v5122 = vpop.permute.xlu0 %5121
      %5123 = vrot.lane.b32.xlu0 %v797, 104
      %v5124 = vpop.permute.xlu0 %5123
      %5125 = vrot.lane.b32.xlu0 %v798, 104
      %v5126 = vpop.permute.xlu0 %5125
      %5127 = vrot.lane.b32.xlu0 %v799, 104
      %v5128 = vpop.permute.xlu0 %5127
      %5129 = vrot.lane.b32.xlu0 %v800, 104
      %v5130 = vpop.permute.xlu0 %5129
      %5131 = vrot.lane.b32.xlu0 %v801, 104
      %v5132 = vpop.permute.xlu0 %5131
      %5133 = vrot.lane.b32.xlu0 %v802, 104
      %v5134 = vpop.permute.xlu0 %5133
      %5135 = vrot.lane.b32.xlu0 %v803, 104
      %v5136 = vpop.permute.xlu0 %5135
      %5137 = vrot.lane.b32.xlu0 %v804, 104
      %v5138 = vpop.permute.xlu0 %5137
      %v5141 = vpack.i.b16 %v5092, %v797
      %v5143 = vshrl.u32 %v797, 16
      %v5144 = vshrl.u32 %v5092, 16
      %v5145 = vpack.i.b16 %v5144, %v5143
      %v5149 = vpack.i.b16 %v5124, %v5108
      %v5151 = vshrl.u32 %v5108, 16
      %v5152 = vshrl.u32 %v5124, 16
      %v5153 = vpack.i.b16 %v5152, %v5151
      %v5157 = vpack.i.b16 %v5094, %v798
      %v5159 = vshrl.u32 %v798, 16
      %v5160 = vshrl.u32 %v5094, 16
      %v5161 = vpack.i.b16 %v5160, %v5159
      %v5165 = vpack.i.b16 %v5126, %v5110
      %v5167 = vshrl.u32 %v5110, 16
      %v5168 = vshrl.u32 %v5126, 16
      %v5169 = vpack.i.b16 %v5168, %v5167
      %v5173 = vpack.i.b16 %v5096, %v799
      %v5175 = vshrl.u32 %v799, 16
      %v5176 = vshrl.u32 %v5096, 16
      %v5177 = vpack.i.b16 %v5176, %v5175
      %v5181 = vpack.i.b16 %v5128, %v5112
      %v5183 = vshrl.u32 %v5112, 16
      %v5184 = vshrl.u32 %v5128, 16
      %v5185 = vpack.i.b16 %v5184, %v5183
      %v5189 = vpack.i.b16 %v5098, %v800
      %v5191 = vshrl.u32 %v800, 16
      %v5192 = vshrl.u32 %v5098, 16
      %v5193 = vpack.i.b16 %v5192, %v5191
      %v5197 = vpack.i.b16 %v5130, %v5114
      %v5199 = vshrl.u32 %v5114, 16
      %v5200 = vshrl.u32 %v5130, 16
      %v5201 = vpack.i.b16 %v5200, %v5199
      %v5205 = vpack.i.b16 %v5100, %v801
      %v5207 = vshrl.u32 %v801, 16
      %v5208 = vshrl.u32 %v5100, 16
      %v5209 = vpack.i.b16 %v5208, %v5207
      %v5213 = vpack.i.b16 %v5132, %v5116
      %v5215 = vshrl.u32 %v5116, 16
      %v5216 = vshrl.u32 %v5132, 16
      %v5217 = vpack.i.b16 %v5216, %v5215
      %v5221 = vpack.i.b16 %v5102, %v802
      %v5223 = vshrl.u32 %v802, 16
      %v5224 = vshrl.u32 %v5102, 16
      %v5225 = vpack.i.b16 %v5224, %v5223
      %v5229 = vpack.i.b16 %v5134, %v5118
      %v5231 = vshrl.u32 %v5118, 16
      %v5232 = vshrl.u32 %v5134, 16
      %v5233 = vpack.i.b16 %v5232, %v5231
      %v5237 = vpack.i.b16 %v5104, %v803
      %v5239 = vshrl.u32 %v803, 16
      %v5240 = vshrl.u32 %v5104, 16
      %v5241 = vpack.i.b16 %v5240, %v5239
      %v5245 = vpack.i.b16 %v5136, %v5120
      %v5247 = vshrl.u32 %v5120, 16
      %v5248 = vshrl.u32 %v5136, 16
      %v5249 = vpack.i.b16 %v5248, %v5247
      %v5253 = vpack.i.b16 %v5106, %v804
      %v5255 = vshrl.u32 %v804, 16
      %v5256 = vshrl.u32 %v5106, 16
      %v5257 = vpack.i.b16 %v5256, %v5255
      %v5261 = vpack.i.b16 %v5138, %v5122
      %v5263 = vshrl.u32 %v5122, 16
      %v5264 = vshrl.u32 %v5138, 16
      %v5265 = vpack.i.b16 %v5264, %v5263
      %v5267 = vcombine.high %v5141, %v878
      %v5269 = vunpack.c.l.s4 1983009808
      %v5270 = vunpack.c.0.s8 %v5269
      %v5271 = vlaneseq
      %v5272 = vshrl.u32 %v5271, 7
      %v5273 = vsub.s32 %v5270, %v5272
      %v5274 = vrot.slane %v5141, %v5273
      %v5276 = vunpack.c.l.s4 1983009808
      %v5277 = vunpack.c.0.s8 %v5276
      %v5278 = vlaneseq
      %v5279 = vshrl.u32 %v5278, 7
      %v5280 = vsub.s32 %v5277, %v5279
      %v5281 = vrot.slane %v5267, %v5280
      %v5282 = vcombine.high %v5149, %v878
      %v5284 = vunpack.c.l.s4 1983009808
      %v5285 = vunpack.c.0.s8 %v5284
      %v5286 = vlaneseq
      %v5287 = vshrl.u32 %v5286, 7
      %v5288 = vsub.s32 %v5285, %v5287
      %v5289 = vrot.slane %v5149, %v5288
      %v5291 = vunpack.c.l.s4 1983009808
      %v5292 = vunpack.c.0.s8 %v5291
      %v5293 = vlaneseq
      %v5294 = vshrl.u32 %v5293, 7
      %v5295 = vsub.s32 %v5292, %v5294
      %v5296 = vrot.slane %v5282, %v5295
      %v5297 = vcombine.low %v5274, %v5289
      %v5298 = vcombine.high %v5274, %v5289
      %v5300 = vunpack.c.l.s4 1934713408
      %v5301 = vunpack.c.0.s8 %v5300
      %v5302 = vlaneseq
      %v5303 = vshrl.u32 %v5302, 7
      %v5304 = vsub.s32 %v5301, %v5303
      %v5305 = vrot.slane %v5297, %v5304
      %v5307 = vunpack.c.l.s4 1934713408
      %v5308 = vunpack.c.0.s8 %v5307
      %v5309 = vlaneseq
      %v5310 = vshrl.u32 %v5309, 7
      %v5311 = vsub.s32 %v5308, %v5310
      %v5312 = vrot.slane %v5298, %v5311
      %v5313 = vcombine.low %v5281, %v5296
      %v5314 = vcombine.high %v5281, %v5296
      %v5316 = vunpack.c.l.s4 1934713408
      %v5317 = vunpack.c.0.s8 %v5316
      %v5318 = vlaneseq
      %v5319 = vshrl.u32 %v5318, 7
      %v5320 = vsub.s32 %v5317, %v5319
      %v5321 = vrot.slane %v5313, %v5320
      %v5323 = vunpack.c.l.s4 1934713408
      %v5324 = vunpack.c.0.s8 %v5323
      %v5325 = vlaneseq
      %v5326 = vshrl.u32 %v5325, 7
      %v5327 = vsub.s32 %v5324, %v5326
      %v5328 = vrot.slane %v5314, %v5327
      %v5329 = vcombine.high %v5305, 0
      %v5330 = vcombine.high %v5312, 0
      %v5331 = vcombine.high %v5321, 0
      %v5332 = vcombine.high %v5328, 0
      %v5333 = vcombine.high %v5145, %v881
      %v5335 = vunpack.c.l.s4 1983009808
      %v5336 = vunpack.c.0.s8 %v5335
      %v5337 = vlaneseq
      %v5338 = vshrl.u32 %v5337, 7
      %v5339 = vsub.s32 %v5336, %v5338
      %v5340 = vrot.slane %v5145, %v5339
      %v5342 = vunpack.c.l.s4 1983009808
      %v5343 = vunpack.c.0.s8 %v5342
      %v5344 = vlaneseq
      %v5345 = vshrl.u32 %v5344, 7
      %v5346 = vsub.s32 %v5343, %v5345
      %v5347 = vrot.slane %v5333, %v5346
      %v5348 = vcombine.high %v5153, %v881
      %v5350 = vunpack.c.l.s4 1983009808
      %v5351 = vunpack.c.0.s8 %v5350
      %v5352 = vlaneseq
      %v5353 = vshrl.u32 %v5352, 7
      %v5354 = vsub.s32 %v5351, %v5353
      %v5355 = vrot.slane %v5153, %v5354
      %v5357 = vunpack.c.l.s4 1983009808
      %v5358 = vunpack.c.0.s8 %v5357
      %v5359 = vlaneseq
      %v5360 = vshrl.u32 %v5359, 7
      %v5361 = vsub.s32 %v5358, %v5360
      %v5362 = vrot.slane %v5348, %v5361
      %v5363 = vcombine.low %v5340, %v5355
      %v5364 = vcombine.high %v5340, %v5355
      %v5366 = vunpack.c.l.s4 1934713408
      %v5367 = vunpack.c.0.s8 %v5366
      %v5368 = vlaneseq
      %v5369 = vshrl.u32 %v5368, 7
      %v5370 = vsub.s32 %v5367, %v5369
      %v5371 = vrot.slane %v5363, %v5370
      %v5373 = vunpack.c.l.s4 1934713408
      %v5374 = vunpack.c.0.s8 %v5373
      %v5375 = vlaneseq
      %v5376 = vshrl.u32 %v5375, 7
      %v5377 = vsub.s32 %v5374, %v5376
      %v5378 = vrot.slane %v5364, %v5377
      %v5379 = vcombine.low %v5347, %v5362
      %v5380 = vcombine.high %v5347, %v5362
      %v5382 = vunpack.c.l.s4 1934713408
      %v5383 = vunpack.c.0.s8 %v5382
      %v5384 = vlaneseq
      %v5385 = vshrl.u32 %v5384, 7
      %v5386 = vsub.s32 %v5383, %v5385
      %v5387 = vrot.slane %v5379, %v5386
      %v5389 = vunpack.c.l.s4 1934713408
      %v5390 = vunpack.c.0.s8 %v5389
      %v5391 = vlaneseq
      %v5392 = vshrl.u32 %v5391, 7
      %v5393 = vsub.s32 %v5390, %v5392
      %v5394 = vrot.slane %v5380, %v5393
      %v5395 = vcombine.high %v5371, 0
      %v5396 = vcombine.high %v5378, 0
      %v5397 = vcombine.high %v5387, 0
      %v5398 = vcombine.high %v5394, 0
      %v5399 = vcombine.high %v5157, %v878
      %v5401 = vunpack.c.l.s4 1983009808
      %v5402 = vunpack.c.0.s8 %v5401
      %v5403 = vlaneseq
      %v5404 = vshrl.u32 %v5403, 7
      %v5405 = vsub.s32 %v5402, %v5404
      %v5406 = vrot.slane %v5157, %v5405
      %v5408 = vunpack.c.l.s4 1983009808
      %v5409 = vunpack.c.0.s8 %v5408
      %v5410 = vlaneseq
      %v5411 = vshrl.u32 %v5410, 7
      %v5412 = vsub.s32 %v5409, %v5411
      %v5413 = vrot.slane %v5399, %v5412
      %v5414 = vcombine.high %v5165, %v878
      %v5416 = vunpack.c.l.s4 1983009808
      %v5417 = vunpack.c.0.s8 %v5416
      %v5418 = vlaneseq
      %v5419 = vshrl.u32 %v5418, 7
      %v5420 = vsub.s32 %v5417, %v5419
      %v5421 = vrot.slane %v5165, %v5420
      %v5423 = vunpack.c.l.s4 1983009808
      %v5424 = vunpack.c.0.s8 %v5423
      %v5425 = vlaneseq
      %v5426 = vshrl.u32 %v5425, 7
      %v5427 = vsub.s32 %v5424, %v5426
      %v5428 = vrot.slane %v5414, %v5427
      %v5429 = vcombine.low %v5406, %v5421
      %v5430 = vcombine.high %v5406, %v5421
      %v5432 = vunpack.c.l.s4 1934713408
      %v5433 = vunpack.c.0.s8 %v5432
      %v5434 = vlaneseq
      %v5435 = vshrl.u32 %v5434, 7
      %v5436 = vsub.s32 %v5433, %v5435
      %v5437 = vrot.slane %v5429, %v5436
      %v5439 = vunpack.c.l.s4 1934713408
      %v5440 = vunpack.c.0.s8 %v5439
      %v5441 = vlaneseq
      %v5442 = vshrl.u32 %v5441, 7
      %v5443 = vsub.s32 %v5440, %v5442
      %v5444 = vrot.slane %v5430, %v5443
      %v5445 = vcombine.low %v5413, %v5428
      %v5446 = vcombine.high %v5413, %v5428
      %v5448 = vunpack.c.l.s4 1934713408
      %v5449 = vunpack.c.0.s8 %v5448
      %v5450 = vlaneseq
      %v5451 = vshrl.u32 %v5450, 7
      %v5452 = vsub.s32 %v5449, %v5451
      %v5453 = vrot.slane %v5445, %v5452
      %v5455 = vunpack.c.l.s4 1934713408
      %v5456 = vunpack.c.0.s8 %v5455
      %v5457 = vlaneseq
      %v5458 = vshrl.u32 %v5457, 7
      %v5459 = vsub.s32 %v5456, %v5458
      %v5460 = vrot.slane %v5446, %v5459
      %v5461 = vcombine.high %v5437, 0
      %v5462 = vcombine.high %v5444, 0
      %v5463 = vcombine.high %v5453, 0
      %v5464 = vcombine.high %v5460, 0
      %v5465 = vcombine.high %v5161, %v881
      %v5467 = vunpack.c.l.s4 1983009808
      %v5468 = vunpack.c.0.s8 %v5467
      %v5469 = vlaneseq
      %v5470 = vshrl.u32 %v5469, 7
      %v5471 = vsub.s32 %v5468, %v5470
      %v5472 = vrot.slane %v5161, %v5471
      %v5474 = vunpack.c.l.s4 1983009808
      %v5475 = vunpack.c.0.s8 %v5474
      %v5476 = vlaneseq
      %v5477 = vshrl.u32 %v5476, 7
      %v5478 = vsub.s32 %v5475, %v5477
      %v5479 = vrot.slane %v5465, %v5478
      %v5480 = vcombine.high %v5169, %v881
      %v5482 = vunpack.c.l.s4 1983009808
      %v5483 = vunpack.c.0.s8 %v5482
      %v5484 = vlaneseq
      %v5485 = vshrl.u32 %v5484, 7
      %v5486 = vsub.s32 %v5483, %v5485
      %v5487 = vrot.slane %v5169, %v5486
      %v5489 = vunpack.c.l.s4 1983009808
      %v5490 = vunpack.c.0.s8 %v5489
      %v5491 = vlaneseq
      %v5492 = vshrl.u32 %v5491, 7
      %v5493 = vsub.s32 %v5490, %v5492
      %v5494 = vrot.slane %v5480, %v5493
      %v5495 = vcombine.low %v5472, %v5487
      %v5496 = vcombine.high %v5472, %v5487
      %v5498 = vunpack.c.l.s4 1934713408
      %v5499 = vunpack.c.0.s8 %v5498
      %v5500 = vlaneseq
      %v5501 = vshrl.u32 %v5500, 7
      %v5502 = vsub.s32 %v5499, %v5501
      %v5503 = vrot.slane %v5495, %v5502
      %v5505 = vunpack.c.l.s4 1934713408
      %v5506 = vunpack.c.0.s8 %v5505
      %v5507 = vlaneseq
      %v5508 = vshrl.u32 %v5507, 7
      %v5509 = vsub.s32 %v5506, %v5508
      %v5510 = vrot.slane %v5496, %v5509
      %v5511 = vcombine.low %v5479, %v5494
      %v5512 = vcombine.high %v5479, %v5494
      %v5514 = vunpack.c.l.s4 1934713408
      %v5515 = vunpack.c.0.s8 %v5514
      %v5516 = vlaneseq
      %v5517 = vshrl.u32 %v5516, 7
      %v5518 = vsub.s32 %v5515, %v5517
      %v5519 = vrot.slane %v5511, %v5518
      %v5521 = vunpack.c.l.s4 1934713408
      %v5522 = vunpack.c.0.s8 %v5521
      %v5523 = vlaneseq
      %v5524 = vshrl.u32 %v5523, 7
      %v5525 = vsub.s32 %v5522, %v5524
      %v5526 = vrot.slane %v5512, %v5525
      %v5527 = vcombine.high %v5503, 0
      %v5528 = vcombine.high %v5510, 0
      %v5529 = vcombine.high %v5519, 0
      %v5530 = vcombine.high %v5526, 0
      %v5531 = vcombine.high %v5173, %v878
      %v5533 = vunpack.c.l.s4 1983009808
      %v5534 = vunpack.c.0.s8 %v5533
      %v5535 = vlaneseq
      %v5536 = vshrl.u32 %v5535, 7
      %v5537 = vsub.s32 %v5534, %v5536
      %v5538 = vrot.slane %v5173, %v5537
      %v5540 = vunpack.c.l.s4 1983009808
      %v5541 = vunpack.c.0.s8 %v5540
      %v5542 = vlaneseq
      %v5543 = vshrl.u32 %v5542, 7
      %v5544 = vsub.s32 %v5541, %v5543
      %v5545 = vrot.slane %v5531, %v5544
      %v5546 = vcombine.high %v5181, %v878
      %v5548 = vunpack.c.l.s4 1983009808
      %v5549 = vunpack.c.0.s8 %v5548
      %v5550 = vlaneseq
      %v5551 = vshrl.u32 %v5550, 7
      %v5552 = vsub.s32 %v5549, %v5551
      %v5553 = vrot.slane %v5181, %v5552
      %v5555 = vunpack.c.l.s4 1983009808
      %v5556 = vunpack.c.0.s8 %v5555
      %v5557 = vlaneseq
      %v5558 = vshrl.u32 %v5557, 7
      %v5559 = vsub.s32 %v5556, %v5558
      %v5560 = vrot.slane %v5546, %v5559
      %v5561 = vcombine.low %v5538, %v5553
      %v5562 = vcombine.high %v5538, %v5553
      %v5564 = vunpack.c.l.s4 1934713408
      %v5565 = vunpack.c.0.s8 %v5564
      %v5566 = vlaneseq
      %v5567 = vshrl.u32 %v5566, 7
      %v5568 = vsub.s32 %v5565, %v5567
      %v5569 = vrot.slane %v5561, %v5568
      %v5571 = vunpack.c.l.s4 1934713408
      %v5572 = vunpack.c.0.s8 %v5571
      %v5573 = vlaneseq
      %v5574 = vshrl.u32 %v5573, 7
      %v5575 = vsub.s32 %v5572, %v5574
      %v5576 = vrot.slane %v5562, %v5575
      %v5577 = vcombine.low %v5545, %v5560
      %v5578 = vcombine.high %v5545, %v5560
      %v5580 = vunpack.c.l.s4 1934713408
      %v5581 = vunpack.c.0.s8 %v5580
      %v5582 = vlaneseq
      %v5583 = vshrl.u32 %v5582, 7
      %v5584 = vsub.s32 %v5581, %v5583
      %v5585 = vrot.slane %v5577, %v5584
      %v5587 = vunpack.c.l.s4 1934713408
      %v5588 = vunpack.c.0.s8 %v5587
      %v5589 = vlaneseq
      %v5590 = vshrl.u32 %v5589, 7
      %v5591 = vsub.s32 %v5588, %v5590
      %v5592 = vrot.slane %v5578, %v5591
      %v5593 = vcombine.high %v5569, 0
      %v5594 = vcombine.high %v5576, 0
      %v5595 = vcombine.high %v5585, 0
      %v5596 = vcombine.high %v5592, 0
      %v5597 = vcombine.high %v5177, %v881
      %v5599 = vunpack.c.l.s4 1983009808
      %v5600 = vunpack.c.0.s8 %v5599
      %v5601 = vlaneseq
      %v5602 = vshrl.u32 %v5601, 7
      %v5603 = vsub.s32 %v5600, %v5602
      %v5604 = vrot.slane %v5177, %v5603
      %v5606 = vunpack.c.l.s4 1983009808
      %v5607 = vunpack.c.0.s8 %v5606
      %v5608 = vlaneseq
      %v5609 = vshrl.u32 %v5608, 7
      %v5610 = vsub.s32 %v5607, %v5609
      %v5611 = vrot.slane %v5597, %v5610
      %v5612 = vcombine.high %v5185, %v881
      %v5614 = vunpack.c.l.s4 1983009808
      %v5615 = vunpack.c.0.s8 %v5614
      %v5616 = vlaneseq
      %v5617 = vshrl.u32 %v5616, 7
      %v5618 = vsub.s32 %v5615, %v5617
      %v5619 = vrot.slane %v5185, %v5618
      %v5621 = vunpack.c.l.s4 1983009808
      %v5622 = vunpack.c.0.s8 %v5621
      %v5623 = vlaneseq
      %v5624 = vshrl.u32 %v5623, 7
      %v5625 = vsub.s32 %v5622, %v5624
      %v5626 = vrot.slane %v5612, %v5625
      %v5627 = vcombine.low %v5604, %v5619
      %v5628 = vcombine.high %v5604, %v5619
      %v5630 = vunpack.c.l.s4 1934713408
      %v5631 = vunpack.c.0.s8 %v5630
      %v5632 = vlaneseq
      %v5633 = vshrl.u32 %v5632, 7
      %v5634 = vsub.s32 %v5631, %v5633
      %v5635 = vrot.slane %v5627, %v5634
      %v5637 = vunpack.c.l.s4 1934713408
      %v5638 = vunpack.c.0.s8 %v5637
      %v5639 = vlaneseq
      %v5640 = vshrl.u32 %v5639, 7
      %v5641 = vsub.s32 %v5638, %v5640
      %v5642 = vrot.slane %v5628, %v5641
      %v5643 = vcombine.low %v5611, %v5626
      %v5644 = vcombine.high %v5611, %v5626
      %v5646 = vunpack.c.l.s4 1934713408
      %v5647 = vunpack.c.0.s8 %v5646
      %v5648 = vlaneseq
      %v5649 = vshrl.u32 %v5648, 7
      %v5650 = vsub.s32 %v5647, %v5649
      %v5651 = vrot.slane %v5643, %v5650
      %v5653 = vunpack.c.l.s4 1934713408
      %v5654 = vunpack.c.0.s8 %v5653
      %v5655 = vlaneseq
      %v5656 = vshrl.u32 %v5655, 7
      %v5657 = vsub.s32 %v5654, %v5656
      %v5658 = vrot.slane %v5644, %v5657
      %v5659 = vcombine.high %v5635, 0
      %v5660 = vcombine.high %v5642, 0
      %v5661 = vcombine.high %v5651, 0
      %v5662 = vcombine.high %v5658, 0
      %v5663 = vcombine.high %v5189, %v878
      %v5665 = vunpack.c.l.s4 1983009808
      %v5666 = vunpack.c.0.s8 %v5665
      %v5667 = vlaneseq
      %v5668 = vshrl.u32 %v5667, 7
      %v5669 = vsub.s32 %v5666, %v5668
      %v5670 = vrot.slane %v5189, %v5669
      %v5672 = vunpack.c.l.s4 1983009808
      %v5673 = vunpack.c.0.s8 %v5672
      %v5674 = vlaneseq
      %v5675 = vshrl.u32 %v5674, 7
      %v5676 = vsub.s32 %v5673, %v5675
      %v5677 = vrot.slane %v5663, %v5676
      %v5678 = vcombine.high %v5197, %v878
      %v5680 = vunpack.c.l.s4 1983009808
      %v5681 = vunpack.c.0.s8 %v5680
      %v5682 = vlaneseq
      %v5683 = vshrl.u32 %v5682, 7
      %v5684 = vsub.s32 %v5681, %v5683
      %v5685 = vrot.slane %v5197, %v5684
      %v5687 = vunpack.c.l.s4 1983009808
      %v5688 = vunpack.c.0.s8 %v5687
      %v5689 = vlaneseq
      %v5690 = vshrl.u32 %v5689, 7
      %v5691 = vsub.s32 %v5688, %v5690
      %v5692 = vrot.slane %v5678, %v5691
      %v5693 = vcombine.low %v5670, %v5685
      %v5694 = vcombine.high %v5670, %v5685
      %v5696 = vunpack.c.l.s4 1934713408
      %v5697 = vunpack.c.0.s8 %v5696
      %v5698 = vlaneseq
      %v5699 = vshrl.u32 %v5698, 7
      %v5700 = vsub.s32 %v5697, %v5699
      %v5701 = vrot.slane %v5693, %v5700
      %v5703 = vunpack.c.l.s4 1934713408
      %v5704 = vunpack.c.0.s8 %v5703
      %v5705 = vlaneseq
      %v5706 = vshrl.u32 %v5705, 7
      %v5707 = vsub.s32 %v5704, %v5706
      %v5708 = vrot.slane %v5694, %v5707
      %v5709 = vcombine.low %v5677, %v5692
      %v5710 = vcombine.high %v5677, %v5692
      %v5712 = vunpack.c.l.s4 1934713408
      %v5713 = vunpack.c.0.s8 %v5712
      %v5714 = vlaneseq
      %v5715 = vshrl.u32 %v5714, 7
      %v5716 = vsub.s32 %v5713, %v5715
      %v5717 = vrot.slane %v5709, %v5716
      %v5719 = vunpack.c.l.s4 1934713408
      %v5720 = vunpack.c.0.s8 %v5719
      %v5721 = vlaneseq
      %v5722 = vshrl.u32 %v5721, 7
      %v5723 = vsub.s32 %v5720, %v5722
      %v5724 = vrot.slane %v5710, %v5723
      %v5725 = vcombine.high %v5701, 0
      %v5726 = vcombine.high %v5708, 0
      %v5727 = vcombine.high %v5717, 0
      %v5728 = vcombine.high %v5724, 0
      %v5729 = vcombine.high %v5193, %v881
      %v5731 = vunpack.c.l.s4 1983009808
      %v5732 = vunpack.c.0.s8 %v5731
      %v5733 = vlaneseq
      %v5734 = vshrl.u32 %v5733, 7
      %v5735 = vsub.s32 %v5732, %v5734
      %v5736 = vrot.slane %v5193, %v5735
      %v5738 = vunpack.c.l.s4 1983009808
      %v5739 = vunpack.c.0.s8 %v5738
      %v5740 = vlaneseq
      %v5741 = vshrl.u32 %v5740, 7
      %v5742 = vsub.s32 %v5739, %v5741
      %v5743 = vrot.slane %v5729, %v5742
      %v5744 = vcombine.high %v5201, %v881
      %v5746 = vunpack.c.l.s4 1983009808
      %v5747 = vunpack.c.0.s8 %v5746
      %v5748 = vlaneseq
      %v5749 = vshrl.u32 %v5748, 7
      %v5750 = vsub.s32 %v5747, %v5749
      %v5751 = vrot.slane %v5201, %v5750
      %v5753 = vunpack.c.l.s4 1983009808
      %v5754 = vunpack.c.0.s8 %v5753
      %v5755 = vlaneseq
      %v5756 = vshrl.u32 %v5755, 7
      %v5757 = vsub.s32 %v5754, %v5756
      %v5758 = vrot.slane %v5744, %v5757
      %v5759 = vcombine.low %v5736, %v5751
      %v5760 = vcombine.high %v5736, %v5751
      %v5762 = vunpack.c.l.s4 1934713408
      %v5763 = vunpack.c.0.s8 %v5762
      %v5764 = vlaneseq
      %v5765 = vshrl.u32 %v5764, 7
      %v5766 = vsub.s32 %v5763, %v5765
      %v5767 = vrot.slane %v5759, %v5766
      %v5769 = vunpack.c.l.s4 1934713408
      %v5770 = vunpack.c.0.s8 %v5769
      %v5771 = vlaneseq
      %v5772 = vshrl.u32 %v5771, 7
      %v5773 = vsub.s32 %v5770, %v5772
      %v5774 = vrot.slane %v5760, %v5773
      %v5775 = vcombine.low %v5743, %v5758
      %v5776 = vcombine.high %v5743, %v5758
      %v5778 = vunpack.c.l.s4 1934713408
      %v5779 = vunpack.c.0.s8 %v5778
      %v5780 = vlaneseq
      %v5781 = vshrl.u32 %v5780, 7
      %v5782 = vsub.s32 %v5779, %v5781
      %v5783 = vrot.slane %v5775, %v5782
      %v5785 = vunpack.c.l.s4 1934713408
      %v5786 = vunpack.c.0.s8 %v5785
      %v5787 = vlaneseq
      %v5788 = vshrl.u32 %v5787, 7
      %v5789 = vsub.s32 %v5786, %v5788
      %v5790 = vrot.slane %v5776, %v5789
      %v5791 = vcombine.high %v5767, 0
      %v5792 = vcombine.high %v5774, 0
      %v5793 = vcombine.high %v5783, 0
      %v5794 = vcombine.high %v5790, 0
      %v5795 = vcombine.high %v5205, %v878
      %v5797 = vunpack.c.l.s4 1983009808
      %v5798 = vunpack.c.0.s8 %v5797
      %v5799 = vlaneseq
      %v5800 = vshrl.u32 %v5799, 7
      %v5801 = vsub.s32 %v5798, %v5800
      %v5802 = vrot.slane %v5205, %v5801
      %v5804 = vunpack.c.l.s4 1983009808
      %v5805 = vunpack.c.0.s8 %v5804
      %v5806 = vlaneseq
      %v5807 = vshrl.u32 %v5806, 7
      %v5808 = vsub.s32 %v5805, %v5807
      %v5809 = vrot.slane %v5795, %v5808
      %v5810 = vcombine.high %v5213, %v878
      %v5812 = vunpack.c.l.s4 1983009808
      %v5813 = vunpack.c.0.s8 %v5812
      %v5814 = vlaneseq
      %v5815 = vshrl.u32 %v5814, 7
      %v5816 = vsub.s32 %v5813, %v5815
      %v5817 = vrot.slane %v5213, %v5816
      %v5819 = vunpack.c.l.s4 1983009808
      %v5820 = vunpack.c.0.s8 %v5819
      %v5821 = vlaneseq
      %v5822 = vshrl.u32 %v5821, 7
      %v5823 = vsub.s32 %v5820, %v5822
      %v5824 = vrot.slane %v5810, %v5823
      %v5825 = vcombine.low %v5802, %v5817
      %v5826 = vcombine.high %v5802, %v5817
      %v5828 = vunpack.c.l.s4 1934713408
      %v5829 = vunpack.c.0.s8 %v5828
      %v5830 = vlaneseq
      %v5831 = vshrl.u32 %v5830, 7
      %v5832 = vsub.s32 %v5829, %v5831
      %v5833 = vrot.slane %v5825, %v5832
      %v5835 = vunpack.c.l.s4 1934713408
      %v5836 = vunpack.c.0.s8 %v5835
      %v5837 = vlaneseq
      %v5838 = vshrl.u32 %v5837, 7
      %v5839 = vsub.s32 %v5836, %v5838
      %v5840 = vrot.slane %v5826, %v5839
      %v5841 = vcombine.low %v5809, %v5824
      %v5842 = vcombine.high %v5809, %v5824
      %v5844 = vunpack.c.l.s4 1934713408
      %v5845 = vunpack.c.0.s8 %v5844
      %v5846 = vlaneseq
      %v5847 = vshrl.u32 %v5846, 7
      %v5848 = vsub.s32 %v5845, %v5847
      %v5849 = vrot.slane %v5841, %v5848
      %v5851 = vunpack.c.l.s4 1934713408
      %v5852 = vunpack.c.0.s8 %v5851
      %v5853 = vlaneseq
      %v5854 = vshrl.u32 %v5853, 7
      %v5855 = vsub.s32 %v5852, %v5854
      %v5856 = vrot.slane %v5842, %v5855
      %v5857 = vcombine.high %v5833, 0
      %v5858 = vcombine.high %v5840, 0
      %v5859 = vcombine.high %v5849, 0
      %v5860 = vcombine.high %v5856, 0
      %v5861 = vcombine.high %v5209, %v881
      %v5863 = vunpack.c.l.s4 1983009808
      %v5864 = vunpack.c.0.s8 %v5863
      %v5865 = vlaneseq
      %v5866 = vshrl.u32 %v5865, 7
      %v5867 = vsub.s32 %v5864, %v5866
      %v5868 = vrot.slane %v5209, %v5867
      %v5870 = vunpack.c.l.s4 1983009808
      %v5871 = vunpack.c.0.s8 %v5870
      %v5872 = vlaneseq
      %v5873 = vshrl.u32 %v5872, 7
      %v5874 = vsub.s32 %v5871, %v5873
      %v5875 = vrot.slane %v5861, %v5874
      %v5876 = vcombine.high %v5217, %v881
      %v5878 = vunpack.c.l.s4 1983009808
      %v5879 = vunpack.c.0.s8 %v5878
      %v5880 = vlaneseq
      %v5881 = vshrl.u32 %v5880, 7
      %v5882 = vsub.s32 %v5879, %v5881
      %v5883 = vrot.slane %v5217, %v5882
      %v5885 = vunpack.c.l.s4 1983009808
      %v5886 = vunpack.c.0.s8 %v5885
      %v5887 = vlaneseq
      %v5888 = vshrl.u32 %v5887, 7
      %v5889 = vsub.s32 %v5886, %v5888
      %v5890 = vrot.slane %v5876, %v5889
      %v5891 = vcombine.low %v5868, %v5883
      %v5892 = vcombine.high %v5868, %v5883
      %v5894 = vunpack.c.l.s4 1934713408
      %v5895 = vunpack.c.0.s8 %v5894
      %v5896 = vlaneseq
      %v5897 = vshrl.u32 %v5896, 7
      %v5898 = vsub.s32 %v5895, %v5897
      %v5899 = vrot.slane %v5891, %v5898
      %v5901 = vunpack.c.l.s4 1934713408
      %v5902 = vunpack.c.0.s8 %v5901
      %v5903 = vlaneseq
      %v5904 = vshrl.u32 %v5903, 7
      %v5905 = vsub.s32 %v5902, %v5904
      %v5906 = vrot.slane %v5892, %v5905
      %v5907 = vcombine.low %v5875, %v5890
      %v5908 = vcombine.high %v5875, %v5890
      %v5910 = vunpack.c.l.s4 1934713408
      %v5911 = vunpack.c.0.s8 %v5910
      %v5912 = vlaneseq
      %v5913 = vshrl.u32 %v5912, 7
      %v5914 = vsub.s32 %v5911, %v5913
      %v5915 = vrot.slane %v5907, %v5914
      %v5917 = vunpack.c.l.s4 1934713408
      %v5918 = vunpack.c.0.s8 %v5917
      %v5919 = vlaneseq
      %v5920 = vshrl.u32 %v5919, 7
      %v5921 = vsub.s32 %v5918, %v5920
      %v5922 = vrot.slane %v5908, %v5921
      %v5923 = vcombine.high %v5899, 0
      %v5924 = vcombine.high %v5906, 0
      %v5925 = vcombine.high %v5915, 0
      %v5926 = vcombine.high %v5922, 0
      %v5927 = vcombine.high %v5221, %v878
      %v5929 = vunpack.c.l.s4 1983009808
      %v5930 = vunpack.c.0.s8 %v5929
      %v5931 = vlaneseq
      %v5932 = vshrl.u32 %v5931, 7
      %v5933 = vsub.s32 %v5930, %v5932
      %v5934 = vrot.slane %v5221, %v5933
      %v5936 = vunpack.c.l.s4 1983009808
      %v5937 = vunpack.c.0.s8 %v5936
      %v5938 = vlaneseq
      %v5939 = vshrl.u32 %v5938, 7
      %v5940 = vsub.s32 %v5937, %v5939
      %v5941 = vrot.slane %v5927, %v5940
      %v5942 = vcombine.high %v5229, %v878
      %v5944 = vunpack.c.l.s4 1983009808
      %v5945 = vunpack.c.0.s8 %v5944
      %v5946 = vlaneseq
      %v5947 = vshrl.u32 %v5946, 7
      %v5948 = vsub.s32 %v5945, %v5947
      %v5949 = vrot.slane %v5229, %v5948
      %v5951 = vunpack.c.l.s4 1983009808
      %v5952 = vunpack.c.0.s8 %v5951
      %v5953 = vlaneseq
      %v5954 = vshrl.u32 %v5953, 7
      %v5955 = vsub.s32 %v5952, %v5954
      %v5956 = vrot.slane %v5942, %v5955
      %v5957 = vcombine.low %v5934, %v5949
      %v5958 = vcombine.high %v5934, %v5949
      %v5960 = vunpack.c.l.s4 1934713408
      %v5961 = vunpack.c.0.s8 %v5960
      %v5962 = vlaneseq
      %v5963 = vshrl.u32 %v5962, 7
      %v5964 = vsub.s32 %v5961, %v5963
      %v5965 = vrot.slane %v5957, %v5964
      %v5967 = vunpack.c.l.s4 1934713408
      %v5968 = vunpack.c.0.s8 %v5967
      %v5969 = vlaneseq
      %v5970 = vshrl.u32 %v5969, 7
      %v5971 = vsub.s32 %v5968, %v5970
      %v5972 = vrot.slane %v5958, %v5971
      %v5973 = vcombine.low %v5941, %v5956
      %v5974 = vcombine.high %v5941, %v5956
      %v5976 = vunpack.c.l.s4 1934713408
      %v5977 = vunpack.c.0.s8 %v5976
      %v5978 = vlaneseq
      %v5979 = vshrl.u32 %v5978, 7
      %v5980 = vsub.s32 %v5977, %v5979
      %v5981 = vrot.slane %v5973, %v5980
      %v5983 = vunpack.c.l.s4 1934713408
      %v5984 = vunpack.c.0.s8 %v5983
      %v5985 = vlaneseq
      %v5986 = vshrl.u32 %v5985, 7
      %v5987 = vsub.s32 %v5984, %v5986
      %v5988 = vrot.slane %v5974, %v5987
      %v5989 = vcombine.high %v5965, 0
      %v5990 = vcombine.high %v5972, 0
      %v5991 = vcombine.high %v5981, 0
      %v5992 = vcombine.high %v5988, 0
      %v5993 = vcombine.high %v5225, %v881
      %v5995 = vunpack.c.l.s4 1983009808
      %v5996 = vunpack.c.0.s8 %v5995
      %v5997 = vlaneseq
      %v5998 = vshrl.u32 %v5997, 7
      %v5999 = vsub.s32 %v5996, %v5998
      %v6000 = vrot.slane %v5225, %v5999
      %v6002 = vunpack.c.l.s4 1983009808
      %v6003 = vunpack.c.0.s8 %v6002
      %v6004 = vlaneseq
      %v6005 = vshrl.u32 %v6004, 7
      %v6006 = vsub.s32 %v6003, %v6005
      %v6007 = vrot.slane %v5993, %v6006
      %v6008 = vcombine.high %v5233, %v881
      %v6010 = vunpack.c.l.s4 1983009808
      %v6011 = vunpack.c.0.s8 %v6010
      %v6012 = vlaneseq
      %v6013 = vshrl.u32 %v6012, 7
      %v6014 = vsub.s32 %v6011, %v6013
      %v6015 = vrot.slane %v5233, %v6014
      %v6017 = vunpack.c.l.s4 1983009808
      %v6018 = vunpack.c.0.s8 %v6017
      %v6019 = vlaneseq
      %v6020 = vshrl.u32 %v6019, 7
      %v6021 = vsub.s32 %v6018, %v6020
      %v6022 = vrot.slane %v6008, %v6021
      %v6023 = vcombine.low %v6000, %v6015
      %v6024 = vcombine.high %v6000, %v6015
      %v6026 = vunpack.c.l.s4 1934713408
      %v6027 = vunpack.c.0.s8 %v6026
      %v6028 = vlaneseq
      %v6029 = vshrl.u32 %v6028, 7
      %v6030 = vsub.s32 %v6027, %v6029
      %v6031 = vrot.slane %v6023, %v6030
      %v6033 = vunpack.c.l.s4 1934713408
      %v6034 = vunpack.c.0.s8 %v6033
      %v6035 = vlaneseq
      %v6036 = vshrl.u32 %v6035, 7
      %v6037 = vsub.s32 %v6034, %v6036
      %v6038 = vrot.slane %v6024, %v6037
      %v6039 = vcombine.low %v6007, %v6022
      %v6040 = vcombine.high %v6007, %v6022
      %v6042 = vunpack.c.l.s4 1934713408
      %v6043 = vunpack.c.0.s8 %v6042
      %v6044 = vlaneseq
      %v6045 = vshrl.u32 %v6044, 7
      %v6046 = vsub.s32 %v6043, %v6045
      %v6047 = vrot.slane %v6039, %v6046
      %v6049 = vunpack.c.l.s4 1934713408
      %v6050 = vunpack.c.0.s8 %v6049
      %v6051 = vlaneseq
      %v6052 = vshrl.u32 %v6051, 7
      %v6053 = vsub.s32 %v6050, %v6052
      %v6054 = vrot.slane %v6040, %v6053
      %v6055 = vcombine.high %v6031, 0
      %v6056 = vcombine.high %v6038, 0
      %v6057 = vcombine.high %v6047, 0
      %v6058 = vcombine.high %v6054, 0
      %v6059 = vcombine.high %v5237, %v878
      %v6061 = vunpack.c.l.s4 1983009808
      %v6062 = vunpack.c.0.s8 %v6061
      %v6063 = vlaneseq
      %v6064 = vshrl.u32 %v6063, 7
      %v6065 = vsub.s32 %v6062, %v6064
      %v6066 = vrot.slane %v5237, %v6065
      %v6068 = vunpack.c.l.s4 1983009808
      %v6069 = vunpack.c.0.s8 %v6068
      %v6070 = vlaneseq
      %v6071 = vshrl.u32 %v6070, 7
      %v6072 = vsub.s32 %v6069, %v6071
      %v6073 = vrot.slane %v6059, %v6072
      %v6074 = vcombine.high %v5245, %v878
      %v6076 = vunpack.c.l.s4 1983009808
      %v6077 = vunpack.c.0.s8 %v6076
      %v6078 = vlaneseq
      %v6079 = vshrl.u32 %v6078, 7
      %v6080 = vsub.s32 %v6077, %v6079
      %v6081 = vrot.slane %v5245, %v6080
      %v6083 = vunpack.c.l.s4 1983009808
      %v6084 = vunpack.c.0.s8 %v6083
      %v6085 = vlaneseq
      %v6086 = vshrl.u32 %v6085, 7
      %v6087 = vsub.s32 %v6084, %v6086
      %v6088 = vrot.slane %v6074, %v6087
      %v6089 = vcombine.low %v6066, %v6081
      %v6090 = vcombine.high %v6066, %v6081
      %v6092 = vunpack.c.l.s4 1934713408
      %v6093 = vunpack.c.0.s8 %v6092
      %v6094 = vlaneseq
      %v6095 = vshrl.u32 %v6094, 7
      %v6096 = vsub.s32 %v6093, %v6095
      %v6097 = vrot.slane %v6089, %v6096
      %v6099 = vunpack.c.l.s4 1934713408
      %v6100 = vunpack.c.0.s8 %v6099
      %v6101 = vlaneseq
      %v6102 = vshrl.u32 %v6101, 7
      %v6103 = vsub.s32 %v6100, %v6102
      %v6104 = vrot.slane %v6090, %v6103
      %v6105 = vcombine.low %v6073, %v6088
      %v6106 = vcombine.high %v6073, %v6088
      %v6108 = vunpack.c.l.s4 1934713408
      %v6109 = vunpack.c.0.s8 %v6108
      %v6110 = vlaneseq
      %v6111 = vshrl.u32 %v6110, 7
      %v6112 = vsub.s32 %v6109, %v6111
      %v6113 = vrot.slane %v6105, %v6112
      %v6115 = vunpack.c.l.s4 1934713408
      %v6116 = vunpack.c.0.s8 %v6115
      %v6117 = vlaneseq
      %v6118 = vshrl.u32 %v6117, 7
      %v6119 = vsub.s32 %v6116, %v6118
      %v6120 = vrot.slane %v6106, %v6119
      %v6121 = vcombine.high %v6097, 0
      %v6122 = vcombine.high %v6104, 0
      %v6123 = vcombine.high %v6113, 0
      %v6124 = vcombine.high %v6120, 0
      %v6125 = vcombine.high %v5241, %v881
      %v6127 = vunpack.c.l.s4 1983009808
      %v6128 = vunpack.c.0.s8 %v6127
      %v6129 = vlaneseq
      %v6130 = vshrl.u32 %v6129, 7
      %v6131 = vsub.s32 %v6128, %v6130
      %v6132 = vrot.slane %v5241, %v6131
      %v6134 = vunpack.c.l.s4 1983009808
      %v6135 = vunpack.c.0.s8 %v6134
      %v6136 = vlaneseq
      %v6137 = vshrl.u32 %v6136, 7
      %v6138 = vsub.s32 %v6135, %v6137
      %v6139 = vrot.slane %v6125, %v6138
      %v6140 = vcombine.high %v5249, %v881
      %v6142 = vunpack.c.l.s4 1983009808
      %v6143 = vunpack.c.0.s8 %v6142
      %v6144 = vlaneseq
      %v6145 = vshrl.u32 %v6144, 7
      %v6146 = vsub.s32 %v6143, %v6145
      %v6147 = vrot.slane %v5249, %v6146
      %v6149 = vunpack.c.l.s4 1983009808
      %v6150 = vunpack.c.0.s8 %v6149
      %v6151 = vlaneseq
      %v6152 = vshrl.u32 %v6151, 7
      %v6153 = vsub.s32 %v6150, %v6152
      %v6154 = vrot.slane %v6140, %v6153
      %v6155 = vcombine.low %v6132, %v6147
      %v6156 = vcombine.high %v6132, %v6147
      %v6158 = vunpack.c.l.s4 1934713408
      %v6159 = vunpack.c.0.s8 %v6158
      %v6160 = vlaneseq
      %v6161 = vshrl.u32 %v6160, 7
      %v6162 = vsub.s32 %v6159, %v6161
      %v6163 = vrot.slane %v6155, %v6162
      %v6165 = vunpack.c.l.s4 1934713408
      %v6166 = vunpack.c.0.s8 %v6165
      %v6167 = vlaneseq
      %v6168 = vshrl.u32 %v6167, 7
      %v6169 = vsub.s32 %v6166, %v6168
      %v6170 = vrot.slane %v6156, %v6169
      %v6171 = vcombine.low %v6139, %v6154
      %v6172 = vcombine.high %v6139, %v6154
      %v6174 = vunpack.c.l.s4 1934713408
      %v6175 = vunpack.c.0.s8 %v6174
      %v6176 = vlaneseq
      %v6177 = vshrl.u32 %v6176, 7
      %v6178 = vsub.s32 %v6175, %v6177
      %v6179 = vrot.slane %v6171, %v6178
      %v6181 = vunpack.c.l.s4 1934713408
      %v6182 = vunpack.c.0.s8 %v6181
      %v6183 = vlaneseq
      %v6184 = vshrl.u32 %v6183, 7
      %v6185 = vsub.s32 %v6182, %v6184
      %v6186 = vrot.slane %v6172, %v6185
      %v6187 = vcombine.high %v6163, 0
      %v6188 = vcombine.high %v6170, 0
      %v6189 = vcombine.high %v6179, 0
      %v6190 = vcombine.high %v6186, 0
      %v6191 = vcombine.high %v5253, %v878
      %v6193 = vunpack.c.l.s4 1983009808
      %v6194 = vunpack.c.0.s8 %v6193
      %v6195 = vlaneseq
      %v6196 = vshrl.u32 %v6195, 7
      %v6197 = vsub.s32 %v6194, %v6196
      %v6198 = vrot.slane %v5253, %v6197
      %v6200 = vunpack.c.l.s4 1983009808
      %v6201 = vunpack.c.0.s8 %v6200
      %v6202 = vlaneseq
      %v6203 = vshrl.u32 %v6202, 7
      %v6204 = vsub.s32 %v6201, %v6203
      %v6205 = vrot.slane %v6191, %v6204
      %v6206 = vcombine.high %v5261, %v878
      %v6208 = vunpack.c.l.s4 1983009808
      %v6209 = vunpack.c.0.s8 %v6208
      %v6210 = vlaneseq
      %v6211 = vshrl.u32 %v6210, 7
      %v6212 = vsub.s32 %v6209, %v6211
      %v6213 = vrot.slane %v5261, %v6212
      %v6215 = vunpack.c.l.s4 1983009808
      %v6216 = vunpack.c.0.s8 %v6215
      %v6217 = vlaneseq
      %v6218 = vshrl.u32 %v6217, 7
      %v6219 = vsub.s32 %v6216, %v6218
      %v6220 = vrot.slane %v6206, %v6219
      %v6221 = vcombine.low %v6198, %v6213
      %v6222 = vcombine.high %v6198, %v6213
      %v6224 = vunpack.c.l.s4 1934713408
      %v6225 = vunpack.c.0.s8 %v6224
      %v6226 = vlaneseq
      %v6227 = vshrl.u32 %v6226, 7
      %v6228 = vsub.s32 %v6225, %v6227
      %v6229 = vrot.slane %v6221, %v6228
      %v6231 = vunpack.c.l.s4 1934713408
      %v6232 = vunpack.c.0.s8 %v6231
      %v6233 = vlaneseq
      %v6234 = vshrl.u32 %v6233, 7
      %v6235 = vsub.s32 %v6232, %v6234
      %v6236 = vrot.slane %v6222, %v6235
      %v6237 = vcombine.low %v6205, %v6220
      %v6238 = vcombine.high %v6205, %v6220
      %v6240 = vunpack.c.l.s4 1934713408
      %v6241 = vunpack.c.0.s8 %v6240
      %v6242 = vlaneseq
      %v6243 = vshrl.u32 %v6242, 7
      %v6244 = vsub.s32 %v6241, %v6243
      %v6245 = vrot.slane %v6237, %v6244
      %v6247 = vunpack.c.l.s4 1934713408
      %v6248 = vunpack.c.0.s8 %v6247
      %v6249 = vlaneseq
      %v6250 = vshrl.u32 %v6249, 7
      %v6251 = vsub.s32 %v6248, %v6250
      %v6252 = vrot.slane %v6238, %v6251
      %v6253 = vcombine.high %v6229, 0
      %v6254 = vcombine.high %v6236, 0
      %v6255 = vcombine.high %v6245, 0
      %v6256 = vcombine.high %v6252, 0
      %v6257 = vcombine.high %v5257, %v881
      %v6259 = vunpack.c.l.s4 1983009808
      %v6260 = vunpack.c.0.s8 %v6259
      %v6261 = vlaneseq
      %v6262 = vshrl.u32 %v6261, 7
      %v6263 = vsub.s32 %v6260, %v6262
      %v6264 = vrot.slane %v5257, %v6263
      %v6266 = vunpack.c.l.s4 1983009808
      %v6267 = vunpack.c.0.s8 %v6266
      %v6268 = vlaneseq
      %v6269 = vshrl.u32 %v6268, 7
      %v6270 = vsub.s32 %v6267, %v6269
      %v6271 = vrot.slane %v6257, %v6270
      %v6272 = vcombine.high %v5265, %v881
      %v6274 = vunpack.c.l.s4 1983009808
      %v6275 = vunpack.c.0.s8 %v6274
      %v6276 = vlaneseq
      %v6277 = vshrl.u32 %v6276, 7
      %v6278 = vsub.s32 %v6275, %v6277
      %v6279 = vrot.slane %v5265, %v6278
      %v6281 = vunpack.c.l.s4 1983009808
      %v6282 = vunpack.c.0.s8 %v6281
      %v6283 = vlaneseq
      %v6284 = vshrl.u32 %v6283, 7
      %v6285 = vsub.s32 %v6282, %v6284
      %v6286 = vrot.slane %v6272, %v6285
      %v6287 = vcombine.low %v6264, %v6279
      %v6288 = vcombine.high %v6264, %v6279
      %v6290 = vunpack.c.l.s4 1934713408
      %v6291 = vunpack.c.0.s8 %v6290
      %v6292 = vlaneseq
      %v6293 = vshrl.u32 %v6292, 7
      %v6294 = vsub.s32 %v6291, %v6293
      %v6295 = vrot.slane %v6287, %v6294
      %v6297 = vunpack.c.l.s4 1934713408
      %v6298 = vunpack.c.0.s8 %v6297
      %v6299 = vlaneseq
      %v6300 = vshrl.u32 %v6299, 7
      %v6301 = vsub.s32 %v6298, %v6300
      %v6302 = vrot.slane %v6288, %v6301
      %v6303 = vcombine.low %v6271, %v6286
      %v6304 = vcombine.high %v6271, %v6286
      %v6306 = vunpack.c.l.s4 1934713408
      %v6307 = vunpack.c.0.s8 %v6306
      %v6308 = vlaneseq
      %v6309 = vshrl.u32 %v6308, 7
      %v6310 = vsub.s32 %v6307, %v6309
      %v6311 = vrot.slane %v6303, %v6310
      %v6313 = vunpack.c.l.s4 1934713408
      %v6314 = vunpack.c.0.s8 %v6313
      %v6315 = vlaneseq
      %v6316 = vshrl.u32 %v6315, 7
      %v6317 = vsub.s32 %v6314, %v6316
      %v6318 = vrot.slane %v6304, %v6317
      %v6319 = vcombine.high %v6295, 0
      %v6320 = vcombine.high %v6302, 0
      %v6321 = vcombine.high %v6311, 0
      %v6322 = vcombine.high %v6318, 0
      %v6323 = vcombine.low %v5305, %v5312
      %v6325 = vunpack.c.l.s4 1983009808
      %v6326 = vunpack.c.0.s8 %v6325
      %v6327 = vlaneseq
      %v6328 = vshrl.u32 %v6327, 7
      %v6329 = vsub.s32 %v6326, %v6328
      %v6330 = vrot.slane %v6323, %v6329
      %v6331 = vcombine.low %v5329, %v5330
      %v6333 = vunpack.c.l.s4 1983009808
      %v6334 = vunpack.c.0.s8 %v6333
      %v6335 = vlaneseq
      %v6336 = vshrl.u32 %v6335, 7
      %v6337 = vsub.s32 %v6334, %v6336
      %v6338 = vrot.slane %v6331, %v6337
      %v6339 = vcombine.low %v5321, %v5328
      %v6341 = vunpack.c.l.s4 1983009808
      %v6342 = vunpack.c.0.s8 %v6341
      %v6343 = vlaneseq
      %v6344 = vshrl.u32 %v6343, 7
      %v6345 = vsub.s32 %v6342, %v6344
      %v6346 = vrot.slane %v6339, %v6345
      %v6347 = vcombine.low %v5331, %v5332
      %v6349 = vunpack.c.l.s4 1983009808
      %v6350 = vunpack.c.0.s8 %v6349
      %v6351 = vlaneseq
      %v6352 = vshrl.u32 %v6351, 7
      %v6353 = vsub.s32 %v6350, %v6352
      %v6354 = vrot.slane %v6347, %v6353
      %v6355 = vcombine.low %v6330, %v6338
      %v6357 = vunpack.c.l.s4 1934713408
      %v6358 = vunpack.c.0.s8 %v6357
      %v6359 = vlaneseq
      %v6360 = vshrl.u32 %v6359, 7
      %v6361 = vsub.s32 %v6358, %v6360
      %v6362 = vrot.slane %v6355, %v6361
      %v6363 = vcombine.low %v6346, %v6354
      %v6365 = vunpack.c.l.s4 1934713408
      %v6366 = vunpack.c.0.s8 %v6365
      %v6367 = vlaneseq
      %v6368 = vshrl.u32 %v6367, 7
      %v6369 = vsub.s32 %v6366, %v6368
      %v6370 = vrot.slane %v6363, %v6369
      %v6371 = vcombine.low %v6362, %v6370
      %v6372 = vcombine.high %v6362, %v6370
      %v6373 = vcombine.low %v5371, %v5378
      %v6375 = vunpack.c.l.s4 1983009808
      %v6376 = vunpack.c.0.s8 %v6375
      %v6377 = vlaneseq
      %v6378 = vshrl.u32 %v6377, 7
      %v6379 = vsub.s32 %v6376, %v6378
      %v6380 = vrot.slane %v6373, %v6379
      %v6381 = vcombine.low %v5395, %v5396
      %v6383 = vunpack.c.l.s4 1983009808
      %v6384 = vunpack.c.0.s8 %v6383
      %v6385 = vlaneseq
      %v6386 = vshrl.u32 %v6385, 7
      %v6387 = vsub.s32 %v6384, %v6386
      %v6388 = vrot.slane %v6381, %v6387
      %v6389 = vcombine.low %v5387, %v5394
      %v6391 = vunpack.c.l.s4 1983009808
      %v6392 = vunpack.c.0.s8 %v6391
      %v6393 = vlaneseq
      %v6394 = vshrl.u32 %v6393, 7
      %v6395 = vsub.s32 %v6392, %v6394
      %v6396 = vrot.slane %v6389, %v6395
      %v6397 = vcombine.low %v5397, %v5398
      %v6399 = vunpack.c.l.s4 1983009808
      %v6400 = vunpack.c.0.s8 %v6399
      %v6401 = vlaneseq
      %v6402 = vshrl.u32 %v6401, 7
      %v6403 = vsub.s32 %v6400, %v6402
      %v6404 = vrot.slane %v6397, %v6403
      %v6405 = vcombine.low %v6380, %v6388
      %v6407 = vunpack.c.l.s4 1934713408
      %v6408 = vunpack.c.0.s8 %v6407
      %v6409 = vlaneseq
      %v6410 = vshrl.u32 %v6409, 7
      %v6411 = vsub.s32 %v6408, %v6410
      %v6412 = vrot.slane %v6405, %v6411
      %v6413 = vcombine.low %v6396, %v6404
      %v6415 = vunpack.c.l.s4 1934713408
      %v6416 = vunpack.c.0.s8 %v6415
      %v6417 = vlaneseq
      %v6418 = vshrl.u32 %v6417, 7
      %v6419 = vsub.s32 %v6416, %v6418
      %v6420 = vrot.slane %v6413, %v6419
      %v6421 = vcombine.low %v6412, %v6420
      %v6422 = vcombine.high %v6412, %v6420
      %v6423 = vcombine.low %v5437, %v5444
      %v6425 = vunpack.c.l.s4 1983009808
      %v6426 = vunpack.c.0.s8 %v6425
      %v6427 = vlaneseq
      %v6428 = vshrl.u32 %v6427, 7
      %v6429 = vsub.s32 %v6426, %v6428
      %v6430 = vrot.slane %v6423, %v6429
      %v6431 = vcombine.low %v5461, %v5462
      %v6433 = vunpack.c.l.s4 1983009808
      %v6434 = vunpack.c.0.s8 %v6433
      %v6435 = vlaneseq
      %v6436 = vshrl.u32 %v6435, 7
      %v6437 = vsub.s32 %v6434, %v6436
      %v6438 = vrot.slane %v6431, %v6437
      %v6439 = vcombine.low %v5453, %v5460
      %v6441 = vunpack.c.l.s4 1983009808
      %v6442 = vunpack.c.0.s8 %v6441
      %v6443 = vlaneseq
      %v6444 = vshrl.u32 %v6443, 7
      %v6445 = vsub.s32 %v6442, %v6444
      %v6446 = vrot.slane %v6439, %v6445
      %v6447 = vcombine.low %v5463, %v5464
      %v6449 = vunpack.c.l.s4 1983009808
      %v6450 = vunpack.c.0.s8 %v6449
      %v6451 = vlaneseq
      %v6452 = vshrl.u32 %v6451, 7
      %v6453 = vsub.s32 %v6450, %v6452
      %v6454 = vrot.slane %v6447, %v6453
      %v6455 = vcombine.low %v6430, %v6438
      %v6457 = vunpack.c.l.s4 1934713408
      %v6458 = vunpack.c.0.s8 %v6457
      %v6459 = vlaneseq
      %v6460 = vshrl.u32 %v6459, 7
      %v6461 = vsub.s32 %v6458, %v6460
      %v6462 = vrot.slane %v6455, %v6461
      %v6463 = vcombine.low %v6446, %v6454
      %v6465 = vunpack.c.l.s4 1934713408
      %v6466 = vunpack.c.0.s8 %v6465
      %v6467 = vlaneseq
      %v6468 = vshrl.u32 %v6467, 7
      %v6469 = vsub.s32 %v6466, %v6468
      %v6470 = vrot.slane %v6463, %v6469
      %v6471 = vcombine.low %v6462, %v6470
      %v6472 = vcombine.high %v6462, %v6470
      %v6473 = vcombine.low %v5503, %v5510
      %v6475 = vunpack.c.l.s4 1983009808
      %v6476 = vunpack.c.0.s8 %v6475
      %v6477 = vlaneseq
      %v6478 = vshrl.u32 %v6477, 7
      %v6479 = vsub.s32 %v6476, %v6478
      %v6480 = vrot.slane %v6473, %v6479
      %v6481 = vcombine.low %v5527, %v5528
      %v6483 = vunpack.c.l.s4 1983009808
      %v6484 = vunpack.c.0.s8 %v6483
      %v6485 = vlaneseq
      %v6486 = vshrl.u32 %v6485, 7
      %v6487 = vsub.s32 %v6484, %v6486
      %v6488 = vrot.slane %v6481, %v6487
      %v6489 = vcombine.low %v5519, %v5526
      %v6491 = vunpack.c.l.s4 1983009808
      %v6492 = vunpack.c.0.s8 %v6491
      %v6493 = vlaneseq
      %v6494 = vshrl.u32 %v6493, 7
      %v6495 = vsub.s32 %v6492, %v6494
      %v6496 = vrot.slane %v6489, %v6495
      %v6497 = vcombine.low %v5529, %v5530
      %v6499 = vunpack.c.l.s4 1983009808
      %v6500 = vunpack.c.0.s8 %v6499
      %v6501 = vlaneseq
      %v6502 = vshrl.u32 %v6501, 7
      %v6503 = vsub.s32 %v6500, %v6502
      %v6504 = vrot.slane %v6497, %v6503
      %v6505 = vcombine.low %v6480, %v6488
      %v6507 = vunpack.c.l.s4 1934713408
      %v6508 = vunpack.c.0.s8 %v6507
      %v6509 = vlaneseq
      %v6510 = vshrl.u32 %v6509, 7
      %v6511 = vsub.s32 %v6508, %v6510
      %v6512 = vrot.slane %v6505, %v6511
      %v6513 = vcombine.low %v6496, %v6504
      %v6515 = vunpack.c.l.s4 1934713408
      %v6516 = vunpack.c.0.s8 %v6515
      %v6517 = vlaneseq
      %v6518 = vshrl.u32 %v6517, 7
      %v6519 = vsub.s32 %v6516, %v6518
      %v6520 = vrot.slane %v6513, %v6519
      %v6521 = vcombine.low %v6512, %v6520
      %v6522 = vcombine.high %v6512, %v6520
      %v6523 = vcombine.low %v5569, %v5576
      %v6525 = vunpack.c.l.s4 1983009808
      %v6526 = vunpack.c.0.s8 %v6525
      %v6527 = vlaneseq
      %v6528 = vshrl.u32 %v6527, 7
      %v6529 = vsub.s32 %v6526, %v6528
      %v6530 = vrot.slane %v6523, %v6529
      %v6531 = vcombine.low %v5593, %v5594
      %v6533 = vunpack.c.l.s4 1983009808
      %v6534 = vunpack.c.0.s8 %v6533
      %v6535 = vlaneseq
      %v6536 = vshrl.u32 %v6535, 7
      %v6537 = vsub.s32 %v6534, %v6536
      %v6538 = vrot.slane %v6531, %v6537
      %v6539 = vcombine.low %v5585, %v5592
      %v6541 = vunpack.c.l.s4 1983009808
      %v6542 = vunpack.c.0.s8 %v6541
      %v6543 = vlaneseq
      %v6544 = vshrl.u32 %v6543, 7
      %v6545 = vsub.s32 %v6542, %v6544
      %v6546 = vrot.slane %v6539, %v6545
      %v6547 = vcombine.low %v5595, %v5596
      %v6549 = vunpack.c.l.s4 1983009808
      %v6550 = vunpack.c.0.s8 %v6549
      %v6551 = vlaneseq
      %v6552 = vshrl.u32 %v6551, 7
      %v6553 = vsub.s32 %v6550, %v6552
      %v6554 = vrot.slane %v6547, %v6553
      %v6555 = vcombine.low %v6530, %v6538
      %v6557 = vunpack.c.l.s4 1934713408
      %v6558 = vunpack.c.0.s8 %v6557
      %v6559 = vlaneseq
      %v6560 = vshrl.u32 %v6559, 7
      %v6561 = vsub.s32 %v6558, %v6560
      %v6562 = vrot.slane %v6555, %v6561
      %v6563 = vcombine.low %v6546, %v6554
      %v6565 = vunpack.c.l.s4 1934713408
      %v6566 = vunpack.c.0.s8 %v6565
      %v6567 = vlaneseq
      %v6568 = vshrl.u32 %v6567, 7
      %v6569 = vsub.s32 %v6566, %v6568
      %v6570 = vrot.slane %v6563, %v6569
      %v6571 = vcombine.low %v6562, %v6570
      %v6572 = vcombine.high %v6562, %v6570
      %v6573 = vcombine.low %v5635, %v5642
      %v6575 = vunpack.c.l.s4 1983009808
      %v6576 = vunpack.c.0.s8 %v6575
      %v6577 = vlaneseq
      %v6578 = vshrl.u32 %v6577, 7
      %v6579 = vsub.s32 %v6576, %v6578
      %v6580 = vrot.slane %v6573, %v6579
      %v6581 = vcombine.low %v5659, %v5660
      %v6583 = vunpack.c.l.s4 1983009808
      %v6584 = vunpack.c.0.s8 %v6583
      %v6585 = vlaneseq
      %v6586 = vshrl.u32 %v6585, 7
      %v6587 = vsub.s32 %v6584, %v6586
      %v6588 = vrot.slane %v6581, %v6587
      %v6589 = vcombine.low %v5651, %v5658
      %v6591 = vunpack.c.l.s4 1983009808
      %v6592 = vunpack.c.0.s8 %v6591
      %v6593 = vlaneseq
      %v6594 = vshrl.u32 %v6593, 7
      %v6595 = vsub.s32 %v6592, %v6594
      %v6596 = vrot.slane %v6589, %v6595
      %v6597 = vcombine.low %v5661, %v5662
      %v6599 = vunpack.c.l.s4 1983009808
      %v6600 = vunpack.c.0.s8 %v6599
      %v6601 = vlaneseq
      %v6602 = vshrl.u32 %v6601, 7
      %v6603 = vsub.s32 %v6600, %v6602
      %v6604 = vrot.slane %v6597, %v6603
      %v6605 = vcombine.low %v6580, %v6588
      %v6607 = vunpack.c.l.s4 1934713408
      %v6608 = vunpack.c.0.s8 %v6607
      %v6609 = vlaneseq
      %v6610 = vshrl.u32 %v6609, 7
      %v6611 = vsub.s32 %v6608, %v6610
      %v6612 = vrot.slane %v6605, %v6611
      %v6613 = vcombine.low %v6596, %v6604
      %v6615 = vunpack.c.l.s4 1934713408
      %v6616 = vunpack.c.0.s8 %v6615
      %v6617 = vlaneseq
      %v6618 = vshrl.u32 %v6617, 7
      %v6619 = vsub.s32 %v6616, %v6618
      %v6620 = vrot.slane %v6613, %v6619
      %v6621 = vcombine.low %v6612, %v6620
      %v6622 = vcombine.high %v6612, %v6620
      %v6623 = vcombine.low %v5701, %v5708
      %v6625 = vunpack.c.l.s4 1983009808
      %v6626 = vunpack.c.0.s8 %v6625
      %v6627 = vlaneseq
      %v6628 = vshrl.u32 %v6627, 7
      %v6629 = vsub.s32 %v6626, %v6628
      %v6630 = vrot.slane %v6623, %v6629
      %v6631 = vcombine.low %v5725, %v5726
      %v6633 = vunpack.c.l.s4 1983009808
      %v6634 = vunpack.c.0.s8 %v6633
      %v6635 = vlaneseq
      %v6636 = vshrl.u32 %v6635, 7
      %v6637 = vsub.s32 %v6634, %v6636
      %v6638 = vrot.slane %v6631, %v6637
      %v6639 = vcombine.low %v5717, %v5724
      %v6641 = vunpack.c.l.s4 1983009808
      %v6642 = vunpack.c.0.s8 %v6641
      %v6643 = vlaneseq
      %v6644 = vshrl.u32 %v6643, 7
      %v6645 = vsub.s32 %v6642, %v6644
      %v6646 = vrot.slane %v6639, %v6645
      %v6647 = vcombine.low %v5727, %v5728
      %v6649 = vunpack.c.l.s4 1983009808
      %v6650 = vunpack.c.0.s8 %v6649
      %v6651 = vlaneseq
      %v6652 = vshrl.u32 %v6651, 7
      %v6653 = vsub.s32 %v6650, %v6652
      %v6654 = vrot.slane %v6647, %v6653
      %v6655 = vcombine.low %v6630, %v6638
      %v6657 = vunpack.c.l.s4 1934713408
      %v6658 = vunpack.c.0.s8 %v6657
      %v6659 = vlaneseq
      %v6660 = vshrl.u32 %v6659, 7
      %v6661 = vsub.s32 %v6658, %v6660
      %v6662 = vrot.slane %v6655, %v6661
      %v6663 = vcombine.low %v6646, %v6654
      %v6665 = vunpack.c.l.s4 1934713408
      %v6666 = vunpack.c.0.s8 %v6665
      %v6667 = vlaneseq
      %v6668 = vshrl.u32 %v6667, 7
      %v6669 = vsub.s32 %v6666, %v6668
      %v6670 = vrot.slane %v6663, %v6669
      %v6671 = vcombine.low %v6662, %v6670
      %v6672 = vcombine.high %v6662, %v6670
      %v6673 = vcombine.low %v5767, %v5774
      %v6675 = vunpack.c.l.s4 1983009808
      %v6676 = vunpack.c.0.s8 %v6675
      %v6677 = vlaneseq
      %v6678 = vshrl.u32 %v6677, 7
      %v6679 = vsub.s32 %v6676, %v6678
      %v6680 = vrot.slane %v6673, %v6679
      %v6681 = vcombine.low %v5791, %v5792
      %v6683 = vunpack.c.l.s4 1983009808
      %v6684 = vunpack.c.0.s8 %v6683
      %v6685 = vlaneseq
      %v6686 = vshrl.u32 %v6685, 7
      %v6687 = vsub.s32 %v6684, %v6686
      %v6688 = vrot.slane %v6681, %v6687
      %v6689 = vcombine.low %v5783, %v5790
      %v6691 = vunpack.c.l.s4 1983009808
      %v6692 = vunpack.c.0.s8 %v6691
      %v6693 = vlaneseq
      %v6694 = vshrl.u32 %v6693, 7
      %v6695 = vsub.s32 %v6692, %v6694
      %v6696 = vrot.slane %v6689, %v6695
      %v6697 = vcombine.low %v5793, %v5794
      %v6699 = vunpack.c.l.s4 1983009808
      %v6700 = vunpack.c.0.s8 %v6699
      %v6701 = vlaneseq
      %v6702 = vshrl.u32 %v6701, 7
      %v6703 = vsub.s32 %v6700, %v6702
      %v6704 = vrot.slane %v6697, %v6703
      %v6705 = vcombine.low %v6680, %v6688
      %v6707 = vunpack.c.l.s4 1934713408
      %v6708 = vunpack.c.0.s8 %v6707
      %v6709 = vlaneseq
      %v6710 = vshrl.u32 %v6709, 7
      %v6711 = vsub.s32 %v6708, %v6710
      %v6712 = vrot.slane %v6705, %v6711
      %v6713 = vcombine.low %v6696, %v6704
      %v6715 = vunpack.c.l.s4 1934713408
      %v6716 = vunpack.c.0.s8 %v6715
      %v6717 = vlaneseq
      %v6718 = vshrl.u32 %v6717, 7
      %v6719 = vsub.s32 %v6716, %v6718
      %v6720 = vrot.slane %v6713, %v6719
      %v6721 = vcombine.low %v6712, %v6720
      %v6722 = vcombine.high %v6712, %v6720
      %v6723 = vcombine.low %v5833, %v5840
      %v6725 = vunpack.c.l.s4 1983009808
      %v6726 = vunpack.c.0.s8 %v6725
      %v6727 = vlaneseq
      %v6728 = vshrl.u32 %v6727, 7
      %v6729 = vsub.s32 %v6726, %v6728
      %v6730 = vrot.slane %v6723, %v6729
      %v6731 = vcombine.low %v5857, %v5858
      %v6733 = vunpack.c.l.s4 1983009808
      %v6734 = vunpack.c.0.s8 %v6733
      %v6735 = vlaneseq
      %v6736 = vshrl.u32 %v6735, 7
      %v6737 = vsub.s32 %v6734, %v6736
      %v6738 = vrot.slane %v6731, %v6737
      %v6739 = vcombine.low %v5849, %v5856
      %v6741 = vunpack.c.l.s4 1983009808
      %v6742 = vunpack.c.0.s8 %v6741
      %v6743 = vlaneseq
      %v6744 = vshrl.u32 %v6743, 7
      %v6745 = vsub.s32 %v6742, %v6744
      %v6746 = vrot.slane %v6739, %v6745
      %v6747 = vcombine.low %v5859, %v5860
      %v6749 = vunpack.c.l.s4 1983009808
      %v6750 = vunpack.c.0.s8 %v6749
      %v6751 = vlaneseq
      %v6752 = vshrl.u32 %v6751, 7
      %v6753 = vsub.s32 %v6750, %v6752
      %v6754 = vrot.slane %v6747, %v6753
      %v6755 = vcombine.low %v6730, %v6738
      %v6757 = vunpack.c.l.s4 1934713408
      %v6758 = vunpack.c.0.s8 %v6757
      %v6759 = vlaneseq
      %v6760 = vshrl.u32 %v6759, 7
      %v6761 = vsub.s32 %v6758, %v6760
      %v6762 = vrot.slane %v6755, %v6761
      %v6763 = vcombine.low %v6746, %v6754
      %v6765 = vunpack.c.l.s4 1934713408
      %v6766 = vunpack.c.0.s8 %v6765
      %v6767 = vlaneseq
      %v6768 = vshrl.u32 %v6767, 7
      %v6769 = vsub.s32 %v6766, %v6768
      %v6770 = vrot.slane %v6763, %v6769
      %v6771 = vcombine.low %v6762, %v6770
      %v6772 = vcombine.high %v6762, %v6770
      %v6773 = vcombine.low %v5899, %v5906
      %v6775 = vunpack.c.l.s4 1983009808
      %v6776 = vunpack.c.0.s8 %v6775
      %v6777 = vlaneseq
      %v6778 = vshrl.u32 %v6777, 7
      %v6779 = vsub.s32 %v6776, %v6778
      %v6780 = vrot.slane %v6773, %v6779
      %v6781 = vcombine.low %v5923, %v5924
      %v6783 = vunpack.c.l.s4 1983009808
      %v6784 = vunpack.c.0.s8 %v6783
      %v6785 = vlaneseq
      %v6786 = vshrl.u32 %v6785, 7
      %v6787 = vsub.s32 %v6784, %v6786
      %v6788 = vrot.slane %v6781, %v6787
      %v6789 = vcombine.low %v5915, %v5922
      %v6791 = vunpack.c.l.s4 1983009808
      %v6792 = vunpack.c.0.s8 %v6791
      %v6793 = vlaneseq
      %v6794 = vshrl.u32 %v6793, 7
      %v6795 = vsub.s32 %v6792, %v6794
      %v6796 = vrot.slane %v6789, %v6795
      %v6797 = vcombine.low %v5925, %v5926
      %v6799 = vunpack.c.l.s4 1983009808
      %v6800 = vunpack.c.0.s8 %v6799
      %v6801 = vlaneseq
      %v6802 = vshrl.u32 %v6801, 7
      %v6803 = vsub.s32 %v6800, %v6802
      %v6804 = vrot.slane %v6797, %v6803
      %v6805 = vcombine.low %v6780, %v6788
      %v6807 = vunpack.c.l.s4 1934713408
      %v6808 = vunpack.c.0.s8 %v6807
      %v6809 = vlaneseq
      %v6810 = vshrl.u32 %v6809, 7
      %v6811 = vsub.s32 %v6808, %v6810
      %v6812 = vrot.slane %v6805, %v6811
      %v6813 = vcombine.low %v6796, %v6804
      %v6815 = vunpack.c.l.s4 1934713408
      %v6816 = vunpack.c.0.s8 %v6815
      %v6817 = vlaneseq
      %v6818 = vshrl.u32 %v6817, 7
      %v6819 = vsub.s32 %v6816, %v6818
      %v6820 = vrot.slane %v6813, %v6819
      %v6821 = vcombine.low %v6812, %v6820
      %v6822 = vcombine.high %v6812, %v6820
      %v6823 = vcombine.low %v5965, %v5972
      %v6825 = vunpack.c.l.s4 1983009808
      %v6826 = vunpack.c.0.s8 %v6825
      %v6827 = vlaneseq
      %v6828 = vshrl.u32 %v6827, 7
      %v6829 = vsub.s32 %v6826, %v6828
      %v6830 = vrot.slane %v6823, %v6829
      %v6831 = vcombine.low %v5989, %v5990
      %v6833 = vunpack.c.l.s4 1983009808
      %v6834 = vunpack.c.0.s8 %v6833
      %v6835 = vlaneseq
      %v6836 = vshrl.u32 %v6835, 7
      %v6837 = vsub.s32 %v6834, %v6836
      %v6838 = vrot.slane %v6831, %v6837
      %v6839 = vcombine.low %v5981, %v5988
      %v6841 = vunpack.c.l.s4 1983009808
      %v6842 = vunpack.c.0.s8 %v6841
      %v6843 = vlaneseq
      %v6844 = vshrl.u32 %v6843, 7
      %v6845 = vsub.s32 %v6842, %v6844
      %v6846 = vrot.slane %v6839, %v6845
      %v6847 = vcombine.low %v5991, %v5992
      %v6849 = vunpack.c.l.s4 1983009808
      %v6850 = vunpack.c.0.s8 %v6849
      %v6851 = vlaneseq
      %v6852 = vshrl.u32 %v6851, 7
      %v6853 = vsub.s32 %v6850, %v6852
      %v6854 = vrot.slane %v6847, %v6853
      %v6855 = vcombine.low %v6830, %v6838
      %v6857 = vunpack.c.l.s4 1934713408
      %v6858 = vunpack.c.0.s8 %v6857
      %v6859 = vlaneseq
      %v6860 = vshrl.u32 %v6859, 7
      %v6861 = vsub.s32 %v6858, %v6860
      %v6862 = vrot.slane %v6855, %v6861
      %v6863 = vcombine.low %v6846, %v6854
      %v6865 = vunpack.c.l.s4 1934713408
      %v6866 = vunpack.c.0.s8 %v6865
      %v6867 = vlaneseq
      %v6868 = vshrl.u32 %v6867, 7
      %v6869 = vsub.s32 %v6866, %v6868
      %v6870 = vrot.slane %v6863, %v6869
      %v6871 = vcombine.low %v6862, %v6870
      %v6872 = vcombine.high %v6862, %v6870
      %v6873 = vcombine.low %v6031, %v6038
      %v6875 = vunpack.c.l.s4 1983009808
      %v6876 = vunpack.c.0.s8 %v6875
      %v6877 = vlaneseq
      %v6878 = vshrl.u32 %v6877, 7
      %v6879 = vsub.s32 %v6876, %v6878
      %v6880 = vrot.slane %v6873, %v6879
      %v6881 = vcombine.low %v6055, %v6056
      %v6883 = vunpack.c.l.s4 1983009808
      %v6884 = vunpack.c.0.s8 %v6883
      %v6885 = vlaneseq
      %v6886 = vshrl.u32 %v6885, 7
      %v6887 = vsub.s32 %v6884, %v6886
      %v6888 = vrot.slane %v6881, %v6887
      %v6889 = vcombine.low %v6047, %v6054
      %v6891 = vunpack.c.l.s4 1983009808
      %v6892 = vunpack.c.0.s8 %v6891
      %v6893 = vlaneseq
      %v6894 = vshrl.u32 %v6893, 7
      %v6895 = vsub.s32 %v6892, %v6894
      %v6896 = vrot.slane %v6889, %v6895
      %v6897 = vcombine.low %v6057, %v6058
      %v6899 = vunpack.c.l.s4 1983009808
      %v6900 = vunpack.c.0.s8 %v6899
      %v6901 = vlaneseq
      %v6902 = vshrl.u32 %v6901, 7
      %v6903 = vsub.s32 %v6900, %v6902
      %v6904 = vrot.slane %v6897, %v6903
      %v6905 = vcombine.low %v6880, %v6888
      %v6907 = vunpack.c.l.s4 1934713408
      %v6908 = vunpack.c.0.s8 %v6907
      %v6909 = vlaneseq
      %v6910 = vshrl.u32 %v6909, 7
      %v6911 = vsub.s32 %v6908, %v6910
      %v6912 = vrot.slane %v6905, %v6911
      %v6913 = vcombine.low %v6896, %v6904
      %v6915 = vunpack.c.l.s4 1934713408
      %v6916 = vunpack.c.0.s8 %v6915
      %v6917 = vlaneseq
      %v6918 = vshrl.u32 %v6917, 7
      %v6919 = vsub.s32 %v6916, %v6918
      %v6920 = vrot.slane %v6913, %v6919
      %v6921 = vcombine.low %v6912, %v6920
      %v6922 = vcombine.high %v6912, %v6920
      %v6923 = vcombine.low %v6097, %v6104
      %v6925 = vunpack.c.l.s4 1983009808
      %v6926 = vunpack.c.0.s8 %v6925
      %v6927 = vlaneseq
      %v6928 = vshrl.u32 %v6927, 7
      %v6929 = vsub.s32 %v6926, %v6928
      %v6930 = vrot.slane %v6923, %v6929
      %v6931 = vcombine.low %v6121, %v6122
      %v6933 = vunpack.c.l.s4 1983009808
      %v6934 = vunpack.c.0.s8 %v6933
      %v6935 = vlaneseq
      %v6936 = vshrl.u32 %v6935, 7
      %v6937 = vsub.s32 %v6934, %v6936
      %v6938 = vrot.slane %v6931, %v6937
      %v6939 = vcombine.low %v6113, %v6120
      %v6941 = vunpack.c.l.s4 1983009808
      %v6942 = vunpack.c.0.s8 %v6941
      %v6943 = vlaneseq
      %v6944 = vshrl.u32 %v6943, 7
      %v6945 = vsub.s32 %v6942, %v6944
      %v6946 = vrot.slane %v6939, %v6945
      %v6947 = vcombine.low %v6123, %v6124
      %v6949 = vunpack.c.l.s4 1983009808
      %v6950 = vunpack.c.0.s8 %v6949
      %v6951 = vlaneseq
      %v6952 = vshrl.u32 %v6951, 7
      %v6953 = vsub.s32 %v6950, %v6952
      %v6954 = vrot.slane %v6947, %v6953
      %v6955 = vcombine.low %v6930, %v6938
      %v6957 = vunpack.c.l.s4 1934713408
      %v6958 = vunpack.c.0.s8 %v6957
      %v6959 = vlaneseq
      %v6960 = vshrl.u32 %v6959, 7
      %v6961 = vsub.s32 %v6958, %v6960
      %v6962 = vrot.slane %v6955, %v6961
      %v6963 = vcombine.low %v6946, %v6954
      %v6965 = vunpack.c.l.s4 1934713408
      %v6966 = vunpack.c.0.s8 %v6965
      %v6967 = vlaneseq
      %v6968 = vshrl.u32 %v6967, 7
      %v6969 = vsub.s32 %v6966, %v6968
      %v6970 = vrot.slane %v6963, %v6969
      %v6971 = vcombine.low %v6962, %v6970
      %v6972 = vcombine.high %v6962, %v6970
      %v6973 = vcombine.low %v6163, %v6170
      %v6975 = vunpack.c.l.s4 1983009808
      %v6976 = vunpack.c.0.s8 %v6975
      %v6977 = vlaneseq
      %v6978 = vshrl.u32 %v6977, 7
      %v6979 = vsub.s32 %v6976, %v6978
      %v6980 = vrot.slane %v6973, %v6979
      %v6981 = vcombine.low %v6187, %v6188
      %v6983 = vunpack.c.l.s4 1983009808
      %v6984 = vunpack.c.0.s8 %v6983
      %v6985 = vlaneseq
      %v6986 = vshrl.u32 %v6985, 7
      %v6987 = vsub.s32 %v6984, %v6986
      %v6988 = vrot.slane %v6981, %v6987
      %v6989 = vcombine.low %v6179, %v6186
      %v6991 = vunpack.c.l.s4 1983009808
      %v6992 = vunpack.c.0.s8 %v6991
      %v6993 = vlaneseq
      %v6994 = vshrl.u32 %v6993, 7
      %v6995 = vsub.s32 %v6992, %v6994
      %v6996 = vrot.slane %v6989, %v6995
      %v6997 = vcombine.low %v6189, %v6190
      %v6999 = vunpack.c.l.s4 1983009808
      %v7000 = vunpack.c.0.s8 %v6999
      %v7001 = vlaneseq
      %v7002 = vshrl.u32 %v7001, 7
      %v7003 = vsub.s32 %v7000, %v7002
      %v7004 = vrot.slane %v6997, %v7003
      %v7005 = vcombine.low %v6980, %v6988
      %v7007 = vunpack.c.l.s4 1934713408
      %v7008 = vunpack.c.0.s8 %v7007
      %v7009 = vlaneseq
      %v7010 = vshrl.u32 %v7009, 7
      %v7011 = vsub.s32 %v7008, %v7010
      %v7012 = vrot.slane %v7005, %v7011
      %v7013 = vcombine.low %v6996, %v7004
      %v7015 = vunpack.c.l.s4 1934713408
      %v7016 = vunpack.c.0.s8 %v7015
      %v7017 = vlaneseq
      %v7018 = vshrl.u32 %v7017, 7
      %v7019 = vsub.s32 %v7016, %v7018
      %v7020 = vrot.slane %v7013, %v7019
      %v7021 = vcombine.low %v7012, %v7020
      %v7022 = vcombine.high %v7012, %v7020
      %v7023 = vcombine.low %v6229, %v6236
      %v7025 = vunpack.c.l.s4 1983009808
      %v7026 = vunpack.c.0.s8 %v7025
      %v7027 = vlaneseq
      %v7028 = vshrl.u32 %v7027, 7
      %v7029 = vsub.s32 %v7026, %v7028
      %v7030 = vrot.slane %v7023, %v7029
      %v7031 = vcombine.low %v6253, %v6254
      %v7033 = vunpack.c.l.s4 1983009808
      %v7034 = vunpack.c.0.s8 %v7033
      %v7035 = vlaneseq
      %v7036 = vshrl.u32 %v7035, 7
      %v7037 = vsub.s32 %v7034, %v7036
      %v7038 = vrot.slane %v7031, %v7037
      %v7039 = vcombine.low %v6245, %v6252
      %v7041 = vunpack.c.l.s4 1983009808
      %v7042 = vunpack.c.0.s8 %v7041
      %v7043 = vlaneseq
      %v7044 = vshrl.u32 %v7043, 7
      %v7045 = vsub.s32 %v7042, %v7044
      %v7046 = vrot.slane %v7039, %v7045
      %v7047 = vcombine.low %v6255, %v6256
      %v7049 = vunpack.c.l.s4 1983009808
      %v7050 = vunpack.c.0.s8 %v7049
      %v7051 = vlaneseq
      %v7052 = vshrl.u32 %v7051, 7
      %v7053 = vsub.s32 %v7050, %v7052
      %v7054 = vrot.slane %v7047, %v7053
      %v7055 = vcombine.low %v7030, %v7038
      %v7057 = vunpack.c.l.s4 1934713408
      %v7058 = vunpack.c.0.s8 %v7057
      %v7059 = vlaneseq
      %v7060 = vshrl.u32 %v7059, 7
      %v7061 = vsub.s32 %v7058, %v7060
      %v7062 = vrot.slane %v7055, %v7061
      %v7063 = vcombine.low %v7046, %v7054
      %v7065 = vunpack.c.l.s4 1934713408
      %v7066 = vunpack.c.0.s8 %v7065
      %v7067 = vlaneseq
      %v7068 = vshrl.u32 %v7067, 7
      %v7069 = vsub.s32 %v7066, %v7068
      %v7070 = vrot.slane %v7063, %v7069
      %v7071 = vcombine.low %v7062, %v7070
      %v7072 = vcombine.high %v7062, %v7070
      %v7073 = vcombine.low %v6295, %v6302
      %v7075 = vunpack.c.l.s4 1983009808
      %v7076 = vunpack.c.0.s8 %v7075
      %v7077 = vlaneseq
      %v7078 = vshrl.u32 %v7077, 7
      %v7079 = vsub.s32 %v7076, %v7078
      %v7080 = vrot.slane %v7073, %v7079
      %v7081 = vcombine.low %v6319, %v6320
      %v7083 = vunpack.c.l.s4 1983009808
      %v7084 = vunpack.c.0.s8 %v7083
      %v7085 = vlaneseq
      %v7086 = vshrl.u32 %v7085, 7
      %v7087 = vsub.s32 %v7084, %v7086
      %v7088 = vrot.slane %v7081, %v7087
      %v7089 = vcombine.low %v6311, %v6318
      %v7091 = vunpack.c.l.s4 1983009808
      %v7092 = vunpack.c.0.s8 %v7091
      %v7093 = vlaneseq
      %v7094 = vshrl.u32 %v7093, 7
      %v7095 = vsub.s32 %v7092, %v7094
      %v7096 = vrot.slane %v7089, %v7095
      %v7097 = vcombine.low %v6321, %v6322
      %v7099 = vunpack.c.l.s4 1983009808
      %v7100 = vunpack.c.0.s8 %v7099
      %v7101 = vlaneseq
      %v7102 = vshrl.u32 %v7101, 7
      %v7103 = vsub.s32 %v7100, %v7102
      %v7104 = vrot.slane %v7097, %v7103
      %v7105 = vcombine.low %v7080, %v7088
      %v7107 = vunpack.c.l.s4 1934713408
      %v7108 = vunpack.c.0.s8 %v7107
      %v7109 = vlaneseq
      %v7110 = vshrl.u32 %v7109, 7
      %v7111 = vsub.s32 %v7108, %v7110
      %v7112 = vrot.slane %v7105, %v7111
      %v7113 = vcombine.low %v7096, %v7104
      %v7115 = vunpack.c.l.s4 1934713408
      %v7116 = vunpack.c.0.s8 %v7115
      %v7117 = vlaneseq
      %v7118 = vshrl.u32 %v7117, 7
      %v7119 = vsub.s32 %v7116, %v7118
      %v7120 = vrot.slane %v7113, %v7119
      %v7121 = vcombine.low %v7112, %v7120
      %v7122 = vcombine.high %v7112, %v7120
      %v7125 = vpack.i.b16 %v6421, %v6371
      %v7127 = vshrl.u32 %v6371, 16
      %v7128 = vshrl.u32 %v6421, 16
      %v7129 = vpack.i.b16 %v7128, %v7127
      %v7133 = vpack.i.b16 %v6422, %v6372
      %v7135 = vshrl.u32 %v6372, 16
      %v7136 = vshrl.u32 %v6422, 16
      %v7137 = vpack.i.b16 %v7136, %v7135
      %v7141 = vpack.i.b16 %v6521, %v6471
      %v7143 = vshrl.u32 %v6471, 16
      %v7144 = vshrl.u32 %v6521, 16
      %v7145 = vpack.i.b16 %v7144, %v7143
      %v7149 = vpack.i.b16 %v6522, %v6472
      %v7151 = vshrl.u32 %v6472, 16
      %v7152 = vshrl.u32 %v6522, 16
      %v7153 = vpack.i.b16 %v7152, %v7151
      %v7157 = vpack.i.b16 %v6621, %v6571
      %v7159 = vshrl.u32 %v6571, 16
      %v7160 = vshrl.u32 %v6621, 16
      %v7161 = vpack.i.b16 %v7160, %v7159
      %v7165 = vpack.i.b16 %v6622, %v6572
      %v7167 = vshrl.u32 %v6572, 16
      %v7168 = vshrl.u32 %v6622, 16
      %v7169 = vpack.i.b16 %v7168, %v7167
      %v7173 = vpack.i.b16 %v6721, %v6671
      %v7175 = vshrl.u32 %v6671, 16
      %v7176 = vshrl.u32 %v6721, 16
      %v7177 = vpack.i.b16 %v7176, %v7175
      %v7181 = vpack.i.b16 %v6722, %v6672
      %v7183 = vshrl.u32 %v6672, 16
      %v7184 = vshrl.u32 %v6722, 16
      %v7185 = vpack.i.b16 %v7184, %v7183
      %v7189 = vpack.i.b16 %v6821, %v6771
      %v7191 = vshrl.u32 %v6771, 16
      %v7192 = vshrl.u32 %v6821, 16
      %v7193 = vpack.i.b16 %v7192, %v7191
      %v7197 = vpack.i.b16 %v6822, %v6772
      %v7199 = vshrl.u32 %v6772, 16
      %v7200 = vshrl.u32 %v6822, 16
      %v7201 = vpack.i.b16 %v7200, %v7199
      %v7205 = vpack.i.b16 %v6921, %v6871
      %v7207 = vshrl.u32 %v6871, 16
      %v7208 = vshrl.u32 %v6921, 16
      %v7209 = vpack.i.b16 %v7208, %v7207
      %v7213 = vpack.i.b16 %v6922, %v6872
      %v7215 = vshrl.u32 %v6872, 16
      %v7216 = vshrl.u32 %v6922, 16
      %v7217 = vpack.i.b16 %v7216, %v7215
      %v7221 = vpack.i.b16 %v7021, %v6971
      %v7223 = vshrl.u32 %v6971, 16
      %v7224 = vshrl.u32 %v7021, 16
      %v7225 = vpack.i.b16 %v7224, %v7223
      %v7229 = vpack.i.b16 %v7022, %v6972
      %v7231 = vshrl.u32 %v6972, 16
      %v7232 = vshrl.u32 %v7022, 16
      %v7233 = vpack.i.b16 %v7232, %v7231
      %v7237 = vpack.i.b16 %v7121, %v7071
      %v7239 = vshrl.u32 %v7071, 16
      %v7240 = vshrl.u32 %v7121, 16
      %v7241 = vpack.i.b16 %v7240, %v7239
      %v7245 = vpack.i.b16 %v7122, %v7072
      %v7247 = vshrl.u32 %v7072, 16
      %v7248 = vshrl.u32 %v7122, 16
      %v7249 = vpack.i.b16 %v7248, %v7247
      %vm7251 = vcmask 64512
      %v7253 = vsel %vm7251, %v2853, 0
      %v7256 = vsel %vm7251, %v2865, 0
      %v7259 = vsel %vm7251, %v2877, 0
      %v7262 = vsel %vm7251, %v2889, 0
      %v7265 = vsel %vm7251, %v2901, 0
      %v7268 = vsel %vm7251, %v2913, 0
      %v7271 = vsel %vm7251, %v2925, 0
      %v7274 = vsel %vm7251, %v2937, 0
      %v7277 = vsel %vm7251, %v4989, 0
      %v7280 = vsel %vm7251, %v5001, 0
      %v7283 = vsel %vm7251, %v5013, 0
      %v7286 = vsel %vm7251, %v5025, 0
      %v7289 = vsel %vm7251, %v5037, 0
      %v7292 = vsel %vm7251, %v5049, 0
      %v7295 = vsel %vm7251, %v5061, 0
      %v7298 = vsel %vm7251, %v5073, 0
      %7300 = vmatprep.subr.bf16.mxu0 0
      %7301 = vmatpush1.bf16.xpose.msra.mxu0 %v7277
      %7302 = vmatprep.subr.bf16.mxu0 0
      %7303 = vmatpush1.bf16.xpose.msra.mxu0 %v7280
      %7304 = vmatprep.subr.bf16.mxu0 0
      %7305 = vmatpush1.bf16.xpose.msra.mxu0 %v7283
      %7306 = vmatprep.subr.bf16.mxu0 0
      %7307 = vmatpush1.bf16.xpose.msra.mxu0 %v7286
      %7308 = vmatprep.subr.bf16.mxu0 0
      %7309 = vmatpush1.bf16.xpose.msra.mxu0 %v7289
      %7310 = vmatprep.subr.bf16.mxu0 0
      %7311 = vmatpush1.bf16.xpose.msra.mxu0 %v7292
      %7312 = vmatprep.subr.bf16.mxu0 0
      %7313 = vmatpush1.bf16.xpose.msra.mxu0 %v7295
      %7314 = vmatprep.subr.bf16.mxu0 0
      %7315 = vmatpush1.bf16.xpose.msra.mxu0 %v7298
      %7316 = vmatprep.subr.bf16.mxu0 0
      %7317 = vmatpush1.bf16.xpose.msra.mxu0 0
      %7318 = vmatprep.subr.bf16.mxu0 0
      %7319 = vmatpush1.bf16.xpose.msra.mxu0 0
      %7320 = vmatprep.subr.bf16.mxu0 0
      %7321 = vmatpush1.bf16.xpose.msra.mxu0 0
      %7322 = vmatprep.subr.bf16.mxu0 0
      %7323 = vmatpush1.bf16.xpose.msra.mxu0 0
      %7324 = vmatprep.subr.bf16.mxu0 0
      %7325 = vmatpush1.bf16.xpose.msra.mxu0 0
      %7326 = vmatprep.subr.bf16.mxu0 0
      %7327 = vmatpush1.bf16.xpose.msra.mxu0 0
      %7328 = vmatprep.subr.bf16.mxu0 0
      %7329 = vmatpush1.bf16.xpose.msra.mxu0 0
      %7330 = vmatprep.subr.bf16.mxu0 0
      %7331 = vmatpush1.bf16.xpose.msra.mxu0 0
      %7332 = vmatprep.mubr.bf16.mxu0 0
      %7333 = vmatmul.mubr.bf16.gmra.mrb[0].mxu0 %v7253
      %v7334 = vpop.f32.mrb[0].mxu0
      %v7335 = vadd.f32 0.0, %v7334
      %v7336 = vpop.f32.mrb[0].mxu0
      %v7337 = vpop.f32.mrb[0].mxu0
      %v7338 = vadd.f32 0.0, %v7337
      %v7339 = vpop.f32.mrb[0].mxu0
      %7340 = vmatprep.mubr.bf16.mxu0 0
      %7341 = vmatmul.mubr.bf16.gmra.mrb[0].mxu0 %v7256
      %v7342 = vpop.f32.mrb[0].mxu0
      %v7343 = vadd.f32 0.0, %v7342
      %v7344 = vpop.f32.mrb[0].mxu0
      %v7345 = vpop.f32.mrb[0].mxu0
      %v7346 = vadd.f32 0.0, %v7345
      %v7347 = vpop.f32.mrb[0].mxu0
      %7348 = vmatprep.mubr.bf16.mxu0 0
      %7349 = vmatmul.mubr.bf16.gmra.mrb[0].mxu0 %v7259
      %v7350 = vpop.f32.mrb[0].mxu0
      %v7351 = vadd.f32 0.0, %v7350
      %v7352 = vpop.f32.mrb[0].mxu0
      %v7353 = vpop.f32.mrb[0].mxu0
      %v7354 = vadd.f32 0.0, %v7353
      %v7355 = vpop.f32.mrb[0].mxu0
      %7356 = vmatprep.mubr.bf16.mxu0 0
      %7357 = vmatmul.mubr.bf16.gmra.mrb[0].mxu0 %v7262
      %v7358 = vpop.f32.mrb[0].mxu0
      %v7359 = vadd.f32 0.0, %v7358
      %v7360 = vpop.f32.mrb[0].mxu0
      %v7361 = vpop.f32.mrb[0].mxu0
      %v7362 = vadd.f32 0.0, %v7361
      %v7363 = vpop.f32.mrb[0].mxu0
      %7364 = vmatprep.mubr.bf16.mxu0 0
      %7365 = vmatmul.mubr.bf16.gmra.mrb[0].mxu0 %v7265
      %v7366 = vpop.f32.mrb[0].mxu0
      %v7367 = vadd.f32 0.0, %v7366
      %v7368 = vpop.f32.mrb[0].mxu0
      %v7369 = vpop.f32.mrb[0].mxu0
      %v7370 = vadd.f32 0.0, %v7369
      %v7371 = vpop.f32.mrb[0].mxu0
      %7372 = vmatprep.mubr.bf16.mxu0 0
      %7373 = vmatmul.mubr.bf16.gmra.mrb[0].mxu0 %v7268
      %v7374 = vpop.f32.mrb[0].mxu0
      %v7375 = vadd.f32 0.0, %v7374
      %v7376 = vpop.f32.mrb[0].mxu0
      %v7377 = vpop.f32.mrb[0].mxu0
      %v7378 = vadd.f32 0.0, %v7377
      %v7379 = vpop.f32.mrb[0].mxu0
      %7380 = vmatprep.mubr.bf16.mxu0 0
      %7381 = vmatmul.mubr.bf16.gmra.mrb[0].mxu0 %v7271
      %v7382 = vpop.f32.mrb[0].mxu0
      %v7383 = vadd.f32 0.0, %v7382
      %v7384 = vpop.f32.mrb[0].mxu0
      %v7385 = vpop.f32.mrb[0].mxu0
      %v7386 = vadd.f32 0.0, %v7385
      %v7387 = vpop.f32.mrb[0].mxu0
      %7388 = vmatprep.mubr.bf16.mxu0 0
      %7389 = vmatmul.mubr.bf16.gmra.mrb[0].mxu0 %v7274
      %v7390 = vpop.f32.mrb[0].mxu0
      %v7391 = vadd.f32 0.0, %v7390
      %v7392 = vpop.f32.mrb[0].mxu0
      %v7393 = vpop.f32.mrb[0].mxu0
      %v7394 = vadd.f32 0.0, %v7393
      %v7395 = vpop.f32.mrb[0].mxu0
      %7396 = vdwg.mxu0
      %v7398 = vsel %vm7251, %v2856, 0
      %v7401 = vsel %vm7251, %v2868, 0
      %v7404 = vsel %vm7251, %v2880, 0
      %v7407 = vsel %vm7251, %v2892, 0
      %v7410 = vsel %vm7251, %v2904, 0
      %v7413 = vsel %vm7251, %v2916, 0
      %v7416 = vsel %vm7251, %v2928, 0
      %v7419 = vsel %vm7251, %v2940, 0
      %v7422 = vsel %vm7251, %v4992, 0
      %v7425 = vsel %vm7251, %v5004, 0
      %v7428 = vsel %vm7251, %v5016, 0
      %v7431 = vsel %vm7251, %v5028, 0
      %v7434 = vsel %vm7251, %v5040, 0
      %v7437 = vsel %vm7251, %v5052, 0
      %v7440 = vsel %vm7251, %v5064, 0
      %v7443 = vsel %vm7251, %v5076, 0
      %7445 = vmatprep.subr.bf16.mxu0 0
      %7446 = vmatpush1.bf16.xpose.msra.mxu0 %v7422
      %7447 = vmatprep.subr.bf16.mxu0 0
      %7448 = vmatpush1.bf16.xpose.msra.mxu0 %v7425
      %7449 = vmatprep.subr.bf16.mxu0 0
      %7450 = vmatpush1.bf16.xpose.msra.mxu0 %v7428
      %7451 = vmatprep.subr.bf16.mxu0 0
      %7452 = vmatpush1.bf16.xpose.msra.mxu0 %v7431
      %7453 = vmatprep.subr.bf16.mxu0 0
      %7454 = vmatpush1.bf16.xpose.msra.mxu0 %v7434
      %7455 = vmatprep.subr.bf16.mxu0 0
      %7456 = vmatpush1.bf16.xpose.msra.mxu0 %v7437
      %7457 = vmatprep.subr.bf16.mxu0 0
      %7458 = vmatpush1.bf16.xpose.msra.mxu0 %v7440
      %7459 = vmatprep.subr.bf16.mxu0 0
      %7460 = vmatpush1.bf16.xpose.msra.mxu0 %v7443
      %7461 = vmatprep.subr.bf16.mxu0 0
      %7462 = vmatpush1.bf16.xpose.msra.mxu0 0
      %7463 = vmatprep.subr.bf16.mxu0 0
      %7464 = vmatpush1.bf16.xpose.msra.mxu0 0
      %7465 = vmatprep.subr.bf16.mxu0 0
      %7466 = vmatpush1.bf16.xpose.msra.mxu0 0
      %7467 = vmatprep.subr.bf16.mxu0 0
      %7468 = vmatpush1.bf16.xpose.msra.mxu0 0
      %7469 = vmatprep.subr.bf16.mxu0 0
      %7470 = vmatpush1.bf16.xpose.msra.mxu0 0
      %7471 = vmatprep.subr.bf16.mxu0 0
      %7472 = vmatpush1.bf16.xpose.msra.mxu0 0
      %7473 = vmatprep.subr.bf16.mxu0 0
      %7474 = vmatpush1.bf16.xpose.msra.mxu0 0
      %7475 = vmatprep.subr.bf16.mxu0 0
      %7476 = vmatpush1.bf16.xpose.msra.mxu0 0
      %7477 = vmatprep.mubr.bf16.mxu0 0
      %7478 = vmatmul.mubr.bf16.gmra.mrb[0].mxu0 %v7398
      %v7479 = vpop.f32.mrb[0].mxu0
      %v7480 = vadd.f32 0.0, %v7479
      %v7481 = vpop.f32.mrb[0].mxu0
      %v7482 = vpop.f32.mrb[0].mxu0
      %v7483 = vadd.f32 0.0, %v7482
      %v7484 = vpop.f32.mrb[0].mxu0
      %7485 = vmatprep.mubr.bf16.mxu0 0
      %7486 = vmatmul.mubr.bf16.gmra.mrb[0].mxu0 %v7401
      %v7487 = vpop.f32.mrb[0].mxu0
      %v7488 = vadd.f32 0.0, %v7487
      %v7489 = vpop.f32.mrb[0].mxu0
      %v7490 = vpop.f32.mrb[0].mxu0
      %v7491 = vadd.f32 0.0, %v7490
      %v7492 = vpop.f32.mrb[0].mxu0
      %7493 = vmatprep.mubr.bf16.mxu0 0
      %7494 = vmatmul.mubr.bf16.gmra.mrb[0].mxu0 %v7404
      %v7495 = vpop.f32.mrb[0].mxu0
      %v7496 = vadd.f32 0.0, %v7495
      %v7497 = vpop.f32.mrb[0].mxu0
      %v7498 = vpop.f32.mrb[0].mxu0
      %v7499 = vadd.f32 0.0, %v7498
      %v7500 = vpop.f32.mrb[0].mxu0
      %7501 = vmatprep.mubr.bf16.mxu0 0
      %7502 = vmatmul.mubr.bf16.gmra.mrb[0].mxu0 %v7407
      %v7503 = vpop.f32.mrb[0].mxu0
      %v7504 = vadd.f32 0.0, %v7503
      %v7505 = vpop.f32.mrb[0].mxu0
      %v7506 = vpop.f32.mrb[0].mxu0
      %v7507 = vadd.f32 0.0, %v7506
      %v7508 = vpop.f32.mrb[0].mxu0
      %7509 = vmatprep.mubr.bf16.mxu0 0
      %7510 = vmatmul.mubr.bf16.gmra.mrb[0].mxu0 %v7410
      %v7511 = vpop.f32.mrb[0].mxu0
      %v7512 = vadd.f32 0.0, %v7511
      %v7513 = vpop.f32.mrb[0].mxu0
      %v7514 = vpop.f32.mrb[0].mxu0
      %v7515 = vadd.f32 0.0, %v7514
      %v7516 = vpop.f32.mrb[0].mxu0
      %7517 = vmatprep.mubr.bf16.mxu0 0
      %7518 = vmatmul.mubr.bf16.gmra.mrb[0].mxu0 %v7413
      %v7519 = vpop.f32.mrb[0].mxu0
      %v7520 = vadd.f32 0.0, %v7519
      %v7521 = vpop.f32.mrb[0].mxu0
      %v7522 = vpop.f32.mrb[0].mxu0
      %v7523 = vadd.f32 0.0, %v7522
      %v7524 = vpop.f32.mrb[0].mxu0
      %7525 = vmatprep.mubr.bf16.mxu0 0
      %7526 = vmatmul.mubr.bf16.gmra.mrb[0].mxu0 %v7416
      %v7527 = vpop.f32.mrb[0].mxu0
      %v7528 = vadd.f32 0.0, %v7527
      %v7529 = vpop.f32.mrb[0].mxu0
      %v7530 = vpop.f32.mrb[0].mxu0
      %v7531 = vadd.f32 0.0, %v7530
      %v7532 = vpop.f32.mrb[0].mxu0
      %7533 = vmatprep.mubr.bf16.mxu0 0
      %7534 = vmatmul.mubr.bf16.gmra.mrb[0].mxu0 %v7419
      %v7535 = vpop.f32.mrb[0].mxu0
      %v7536 = vadd.f32 0.0, %v7535
      %v7537 = vpop.f32.mrb[0].mxu0
      %v7538 = vpop.f32.mrb[0].mxu0
      %v7539 = vadd.f32 0.0, %v7538
      %v7540 = vpop.f32.mrb[0].mxu0
      %7541 = vdwg.mxu0
      %v7543 = vsel %vm7251, %v2859, 0
      %v7546 = vsel %vm7251, %v2871, 0
      %v7549 = vsel %vm7251, %v2883, 0
      %v7552 = vsel %vm7251, %v2895, 0
      %v7555 = vsel %vm7251, %v2907, 0
      %v7558 = vsel %vm7251, %v2919, 0
      %v7561 = vsel %vm7251, %v2931, 0
      %v7564 = vsel %vm7251, %v2943, 0
      %v7567 = vsel %vm7251, %v4995, 0
      %v7570 = vsel %vm7251, %v5007, 0
      %v7573 = vsel %vm7251, %v5019, 0
      %v7576 = vsel %vm7251, %v5031, 0
      %v7579 = vsel %vm7251, %v5043, 0
      %v7582 = vsel %vm7251, %v5055, 0
      %v7585 = vsel %vm7251, %v5067, 0
      %v7588 = vsel %vm7251, %v5079, 0
      %7590 = vmatprep.subr.bf16.mxu0 0
      %7591 = vmatpush1.bf16.xpose.msra.mxu0 %v7567
      %7592 = vmatprep.subr.bf16.mxu0 0
      %7593 = vmatpush1.bf16.xpose.msra.mxu0 %v7570
      %7594 = vmatprep.subr.bf16.mxu0 0
      %7595 = vmatpush1.bf16.xpose.msra.mxu0 %v7573
      %7596 = vmatprep.subr.bf16.mxu0 0
      %7597 = vmatpush1.bf16.xpose.msra.mxu0 %v7576
      %7598 = vmatprep.subr.bf16.mxu0 0
      %7599 = vmatpush1.bf16.xpose.msra.mxu0 %v7579
      %7600 = vmatprep.subr.bf16.mxu0 0
      %7601 = vmatpush1.bf16.xpose.msra.mxu0 %v7582
      %7602 = vmatprep.subr.bf16.mxu0 0
      %7603 = vmatpush1.bf16.xpose.msra.mxu0 %v7585
      %7604 = vmatprep.subr.bf16.mxu0 0
      %7605 = vmatpush1.bf16.xpose.msra.mxu0 %v7588
      %7606 = vmatprep.subr.bf16.mxu0 0
      %7607 = vmatpush1.bf16.xpose.msra.mxu0 0
      %7608 = vmatprep.subr.bf16.mxu0 0
      %7609 = vmatpush1.bf16.xpose.msra.mxu0 0
      %7610 = vmatprep.subr.bf16.mxu0 0
      %7611 = vmatpush1.bf16.xpose.msra.mxu0 0
      %7612 = vmatprep.subr.bf16.mxu0 0
      %7613 = vmatpush1.bf16.xpose.msra.mxu0 0
      %7614 = vmatprep.subr.bf16.mxu0 0
      %7615 = vmatpush1.bf16.xpose.msra.mxu0 0
      %7616 = vmatprep.subr.bf16.mxu0 0
      %7617 = vmatpush1.bf16.xpose.msra.mxu0 0
      %7618 = vmatprep.subr.bf16.mxu0 0
      %7619 = vmatpush1.bf16.xpose.msra.mxu0 0
      %7620 = vmatprep.subr.bf16.mxu0 0
      %7621 = vmatpush1.bf16.xpose.msra.mxu0 0
      %7622 = vmatprep.mubr.bf16.mxu0 0
      %7623 = vmatmul.mubr.bf16.gmra.mrb[0].mxu0 %v7543
      %v7624 = vpop.f32.mrb[0].mxu0
      %v7625 = vadd.f32 0.0, %v7624
      %v7626 = vpop.f32.mrb[0].mxu0
      %v7627 = vpop.f32.mrb[0].mxu0
      %v7628 = vadd.f32 0.0, %v7627
      %v7629 = vpop.f32.mrb[0].mxu0
      %7630 = vmatprep.mubr.bf16.mxu0 0
      %7631 = vmatmul.mubr.bf16.gmra.mrb[0].mxu0 %v7546
      %v7632 = vpop.f32.mrb[0].mxu0
      %v7633 = vadd.f32 0.0, %v7632
      %v7634 = vpop.f32.mrb[0].mxu0
      %v7635 = vpop.f32.mrb[0].mxu0
      %v7636 = vadd.f32 0.0, %v7635
      %v7637 = vpop.f32.mrb[0].mxu0
      %7638 = vmatprep.mubr.bf16.mxu0 0
      %7639 = vmatmul.mubr.bf16.gmra.mrb[0].mxu0 %v7549
      %v7640 = vpop.f32.mrb[0].mxu0
      %v7641 = vadd.f32 0.0, %v7640
      %v7642 = vpop.f32.mrb[0].mxu0
      %v7643 = vpop.f32.mrb[0].mxu0
      %v7644 = vadd.f32 0.0, %v7643
      %v7645 = vpop.f32.mrb[0].mxu0
      %7646 = vmatprep.mubr.bf16.mxu0 0
      %7647 = vmatmul.mubr.bf16.gmra.mrb[0].mxu0 %v7552
      %v7648 = vpop.f32.mrb[0].mxu0
      %v7649 = vadd.f32 0.0, %v7648
      %v7650 = vpop.f32.mrb[0].mxu0
      %v7651 = vpop.f32.mrb[0].mxu0
      %v7652 = vadd.f32 0.0, %v7651
      %v7653 = vpop.f32.mrb[0].mxu0
      %7654 = vmatprep.mubr.bf16.mxu0 0
      %7655 = vmatmul.mubr.bf16.gmra.mrb[0].mxu0 %v7555
      %v7656 = vpop.f32.mrb[0].mxu0
      %v7657 = vadd.f32 0.0, %v7656
      %v7658 = vpop.f32.mrb[0].mxu0
      %v7659 = vpop.f32.mrb[0].mxu0
      %v7660 = vadd.f32 0.0, %v7659
      %v7661 = vpop.f32.mrb[0].mxu0
      %7662 = vmatprep.mubr.bf16.mxu0 0
      %7663 = vmatmul.mubr.bf16.gmra.mrb[0].mxu0 %v7558
      %v7664 = vpop.f32.mrb[0].mxu0
      %v7665 = vadd.f32 0.0, %v7664
      %v7666 = vpop.f32.mrb[0].mxu0
      %v7667 = vpop.f32.mrb[0].mxu0
      %v7668 = vadd.f32 0.0, %v7667
      %v7669 = vpop.f32.mrb[0].mxu0
      %7670 = vmatprep.mubr.bf16.mxu0 0
      %7671 = vmatmul.mubr.bf16.gmra.mrb[0].mxu0 %v7561
      %v7672 = vpop.f32.mrb[0].mxu0
      %v7673 = vadd.f32 0.0, %v7672
      %v7674 = vpop.f32.mrb[0].mxu0
      %v7675 = vpop.f32.mrb[0].mxu0
      %v7676 = vadd.f32 0.0, %v7675
      %v7677 = vpop.f32.mrb[0].mxu0
      %7678 = vmatprep.mubr.bf16.mxu0 0
      %7679 = vmatmul.mubr.bf16.gmra.mrb[0].mxu0 %v7564
      %v7680 = vpop.f32.mrb[0].mxu0
      %v7681 = vadd.f32 0.0, %v7680
      %v7682 = vpop.f32.mrb[0].mxu0
      %v7683 = vpop.f32.mrb[0].mxu0
      %v7684 = vadd.f32 0.0, %v7683
      %v7685 = vpop.f32.mrb[0].mxu0
      %7686 = vdwg.mxu0
      %v7688 = vsel %vm7251, %v2862, 0
      %v7691 = vsel %vm7251, %v2874, 0
      %v7694 = vsel %vm7251, %v2886, 0
      %v7697 = vsel %vm7251, %v2898, 0
      %v7700 = vsel %vm7251, %v2910, 0
      %v7703 = vsel %vm7251, %v2922, 0
      %v7706 = vsel %vm7251, %v2934, 0
      %v7709 = vsel %vm7251, %v2946, 0
      %v7712 = vsel %vm7251, %v4998, 0
      %v7715 = vsel %vm7251, %v5010, 0
      %v7718 = vsel %vm7251, %v5022, 0
      %v7721 = vsel %vm7251, %v5034, 0
      %v7724 = vsel %vm7251, %v5046, 0
      %v7727 = vsel %vm7251, %v5058, 0
      %v7730 = vsel %vm7251, %v5070, 0
      %v7733 = vsel %vm7251, %v5082, 0
      %7735 = vmatprep.subr.bf16.mxu0 0
      %7736 = vmatpush1.bf16.xpose.msra.mxu0 %v7712
      %7737 = vmatprep.subr.bf16.mxu0 0
      %7738 = vmatpush1.bf16.xpose.msra.mxu0 %v7715
      %7739 = vmatprep.subr.bf16.mxu0 0
      %7740 = vmatpush1.bf16.xpose.msra.mxu0 %v7718
      %7741 = vmatprep.subr.bf16.mxu0 0
      %7742 = vmatpush1.bf16.xpose.msra.mxu0 %v7721
      %7743 = vmatprep.subr.bf16.mxu0 0
      %7744 = vmatpush1.bf16.xpose.msra.mxu0 %v7724
      %7745 = vmatprep.subr.bf16.mxu0 0
      %7746 = vmatpush1.bf16.xpose.msra.mxu0 %v7727
      %7747 = vmatprep.subr.bf16.mxu0 0
      %7748 = vmatpush1.bf16.xpose.msra.mxu0 %v7730
      %7749 = vmatprep.subr.bf16.mxu0 0
      %7750 = vmatpush1.bf16.xpose.msra.mxu0 %v7733
      %7751 = vmatprep.subr.bf16.mxu0 0
      %7752 = vmatpush1.bf16.xpose.msra.mxu0 0
      %7753 = vmatprep.subr.bf16.mxu0 0
      %7754 = vmatpush1.bf16.xpose.msra.mxu0 0
      %7755 = vmatprep.subr.bf16.mxu0 0
      %7756 = vmatpush1.bf16.xpose.msra.mxu0 0
      %7757 = vmatprep.subr.bf16.mxu0 0
      %7758 = vmatpush1.bf16.xpose.msra.mxu0 0
      %7759 = vmatprep.subr.bf16.mxu0 0
      %7760 = vmatpush1.bf16.xpose.msra.mxu0 0
      %7761 = vmatprep.subr.bf16.mxu0 0
      %7762 = vmatpush1.bf16.xpose.msra.mxu0 0
      %7763 = vmatprep.subr.bf16.mxu0 0
      %7764 = vmatpush1.bf16.xpose.msra.mxu0 0
      %7765 = vmatprep.subr.bf16.mxu0 0
      %7766 = vmatpush1.bf16.xpose.msra.mxu0 0
      %7767 = vmatprep.mubr.bf16.mxu0 0
      %7768 = vmatmul.mubr.bf16.gmra.mrb[0].mxu0 %v7688
      %v7769 = vpop.f32.mrb[0].mxu0
      %v7770 = vadd.f32 0.0, %v7769
      %v7771 = vpop.f32.mrb[0].mxu0
      %v7772 = vpop.f32.mrb[0].mxu0
      %v7773 = vadd.f32 0.0, %v7772
      %v7774 = vpop.f32.mrb[0].mxu0
      %7775 = vmatprep.mubr.bf16.mxu0 0
      %7776 = vmatmul.mubr.bf16.gmra.mrb[0].mxu0 %v7691
      %v7777 = vpop.f32.mrb[0].mxu0
      %v7778 = vadd.f32 0.0, %v7777
      %v7779 = vpop.f32.mrb[0].mxu0
      %v7780 = vpop.f32.mrb[0].mxu0
      %v7781 = vadd.f32 0.0, %v7780
      %v7782 = vpop.f32.mrb[0].mxu0
      %7783 = vmatprep.mubr.bf16.mxu0 0
      %7784 = vmatmul.mubr.bf16.gmra.mrb[0].mxu0 %v7694
      %v7785 = vpop.f32.mrb[0].mxu0
      %v7786 = vadd.f32 0.0, %v7785
      %v7787 = vpop.f32.mrb[0].mxu0
      %v7788 = vpop.f32.mrb[0].mxu0
      %v7789 = vadd.f32 0.0, %v7788
      %v7790 = vpop.f32.mrb[0].mxu0
      %7791 = vmatprep.mubr.bf16.mxu0 0
      %7792 = vmatmul.mubr.bf16.gmra.mrb[0].mxu0 %v7697
      %v7793 = vpop.f32.mrb[0].mxu0
      %v7794 = vadd.f32 0.0, %v7793
      %v7795 = vpop.f32.mrb[0].mxu0
      %v7796 = vpop.f32.mrb[0].mxu0
      %v7797 = vadd.f32 0.0, %v7796
      %v7798 = vpop.f32.mrb[0].mxu0
      %7799 = vmatprep.mubr.bf16.mxu0 0
      %7800 = vmatmul.mubr.bf16.gmra.mrb[0].mxu0 %v7700
      %v7801 = vpop.f32.mrb[0].mxu0
      %v7802 = vadd.f32 0.0, %v7801
      %v7803 = vpop.f32.mrb[0].mxu0
      %v7804 = vpop.f32.mrb[0].mxu0
      %v7805 = vadd.f32 0.0, %v7804
      %v7806 = vpop.f32.mrb[0].mxu0
      %7807 = vmatprep.mubr.bf16.mxu0 0
      %7808 = vmatmul.mubr.bf16.gmra.mrb[0].mxu0 %v7703
      %v7809 = vpop.f32.mrb[0].mxu0
      %v7810 = vadd.f32 0.0, %v7809
      %v7811 = vpop.f32.mrb[0].mxu0
      %v7812 = vpop.f32.mrb[0].mxu0
      %v7813 = vadd.f32 0.0, %v7812
      %v7814 = vpop.f32.mrb[0].mxu0
      %7815 = vmatprep.mubr.bf16.mxu0 0
      %7816 = vmatmul.mubr.bf16.gmra.mrb[0].mxu0 %v7706
      %v7817 = vpop.f32.mrb[0].mxu0
      %v7818 = vadd.f32 0.0, %v7817
      %v7819 = vpop.f32.mrb[0].mxu0
      %v7820 = vpop.f32.mrb[0].mxu0
      %v7821 = vadd.f32 0.0, %v7820
      %v7822 = vpop.f32.mrb[0].mxu0
      %7823 = vmatprep.mubr.bf16.mxu0 0
      %7824 = vmatmul.mubr.bf16.gmra.mrb[0].mxu0 %v7709
      %v7825 = vpop.f32.mrb[0].mxu0
      %v7826 = vadd.f32 0.0, %v7825
      %v7827 = vpop.f32.mrb[0].mxu0
      %v7828 = vpop.f32.mrb[0].mxu0
      %v7829 = vadd.f32 0.0, %v7828
      %v7830 = vpop.f32.mrb[0].mxu0
      %7831 = vdwg.mxu0
      %v7832 = vlaneseq
      %v7833 = vand.u32 %v7832, 127
      %vm7834 = vcmp.lt.s32.totalorder %v7833, 8
      %v7835 = vsel %vm7834, 1, 0
      %vm7836 = vcmp.eq.s32.totalorder %v7835, 1
      %v7837 = vsel %vm7836, %v7335, -1e+30
      %v7838 = vsel %vm7836, %v7338, -1e+30
      %v7839 = vsel %vm7836, %v7343, -1e+30
      %v7840 = vsel %vm7836, %v7346, -1e+30
      %v7841 = vsel %vm7836, %v7351, -1e+30
      %v7842 = vsel %vm7836, %v7354, -1e+30
      %v7843 = vsel %vm7836, %v7359, -1e+30
      %v7844 = vsel %vm7836, %v7362, -1e+30
      %v7845 = vsel %vm7836, %v7367, -1e+30
      %v7846 = vsel %vm7836, %v7370, -1e+30
      %v7847 = vsel %vm7836, %v7375, -1e+30
      %v7848 = vsel %vm7836, %v7378, -1e+30
      %v7849 = vsel %vm7836, %v7383, -1e+30
      %v7850 = vsel %vm7836, %v7386, -1e+30
      %v7851 = vsel %vm7836, %v7391, -1e+30
      %v7852 = vsel %vm7836, %v7394, -1e+30
      %v7853 = vsel %vm7836, %v7480, -1e+30
      %v7854 = vsel %vm7836, %v7483, -1e+30
      %v7855 = vsel %vm7836, %v7488, -1e+30
      %v7856 = vsel %vm7836, %v7491, -1e+30
      %v7857 = vsel %vm7836, %v7496, -1e+30
      %v7858 = vsel %vm7836, %v7499, -1e+30
      %v7859 = vsel %vm7836, %v7504, -1e+30
      %v7860 = vsel %vm7836, %v7507, -1e+30
      %v7861 = vsel %vm7836, %v7512, -1e+30
      %v7862 = vsel %vm7836, %v7515, -1e+30
      %v7863 = vsel %vm7836, %v7520, -1e+30
      %v7864 = vsel %vm7836, %v7523, -1e+30
      %v7865 = vsel %vm7836, %v7528, -1e+30
      %v7866 = vsel %vm7836, %v7531, -1e+30
      %v7867 = vsel %vm7836, %v7536, -1e+30
      %v7868 = vsel %vm7836, %v7539, -1e+30
      %v7869 = vsel %vm7836, %v7625, -1e+30
      %v7870 = vsel %vm7836, %v7628, -1e+30
      %v7871 = vsel %vm7836, %v7633, -1e+30
      %v7872 = vsel %vm7836, %v7636, -1e+30
      %v7873 = vsel %vm7836, %v7641, -1e+30
      %v7874 = vsel %vm7836, %v7644, -1e+30
      %v7875 = vsel %vm7836, %v7649, -1e+30
      %v7876 = vsel %vm7836, %v7652, -1e+30
      %v7877 = vsel %vm7836, %v7657, -1e+30
      %v7878 = vsel %vm7836, %v7660, -1e+30
      %v7879 = vsel %vm7836, %v7665, -1e+30
      %v7880 = vsel %vm7836, %v7668, -1e+30
      %v7881 = vsel %vm7836, %v7673, -1e+30
      %v7882 = vsel %vm7836, %v7676, -1e+30
      %v7883 = vsel %vm7836, %v7681, -1e+30
      %v7884 = vsel %vm7836, %v7684, -1e+30
      %v7885 = vsel %vm7836, %v7770, -1e+30
      %v7886 = vsel %vm7836, %v7773, -1e+30
      %v7887 = vsel %vm7836, %v7778, -1e+30
      %v7888 = vsel %vm7836, %v7781, -1e+30
      %v7889 = vsel %vm7836, %v7786, -1e+30
      %v7890 = vsel %vm7836, %v7789, -1e+30
      %v7891 = vsel %vm7836, %v7794, -1e+30
      %v7892 = vsel %vm7836, %v7797, -1e+30
      %v7893 = vsel %vm7836, %v7802, -1e+30
      %v7894 = vsel %vm7836, %v7805, -1e+30
      %v7895 = vsel %vm7836, %v7810, -1e+30
      %v7896 = vsel %vm7836, %v7813, -1e+30
      %v7897 = vsel %vm7836, %v7818, -1e+30
      %v7898 = vsel %vm7836, %v7821, -1e+30
      %v7899 = vsel %vm7836, %v7826, -1e+30
      %v7900 = vsel %vm7836, %v7829, -1e+30
      %7901 = vmax.xlane.f32.xlu0 %v7837
      %v7902 = vpop.xlane.xlu0 %7901
      %7903 = vmax.xlane.f32.xlu0 %v7838
      %v7904 = vpop.xlane.xlu0 %7903
      %7905 = vmax.xlane.f32.xlu0 %v7839
      %v7906 = vpop.xlane.xlu0 %7905
      %7907 = vmax.xlane.f32.xlu0 %v7840
      %v7908 = vpop.xlane.xlu0 %7907
      %7909 = vmax.xlane.f32.xlu0 %v7841
      %v7910 = vpop.xlane.xlu0 %7909
      %7911 = vmax.xlane.f32.xlu0 %v7842
      %v7912 = vpop.xlane.xlu0 %7911
      %7913 = vmax.xlane.f32.xlu0 %v7843
      %v7914 = vpop.xlane.xlu0 %7913
      %7915 = vmax.xlane.f32.xlu0 %v7844
      %v7916 = vpop.xlane.xlu0 %7915
      %7917 = vmax.xlane.f32.xlu0 %v7845
      %v7918 = vpop.xlane.xlu0 %7917
      %7919 = vmax.xlane.f32.xlu0 %v7846
      %v7920 = vpop.xlane.xlu0 %7919
      %7921 = vmax.xlane.f32.xlu0 %v7847
      %v7922 = vpop.xlane.xlu0 %7921
      %7923 = vmax.xlane.f32.xlu0 %v7848
      %v7924 = vpop.xlane.xlu0 %7923
      %7925 = vmax.xlane.f32.xlu0 %v7849
      %v7926 = vpop.xlane.xlu0 %7925
      %7927 = vmax.xlane.f32.xlu0 %v7850
      %v7928 = vpop.xlane.xlu0 %7927
      %7929 = vmax.xlane.f32.xlu0 %v7851
      %v7930 = vpop.xlane.xlu0 %7929
      %7931 = vmax.xlane.f32.xlu0 %v7852
      %v7932 = vpop.xlane.xlu0 %7931
      %7933 = vmax.xlane.f32.xlu0 %v7853
      %v7934 = vpop.xlane.xlu0 %7933
      %7935 = vmax.xlane.f32.xlu0 %v7854
      %v7936 = vpop.xlane.xlu0 %7935
      %7937 = vmax.xlane.f32.xlu0 %v7855
      %v7938 = vpop.xlane.xlu0 %7937
      %7939 = vmax.xlane.f32.xlu0 %v7856
      %v7940 = vpop.xlane.xlu0 %7939
      %7941 = vmax.xlane.f32.xlu0 %v7857
      %v7942 = vpop.xlane.xlu0 %7941
      %7943 = vmax.xlane.f32.xlu0 %v7858
      %v7944 = vpop.xlane.xlu0 %7943
      %7945 = vmax.xlane.f32.xlu0 %v7859
      %v7946 = vpop.xlane.xlu0 %7945
      %7947 = vmax.xlane.f32.xlu0 %v7860
      %v7948 = vpop.xlane.xlu0 %7947
      %7949 = vmax.xlane.f32.xlu0 %v7861
      %v7950 = vpop.xlane.xlu0 %7949
      %7951 = vmax.xlane.f32.xlu0 %v7862
      %v7952 = vpop.xlane.xlu0 %7951
      %7953 = vmax.xlane.f32.xlu0 %v7863
      %v7954 = vpop.xlane.xlu0 %7953
      %7955 = vmax.xlane.f32.xlu0 %v7864
      %v7956 = vpop.xlane.xlu0 %7955
      %7957 = vmax.xlane.f32.xlu0 %v7865
      %v7958 = vpop.xlane.xlu0 %7957
      %7959 = vmax.xlane.f32.xlu0 %v7866
      %v7960 = vpop.xlane.xlu0 %7959
      %7961 = vmax.xlane.f32.xlu0 %v7867
      %v7962 = vpop.xlane.xlu0 %7961
      %7963 = vmax.xlane.f32.xlu0 %v7868
      %v7964 = vpop.xlane.xlu0 %7963
      %7965 = vmax.xlane.f32.xlu0 %v7869
      %v7966 = vpop.xlane.xlu0 %7965
      %7967 = vmax.xlane.f32.xlu0 %v7870
      %v7968 = vpop.xlane.xlu0 %7967
      %7969 = vmax.xlane.f32.xlu0 %v7871
      %v7970 = vpop.xlane.xlu0 %7969
      %7971 = vmax.xlane.f32.xlu0 %v7872
      %v7972 = vpop.xlane.xlu0 %7971
      %7973 = vmax.xlane.f32.xlu0 %v7873
      %v7974 = vpop.xlane.xlu0 %7973
      %7975 = vmax.xlane.f32.xlu0 %v7874
      %v7976 = vpop.xlane.xlu0 %7975
      %7977 = vmax.xlane.f32.xlu0 %v7875
      %v7978 = vpop.xlane.xlu0 %7977
      %7979 = vmax.xlane.f32.xlu0 %v7876
      %v7980 = vpop.xlane.xlu0 %7979
      %7981 = vmax.xlane.f32.xlu0 %v7877
      %v7982 = vpop.xlane.xlu0 %7981
      %7983 = vmax.xlane.f32.xlu0 %v7878
      %v7984 = vpop.xlane.xlu0 %7983
      %7985 = vmax.xlane.f32.xlu0 %v7879
      %v7986 = vpop.xlane.xlu0 %7985
      %7987 = vmax.xlane.f32.xlu0 %v7880
      %v7988 = vpop.xlane.xlu0 %7987
      %7989 = vmax.xlane.f32.xlu0 %v7881
      %v7990 = vpop.xlane.xlu0 %7989
      %7991 = vmax.xlane.f32.xlu0 %v7882
      %v7992 = vpop.xlane.xlu0 %7991
      %7993 = vmax.xlane.f32.xlu0 %v7883
      %v7994 = vpop.xlane.xlu0 %7993
      %7995 = vmax.xlane.f32.xlu0 %v7884
      %v7996 = vpop.xlane.xlu0 %7995
      %7997 = vmax.xlane.f32.xlu0 %v7885
      %v7998 = vpop.xlane.xlu0 %7997
      %7999 = vmax.xlane.f32.xlu0 %v7886
      %v8000 = vpop.xlane.xlu0 %7999
      %8001 = vmax.xlane.f32.xlu0 %v7887
      %v8002 = vpop.xlane.xlu0 %8001
      %8003 = vmax.xlane.f32.xlu0 %v7888
      %v8004 = vpop.xlane.xlu0 %8003
      %8005 = vmax.xlane.f32.xlu0 %v7889
      %v8006 = vpop.xlane.xlu0 %8005
      %8007 = vmax.xlane.f32.xlu0 %v7890
      %v8008 = vpop.xlane.xlu0 %8007
      %8009 = vmax.xlane.f32.xlu0 %v7891
      %v8010 = vpop.xlane.xlu0 %8009
      %8011 = vmax.xlane.f32.xlu0 %v7892
      %v8012 = vpop.xlane.xlu0 %8011
      %8013 = vmax.xlane.f32.xlu0 %v7893
      %v8014 = vpop.xlane.xlu0 %8013
      %8015 = vmax.xlane.f32.xlu0 %v7894
      %v8016 = vpop.xlane.xlu0 %8015
      %8017 = vmax.xlane.f32.xlu0 %v7895
      %v8018 = vpop.xlane.xlu0 %8017
      %8019 = vmax.xlane.f32.xlu0 %v7896
      %v8020 = vpop.xlane.xlu0 %8019
      %8021 = vmax.xlane.f32.xlu0 %v7897
      %v8022 = vpop.xlane.xlu0 %8021
      %8023 = vmax.xlane.f32.xlu0 %v7898
      %v8024 = vpop.xlane.xlu0 %8023
      %8025 = vmax.xlane.f32.xlu0 %v7899
      %v8026 = vpop.xlane.xlu0 %8025
      %8027 = vmax.xlane.f32.xlu0 %v7900
      %v8028 = vpop.xlane.xlu0 %8027
      %v8029 = vsub.f32 %v7837, %v7902
      %v8030 = vsub.f32 %v7838, %v7904
      %v8031 = vsub.f32 %v7839, %v7906
      %v8032 = vsub.f32 %v7840, %v7908
      %v8033 = vsub.f32 %v7841, %v7910
      %v8034 = vsub.f32 %v7842, %v7912
      %v8035 = vsub.f32 %v7843, %v7914
      %v8036 = vsub.f32 %v7844, %v7916
      %v8037 = vsub.f32 %v7845, %v7918
      %v8038 = vsub.f32 %v7846, %v7920
      %v8039 = vsub.f32 %v7847, %v7922
      %v8040 = vsub.f32 %v7848, %v7924
      %v8041 = vsub.f32 %v7849, %v7926
      %v8042 = vsub.f32 %v7850, %v7928
      %v8043 = vsub.f32 %v7851, %v7930
      %v8044 = vsub.f32 %v7852, %v7932
      %v8045 = vsub.f32 %v7853, %v7934
      %v8046 = vsub.f32 %v7854, %v7936
      %v8047 = vsub.f32 %v7855, %v7938
      %v8048 = vsub.f32 %v7856, %v7940
      %v8049 = vsub.f32 %v7857, %v7942
      %v8050 = vsub.f32 %v7858, %v7944
      %v8051 = vsub.f32 %v7859, %v7946
      %v8052 = vsub.f32 %v7860, %v7948
      %v8053 = vsub.f32 %v7861, %v7950
      %v8054 = vsub.f32 %v7862, %v7952
      %v8055 = vsub.f32 %v7863, %v7954
      %v8056 = vsub.f32 %v7864, %v7956
      %v8057 = vsub.f32 %v7865, %v7958
      %v8058 = vsub.f32 %v7866, %v7960
      %v8059 = vsub.f32 %v7867, %v7962
      %v8060 = vsub.f32 %v7868, %v7964
      %v8061 = vsub.f32 %v7869, %v7966
      %v8062 = vsub.f32 %v7870, %v7968
      %v8063 = vsub.f32 %v7871, %v7970
      %v8064 = vsub.f32 %v7872, %v7972
      %v8065 = vsub.f32 %v7873, %v7974
      %v8066 = vsub.f32 %v7874, %v7976
      %v8067 = vsub.f32 %v7875, %v7978
      %v8068 = vsub.f32 %v7876, %v7980
      %v8069 = vsub.f32 %v7877, %v7982
      %v8070 = vsub.f32 %v7878, %v7984
      %v8071 = vsub.f32 %v7879, %v7986
      %v8072 = vsub.f32 %v7880, %v7988
      %v8073 = vsub.f32 %v7881, %v7990
      %v8074 = vsub.f32 %v7882, %v7992
      %v8075 = vsub.f32 %v7883, %v7994
      %v8076 = vsub.f32 %v7884, %v7996
      %v8077 = vsub.f32 %v7885, %v7998
      %v8078 = vsub.f32 %v7886, %v8000
      %v8079 = vsub.f32 %v7887, %v8002
      %v8080 = vsub.f32 %v7888, %v8004
      %v8081 = vsub.f32 %v7889, %v8006
      %v8082 = vsub.f32 %v7890, %v8008
      %v8083 = vsub.f32 %v7891, %v8010
      %v8084 = vsub.f32 %v7892, %v8012
      %v8085 = vsub.f32 %v7893, %v8014
      %v8086 = vsub.f32 %v7894, %v8016
      %v8087 = vsub.f32 %v7895, %v8018
      %v8088 = vsub.f32 %v7896, %v8020
      %v8089 = vsub.f32 %v7897, %v8022
      %v8090 = vsub.f32 %v7898, %v8024
      %v8091 = vsub.f32 %v7899, %v8026
      %v8092 = vsub.f32 %v7900, %v8028
      %v8093 = vmul.f32 %v8029, 1.442695
      %v8094 = vpow.pop %v8093
      %v8095 = vmul.f32 %v8030, 1.442695
      %v8096 = vpow.pop %v8095
      %v8097 = vmul.f32 %v8031, 1.442695
      %v8098 = vpow.pop %v8097
      %v8099 = vmul.f32 %v8032, 1.442695
      %v8100 = vpow.pop %v8099
      %v8101 = vmul.f32 %v8033, 1.442695
      %v8102 = vpow.pop %v8101
      %v8103 = vmul.f32 %v8034, 1.442695
      %v8104 = vpow.pop %v8103
      %v8105 = vmul.f32 %v8035, 1.442695
      %v8106 = vpow.pop %v8105
      %v8107 = vmul.f32 %v8036, 1.442695
      %v8108 = vpow.pop %v8107
      %v8109 = vmul.f32 %v8037, 1.442695
      %v8110 = vpow.pop %v8109
      %v8111 = vmul.f32 %v8038, 1.442695
      %v8112 = vpow.pop %v8111
      %v8113 = vmul.f32 %v8039, 1.442695
      %v8114 = vpow.pop %v8113
      %v8115 = vmul.f32 %v8040, 1.442695
      %v8116 = vpow.pop %v8115
      %v8117 = vmul.f32 %v8041, 1.442695
      %v8118 = vpow.pop %v8117
      %v8119 = vmul.f32 %v8042, 1.442695
      %v8120 = vpow.pop %v8119
      %v8121 = vmul.f32 %v8043, 1.442695
      %v8122 = vpow.pop %v8121
      %v8123 = vmul.f32 %v8044, 1.442695
      %v8124 = vpow.pop %v8123
      %v8125 = vmul.f32 %v8045, 1.442695
      %v8126 = vpow.pop %v8125
      %v8127 = vmul.f32 %v8046, 1.442695
      %v8128 = vpow.pop %v8127
      %v8129 = vmul.f32 %v8047, 1.442695
      %v8130 = vpow.pop %v8129
      %v8131 = vmul.f32 %v8048, 1.442695
      %v8132 = vpow.pop %v8131
      %v8133 = vmul.f32 %v8049, 1.442695
      %v8134 = vpow.pop %v8133
      %v8135 = vmul.f32 %v8050, 1.442695
      %v8136 = vpow.pop %v8135
      %v8137 = vmul.f32 %v8051, 1.442695
      %v8138 = vpow.pop %v8137
      %v8139 = vmul.f32 %v8052, 1.442695
      %v8140 = vpow.pop %v8139
      %v8141 = vmul.f32 %v8053, 1.442695
      %v8142 = vpow.pop %v8141
      %v8143 = vmul.f32 %v8054, 1.442695
      %v8144 = vpow.pop %v8143
      %v8145 = vmul.f32 %v8055, 1.442695
      %v8146 = vpow.pop %v8145
      %v8147 = vmul.f32 %v8056, 1.442695
      %v8148 = vpow.pop %v8147
      %v8149 = vmul.f32 %v8057, 1.442695
      %v8150 = vpow.pop %v8149
      %v8151 = vmul.f32 %v8058, 1.442695
      %v8152 = vpow.pop %v8151
      %v8153 = vmul.f32 %v8059, 1.442695
      %v8154 = vpow.pop %v8153
      %v8155 = vmul.f32 %v8060, 1.442695
      %v8156 = vpow.pop %v8155
      %v8157 = vmul.f32 %v8061, 1.442695
      %v8158 = vpow.pop %v8157
      %v8159 = vmul.f32 %v8062, 1.442695
      %v8160 = vpow.pop %v8159
      %v8161 = vmul.f32 %v8063, 1.442695
      %v8162 = vpow.pop %v8161
      %v8163 = vmul.f32 %v8064, 1.442695
      %v8164 = vpow.pop %v8163
      %v8165 = vmul.f32 %v8065, 1.442695
      %v8166 = vpow.pop %v8165
      %v8167 = vmul.f32 %v8066, 1.442695
      %v8168 = vpow.pop %v8167
      %v8169 = vmul.f32 %v8067, 1.442695
      %v8170 = vpow.pop %v8169
      %v8171 = vmul.f32 %v8068, 1.442695
      %v8172 = vpow.pop %v8171
      %v8173 = vmul.f32 %v8069, 1.442695
      %v8174 = vpow.pop %v8173
      %v8175 = vmul.f32 %v8070, 1.442695
      %v8176 = vpow.pop %v8175
      %v8177 = vmul.f32 %v8071, 1.442695
      %v8178 = vpow.pop %v8177
      %v8179 = vmul.f32 %v8072, 1.442695
      %v8180 = vpow.pop %v8179
      %v8181 = vmul.f32 %v8073, 1.442695
      %v8182 = vpow.pop %v8181
      %v8183 = vmul.f32 %v8074, 1.442695
      %v8184 = vpow.pop %v8183
      %v8185 = vmul.f32 %v8075, 1.442695
      %v8186 = vpow.pop %v8185
      %v8187 = vmul.f32 %v8076, 1.442695
      %v8188 = vpow.pop %v8187
      %v8189 = vmul.f32 %v8077, 1.442695
      %v8190 = vpow.pop %v8189
      %v8191 = vmul.f32 %v8078, 1.442695
      %v8192 = vpow.pop %v8191
      %v8193 = vmul.f32 %v8079, 1.442695
      %v8194 = vpow.pop %v8193
      %v8195 = vmul.f32 %v8080, 1.442695
      %v8196 = vpow.pop %v8195
      %v8197 = vmul.f32 %v8081, 1.442695
      %v8198 = vpow.pop %v8197
      %v8199 = vmul.f32 %v8082, 1.442695
      %v8200 = vpow.pop %v8199
      %v8201 = vmul.f32 %v8083, 1.442695
      %v8202 = vpow.pop %v8201
      %v8203 = vmul.f32 %v8084, 1.442695
      %v8204 = vpow.pop %v8203
      %v8205 = vmul.f32 %v8085, 1.442695
      %v8206 = vpow.pop %v8205
      %v8207 = vmul.f32 %v8086, 1.442695
      %v8208 = vpow.pop %v8207
      %v8209 = vmul.f32 %v8087, 1.442695
      %v8210 = vpow.pop %v8209
      %v8211 = vmul.f32 %v8088, 1.442695
      %v8212 = vpow.pop %v8211
      %v8213 = vmul.f32 %v8089, 1.442695
      %v8214 = vpow.pop %v8213
      %v8215 = vmul.f32 %v8090, 1.442695
      %v8216 = vpow.pop %v8215
      %v8217 = vmul.f32 %v8091, 1.442695
      %v8218 = vpow.pop %v8217
      %v8219 = vmul.f32 %v8092, 1.442695
      %v8220 = vpow.pop %v8219
      %8221 = vadd.xlane.f32.xlu0 %v8094
      %v8222 = vpop.xlane.xlu0 %8221
      %8223 = vadd.xlane.f32.xlu0 %v8096
      %v8224 = vpop.xlane.xlu0 %8223
      %8225 = vadd.xlane.f32.xlu0 %v8098
      %v8226 = vpop.xlane.xlu0 %8225
      %8227 = vadd.xlane.f32.xlu0 %v8100
      %v8228 = vpop.xlane.xlu0 %8227
      %8229 = vadd.xlane.f32.xlu0 %v8102
      %v8230 = vpop.xlane.xlu0 %8229
      %8231 = vadd.xlane.f32.xlu0 %v8104
      %v8232 = vpop.xlane.xlu0 %8231
      %8233 = vadd.xlane.f32.xlu0 %v8106
      %v8234 = vpop.xlane.xlu0 %8233
      %8235 = vadd.xlane.f32.xlu0 %v8108
      %v8236 = vpop.xlane.xlu0 %8235
      %8237 = vadd.xlane.f32.xlu0 %v8110
      %v8238 = vpop.xlane.xlu0 %8237
      %8239 = vadd.xlane.f32.xlu0 %v8112
      %v8240 = vpop.xlane.xlu0 %8239
      %8241 = vadd.xlane.f32.xlu0 %v8114
      %v8242 = vpop.xlane.xlu0 %8241
      %8243 = vadd.xlane.f32.xlu0 %v8116
      %v8244 = vpop.xlane.xlu0 %8243
      %8245 = vadd.xlane.f32.xlu0 %v8118
      %v8246 = vpop.xlane.xlu0 %8245
      %8247 = vadd.xlane.f32.xlu0 %v8120
      %v8248 = vpop.xlane.xlu0 %8247
      %8249 = vadd.xlane.f32.xlu0 %v8122
      %v8250 = vpop.xlane.xlu0 %8249
      %8251 = vadd.xlane.f32.xlu0 %v8124
      %v8252 = vpop.xlane.xlu0 %8251
      %8253 = vadd.xlane.f32.xlu0 %v8126
      %v8254 = vpop.xlane.xlu0 %8253
      %8255 = vadd.xlane.f32.xlu0 %v8128
      %v8256 = vpop.xlane.xlu0 %8255
      %8257 = vadd.xlane.f32.xlu0 %v8130
      %v8258 = vpop.xlane.xlu0 %8257
      %8259 = vadd.xlane.f32.xlu0 %v8132
      %v8260 = vpop.xlane.xlu0 %8259
      %8261 = vadd.xlane.f32.xlu0 %v8134
      %v8262 = vpop.xlane.xlu0 %8261
      %8263 = vadd.xlane.f32.xlu0 %v8136
      %v8264 = vpop.xlane.xlu0 %8263
      %8265 = vadd.xlane.f32.xlu0 %v8138
      %v8266 = vpop.xlane.xlu0 %8265
      %8267 = vadd.xlane.f32.xlu0 %v8140
      %v8268 = vpop.xlane.xlu0 %8267
      %8269 = vadd.xlane.f32.xlu0 %v8142
      %v8270 = vpop.xlane.xlu0 %8269
      %8271 = vadd.xlane.f32.xlu0 %v8144
      %v8272 = vpop.xlane.xlu0 %8271
      %8273 = vadd.xlane.f32.xlu0 %v8146
      %v8274 = vpop.xlane.xlu0 %8273
      %8275 = vadd.xlane.f32.xlu0 %v8148
      %v8276 = vpop.xlane.xlu0 %8275
      %8277 = vadd.xlane.f32.xlu0 %v8150
      %v8278 = vpop.xlane.xlu0 %8277
      %8279 = vadd.xlane.f32.xlu0 %v8152
      %v8280 = vpop.xlane.xlu0 %8279
      %8281 = vadd.xlane.f32.xlu0 %v8154
      %v8282 = vpop.xlane.xlu0 %8281
      %8283 = vadd.xlane.f32.xlu0 %v8156
      %v8284 = vpop.xlane.xlu0 %8283
      %8285 = vadd.xlane.f32.xlu0 %v8158
      %v8286 = vpop.xlane.xlu0 %8285
      %8287 = vadd.xlane.f32.xlu0 %v8160
      %v8288 = vpop.xlane.xlu0 %8287
      %8289 = vadd.xlane.f32.xlu0 %v8162
      %v8290 = vpop.xlane.xlu0 %8289
      %8291 = vadd.xlane.f32.xlu0 %v8164
      %v8292 = vpop.xlane.xlu0 %8291
      %8293 = vadd.xlane.f32.xlu0 %v8166
      %v8294 = vpop.xlane.xlu0 %8293
      %8295 = vadd.xlane.f32.xlu0 %v8168
      %v8296 = vpop.xlane.xlu0 %8295
      %8297 = vadd.xlane.f32.xlu0 %v8170
      %v8298 = vpop.xlane.xlu0 %8297
      %8299 = vadd.xlane.f32.xlu0 %v8172
      %v8300 = vpop.xlane.xlu0 %8299
      %8301 = vadd.xlane.f32.xlu0 %v8174
      %v8302 = vpop.xlane.xlu0 %8301
      %8303 = vadd.xlane.f32.xlu0 %v8176
      %v8304 = vpop.xlane.xlu0 %8303
      %8305 = vadd.xlane.f32.xlu0 %v8178
      %v8306 = vpop.xlane.xlu0 %8305
      %8307 = vadd.xlane.f32.xlu0 %v8180
      %v8308 = vpop.xlane.xlu0 %8307
      %8309 = vadd.xlane.f32.xlu0 %v8182
      %v8310 = vpop.xlane.xlu0 %8309
      %8311 = vadd.xlane.f32.xlu0 %v8184
      %v8312 = vpop.xlane.xlu0 %8311
      %8313 = vadd.xlane.f32.xlu0 %v8186
      %v8314 = vpop.xlane.xlu0 %8313
      %8315 = vadd.xlane.f32.xlu0 %v8188
      %v8316 = vpop.xlane.xlu0 %8315
      %8317 = vadd.xlane.f32.xlu0 %v8190
      %v8318 = vpop.xlane.xlu0 %8317
      %8319 = vadd.xlane.f32.xlu0 %v8192
      %v8320 = vpop.xlane.xlu0 %8319
      %8321 = vadd.xlane.f32.xlu0 %v8194
      %v8322 = vpop.xlane.xlu0 %8321
      %8323 = vadd.xlane.f32.xlu0 %v8196
      %v8324 = vpop.xlane.xlu0 %8323
      %8325 = vadd.xlane.f32.xlu0 %v8198
      %v8326 = vpop.xlane.xlu0 %8325
      %8327 = vadd.xlane.f32.xlu0 %v8200
      %v8328 = vpop.xlane.xlu0 %8327
      %8329 = vadd.xlane.f32.xlu0 %v8202
      %v8330 = vpop.xlane.xlu0 %8329
      %8331 = vadd.xlane.f32.xlu0 %v8204
      %v8332 = vpop.xlane.xlu0 %8331
      %8333 = vadd.xlane.f32.xlu0 %v8206
      %v8334 = vpop.xlane.xlu0 %8333
      %8335 = vadd.xlane.f32.xlu0 %v8208
      %v8336 = vpop.xlane.xlu0 %8335
      %8337 = vadd.xlane.f32.xlu0 %v8210
      %v8338 = vpop.xlane.xlu0 %8337
      %8339 = vadd.xlane.f32.xlu0 %v8212
      %v8340 = vpop.xlane.xlu0 %8339
      %8341 = vadd.xlane.f32.xlu0 %v8214
      %v8342 = vpop.xlane.xlu0 %8341
      %8343 = vadd.xlane.f32.xlu0 %v8216
      %v8344 = vpop.xlane.xlu0 %8343
      %8345 = vadd.xlane.f32.xlu0 %v8218
      %v8346 = vpop.xlane.xlu0 %8345
      %8347 = vadd.xlane.f32.xlu0 %v8220
      %v8348 = vpop.xlane.xlu0 %8347
      %v8349 = vrcp.pop %v8222
      %v8350 = vrcp.pop %v8224
      %v8351 = vrcp.pop %v8226
      %v8352 = vrcp.pop %v8228
      %v8353 = vrcp.pop %v8230
      %v8354 = vrcp.pop %v8232
      %v8355 = vrcp.pop %v8234
      %v8356 = vrcp.pop %v8236
      %v8357 = vrcp.pop %v8238
      %v8358 = vrcp.pop %v8240
      %v8359 = vrcp.pop %v8242
      %v8360 = vrcp.pop %v8244
      %v8361 = vrcp.pop %v8246
      %v8362 = vrcp.pop %v8248
      %v8363 = vrcp.pop %v8250
      %v8364 = vrcp.pop %v8252
      %v8365 = vrcp.pop %v8254
      %v8366 = vrcp.pop %v8256
      %v8367 = vrcp.pop %v8258
      %v8368 = vrcp.pop %v8260
      %v8369 = vrcp.pop %v8262
      %v8370 = vrcp.pop %v8264
      %v8371 = vrcp.pop %v8266
      %v8372 = vrcp.pop %v8268
      %v8373 = vrcp.pop %v8270
      %v8374 = vrcp.pop %v8272
      %v8375 = vrcp.pop %v8274
      %v8376 = vrcp.pop %v8276
      %v8377 = vrcp.pop %v8278
      %v8378 = vrcp.pop %v8280
      %v8379 = vrcp.pop %v8282
      %v8380 = vrcp.pop %v8284
      %v8381 = vrcp.pop %v8286
      %v8382 = vrcp.pop %v8288
      %v8383 = vrcp.pop %v8290
      %v8384 = vrcp.pop %v8292
      %v8385 = vrcp.pop %v8294
      %v8386 = vrcp.pop %v8296
      %v8387 = vrcp.pop %v8298
      %v8388 = vrcp.pop %v8300
      %v8389 = vrcp.pop %v8302
      %v8390 = vrcp.pop %v8304
      %v8391 = vrcp.pop %v8306
      %v8392 = vrcp.pop %v8308
      %v8393 = vrcp.pop %v8310
      %v8394 = vrcp.pop %v8312
      %v8395 = vrcp.pop %v8314
      %v8396 = vrcp.pop %v8316
      %v8397 = vrcp.pop %v8318
      %v8398 = vrcp.pop %v8320
      %v8399 = vrcp.pop %v8322
      %v8400 = vrcp.pop %v8324
      %v8401 = vrcp.pop %v8326
      %v8402 = vrcp.pop %v8328
      %v8403 = vrcp.pop %v8330
      %v8404 = vrcp.pop %v8332
      %v8405 = vrcp.pop %v8334
      %v8406 = vrcp.pop %v8336
      %v8407 = vrcp.pop %v8338
      %v8408 = vrcp.pop %v8340
      %v8409 = vrcp.pop %v8342
      %v8410 = vrcp.pop %v8344
      %v8411 = vrcp.pop %v8346
      %v8412 = vrcp.pop %v8348
      %v8413 = vmul.f32 %v8094, %v8349
      %v8414 = vmul.f32 %v8096, %v8350
      %v8415 = vmul.f32 %v8098, %v8351
      %v8416 = vmul.f32 %v8100, %v8352
      %v8417 = vmul.f32 %v8102, %v8353
      %v8418 = vmul.f32 %v8104, %v8354
      %v8419 = vmul.f32 %v8106, %v8355
      %v8420 = vmul.f32 %v8108, %v8356
      %v8421 = vmul.f32 %v8110, %v8357
      %v8422 = vmul.f32 %v8112, %v8358
      %v8423 = vmul.f32 %v8114, %v8359
      %v8424 = vmul.f32 %v8116, %v8360
      %v8425 = vmul.f32 %v8118, %v8361
      %v8426 = vmul.f32 %v8120, %v8362
      %v8427 = vmul.f32 %v8122, %v8363
      %v8428 = vmul.f32 %v8124, %v8364
      %v8429 = vmul.f32 %v8126, %v8365
      %v8430 = vmul.f32 %v8128, %v8366
      %v8431 = vmul.f32 %v8130, %v8367
      %v8432 = vmul.f32 %v8132, %v8368
      %v8433 = vmul.f32 %v8134, %v8369
      %v8434 = vmul.f32 %v8136, %v8370
      %v8435 = vmul.f32 %v8138, %v8371
      %v8436 = vmul.f32 %v8140, %v8372
      %v8437 = vmul.f32 %v8142, %v8373
      %v8438 = vmul.f32 %v8144, %v8374
      %v8439 = vmul.f32 %v8146, %v8375
      %v8440 = vmul.f32 %v8148, %v8376
      %v8441 = vmul.f32 %v8150, %v8377
      %v8442 = vmul.f32 %v8152, %v8378
      %v8443 = vmul.f32 %v8154, %v8379
      %v8444 = vmul.f32 %v8156, %v8380
      %v8445 = vmul.f32 %v8158, %v8381
      %v8446 = vmul.f32 %v8160, %v8382
      %v8447 = vmul.f32 %v8162, %v8383
      %v8448 = vmul.f32 %v8164, %v8384
      %v8449 = vmul.f32 %v8166, %v8385
      %v8450 = vmul.f32 %v8168, %v8386
      %v8451 = vmul.f32 %v8170, %v8387
      %v8452 = vmul.f32 %v8172, %v8388
      %v8453 = vmul.f32 %v8174, %v8389
      %v8454 = vmul.f32 %v8176, %v8390
      %v8455 = vmul.f32 %v8178, %v8391
      %v8456 = vmul.f32 %v8180, %v8392
      %v8457 = vmul.f32 %v8182, %v8393
      %v8458 = vmul.f32 %v8184, %v8394
      %v8459 = vmul.f32 %v8186, %v8395
      %v8460 = vmul.f32 %v8188, %v8396
      %v8461 = vmul.f32 %v8190, %v8397
      %v8462 = vmul.f32 %v8192, %v8398
      %v8463 = vmul.f32 %v8194, %v8399
      %v8464 = vmul.f32 %v8196, %v8400
      %v8465 = vmul.f32 %v8198, %v8401
      %v8466 = vmul.f32 %v8200, %v8402
      %v8467 = vmul.f32 %v8202, %v8403
      %v8468 = vmul.f32 %v8204, %v8404
      %v8469 = vmul.f32 %v8206, %v8405
      %v8470 = vmul.f32 %v8208, %v8406
      %v8471 = vmul.f32 %v8210, %v8407
      %v8472 = vmul.f32 %v8212, %v8408
      %v8473 = vmul.f32 %v8214, %v8409
      %v8474 = vmul.f32 %v8216, %v8410
      %v8475 = vmul.f32 %v8218, %v8411
      %v8476 = vmul.f32 %v8220, %v8412
      %v8477 = vpack.c.bf16 %v8414, %v8413
      %v8478 = vpack.c.bf16 %v8416, %v8415
      %v8479 = vpack.c.bf16 %v8418, %v8417
      %v8480 = vpack.c.bf16 %v8420, %v8419
      %v8481 = vpack.c.bf16 %v8422, %v8421
      %v8482 = vpack.c.bf16 %v8424, %v8423
      %v8483 = vpack.c.bf16 %v8426, %v8425
      %v8484 = vpack.c.bf16 %v8428, %v8427
      %v8485 = vpack.c.bf16 %v8430, %v8429
      %v8486 = vpack.c.bf16 %v8432, %v8431
      %v8487 = vpack.c.bf16 %v8434, %v8433
      %v8488 = vpack.c.bf16 %v8436, %v8435
      %v8489 = vpack.c.bf16 %v8438, %v8437
      %v8490 = vpack.c.bf16 %v8440, %v8439
      %v8491 = vpack.c.bf16 %v8442, %v8441
      %v8492 = vpack.c.bf16 %v8444, %v8443
      %v8493 = vpack.c.bf16 %v8446, %v8445
      %v8494 = vpack.c.bf16 %v8448, %v8447
      %v8495 = vpack.c.bf16 %v8450, %v8449
      %v8496 = vpack.c.bf16 %v8452, %v8451
      %v8497 = vpack.c.bf16 %v8454, %v8453
      %v8498 = vpack.c.bf16 %v8456, %v8455
      %v8499 = vpack.c.bf16 %v8458, %v8457
      %v8500 = vpack.c.bf16 %v8460, %v8459
      %v8501 = vpack.c.bf16 %v8462, %v8461
      %v8502 = vpack.c.bf16 %v8464, %v8463
      %v8503 = vpack.c.bf16 %v8466, %v8465
      %v8504 = vpack.c.bf16 %v8468, %v8467
      %v8505 = vpack.c.bf16 %v8470, %v8469
      %v8506 = vpack.c.bf16 %v8472, %v8471
      %v8507 = vpack.c.bf16 %v8474, %v8473
      %v8508 = vpack.c.bf16 %v8476, %v8475
      %8509 = vmatprep.subr.bf16.mxu0 0
      %8510 = vmatpush1.bf16.msra.mxu0 %v7125
      %8511 = vmatprep.subr.bf16.mxu0 0
      %8512 = vmatpush1.bf16.msra.mxu0 %v7141
      %8513 = vmatprep.subr.bf16.mxu0 0
      %8514 = vmatpush1.bf16.msra.mxu0 %v7157
      %8515 = vmatprep.subr.bf16.mxu0 0
      %8516 = vmatpush1.bf16.msra.mxu0 %v7173
      %8517 = vmatprep.subr.bf16.mxu0 0
      %8518 = vmatpush1.bf16.msra.mxu0 %v7189
      %8519 = vmatprep.subr.bf16.mxu0 0
      %8520 = vmatpush1.bf16.msra.mxu0 %v7205
      %8521 = vmatprep.subr.bf16.mxu0 0
      %8522 = vmatpush1.bf16.msra.mxu0 %v7221
      %8523 = vmatprep.subr.bf16.mxu0 0
      %8524 = vmatpush1.bf16.msra.mxu0 %v7237
      %8525 = vmatprep.subr.bf16.mxu0 0
      %8526 = vmatpush1.bf16.msra.mxu0 0
      %8527 = vmatprep.subr.bf16.mxu0 0
      %8528 = vmatpush1.bf16.msra.mxu0 0
      %8529 = vmatprep.subr.bf16.mxu0 0
      %8530 = vmatpush1.bf16.msra.mxu0 0
      %8531 = vmatprep.subr.bf16.mxu0 0
      %8532 = vmatpush1.bf16.msra.mxu0 0
      %8533 = vmatprep.subr.bf16.mxu0 0
      %8534 = vmatpush1.bf16.msra.mxu0 0
      %8535 = vmatprep.subr.bf16.mxu0 0
      %8536 = vmatpush1.bf16.msra.mxu0 0
      %8537 = vmatprep.subr.bf16.mxu0 0
      %8538 = vmatpush1.bf16.msra.mxu0 0
      %8539 = vmatprep.subr.bf16.mxu0 0
      %8540 = vmatpush1.bf16.msra.mxu0 0
      %8541 = vmatprep.mubr.bf16.mxu0 0
      %8542 = vmatmul.mubr.bf16.gmra.mrb[0].mxu0 %v8477
      %v8543 = vpop.f32.mrb[0].mxu0
      %v8544 = vadd.f32 0.0, %v8543
      %v8545 = vpop.f32.mrb[0].mxu0
      %v8546 = vpop.f32.mrb[0].mxu0
      %v8547 = vadd.f32 0.0, %v8546
      %v8548 = vpop.f32.mrb[0].mxu0
      %8549 = vmatprep.mubr.bf16.mxu0 0
      %8550 = vmatmul.mubr.bf16.gmra.mrb[0].mxu0 %v8478
      %v8551 = vpop.f32.mrb[0].mxu0
      %v8552 = vadd.f32 0.0, %v8551
      %v8553 = vpop.f32.mrb[0].mxu0
      %v8554 = vpop.f32.mrb[0].mxu0
      %v8555 = vadd.f32 0.0, %v8554
      %v8556 = vpop.f32.mrb[0].mxu0
      %8557 = vmatprep.mubr.bf16.mxu0 0
      %8558 = vmatmul.mubr.bf16.gmra.mrb[0].mxu0 %v8479
      %v8559 = vpop.f32.mrb[0].mxu0
      %v8560 = vadd.f32 0.0, %v8559
      %v8561 = vpop.f32.mrb[0].mxu0
      %v8562 = vpop.f32.mrb[0].mxu0
      %v8563 = vadd.f32 0.0, %v8562
      %v8564 = vpop.f32.mrb[0].mxu0
      %8565 = vmatprep.mubr.bf16.mxu0 0
      %8566 = vmatmul.mubr.bf16.gmra.mrb[0].mxu0 %v8480
      %v8567 = vpop.f32.mrb[0].mxu0
      %v8568 = vadd.f32 0.0, %v8567
      %v8569 = vpop.f32.mrb[0].mxu0
      %v8570 = vpop.f32.mrb[0].mxu0
      %v8571 = vadd.f32 0.0, %v8570
      %v8572 = vpop.f32.mrb[0].mxu0
      %8573 = vmatprep.mubr.bf16.mxu0 0
      %8574 = vmatmul.mubr.bf16.gmra.mrb[0].mxu0 %v8481
      %v8575 = vpop.f32.mrb[0].mxu0
      %v8576 = vadd.f32 0.0, %v8575
      %v8577 = vpop.f32.mrb[0].mxu0
      %v8578 = vpop.f32.mrb[0].mxu0
      %v8579 = vadd.f32 0.0, %v8578
      %v8580 = vpop.f32.mrb[0].mxu0
      %8581 = vmatprep.mubr.bf16.mxu0 0
      %8582 = vmatmul.mubr.bf16.gmra.mrb[0].mxu0 %v8482
      %v8583 = vpop.f32.mrb[0].mxu0
      %v8584 = vadd.f32 0.0, %v8583
      %v8585 = vpop.f32.mrb[0].mxu0
      %v8586 = vpop.f32.mrb[0].mxu0
      %v8587 = vadd.f32 0.0, %v8586
      %v8588 = vpop.f32.mrb[0].mxu0
      %8589 = vmatprep.mubr.bf16.mxu0 0
      %8590 = vmatmul.mubr.bf16.gmra.mrb[0].mxu0 %v8483
      %v8591 = vpop.f32.mrb[0].mxu0
      %v8592 = vadd.f32 0.0, %v8591
      %v8593 = vpop.f32.mrb[0].mxu0
      %v8594 = vpop.f32.mrb[0].mxu0
      %v8595 = vadd.f32 0.0, %v8594
      %v8596 = vpop.f32.mrb[0].mxu0
      %8597 = vmatprep.mubr.bf16.mxu0 0
      %8598 = vmatmul.mubr.bf16.gmra.mrb[0].mxu0 %v8484
      %v8599 = vpop.f32.mrb[0].mxu0
      %v8600 = vadd.f32 0.0, %v8599
      %v8601 = vpop.f32.mrb[0].mxu0
      %v8602 = vpop.f32.mrb[0].mxu0
      %v8603 = vadd.f32 0.0, %v8602
      %v8604 = vpop.f32.mrb[0].mxu0
      %8605 = vdwg.mxu0
      %8606 = vmatprep.subr.bf16.mxu0 0
      %8607 = vmatpush1.bf16.msra.mxu0 %v7129
      %8608 = vmatprep.subr.bf16.mxu0 0
      %8609 = vmatpush1.bf16.msra.mxu0 %v7145
      %8610 = vmatprep.subr.bf16.mxu0 0
      %8611 = vmatpush1.bf16.msra.mxu0 %v7161
      %8612 = vmatprep.subr.bf16.mxu0 0
      %8613 = vmatpush1.bf16.msra.mxu0 %v7177
      %8614 = vmatprep.subr.bf16.mxu0 0
      %8615 = vmatpush1.bf16.msra.mxu0 %v7193
      %8616 = vmatprep.subr.bf16.mxu0 0
      %8617 = vmatpush1.bf16.msra.mxu0 %v7209
      %8618 = vmatprep.subr.bf16.mxu0 0
      %8619 = vmatpush1.bf16.msra.mxu0 %v7225
      %8620 = vmatprep.subr.bf16.mxu0 0
      %8621 = vmatpush1.bf16.msra.mxu0 %v7241
      %8622 = vmatprep.subr.bf16.mxu0 0
      %8623 = vmatpush1.bf16.msra.mxu0 0
      %8624 = vmatprep.subr.bf16.mxu0 0
      %8625 = vmatpush1.bf16.msra.mxu0 0
      %8626 = vmatprep.subr.bf16.mxu0 0
      %8627 = vmatpush1.bf16.msra.mxu0 0
      %8628 = vmatprep.subr.bf16.mxu0 0
      %8629 = vmatpush1.bf16.msra.mxu0 0
      %8630 = vmatprep.subr.bf16.mxu0 0
      %8631 = vmatpush1.bf16.msra.mxu0 0
      %8632 = vmatprep.subr.bf16.mxu0 0
      %8633 = vmatpush1.bf16.msra.mxu0 0
      %8634 = vmatprep.subr.bf16.mxu0 0
      %8635 = vmatpush1.bf16.msra.mxu0 0
      %8636 = vmatprep.subr.bf16.mxu0 0
      %8637 = vmatpush1.bf16.msra.mxu0 0
      %8638 = vmatprep.mubr.bf16.mxu0 0
      %8639 = vmatmul.mubr.bf16.gmra.mrb[0].mxu0 %v8485
      %v8640 = vpop.f32.mrb[0].mxu0
      %v8641 = vadd.f32 0.0, %v8640
      %v8642 = vpop.f32.mrb[0].mxu0
      %v8643 = vpop.f32.mrb[0].mxu0
      %v8644 = vadd.f32 0.0, %v8643
      %v8645 = vpop.f32.mrb[0].mxu0
      %8646 = vmatprep.mubr.bf16.mxu0 0
      %8647 = vmatmul.mubr.bf16.gmra.mrb[0].mxu0 %v8486
      %v8648 = vpop.f32.mrb[0].mxu0
      %v8649 = vadd.f32 0.0, %v8648
      %v8650 = vpop.f32.mrb[0].mxu0
      %v8651 = vpop.f32.mrb[0].mxu0
      %v8652 = vadd.f32 0.0, %v8651
      %v8653 = vpop.f32.mrb[0].mxu0
      %8654 = vmatprep.mubr.bf16.mxu0 0
      %8655 = vmatmul.mubr.bf16.gmra.mrb[0].mxu0 %v8487
      %v8656 = vpop.f32.mrb[0].mxu0
      %v8657 = vadd.f32 0.0, %v8656
      %v8658 = vpop.f32.mrb[0].mxu0
      %v8659 = vpop.f32.mrb[0].mxu0
      %v8660 = vadd.f32 0.0, %v8659
      %v8661 = vpop.f32.mrb[0].mxu0
      %8662 = vmatprep.mubr.bf16.mxu0 0
      %8663 = vmatmul.mubr.bf16.gmra.mrb[0].mxu0 %v8488
      %v8664 = vpop.f32.mrb[0].mxu0
      %v8665 = vadd.f32 0.0, %v8664
      %v8666 = vpop.f32.mrb[0].mxu0
      %v8667 = vpop.f32.mrb[0].mxu0
      %v8668 = vadd.f32 0.0, %v8667
      %v8669 = vpop.f32.mrb[0].mxu0
      %8670 = vmatprep.mubr.bf16.mxu0 0
      %8671 = vmatmul.mubr.bf16.gmra.mrb[0].mxu0 %v8489
      %v8672 = vpop.f32.mrb[0].mxu0
      %v8673 = vadd.f32 0.0, %v8672
      %v8674 = vpop.f32.mrb[0].mxu0
      %v8675 = vpop.f32.mrb[0].mxu0
      %v8676 = vadd.f32 0.0, %v8675
      %v8677 = vpop.f32.mrb[0].mxu0
      %8678 = vmatprep.mubr.bf16.mxu0 0
      %8679 = vmatmul.mubr.bf16.gmra.mrb[0].mxu0 %v8490
      %v8680 = vpop.f32.mrb[0].mxu0
      %v8681 = vadd.f32 0.0, %v8680
      %v8682 = vpop.f32.mrb[0].mxu0
      %v8683 = vpop.f32.mrb[0].mxu0
      %v8684 = vadd.f32 0.0, %v8683
      %v8685 = vpop.f32.mrb[0].mxu0
      %8686 = vmatprep.mubr.bf16.mxu0 0
      %8687 = vmatmul.mubr.bf16.gmra.mrb[0].mxu0 %v8491
      %v8688 = vpop.f32.mrb[0].mxu0
      %v8689 = vadd.f32 0.0, %v8688
      %v8690 = vpop.f32.mrb[0].mxu0
      %v8691 = vpop.f32.mrb[0].mxu0
      %v8692 = vadd.f32 0.0, %v8691
      %v8693 = vpop.f32.mrb[0].mxu0
      %8694 = vmatprep.mubr.bf16.mxu0 0
      %8695 = vmatmul.mubr.bf16.gmra.mrb[0].mxu0 %v8492
      %v8696 = vpop.f32.mrb[0].mxu0
      %v8697 = vadd.f32 0.0, %v8696
      %v8698 = vpop.f32.mrb[0].mxu0
      %v8699 = vpop.f32.mrb[0].mxu0
      %v8700 = vadd.f32 0.0, %v8699
      %v8701 = vpop.f32.mrb[0].mxu0
      %8702 = vdwg.mxu0
      %8703 = vmatprep.subr.bf16.mxu0 0
      %8704 = vmatpush1.bf16.msra.mxu0 %v7133
      %8705 = vmatprep.subr.bf16.mxu0 0
      %8706 = vmatpush1.bf16.msra.mxu0 %v7149
      %8707 = vmatprep.subr.bf16.mxu0 0
      %8708 = vmatpush1.bf16.msra.mxu0 %v7165
      %8709 = vmatprep.subr.bf16.mxu0 0
      %8710 = vmatpush1.bf16.msra.mxu0 %v7181
      %8711 = vmatprep.subr.bf16.mxu0 0
      %8712 = vmatpush1.bf16.msra.mxu0 %v7197
      %8713 = vmatprep.subr.bf16.mxu0 0
      %8714 = vmatpush1.bf16.msra.mxu0 %v7213
      %8715 = vmatprep.subr.bf16.mxu0 0
      %8716 = vmatpush1.bf16.msra.mxu0 %v7229
      %8717 = vmatprep.subr.bf16.mxu0 0
      %8718 = vmatpush1.bf16.msra.mxu0 %v7245
      %8719 = vmatprep.subr.bf16.mxu0 0
      %8720 = vmatpush1.bf16.msra.mxu0 0
      %8721 = vmatprep.subr.bf16.mxu0 0
      %8722 = vmatpush1.bf16.msra.mxu0 0
      %8723 = vmatprep.subr.bf16.mxu0 0
      %8724 = vmatpush1.bf16.msra.mxu0 0
      %8725 = vmatprep.subr.bf16.mxu0 0
      %8726 = vmatpush1.bf16.msra.mxu0 0
      %8727 = vmatprep.subr.bf16.mxu0 0
      %8728 = vmatpush1.bf16.msra.mxu0 0
      %8729 = vmatprep.subr.bf16.mxu0 0
      %8730 = vmatpush1.bf16.msra.mxu0 0
      %8731 = vmatprep.subr.bf16.mxu0 0
      %8732 = vmatpush1.bf16.msra.mxu0 0
      %8733 = vmatprep.subr.bf16.mxu0 0
      %8734 = vmatpush1.bf16.msra.mxu0 0
      %8735 = vmatprep.mubr.bf16.mxu0 0
      %8736 = vmatmul.mubr.bf16.gmra.mrb[0].mxu0 %v8493
      %v8737 = vpop.f32.mrb[0].mxu0
      %v8738 = vadd.f32 0.0, %v8737
      %v8739 = vpop.f32.mrb[0].mxu0
      %v8740 = vpop.f32.mrb[0].mxu0
      %v8741 = vadd.f32 0.0, %v8740
      %v8742 = vpop.f32.mrb[0].mxu0
      %8743 = vmatprep.mubr.bf16.mxu0 0
      %8744 = vmatmul.mubr.bf16.gmra.mrb[0].mxu0 %v8494
      %v8745 = vpop.f32.mrb[0].mxu0
      %v8746 = vadd.f32 0.0, %v8745
      %v8747 = vpop.f32.mrb[0].mxu0
      %v8748 = vpop.f32.mrb[0].mxu0
      %v8749 = vadd.f32 0.0, %v8748
      %v8750 = vpop.f32.mrb[0].mxu0
      %8751 = vmatprep.mubr.bf16.mxu0 0
      %8752 = vmatmul.mubr.bf16.gmra.mrb[0].mxu0 %v8495
      %v8753 = vpop.f32.mrb[0].mxu0
      %v8754 = vadd.f32 0.0, %v8753
      %v8755 = vpop.f32.mrb[0].mxu0
      %v8756 = vpop.f32.mrb[0].mxu0
      %v8757 = vadd.f32 0.0, %v8756
      %v8758 = vpop.f32.mrb[0].mxu0
      %8759 = vmatprep.mubr.bf16.mxu0 0
      %8760 = vmatmul.mubr.bf16.gmra.mrb[0].mxu0 %v8496
      %v8761 = vpop.f32.mrb[0].mxu0
      %v8762 = vadd.f32 0.0, %v8761
      %v8763 = vpop.f32.mrb[0].mxu0
      %v8764 = vpop.f32.mrb[0].mxu0
      %v8765 = vadd.f32 0.0, %v8764
      %v8766 = vpop.f32.mrb[0].mxu0
      %8767 = vmatprep.mubr.bf16.mxu0 0
      %8768 = vmatmul.mubr.bf16.gmra.mrb[0].mxu0 %v8497
      %v8769 = vpop.f32.mrb[0].mxu0
      %v8770 = vadd.f32 0.0, %v8769
      %v8771 = vpop.f32.mrb[0].mxu0
      %v8772 = vpop.f32.mrb[0].mxu0
      %v8773 = vadd.f32 0.0, %v8772
      %v8774 = vpop.f32.mrb[0].mxu0
      %8775 = vmatprep.mubr.bf16.mxu0 0
      %8776 = vmatmul.mubr.bf16.gmra.mrb[0].mxu0 %v8498
      %v8777 = vpop.f32.mrb[0].mxu0
      %v8778 = vadd.f32 0.0, %v8777
      %v8779 = vpop.f32.mrb[0].mxu0
      %v8780 = vpop.f32.mrb[0].mxu0
      %v8781 = vadd.f32 0.0, %v8780
      %v8782 = vpop.f32.mrb[0].mxu0
      %8783 = vmatprep.mubr.bf16.mxu0 0
      %8784 = vmatmul.mubr.bf16.gmra.mrb[0].mxu0 %v8499
      %v8785 = vpop.f32.mrb[0].mxu0
      %v8786 = vadd.f32 0.0, %v8785
      %v8787 = vpop.f32.mrb[0].mxu0
      %v8788 = vpop.f32.mrb[0].mxu0
      %v8789 = vadd.f32 0.0, %v8788
      %v8790 = vpop.f32.mrb[0].mxu0
      %8791 = vmatprep.mubr.bf16.mxu0 0
      %8792 = vmatmul.mubr.bf16.gmra.mrb[0].mxu0 %v8500
      %v8793 = vpop.f32.mrb[0].mxu0
      %v8794 = vadd.f32 0.0, %v8793
      %v8795 = vpop.f32.mrb[0].mxu0
      %v8796 = vpop.f32.mrb[0].mxu0
      %v8797 = vadd.f32 0.0, %v8796
      %v8798 = vpop.f32.mrb[0].mxu0
      %8799 = vdwg.mxu0
      %8800 = vmatprep.subr.bf16.mxu0 0
      %8801 = vmatpush1.bf16.msra.mxu0 %v7137
      %8802 = vmatprep.subr.bf16.mxu0 0
      %8803 = vmatpush1.bf16.msra.mxu0 %v7153
      %8804 = vmatprep.subr.bf16.mxu0 0
      %8805 = vmatpush1.bf16.msra.mxu0 %v7169
      %8806 = vmatprep.subr.bf16.mxu0 0
      %8807 = vmatpush1.bf16.msra.mxu0 %v7185
      %8808 = vmatprep.subr.bf16.mxu0 0
      %8809 = vmatpush1.bf16.msra.mxu0 %v7201
      %8810 = vmatprep.subr.bf16.mxu0 0
      %8811 = vmatpush1.bf16.msra.mxu0 %v7217
      %8812 = vmatprep.subr.bf16.mxu0 0
      %8813 = vmatpush1.bf16.msra.mxu0 %v7233
      %8814 = vmatprep.subr.bf16.mxu0 0
      %8815 = vmatpush1.bf16.msra.mxu0 %v7249
      %8816 = vmatprep.subr.bf16.mxu0 0
      %8817 = vmatpush1.bf16.msra.mxu0 0
      %8818 = vmatprep.subr.bf16.mxu0 0
      %8819 = vmatpush1.bf16.msra.mxu0 0
      %8820 = vmatprep.subr.bf16.mxu0 0
      %8821 = vmatpush1.bf16.msra.mxu0 0
      %8822 = vmatprep.subr.bf16.mxu0 0
      %8823 = vmatpush1.bf16.msra.mxu0 0
      %8824 = vmatprep.subr.bf16.mxu0 0
      %8825 = vmatpush1.bf16.msra.mxu0 0
      %8826 = vmatprep.subr.bf16.mxu0 0
      %8827 = vmatpush1.bf16.msra.mxu0 0
      %8828 = vmatprep.subr.bf16.mxu0 0
      %8829 = vmatpush1.bf16.msra.mxu0 0
      %8830 = vmatprep.subr.bf16.mxu0 0
      %8831 = vmatpush1.bf16.msra.mxu0 0
      %8832 = vmatprep.mubr.bf16.mxu0 0
      %8833 = vmatmul.mubr.bf16.gmra.mrb[0].mxu0 %v8501
      %v8834 = vpop.f32.mrb[0].mxu0
      %v8835 = vadd.f32 0.0, %v8834
      %v8836 = vpop.f32.mrb[0].mxu0
      %v8837 = vpop.f32.mrb[0].mxu0
      %v8838 = vadd.f32 0.0, %v8837
      %v8839 = vpop.f32.mrb[0].mxu0
      %8840 = vmatprep.mubr.bf16.mxu0 0
      %8841 = vmatmul.mubr.bf16.gmra.mrb[0].mxu0 %v8502
      %v8842 = vpop.f32.mrb[0].mxu0
      %v8843 = vadd.f32 0.0, %v8842
      %v8844 = vpop.f32.mrb[0].mxu0
      %v8845 = vpop.f32.mrb[0].mxu0
      %v8846 = vadd.f32 0.0, %v8845
      %v8847 = vpop.f32.mrb[0].mxu0
      %8848 = vmatprep.mubr.bf16.mxu0 0
      %8849 = vmatmul.mubr.bf16.gmra.mrb[0].mxu0 %v8503
      %v8850 = vpop.f32.mrb[0].mxu0
      %v8851 = vadd.f32 0.0, %v8850
      %v8852 = vpop.f32.mrb[0].mxu0
      %v8853 = vpop.f32.mrb[0].mxu0
      %v8854 = vadd.f32 0.0, %v8853
      %v8855 = vpop.f32.mrb[0].mxu0
      %8856 = vmatprep.mubr.bf16.mxu0 0
      %8857 = vmatmul.mubr.bf16.gmra.mrb[0].mxu0 %v8504
      %v8858 = vpop.f32.mrb[0].mxu0
      %v8859 = vadd.f32 0.0, %v8858
      %v8860 = vpop.f32.mrb[0].mxu0
      %v8861 = vpop.f32.mrb[0].mxu0
      %v8862 = vadd.f32 0.0, %v8861
      %v8863 = vpop.f32.mrb[0].mxu0
      %8864 = vmatprep.mubr.bf16.mxu0 0
      %8865 = vmatmul.mubr.bf16.gmra.mrb[0].mxu0 %v8505
      %v8866 = vpop.f32.mrb[0].mxu0
      %v8867 = vadd.f32 0.0, %v8866
      %v8868 = vpop.f32.mrb[0].mxu0
      %v8869 = vpop.f32.mrb[0].mxu0
      %v8870 = vadd.f32 0.0, %v8869
      %v8871 = vpop.f32.mrb[0].mxu0
      %8872 = vmatprep.mubr.bf16.mxu0 0
      %8873 = vmatmul.mubr.bf16.gmra.mrb[0].mxu0 %v8506
      %v8874 = vpop.f32.mrb[0].mxu0
      %v8875 = vadd.f32 0.0, %v8874
      %v8876 = vpop.f32.mrb[0].mxu0
      %v8877 = vpop.f32.mrb[0].mxu0
      %v8878 = vadd.f32 0.0, %v8877
      %v8879 = vpop.f32.mrb[0].mxu0
      %8880 = vmatprep.mubr.bf16.mxu0 0
      %8881 = vmatmul.mubr.bf16.gmra.mrb[0].mxu0 %v8507
      %v8882 = vpop.f32.mrb[0].mxu0
      %v8883 = vadd.f32 0.0, %v8882
      %v8884 = vpop.f32.mrb[0].mxu0
      %v8885 = vpop.f32.mrb[0].mxu0
      %v8886 = vadd.f32 0.0, %v8885
      %v8887 = vpop.f32.mrb[0].mxu0
      %8888 = vmatprep.mubr.bf16.mxu0 0
      %8889 = vmatmul.mubr.bf16.gmra.mrb[0].mxu0 %v8508
      %v8890 = vpop.f32.mrb[0].mxu0
      %v8891 = vadd.f32 0.0, %v8890
      %v8892 = vpop.f32.mrb[0].mxu0
      %v8893 = vpop.f32.mrb[0].mxu0
      %v8894 = vadd.f32 0.0, %v8893
      %v8895 = vpop.f32.mrb[0].mxu0
      %8896 = vdwg.mxu0
      %v8897 = vcombine.low %v8544, %v8738
      %v8898 = vcombine.high %v8544, %v8738
      %v8900 = vunpack.c.l.s4 1983009808
      %v8901 = vunpack.c.0.s8 %v8900
      %v8902 = vlaneseq
      %v8903 = vshrl.u32 %v8902, 7
      %v8904 = vsub.s32 %v8901, %v8903
      %v8905 = vrot.slane %v8897, %v8904
      %v8907 = vunpack.c.l.s4 1983009808
      %v8908 = vunpack.c.0.s8 %v8907
      %v8909 = vlaneseq
      %v8910 = vshrl.u32 %v8909, 7
      %v8911 = vsub.s32 %v8908, %v8910
      %v8912 = vrot.slane %v8898, %v8911
      %v8913 = vcombine.low %v8641, %v8835
      %v8914 = vcombine.high %v8641, %v8835
      %v8916 = vunpack.c.l.s4 1983009808
      %v8917 = vunpack.c.0.s8 %v8916
      %v8918 = vlaneseq
      %v8919 = vshrl.u32 %v8918, 7
      %v8920 = vsub.s32 %v8917, %v8919
      %v8921 = vrot.slane %v8913, %v8920
      %v8923 = vunpack.c.l.s4 1983009808
      %v8924 = vunpack.c.0.s8 %v8923
      %v8925 = vlaneseq
      %v8926 = vshrl.u32 %v8925, 7
      %v8927 = vsub.s32 %v8924, %v8926
      %v8928 = vrot.slane %v8914, %v8927
      %v8929 = vcombine.low %v8905, %v8921
      %v8930 = vcombine.high %v8905, %v8921
      %v8932 = vunpack.c.l.s4 1934713408
      %v8933 = vunpack.c.0.s8 %v8932
      %v8934 = vlaneseq
      %v8935 = vshrl.u32 %v8934, 7
      %v8936 = vsub.s32 %v8933, %v8935
      %v8937 = vrot.slane %v8929, %v8936
      %v8939 = vunpack.c.l.s4 1934713408
      %v8940 = vunpack.c.0.s8 %v8939
      %v8941 = vlaneseq
      %v8942 = vshrl.u32 %v8941, 7
      %v8943 = vsub.s32 %v8940, %v8942
      %v8944 = vrot.slane %v8930, %v8943
      %v8945 = vcombine.low %v8912, %v8928
      %v8946 = vcombine.high %v8912, %v8928
      %v8948 = vunpack.c.l.s4 1934713408
      %v8949 = vunpack.c.0.s8 %v8948
      %v8950 = vlaneseq
      %v8951 = vshrl.u32 %v8950, 7
      %v8952 = vsub.s32 %v8949, %v8951
      %v8953 = vrot.slane %v8945, %v8952
      %v8955 = vunpack.c.l.s4 1934713408
      %v8956 = vunpack.c.0.s8 %v8955
      %v8957 = vlaneseq
      %v8958 = vshrl.u32 %v8957, 7
      %v8959 = vsub.s32 %v8956, %v8958
      %v8960 = vrot.slane %v8946, %v8959
      %v8961 = vcombine.high %v8937, 0.0
      %v8962 = vcombine.high %v8944, 0.0
      %v8963 = vcombine.high %v8953, 0.0
      %v8964 = vcombine.high %v8960, 0.0
      %v8965 = vcombine.low %v8547, %v8741
      %v8966 = vcombine.high %v8547, %v8741
      %v8968 = vunpack.c.l.s4 1983009808
      %v8969 = vunpack.c.0.s8 %v8968
      %v8970 = vlaneseq
      %v8971 = vshrl.u32 %v8970, 7
      %v8972 = vsub.s32 %v8969, %v8971
      %v8973 = vrot.slane %v8965, %v8972
      %v8975 = vunpack.c.l.s4 1983009808
      %v8976 = vunpack.c.0.s8 %v8975
      %v8977 = vlaneseq
      %v8978 = vshrl.u32 %v8977, 7
      %v8979 = vsub.s32 %v8976, %v8978
      %v8980 = vrot.slane %v8966, %v8979
      %v8981 = vcombine.low %v8644, %v8838
      %v8982 = vcombine.high %v8644, %v8838
      %v8984 = vunpack.c.l.s4 1983009808
      %v8985 = vunpack.c.0.s8 %v8984
      %v8986 = vlaneseq
      %v8987 = vshrl.u32 %v8986, 7
      %v8988 = vsub.s32 %v8985, %v8987
      %v8989 = vrot.slane %v8981, %v8988
      %v8991 = vunpack.c.l.s4 1983009808
      %v8992 = vunpack.c.0.s8 %v8991
      %v8993 = vlaneseq
      %v8994 = vshrl.u32 %v8993, 7
      %v8995 = vsub.s32 %v8992, %v8994
      %v8996 = vrot.slane %v8982, %v8995
      %v8997 = vcombine.low %v8973, %v8989
      %v8998 = vcombine.high %v8973, %v8989
      %v9000 = vunpack.c.l.s4 1934713408
      %v9001 = vunpack.c.0.s8 %v9000
      %v9002 = vlaneseq
      %v9003 = vshrl.u32 %v9002, 7
      %v9004 = vsub.s32 %v9001, %v9003
      %v9005 = vrot.slane %v8997, %v9004
      %v9007 = vunpack.c.l.s4 1934713408
      %v9008 = vunpack.c.0.s8 %v9007
      %v9009 = vlaneseq
      %v9010 = vshrl.u32 %v9009, 7
      %v9011 = vsub.s32 %v9008, %v9010
      %v9012 = vrot.slane %v8998, %v9011
      %v9013 = vcombine.low %v8980, %v8996
      %v9014 = vcombine.high %v8980, %v8996
      %v9016 = vunpack.c.l.s4 1934713408
      %v9017 = vunpack.c.0.s8 %v9016
      %v9018 = vlaneseq
      %v9019 = vshrl.u32 %v9018, 7
      %v9020 = vsub.s32 %v9017, %v9019
      %v9021 = vrot.slane %v9013, %v9020
      %v9023 = vunpack.c.l.s4 1934713408
      %v9024 = vunpack.c.0.s8 %v9023
      %v9025 = vlaneseq
      %v9026 = vshrl.u32 %v9025, 7
      %v9027 = vsub.s32 %v9024, %v9026
      %v9028 = vrot.slane %v9014, %v9027
      %v9029 = vcombine.high %v9005, 0.0
      %v9030 = vcombine.high %v9012, 0.0
      %v9031 = vcombine.high %v9021, 0.0
      %v9032 = vcombine.high %v9028, 0.0
      %v9033 = vcombine.low %v8552, %v8746
      %v9034 = vcombine.high %v8552, %v8746
      %v9036 = vunpack.c.l.s4 1983009808
      %v9037 = vunpack.c.0.s8 %v9036
      %v9038 = vlaneseq
      %v9039 = vshrl.u32 %v9038, 7
      %v9040 = vsub.s32 %v9037, %v9039
      %v9041 = vrot.slane %v9033, %v9040
      %v9043 = vunpack.c.l.s4 1983009808
      %v9044 = vunpack.c.0.s8 %v9043
      %v9045 = vlaneseq
      %v9046 = vshrl.u32 %v9045, 7
      %v9047 = vsub.s32 %v9044, %v9046
      %v9048 = vrot.slane %v9034, %v9047
      %v9049 = vcombine.low %v8649, %v8843
      %v9050 = vcombine.high %v8649, %v8843
      %v9052 = vunpack.c.l.s4 1983009808
      %v9053 = vunpack.c.0.s8 %v9052
      %v9054 = vlaneseq
      %v9055 = vshrl.u32 %v9054, 7
      %v9056 = vsub.s32 %v9053, %v9055
      %v9057 = vrot.slane %v9049, %v9056
      %v9059 = vunpack.c.l.s4 1983009808
      %v9060 = vunpack.c.0.s8 %v9059
      %v9061 = vlaneseq
      %v9062 = vshrl.u32 %v9061, 7
      %v9063 = vsub.s32 %v9060, %v9062
      %v9064 = vrot.slane %v9050, %v9063
      %v9065 = vcombine.low %v9041, %v9057
      %v9066 = vcombine.high %v9041, %v9057
      %v9068 = vunpack.c.l.s4 1934713408
      %v9069 = vunpack.c.0.s8 %v9068
      %v9070 = vlaneseq
      %v9071 = vshrl.u32 %v9070, 7
      %v9072 = vsub.s32 %v9069, %v9071
      %v9073 = vrot.slane %v9065, %v9072
      %v9075 = vunpack.c.l.s4 1934713408
      %v9076 = vunpack.c.0.s8 %v9075
      %v9077 = vlaneseq
      %v9078 = vshrl.u32 %v9077, 7
      %v9079 = vsub.s32 %v9076, %v9078
      %v9080 = vrot.slane %v9066, %v9079
      %v9081 = vcombine.low %v9048, %v9064
      %v9082 = vcombine.high %v9048, %v9064
      %v9084 = vunpack.c.l.s4 1934713408
      %v9085 = vunpack.c.0.s8 %v9084
      %v9086 = vlaneseq
      %v9087 = vshrl.u32 %v9086, 7
      %v9088 = vsub.s32 %v9085, %v9087
      %v9089 = vrot.slane %v9081, %v9088
      %v9091 = vunpack.c.l.s4 1934713408
      %v9092 = vunpack.c.0.s8 %v9091
      %v9093 = vlaneseq
      %v9094 = vshrl.u32 %v9093, 7
      %v9095 = vsub.s32 %v9092, %v9094
      %v9096 = vrot.slane %v9082, %v9095
      %v9097 = vcombine.high %v9073, 0.0
      %v9098 = vcombine.high %v9080, 0.0
      %v9099 = vcombine.high %v9089, 0.0
      %v9100 = vcombine.high %v9096, 0.0
      %v9101 = vcombine.low %v8555, %v8749
      %v9102 = vcombine.high %v8555, %v8749
      %v9104 = vunpack.c.l.s4 1983009808
      %v9105 = vunpack.c.0.s8 %v9104
      %v9106 = vlaneseq
      %v9107 = vshrl.u32 %v9106, 7
      %v9108 = vsub.s32 %v9105, %v9107
      %v9109 = vrot.slane %v9101, %v9108
      %v9111 = vunpack.c.l.s4 1983009808
      %v9112 = vunpack.c.0.s8 %v9111
      %v9113 = vlaneseq
      %v9114 = vshrl.u32 %v9113, 7
      %v9115 = vsub.s32 %v9112, %v9114
      %v9116 = vrot.slane %v9102, %v9115
      %v9117 = vcombine.low %v8652, %v8846
      %v9118 = vcombine.high %v8652, %v8846
      %v9120 = vunpack.c.l.s4 1983009808
      %v9121 = vunpack.c.0.s8 %v9120
      %v9122 = vlaneseq
      %v9123 = vshrl.u32 %v9122, 7
      %v9124 = vsub.s32 %v9121, %v9123
      %v9125 = vrot.slane %v9117, %v9124
      %v9127 = vunpack.c.l.s4 1983009808
      %v9128 = vunpack.c.0.s8 %v9127
      %v9129 = vlaneseq
      %v9130 = vshrl.u32 %v9129, 7
      %v9131 = vsub.s32 %v9128, %v9130
      %v9132 = vrot.slane %v9118, %v9131
      %v9133 = vcombine.low %v9109, %v9125
      %v9134 = vcombine.high %v9109, %v9125
      %v9136 = vunpack.c.l.s4 1934713408
      %v9137 = vunpack.c.0.s8 %v9136
      %v9138 = vlaneseq
      %v9139 = vshrl.u32 %v9138, 7
      %v9140 = vsub.s32 %v9137, %v9139
      %v9141 = vrot.slane %v9133, %v9140
      %v9143 = vunpack.c.l.s4 1934713408
      %v9144 = vunpack.c.0.s8 %v9143
      %v9145 = vlaneseq
      %v9146 = vshrl.u32 %v9145, 7
      %v9147 = vsub.s32 %v9144, %v9146
      %v9148 = vrot.slane %v9134, %v9147
      %v9149 = vcombine.low %v9116, %v9132
      %v9150 = vcombine.high %v9116, %v9132
      %v9152 = vunpack.c.l.s4 1934713408
      %v9153 = vunpack.c.0.s8 %v9152
      %v9154 = vlaneseq
      %v9155 = vshrl.u32 %v9154, 7
      %v9156 = vsub.s32 %v9153, %v9155
      %v9157 = vrot.slane %v9149, %v9156
      %v9159 = vunpack.c.l.s4 1934713408
      %v9160 = vunpack.c.0.s8 %v9159
      %v9161 = vlaneseq
      %v9162 = vshrl.u32 %v9161, 7
      %v9163 = vsub.s32 %v9160, %v9162
      %v9164 = vrot.slane %v9150, %v9163
      %v9165 = vcombine.high %v9141, 0.0
      %v9166 = vcombine.high %v9148, 0.0
      %v9167 = vcombine.high %v9157, 0.0
      %v9168 = vcombine.high %v9164, 0.0
      %v9169 = vcombine.low %v8560, %v8754
      %v9170 = vcombine.high %v8560, %v8754
      %v9172 = vunpack.c.l.s4 1983009808
      %v9173 = vunpack.c.0.s8 %v9172
      %v9174 = vlaneseq
      %v9175 = vshrl.u32 %v9174, 7
      %v9176 = vsub.s32 %v9173, %v9175
      %v9177 = vrot.slane %v9169, %v9176
      %v9179 = vunpack.c.l.s4 1983009808
      %v9180 = vunpack.c.0.s8 %v9179
      %v9181 = vlaneseq
      %v9182 = vshrl.u32 %v9181, 7
      %v9183 = vsub.s32 %v9180, %v9182
      %v9184 = vrot.slane %v9170, %v9183
      %v9185 = vcombine.low %v8657, %v8851
      %v9186 = vcombine.high %v8657, %v8851
      %v9188 = vunpack.c.l.s4 1983009808
      %v9189 = vunpack.c.0.s8 %v9188
      %v9190 = vlaneseq
      %v9191 = vshrl.u32 %v9190, 7
      %v9192 = vsub.s32 %v9189, %v9191
      %v9193 = vrot.slane %v9185, %v9192
      %v9195 = vunpack.c.l.s4 1983009808
      %v9196 = vunpack.c.0.s8 %v9195
      %v9197 = vlaneseq
      %v9198 = vshrl.u32 %v9197, 7
      %v9199 = vsub.s32 %v9196, %v9198
      %v9200 = vrot.slane %v9186, %v9199
      %v9201 = vcombine.low %v9177, %v9193
      %v9202 = vcombine.high %v9177, %v9193
      %v9204 = vunpack.c.l.s4 1934713408
      %v9205 = vunpack.c.0.s8 %v9204
      %v9206 = vlaneseq
      %v9207 = vshrl.u32 %v9206, 7
      %v9208 = vsub.s32 %v9205, %v9207
      %v9209 = vrot.slane %v9201, %v9208
      %v9211 = vunpack.c.l.s4 1934713408
      %v9212 = vunpack.c.0.s8 %v9211
      %v9213 = vlaneseq
      %v9214 = vshrl.u32 %v9213, 7
      %v9215 = vsub.s32 %v9212, %v9214
      %v9216 = vrot.slane %v9202, %v9215
      %v9217 = vcombine.low %v9184, %v9200
      %v9218 = vcombine.high %v9184, %v9200
      %v9220 = vunpack.c.l.s4 1934713408
      %v9221 = vunpack.c.0.s8 %v9220
      %v9222 = vlaneseq
      %v9223 = vshrl.u32 %v9222, 7
      %v9224 = vsub.s32 %v9221, %v9223
      %v9225 = vrot.slane %v9217, %v9224
      %v9227 = vunpack.c.l.s4 1934713408
      %v9228 = vunpack.c.0.s8 %v9227
      %v9229 = vlaneseq
      %v9230 = vshrl.u32 %v9229, 7
      %v9231 = vsub.s32 %v9228, %v9230
      %v9232 = vrot.slane %v9218, %v9231
      %v9233 = vcombine.high %v9209, 0.0
      %v9234 = vcombine.high %v9216, 0.0
      %v9235 = vcombine.high %v9225, 0.0
      %v9236 = vcombine.high %v9232, 0.0
      %v9237 = vcombine.low %v8563, %v8757
      %v9238 = vcombine.high %v8563, %v8757
      %v9240 = vunpack.c.l.s4 1983009808
      %v9241 = vunpack.c.0.s8 %v9240
      %v9242 = vlaneseq
      %v9243 = vshrl.u32 %v9242, 7
      %v9244 = vsub.s32 %v9241, %v9243
      %v9245 = vrot.slane %v9237, %v9244
      %v9247 = vunpack.c.l.s4 1983009808
      %v9248 = vunpack.c.0.s8 %v9247
      %v9249 = vlaneseq
      %v9250 = vshrl.u32 %v9249, 7
      %v9251 = vsub.s32 %v9248, %v9250
      %v9252 = vrot.slane %v9238, %v9251
      %v9253 = vcombine.low %v8660, %v8854
      %v9254 = vcombine.high %v8660, %v8854
      %v9256 = vunpack.c.l.s4 1983009808
      %v9257 = vunpack.c.0.s8 %v9256
      %v9258 = vlaneseq
      %v9259 = vshrl.u32 %v9258, 7
      %v9260 = vsub.s32 %v9257, %v9259
      %v9261 = vrot.slane %v9253, %v9260
      %v9263 = vunpack.c.l.s4 1983009808
      %v9264 = vunpack.c.0.s8 %v9263
      %v9265 = vlaneseq
      %v9266 = vshrl.u32 %v9265, 7
      %v9267 = vsub.s32 %v9264, %v9266
      %v9268 = vrot.slane %v9254, %v9267
      %v9269 = vcombine.low %v9245, %v9261
      %v9270 = vcombine.high %v9245, %v9261
      %v9272 = vunpack.c.l.s4 1934713408
      %v9273 = vunpack.c.0.s8 %v9272
      %v9274 = vlaneseq
      %v9275 = vshrl.u32 %v9274, 7
      %v9276 = vsub.s32 %v9273, %v9275
      %v9277 = vrot.slane %v9269, %v9276
      %v9279 = vunpack.c.l.s4 1934713408
      %v9280 = vunpack.c.0.s8 %v9279
      %v9281 = vlaneseq
      %v9282 = vshrl.u32 %v9281, 7
      %v9283 = vsub.s32 %v9280, %v9282
      %v9284 = vrot.slane %v9270, %v9283
      %v9285 = vcombine.low %v9252, %v9268
      %v9286 = vcombine.high %v9252, %v9268
      %v9288 = vunpack.c.l.s4 1934713408
      %v9289 = vunpack.c.0.s8 %v9288
      %v9290 = vlaneseq
      %v9291 = vshrl.u32 %v9290, 7
      %v9292 = vsub.s32 %v9289, %v9291
      %v9293 = vrot.slane %v9285, %v9292
      %v9295 = vunpack.c.l.s4 1934713408
      %v9296 = vunpack.c.0.s8 %v9295
      %v9297 = vlaneseq
      %v9298 = vshrl.u32 %v9297, 7
      %v9299 = vsub.s32 %v9296, %v9298
      %v9300 = vrot.slane %v9286, %v9299
      %v9301 = vcombine.high %v9277, 0.0
      %v9302 = vcombine.high %v9284, 0.0
      %v9303 = vcombine.high %v9293, 0.0
      %v9304 = vcombine.high %v9300, 0.0
      %v9305 = vcombine.low %v8568, %v8762
      %v9306 = vcombine.high %v8568, %v8762
      %v9308 = vunpack.c.l.s4 1983009808
      %v9309 = vunpack.c.0.s8 %v9308
      %v9310 = vlaneseq
      %v9311 = vshrl.u32 %v9310, 7
      %v9312 = vsub.s32 %v9309, %v9311
      %v9313 = vrot.slane %v9305, %v9312
      %v9315 = vunpack.c.l.s4 1983009808
      %v9316 = vunpack.c.0.s8 %v9315
      %v9317 = vlaneseq
      %v9318 = vshrl.u32 %v9317, 7
      %v9319 = vsub.s32 %v9316, %v9318
      %v9320 = vrot.slane %v9306, %v9319
      %v9321 = vcombine.low %v8665, %v8859
      %v9322 = vcombine.high %v8665, %v8859
      %v9324 = vunpack.c.l.s4 1983009808
      %v9325 = vunpack.c.0.s8 %v9324
      %v9326 = vlaneseq
      %v9327 = vshrl.u32 %v9326, 7
      %v9328 = vsub.s32 %v9325, %v9327
      %v9329 = vrot.slane %v9321, %v9328
      %v9331 = vunpack.c.l.s4 1983009808
      %v9332 = vunpack.c.0.s8 %v9331
      %v9333 = vlaneseq
      %v9334 = vshrl.u32 %v9333, 7
      %v9335 = vsub.s32 %v9332, %v9334
      %v9336 = vrot.slane %v9322, %v9335
      %v9337 = vcombine.low %v9313, %v9329
      %v9338 = vcombine.high %v9313, %v9329
      %v9340 = vunpack.c.l.s4 1934713408
      %v9341 = vunpack.c.0.s8 %v9340
      %v9342 = vlaneseq
      %v9343 = vshrl.u32 %v9342, 7
      %v9344 = vsub.s32 %v9341, %v9343
      %v9345 = vrot.slane %v9337, %v9344
      %v9347 = vunpack.c.l.s4 1934713408
      %v9348 = vunpack.c.0.s8 %v9347
      %v9349 = vlaneseq
      %v9350 = vshrl.u32 %v9349, 7
      %v9351 = vsub.s32 %v9348, %v9350
      %v9352 = vrot.slane %v9338, %v9351
      %v9353 = vcombine.low %v9320, %v9336
      %v9354 = vcombine.high %v9320, %v9336
      %v9356 = vunpack.c.l.s4 1934713408
      %v9357 = vunpack.c.0.s8 %v9356
      %v9358 = vlaneseq
      %v9359 = vshrl.u32 %v9358, 7
      %v9360 = vsub.s32 %v9357, %v9359
      %v9361 = vrot.slane %v9353, %v9360
      %v9363 = vunpack.c.l.s4 1934713408
      %v9364 = vunpack.c.0.s8 %v9363
      %v9365 = vlaneseq
      %v9366 = vshrl.u32 %v9365, 7
      %v9367 = vsub.s32 %v9364, %v9366
      %v9368 = vrot.slane %v9354, %v9367
      %v9369 = vcombine.high %v9345, 0.0
      %v9370 = vcombine.high %v9352, 0.0
      %v9371 = vcombine.high %v9361, 0.0
      %v9372 = vcombine.high %v9368, 0.0
      %v9373 = vcombine.low %v8571, %v8765
      %v9374 = vcombine.high %v8571, %v8765
      %v9376 = vunpack.c.l.s4 1983009808
      %v9377 = vunpack.c.0.s8 %v9376
      %v9378 = vlaneseq
      %v9379 = vshrl.u32 %v9378, 7
      %v9380 = vsub.s32 %v9377, %v9379
      %v9381 = vrot.slane %v9373, %v9380
      %v9383 = vunpack.c.l.s4 1983009808
      %v9384 = vunpack.c.0.s8 %v9383
      %v9385 = vlaneseq
      %v9386 = vshrl.u32 %v9385, 7
      %v9387 = vsub.s32 %v9384, %v9386
      %v9388 = vrot.slane %v9374, %v9387
      %v9389 = vcombine.low %v8668, %v8862
      %v9390 = vcombine.high %v8668, %v8862
      %v9392 = vunpack.c.l.s4 1983009808
      %v9393 = vunpack.c.0.s8 %v9392
      %v9394 = vlaneseq
      %v9395 = vshrl.u32 %v9394, 7
      %v9396 = vsub.s32 %v9393, %v9395
      %v9397 = vrot.slane %v9389, %v9396
      %v9399 = vunpack.c.l.s4 1983009808
      %v9400 = vunpack.c.0.s8 %v9399
      %v9401 = vlaneseq
      %v9402 = vshrl.u32 %v9401, 7
      %v9403 = vsub.s32 %v9400, %v9402
      %v9404 = vrot.slane %v9390, %v9403
      %v9405 = vcombine.low %v9381, %v9397
      %v9406 = vcombine.high %v9381, %v9397
      %v9408 = vunpack.c.l.s4 1934713408
      %v9409 = vunpack.c.0.s8 %v9408
      %v9410 = vlaneseq
      %v9411 = vshrl.u32 %v9410, 7
      %v9412 = vsub.s32 %v9409, %v9411
      %v9413 = vrot.slane %v9405, %v9412
      %v9415 = vunpack.c.l.s4 1934713408
      %v9416 = vunpack.c.0.s8 %v9415
      %v9417 = vlaneseq
      %v9418 = vshrl.u32 %v9417, 7
      %v9419 = vsub.s32 %v9416, %v9418
      %v9420 = vrot.slane %v9406, %v9419
      %v9421 = vcombine.low %v9388, %v9404
      %v9422 = vcombine.high %v9388, %v9404
      %v9424 = vunpack.c.l.s4 1934713408
      %v9425 = vunpack.c.0.s8 %v9424
      %v9426 = vlaneseq
      %v9427 = vshrl.u32 %v9426, 7
      %v9428 = vsub.s32 %v9425, %v9427
      %v9429 = vrot.slane %v9421, %v9428
      %v9431 = vunpack.c.l.s4 1934713408
      %v9432 = vunpack.c.0.s8 %v9431
      %v9433 = vlaneseq
      %v9434 = vshrl.u32 %v9433, 7
      %v9435 = vsub.s32 %v9432, %v9434
      %v9436 = vrot.slane %v9422, %v9435
      %v9437 = vcombine.high %v9413, 0.0
      %v9438 = vcombine.high %v9420, 0.0
      %v9439 = vcombine.high %v9429, 0.0
      %v9440 = vcombine.high %v9436, 0.0
      %v9441 = vcombine.low %v8576, %v8770
      %v9442 = vcombine.high %v8576, %v8770
      %v9444 = vunpack.c.l.s4 1983009808
      %v9445 = vunpack.c.0.s8 %v9444
      %v9446 = vlaneseq
      %v9447 = vshrl.u32 %v9446, 7
      %v9448 = vsub.s32 %v9445, %v9447
      %v9449 = vrot.slane %v9441, %v9448
      %v9451 = vunpack.c.l.s4 1983009808
      %v9452 = vunpack.c.0.s8 %v9451
      %v9453 = vlaneseq
      %v9454 = vshrl.u32 %v9453, 7
      %v9455 = vsub.s32 %v9452, %v9454
      %v9456 = vrot.slane %v9442, %v9455
      %v9457 = vcombine.low %v8673, %v8867
      %v9458 = vcombine.high %v8673, %v8867
      %v9460 = vunpack.c.l.s4 1983009808
      %v9461 = vunpack.c.0.s8 %v9460
      %v9462 = vlaneseq
      %v9463 = vshrl.u32 %v9462, 7
      %v9464 = vsub.s32 %v9461, %v9463
      %v9465 = vrot.slane %v9457, %v9464
      %v9467 = vunpack.c.l.s4 1983009808
      %v9468 = vunpack.c.0.s8 %v9467
      %v9469 = vlaneseq
      %v9470 = vshrl.u32 %v9469, 7
      %v9471 = vsub.s32 %v9468, %v9470
      %v9472 = vrot.slane %v9458, %v9471
      %v9473 = vcombine.low %v9449, %v9465
      %v9474 = vcombine.high %v9449, %v9465
      %v9476 = vunpack.c.l.s4 1934713408
      %v9477 = vunpack.c.0.s8 %v9476
      %v9478 = vlaneseq
      %v9479 = vshrl.u32 %v9478, 7
      %v9480 = vsub.s32 %v9477, %v9479
      %v9481 = vrot.slane %v9473, %v9480
      %v9483 = vunpack.c.l.s4 1934713408
      %v9484 = vunpack.c.0.s8 %v9483
      %v9485 = vlaneseq
      %v9486 = vshrl.u32 %v9485, 7
      %v9487 = vsub.s32 %v9484, %v9486
      %v9488 = vrot.slane %v9474, %v9487
      %v9489 = vcombine.low %v9456, %v9472
      %v9490 = vcombine.high %v9456, %v9472
      %v9492 = vunpack.c.l.s4 1934713408
      %v9493 = vunpack.c.0.s8 %v9492
      %v9494 = vlaneseq
      %v9495 = vshrl.u32 %v9494, 7
      %v9496 = vsub.s32 %v9493, %v9495
      %v9497 = vrot.slane %v9489, %v9496
      %v9499 = vunpack.c.l.s4 1934713408
      %v9500 = vunpack.c.0.s8 %v9499
      %v9501 = vlaneseq
      %v9502 = vshrl.u32 %v9501, 7
      %v9503 = vsub.s32 %v9500, %v9502
      %v9504 = vrot.slane %v9490, %v9503
      %v9505 = vcombine.high %v9481, 0.0
      %v9506 = vcombine.high %v9488, 0.0
      %v9507 = vcombine.high %v9497, 0.0
      %v9508 = vcombine.high %v9504, 0.0
      %v9509 = vcombine.low %v8579, %v8773
      %v9510 = vcombine.high %v8579, %v8773
      %v9512 = vunpack.c.l.s4 1983009808
      %v9513 = vunpack.c.0.s8 %v9512
      %v9514 = vlaneseq
      %v9515 = vshrl.u32 %v9514, 7
      %v9516 = vsub.s32 %v9513, %v9515
      %v9517 = vrot.slane %v9509, %v9516
      %v9519 = vunpack.c.l.s4 1983009808
      %v9520 = vunpack.c.0.s8 %v9519
      %v9521 = vlaneseq
      %v9522 = vshrl.u32 %v9521, 7
      %v9523 = vsub.s32 %v9520, %v9522
      %v9524 = vrot.slane %v9510, %v9523
      %v9525 = vcombine.low %v8676, %v8870
      %v9526 = vcombine.high %v8676, %v8870
      %v9528 = vunpack.c.l.s4 1983009808
      %v9529 = vunpack.c.0.s8 %v9528
      %v9530 = vlaneseq
      %v9531 = vshrl.u32 %v9530, 7
      %v9532 = vsub.s32 %v9529, %v9531
      %v9533 = vrot.slane %v9525, %v9532
      %v9535 = vunpack.c.l.s4 1983009808
      %v9536 = vunpack.c.0.s8 %v9535
      %v9537 = vlaneseq
      %v9538 = vshrl.u32 %v9537, 7
      %v9539 = vsub.s32 %v9536, %v9538
      %v9540 = vrot.slane %v9526, %v9539
      %v9541 = vcombine.low %v9517, %v9533
      %v9542 = vcombine.high %v9517, %v9533
      %v9544 = vunpack.c.l.s4 1934713408
      %v9545 = vunpack.c.0.s8 %v9544
      %v9546 = vlaneseq
      %v9547 = vshrl.u32 %v9546, 7
      %v9548 = vsub.s32 %v9545, %v9547
      %v9549 = vrot.slane %v9541, %v9548
      %v9551 = vunpack.c.l.s4 1934713408
      %v9552 = vunpack.c.0.s8 %v9551
      %v9553 = vlaneseq
      %v9554 = vshrl.u32 %v9553, 7
      %v9555 = vsub.s32 %v9552, %v9554
      %v9556 = vrot.slane %v9542, %v9555
      %v9557 = vcombine.low %v9524, %v9540
      %v9558 = vcombine.high %v9524, %v9540
      %v9560 = vunpack.c.l.s4 1934713408
      %v9561 = vunpack.c.0.s8 %v9560
      %v9562 = vlaneseq
      %v9563 = vshrl.u32 %v9562, 7
      %v9564 = vsub.s32 %v9561, %v9563
      %v9565 = vrot.slane %v9557, %v9564
      %v9567 = vunpack.c.l.s4 1934713408
      %v9568 = vunpack.c.0.s8 %v9567
      %v9569 = vlaneseq
      %v9570 = vshrl.u32 %v9569, 7
      %v9571 = vsub.s32 %v9568, %v9570
      %v9572 = vrot.slane %v9558, %v9571
      %v9573 = vcombine.high %v9549, 0.0
      %v9574 = vcombine.high %v9556, 0.0
      %v9575 = vcombine.high %v9565, 0.0
      %v9576 = vcombine.high %v9572, 0.0
      %v9577 = vcombine.low %v8584, %v8778
      %v9578 = vcombine.high %v8584, %v8778
      %v9580 = vunpack.c.l.s4 1983009808
      %v9581 = vunpack.c.0.s8 %v9580
      %v9582 = vlaneseq
      %v9583 = vshrl.u32 %v9582, 7
      %v9584 = vsub.s32 %v9581, %v9583
      %v9585 = vrot.slane %v9577, %v9584
      %v9587 = vunpack.c.l.s4 1983009808
      %v9588 = vunpack.c.0.s8 %v9587
      %v9589 = vlaneseq
      %v9590 = vshrl.u32 %v9589, 7
      %v9591 = vsub.s32 %v9588, %v9590
      %v9592 = vrot.slane %v9578, %v9591
      %v9593 = vcombine.low %v8681, %v8875
      %v9594 = vcombine.high %v8681, %v8875
      %v9596 = vunpack.c.l.s4 1983009808
      %v9597 = vunpack.c.0.s8 %v9596
      %v9598 = vlaneseq
      %v9599 = vshrl.u32 %v9598, 7
      %v9600 = vsub.s32 %v9597, %v9599
      %v9601 = vrot.slane %v9593, %v9600
      %v9603 = vunpack.c.l.s4 1983009808
      %v9604 = vunpack.c.0.s8 %v9603
      %v9605 = vlaneseq
      %v9606 = vshrl.u32 %v9605, 7
      %v9607 = vsub.s32 %v9604, %v9606
      %v9608 = vrot.slane %v9594, %v9607
      %v9609 = vcombine.low %v9585, %v9601
      %v9610 = vcombine.high %v9585, %v9601
      %v9612 = vunpack.c.l.s4 1934713408
      %v9613 = vunpack.c.0.s8 %v9612
      %v9614 = vlaneseq
      %v9615 = vshrl.u32 %v9614, 7
      %v9616 = vsub.s32 %v9613, %v9615
      %v9617 = vrot.slane %v9609, %v9616
      %v9619 = vunpack.c.l.s4 1934713408
      %v9620 = vunpack.c.0.s8 %v9619
      %v9621 = vlaneseq
      %v9622 = vshrl.u32 %v9621, 7
      %v9623 = vsub.s32 %v9620, %v9622
      %v9624 = vrot.slane %v9610, %v9623
      %v9625 = vcombine.low %v9592, %v9608
      %v9626 = vcombine.high %v9592, %v9608
      %v9628 = vunpack.c.l.s4 1934713408
      %v9629 = vunpack.c.0.s8 %v9628
      %v9630 = vlaneseq
      %v9631 = vshrl.u32 %v9630, 7
      %v9632 = vsub.s32 %v9629, %v9631
      %v9633 = vrot.slane %v9625, %v9632
      %v9635 = vunpack.c.l.s4 1934713408
      %v9636 = vunpack.c.0.s8 %v9635
      %v9637 = vlaneseq
      %v9638 = vshrl.u32 %v9637, 7
      %v9639 = vsub.s32 %v9636, %v9638
      %v9640 = vrot.slane %v9626, %v9639
      %v9641 = vcombine.high %v9617, 0.0
      %v9642 = vcombine.high %v9624, 0.0
      %v9643 = vcombine.high %v9633, 0.0
      %v9644 = vcombine.high %v9640, 0.0
      %v9645 = vcombine.low %v8587, %v8781
      %v9646 = vcombine.high %v8587, %v8781
      %v9648 = vunpack.c.l.s4 1983009808
      %v9649 = vunpack.c.0.s8 %v9648
      %v9650 = vlaneseq
      %v9651 = vshrl.u32 %v9650, 7
      %v9652 = vsub.s32 %v9649, %v9651
      %v9653 = vrot.slane %v9645, %v9652
      %v9655 = vunpack.c.l.s4 1983009808
      %v9656 = vunpack.c.0.s8 %v9655
      %v9657 = vlaneseq
      %v9658 = vshrl.u32 %v9657, 7
      %v9659 = vsub.s32 %v9656, %v9658
      %v9660 = vrot.slane %v9646, %v9659
      %v9661 = vcombine.low %v8684, %v8878
      %v9662 = vcombine.high %v8684, %v8878
      %v9664 = vunpack.c.l.s4 1983009808
      %v9665 = vunpack.c.0.s8 %v9664
      %v9666 = vlaneseq
      %v9667 = vshrl.u32 %v9666, 7
      %v9668 = vsub.s32 %v9665, %v9667
      %v9669 = vrot.slane %v9661, %v9668
      %v9671 = vunpack.c.l.s4 1983009808
      %v9672 = vunpack.c.0.s8 %v9671
      %v9673 = vlaneseq
      %v9674 = vshrl.u32 %v9673, 7
      %v9675 = vsub.s32 %v9672, %v9674
      %v9676 = vrot.slane %v9662, %v9675
      %v9677 = vcombine.low %v9653, %v9669
      %v9678 = vcombine.high %v9653, %v9669
      %v9680 = vunpack.c.l.s4 1934713408
      %v9681 = vunpack.c.0.s8 %v9680
      %v9682 = vlaneseq
      %v9683 = vshrl.u32 %v9682, 7
      %v9684 = vsub.s32 %v9681, %v9683
      %v9685 = vrot.slane %v9677, %v9684
      %v9687 = vunpack.c.l.s4 1934713408
      %v9688 = vunpack.c.0.s8 %v9687
      %v9689 = vlaneseq
      %v9690 = vshrl.u32 %v9689, 7
      %v9691 = vsub.s32 %v9688, %v9690
      %v9692 = vrot.slane %v9678, %v9691
      %v9693 = vcombine.low %v9660, %v9676
      %v9694 = vcombine.high %v9660, %v9676
      %v9696 = vunpack.c.l.s4 1934713408
      %v9697 = vunpack.c.0.s8 %v9696
      %v9698 = vlaneseq
      %v9699 = vshrl.u32 %v9698, 7
      %v9700 = vsub.s32 %v9697, %v9699
      %v9701 = vrot.slane %v9693, %v9700
      %v9703 = vunpack.c.l.s4 1934713408
      %v9704 = vunpack.c.0.s8 %v9703
      %v9705 = vlaneseq
      %v9706 = vshrl.u32 %v9705, 7
      %v9707 = vsub.s32 %v9704, %v9706
      %v9708 = vrot.slane %v9694, %v9707
      %v9709 = vcombine.high %v9685, 0.0
      %v9710 = vcombine.high %v9692, 0.0
      %v9711 = vcombine.high %v9701, 0.0
      %v9712 = vcombine.high %v9708, 0.0
      %v9713 = vcombine.low %v8592, %v8786
      %v9714 = vcombine.high %v8592, %v8786
      %v9716 = vunpack.c.l.s4 1983009808
      %v9717 = vunpack.c.0.s8 %v9716
      %v9718 = vlaneseq
      %v9719 = vshrl.u32 %v9718, 7
      %v9720 = vsub.s32 %v9717, %v9719
      %v9721 = vrot.slane %v9713, %v9720
      %v9723 = vunpack.c.l.s4 1983009808
      %v9724 = vunpack.c.0.s8 %v9723
      %v9725 = vlaneseq
      %v9726 = vshrl.u32 %v9725, 7
      %v9727 = vsub.s32 %v9724, %v9726
      %v9728 = vrot.slane %v9714, %v9727
      %v9729 = vcombine.low %v8689, %v8883
      %v9730 = vcombine.high %v8689, %v8883
      %v9732 = vunpack.c.l.s4 1983009808
      %v9733 = vunpack.c.0.s8 %v9732
      %v9734 = vlaneseq
      %v9735 = vshrl.u32 %v9734, 7
      %v9736 = vsub.s32 %v9733, %v9735
      %v9737 = vrot.slane %v9729, %v9736
      %v9739 = vunpack.c.l.s4 1983009808
      %v9740 = vunpack.c.0.s8 %v9739
      %v9741 = vlaneseq
      %v9742 = vshrl.u32 %v9741, 7
      %v9743 = vsub.s32 %v9740, %v9742
      %v9744 = vrot.slane %v9730, %v9743
      %v9745 = vcombine.low %v9721, %v9737
      %v9746 = vcombine.high %v9721, %v9737
      %v9748 = vunpack.c.l.s4 1934713408
      %v9749 = vunpack.c.0.s8 %v9748
      %v9750 = vlaneseq
      %v9751 = vshrl.u32 %v9750, 7
      %v9752 = vsub.s32 %v9749, %v9751
      %v9753 = vrot.slane %v9745, %v9752
      %v9755 = vunpack.c.l.s4 1934713408
      %v9756 = vunpack.c.0.s8 %v9755
      %v9757 = vlaneseq
      %v9758 = vshrl.u32 %v9757, 7
      %v9759 = vsub.s32 %v9756, %v9758
      %v9760 = vrot.slane %v9746, %v9759
      %v9761 = vcombine.low %v9728, %v9744
      %v9762 = vcombine.high %v9728, %v9744
      %v9764 = vunpack.c.l.s4 1934713408
      %v9765 = vunpack.c.0.s8 %v9764
      %v9766 = vlaneseq
      %v9767 = vshrl.u32 %v9766, 7
      %v9768 = vsub.s32 %v9765, %v9767
      %v9769 = vrot.slane %v9761, %v9768
      %v9771 = vunpack.c.l.s4 1934713408
      %v9772 = vunpack.c.0.s8 %v9771
      %v9773 = vlaneseq
      %v9774 = vshrl.u32 %v9773, 7
      %v9775 = vsub.s32 %v9772, %v9774
      %v9776 = vrot.slane %v9762, %v9775
      %v9777 = vcombine.high %v9753, 0.0
      %v9778 = vcombine.high %v9760, 0.0
      %v9779 = vcombine.high %v9769, 0.0
      %v9780 = vcombine.high %v9776, 0.0
      %v9781 = vcombine.low %v8595, %v8789
      %v9782 = vcombine.high %v8595, %v8789
      %v9784 = vunpack.c.l.s4 1983009808
      %v9785 = vunpack.c.0.s8 %v9784
      %v9786 = vlaneseq
      %v9787 = vshrl.u32 %v9786, 7
      %v9788 = vsub.s32 %v9785, %v9787
      %v9789 = vrot.slane %v9781, %v9788
      %v9791 = vunpack.c.l.s4 1983009808
      %v9792 = vunpack.c.0.s8 %v9791
      %v9793 = vlaneseq
      %v9794 = vshrl.u32 %v9793, 7
      %v9795 = vsub.s32 %v9792, %v9794
      %v9796 = vrot.slane %v9782, %v9795
      %v9797 = vcombine.low %v8692, %v8886
      %v9798 = vcombine.high %v8692, %v8886
      %v9800 = vunpack.c.l.s4 1983009808
      %v9801 = vunpack.c.0.s8 %v9800
      %v9802 = vlaneseq
      %v9803 = vshrl.u32 %v9802, 7
      %v9804 = vsub.s32 %v9801, %v9803
      %v9805 = vrot.slane %v9797, %v9804
      %v9807 = vunpack.c.l.s4 1983009808
      %v9808 = vunpack.c.0.s8 %v9807
      %v9809 = vlaneseq
      %v9810 = vshrl.u32 %v9809, 7
      %v9811 = vsub.s32 %v9808, %v9810
      %v9812 = vrot.slane %v9798, %v9811
      %v9813 = vcombine.low %v9789, %v9805
      %v9814 = vcombine.high %v9789, %v9805
      %v9816 = vunpack.c.l.s4 1934713408
      %v9817 = vunpack.c.0.s8 %v9816
      %v9818 = vlaneseq
      %v9819 = vshrl.u32 %v9818, 7
      %v9820 = vsub.s32 %v9817, %v9819
      %v9821 = vrot.slane %v9813, %v9820
      %v9823 = vunpack.c.l.s4 1934713408
      %v9824 = vunpack.c.0.s8 %v9823
      %v9825 = vlaneseq
      %v9826 = vshrl.u32 %v9825, 7
      %v9827 = vsub.s32 %v9824, %v9826
      %v9828 = vrot.slane %v9814, %v9827
      %v9829 = vcombine.low %v9796, %v9812
      %v9830 = vcombine.high %v9796, %v9812
      %v9832 = vunpack.c.l.s4 1934713408
      %v9833 = vunpack.c.0.s8 %v9832
      %v9834 = vlaneseq
      %v9835 = vshrl.u32 %v9834, 7
      %v9836 = vsub.s32 %v9833, %v9835
      %v9837 = vrot.slane %v9829, %v9836
      %v9839 = vunpack.c.l.s4 1934713408
      %v9840 = vunpack.c.0.s8 %v9839
      %v9841 = vlaneseq
      %v9842 = vshrl.u32 %v9841, 7
      %v9843 = vsub.s32 %v9840, %v9842
      %v9844 = vrot.slane %v9830, %v9843
      %v9845 = vcombine.high %v9821, 0.0
      %v9846 = vcombine.high %v9828, 0.0
      %v9847 = vcombine.high %v9837, 0.0
      %v9848 = vcombine.high %v9844, 0.0
      %v9849 = vcombine.low %v8600, %v8794
      %v9850 = vcombine.high %v8600, %v8794
      %v9852 = vunpack.c.l.s4 1983009808
      %v9853 = vunpack.c.0.s8 %v9852
      %v9854 = vlaneseq
      %v9855 = vshrl.u32 %v9854, 7
      %v9856 = vsub.s32 %v9853, %v9855
      %v9857 = vrot.slane %v9849, %v9856
      %v9859 = vunpack.c.l.s4 1983009808
      %v9860 = vunpack.c.0.s8 %v9859
      %v9861 = vlaneseq
      %v9862 = vshrl.u32 %v9861, 7
      %v9863 = vsub.s32 %v9860, %v9862
      %v9864 = vrot.slane %v9850, %v9863
      %v9865 = vcombine.low %v8697, %v8891
      %v9866 = vcombine.high %v8697, %v8891
      %v9868 = vunpack.c.l.s4 1983009808
      %v9869 = vunpack.c.0.s8 %v9868
      %v9870 = vlaneseq
      %v9871 = vshrl.u32 %v9870, 7
      %v9872 = vsub.s32 %v9869, %v9871
      %v9873 = vrot.slane %v9865, %v9872
      %v9875 = vunpack.c.l.s4 1983009808
      %v9876 = vunpack.c.0.s8 %v9875
      %v9877 = vlaneseq
      %v9878 = vshrl.u32 %v9877, 7
      %v9879 = vsub.s32 %v9876, %v9878
      %v9880 = vrot.slane %v9866, %v9879
      %v9881 = vcombine.low %v9857, %v9873
      %v9882 = vcombine.high %v9857, %v9873
      %v9884 = vunpack.c.l.s4 1934713408
      %v9885 = vunpack.c.0.s8 %v9884
      %v9886 = vlaneseq
      %v9887 = vshrl.u32 %v9886, 7
      %v9888 = vsub.s32 %v9885, %v9887
      %v9889 = vrot.slane %v9881, %v9888
      %v9891 = vunpack.c.l.s4 1934713408
      %v9892 = vunpack.c.0.s8 %v9891
      %v9893 = vlaneseq
      %v9894 = vshrl.u32 %v9893, 7
      %v9895 = vsub.s32 %v9892, %v9894
      %v9896 = vrot.slane %v9882, %v9895
      %v9897 = vcombine.low %v9864, %v9880
      %v9898 = vcombine.high %v9864, %v9880
      %v9900 = vunpack.c.l.s4 1934713408
      %v9901 = vunpack.c.0.s8 %v9900
      %v9902 = vlaneseq
      %v9903 = vshrl.u32 %v9902, 7
      %v9904 = vsub.s32 %v9901, %v9903
      %v9905 = vrot.slane %v9897, %v9904
      %v9907 = vunpack.c.l.s4 1934713408
      %v9908 = vunpack.c.0.s8 %v9907
      %v9909 = vlaneseq
      %v9910 = vshrl.u32 %v9909, 7
      %v9911 = vsub.s32 %v9908, %v9910
      %v9912 = vrot.slane %v9898, %v9911
      %v9913 = vcombine.high %v9889, 0.0
      %v9914 = vcombine.high %v9896, 0.0
      %v9915 = vcombine.high %v9905, 0.0
      %v9916 = vcombine.high %v9912, 0.0
      %v9917 = vcombine.low %v8603, %v8797
      %v9918 = vcombine.high %v8603, %v8797
      %v9920 = vunpack.c.l.s4 1983009808
      %v9921 = vunpack.c.0.s8 %v9920
      %v9922 = vlaneseq
      %v9923 = vshrl.u32 %v9922, 7
      %v9924 = vsub.s32 %v9921, %v9923
      %v9925 = vrot.slane %v9917, %v9924
      %v9927 = vunpack.c.l.s4 1983009808
      %v9928 = vunpack.c.0.s8 %v9927
      %v9929 = vlaneseq
      %v9930 = vshrl.u32 %v9929, 7
      %v9931 = vsub.s32 %v9928, %v9930
      %v9932 = vrot.slane %v9918, %v9931
      %v9933 = vcombine.low %v8700, %v8894
      %v9934 = vcombine.high %v8700, %v8894
      %v9936 = vunpack.c.l.s4 1983009808
      %v9937 = vunpack.c.0.s8 %v9936
      %v9938 = vlaneseq
      %v9939 = vshrl.u32 %v9938, 7
      %v9940 = vsub.s32 %v9937, %v9939
      %v9941 = vrot.slane %v9933, %v9940
      %v9943 = vunpack.c.l.s4 1983009808
      %v9944 = vunpack.c.0.s8 %v9943
      %v9945 = vlaneseq
      %v9946 = vshrl.u32 %v9945, 7
      %v9947 = vsub.s32 %v9944, %v9946
      %v9948 = vrot.slane %v9934, %v9947
      %v9949 = vcombine.low %v9925, %v9941
      %v9950 = vcombine.high %v9925, %v9941
      %v9952 = vunpack.c.l.s4 1934713408
      %v9953 = vunpack.c.0.s8 %v9952
      %v9954 = vlaneseq
      %v9955 = vshrl.u32 %v9954, 7
      %v9956 = vsub.s32 %v9953, %v9955
      %v9957 = vrot.slane %v9949, %v9956
      %v9959 = vunpack.c.l.s4 1934713408
      %v9960 = vunpack.c.0.s8 %v9959
      %v9961 = vlaneseq
      %v9962 = vshrl.u32 %v9961, 7
      %v9963 = vsub.s32 %v9960, %v9962
      %v9964 = vrot.slane %v9950, %v9963
      %v9965 = vcombine.low %v9932, %v9948
      %v9966 = vcombine.high %v9932, %v9948
      %v9968 = vunpack.c.l.s4 1934713408
      %v9969 = vunpack.c.0.s8 %v9968
      %v9970 = vlaneseq
      %v9971 = vshrl.u32 %v9970, 7
      %v9972 = vsub.s32 %v9969, %v9971
      %v9973 = vrot.slane %v9965, %v9972
      %v9975 = vunpack.c.l.s4 1934713408
      %v9976 = vunpack.c.0.s8 %v9975
      %v9977 = vlaneseq
      %v9978 = vshrl.u32 %v9977, 7
      %v9979 = vsub.s32 %v9976, %v9978
      %v9980 = vrot.slane %v9966, %v9979
      %v9981 = vcombine.high %v9957, 0.0
      %v9982 = vcombine.high %v9964, 0.0
      %v9983 = vcombine.high %v9973, 0.0
      %v9984 = vcombine.high %v9980, 0.0
      %v9985 = vcombine.low %v8937, %v8944
      %v9987 = vunpack.c.l.s4 1983009808
      %v9988 = vunpack.c.0.s8 %v9987
      %v9989 = vlaneseq
      %v9990 = vshrl.u32 %v9989, 7
      %v9991 = vsub.s32 %v9988, %v9990
      %v9992 = vrot.slane %v9985, %v9991
      %v9993 = vcombine.low %v8961, %v8962
      %v9995 = vunpack.c.l.s4 1983009808
      %v9996 = vunpack.c.0.s8 %v9995
      %v9997 = vlaneseq
      %v9998 = vshrl.u32 %v9997, 7
      %v9999 = vsub.s32 %v9996, %v9998
      %v10000 = vrot.slane %v9993, %v9999
      %v10001 = vcombine.low %v8953, %v8960
      %v10003 = vunpack.c.l.s4 1983009808
      %v10004 = vunpack.c.0.s8 %v10003
      %v10005 = vlaneseq
      %v10006 = vshrl.u32 %v10005, 7
      %v10007 = vsub.s32 %v10004, %v10006
      %v10008 = vrot.slane %v10001, %v10007
      %v10009 = vcombine.low %v8963, %v8964
      %v10011 = vunpack.c.l.s4 1983009808
      %v10012 = vunpack.c.0.s8 %v10011
      %v10013 = vlaneseq
      %v10014 = vshrl.u32 %v10013, 7
      %v10015 = vsub.s32 %v10012, %v10014
      %v10016 = vrot.slane %v10009, %v10015
      %v10017 = vcombine.low %v9992, %v10000
      %v10018 = vcombine.high %v9992, %v10000
      %v10020 = vunpack.c.l.s4 1934713408
      %v10021 = vunpack.c.0.s8 %v10020
      %v10022 = vlaneseq
      %v10023 = vshrl.u32 %v10022, 7
      %v10024 = vsub.s32 %v10021, %v10023
      %v10025 = vrot.slane %v10017, %v10024
      %v10027 = vunpack.c.l.s4 1934713408
      %v10028 = vunpack.c.0.s8 %v10027
      %v10029 = vlaneseq
      %v10030 = vshrl.u32 %v10029, 7
      %v10031 = vsub.s32 %v10028, %v10030
      %v10032 = vrot.slane %v10018, %v10031
      %v10033 = vcombine.low %v10008, %v10016
      %v10034 = vcombine.high %v10008, %v10016
      %v10036 = vunpack.c.l.s4 1934713408
      %v10037 = vunpack.c.0.s8 %v10036
      %v10038 = vlaneseq
      %v10039 = vshrl.u32 %v10038, 7
      %v10040 = vsub.s32 %v10037, %v10039
      %v10041 = vrot.slane %v10033, %v10040
      %v10043 = vunpack.c.l.s4 1934713408
      %v10044 = vunpack.c.0.s8 %v10043
      %v10045 = vlaneseq
      %v10046 = vshrl.u32 %v10045, 7
      %v10047 = vsub.s32 %v10044, %v10046
      %v10048 = vrot.slane %v10034, %v10047
      %v10049 = vcombine.low %v10025, %v10041
      %v10050 = vcombine.high %v10025, %v10041
      %v10051 = vcombine.low %v10032, %v10048
      %v10052 = vcombine.high %v10032, %v10048
      %v10053 = vcombine.low %v9005, %v9012
      %v10055 = vunpack.c.l.s4 1983009808
      %v10056 = vunpack.c.0.s8 %v10055
      %v10057 = vlaneseq
      %v10058 = vshrl.u32 %v10057, 7
      %v10059 = vsub.s32 %v10056, %v10058
      %v10060 = vrot.slane %v10053, %v10059
      %v10061 = vcombine.low %v9029, %v9030
      %v10063 = vunpack.c.l.s4 1983009808
      %v10064 = vunpack.c.0.s8 %v10063
      %v10065 = vlaneseq
      %v10066 = vshrl.u32 %v10065, 7
      %v10067 = vsub.s32 %v10064, %v10066
      %v10068 = vrot.slane %v10061, %v10067
      %v10069 = vcombine.low %v9021, %v9028
      %v10071 = vunpack.c.l.s4 1983009808
      %v10072 = vunpack.c.0.s8 %v10071
      %v10073 = vlaneseq
      %v10074 = vshrl.u32 %v10073, 7
      %v10075 = vsub.s32 %v10072, %v10074
      %v10076 = vrot.slane %v10069, %v10075
      %v10077 = vcombine.low %v9031, %v9032
      %v10079 = vunpack.c.l.s4 1983009808
      %v10080 = vunpack.c.0.s8 %v10079
      %v10081 = vlaneseq
      %v10082 = vshrl.u32 %v10081, 7
      %v10083 = vsub.s32 %v10080, %v10082
      %v10084 = vrot.slane %v10077, %v10083
      %v10085 = vcombine.low %v10060, %v10068
      %v10086 = vcombine.high %v10060, %v10068
      %v10088 = vunpack.c.l.s4 1934713408
      %v10089 = vunpack.c.0.s8 %v10088
      %v10090 = vlaneseq
      %v10091 = vshrl.u32 %v10090, 7
      %v10092 = vsub.s32 %v10089, %v10091
      %v10093 = vrot.slane %v10085, %v10092
      %v10095 = vunpack.c.l.s4 1934713408
      %v10096 = vunpack.c.0.s8 %v10095
      %v10097 = vlaneseq
      %v10098 = vshrl.u32 %v10097, 7
      %v10099 = vsub.s32 %v10096, %v10098
      %v10100 = vrot.slane %v10086, %v10099
      %v10101 = vcombine.low %v10076, %v10084
      %v10102 = vcombine.high %v10076, %v10084
      %v10104 = vunpack.c.l.s4 1934713408
      %v10105 = vunpack.c.0.s8 %v10104
      %v10106 = vlaneseq
      %v10107 = vshrl.u32 %v10106, 7
      %v10108 = vsub.s32 %v10105, %v10107
      %v10109 = vrot.slane %v10101, %v10108
      %v10111 = vunpack.c.l.s4 1934713408
      %v10112 = vunpack.c.0.s8 %v10111
      %v10113 = vlaneseq
      %v10114 = vshrl.u32 %v10113, 7
      %v10115 = vsub.s32 %v10112, %v10114
      %v10116 = vrot.slane %v10102, %v10115
      %v10117 = vcombine.low %v10093, %v10109
      %v10118 = vcombine.high %v10093, %v10109
      %v10119 = vcombine.low %v10100, %v10116
      %v10120 = vcombine.high %v10100, %v10116
      %v10121 = vcombine.low %v9073, %v9080
      %v10123 = vunpack.c.l.s4 1983009808
      %v10124 = vunpack.c.0.s8 %v10123
      %v10125 = vlaneseq
      %v10126 = vshrl.u32 %v10125, 7
      %v10127 = vsub.s32 %v10124, %v10126
      %v10128 = vrot.slane %v10121, %v10127
      %v10129 = vcombine.low %v9097, %v9098
      %v10131 = vunpack.c.l.s4 1983009808
      %v10132 = vunpack.c.0.s8 %v10131
      %v10133 = vlaneseq
      %v10134 = vshrl.u32 %v10133, 7
      %v10135 = vsub.s32 %v10132, %v10134
      %v10136 = vrot.slane %v10129, %v10135
      %v10137 = vcombine.low %v9089, %v9096
      %v10139 = vunpack.c.l.s4 1983009808
      %v10140 = vunpack.c.0.s8 %v10139
      %v10141 = vlaneseq
      %v10142 = vshrl.u32 %v10141, 7
      %v10143 = vsub.s32 %v10140, %v10142
      %v10144 = vrot.slane %v10137, %v10143
      %v10145 = vcombine.low %v9099, %v9100
      %v10147 = vunpack.c.l.s4 1983009808
      %v10148 = vunpack.c.0.s8 %v10147
      %v10149 = vlaneseq
      %v10150 = vshrl.u32 %v10149, 7
      %v10151 = vsub.s32 %v10148, %v10150
      %v10152 = vrot.slane %v10145, %v10151
      %v10153 = vcombine.low %v10128, %v10136
      %v10154 = vcombine.high %v10128, %v10136
      %v10156 = vunpack.c.l.s4 1934713408
      %v10157 = vunpack.c.0.s8 %v10156
      %v10158 = vlaneseq
      %v10159 = vshrl.u32 %v10158, 7
      %v10160 = vsub.s32 %v10157, %v10159
      %v10161 = vrot.slane %v10153, %v10160
      %v10163 = vunpack.c.l.s4 1934713408
      %v10164 = vunpack.c.0.s8 %v10163
      %v10165 = vlaneseq
      %v10166 = vshrl.u32 %v10165, 7
      %v10167 = vsub.s32 %v10164, %v10166
      %v10168 = vrot.slane %v10154, %v10167
      %v10169 = vcombine.low %v10144, %v10152
      %v10170 = vcombine.high %v10144, %v10152
      %v10172 = vunpack.c.l.s4 1934713408
      %v10173 = vunpack.c.0.s8 %v10172
      %v10174 = vlaneseq
      %v10175 = vshrl.u32 %v10174, 7
      %v10176 = vsub.s32 %v10173, %v10175
      %v10177 = vrot.slane %v10169, %v10176
      %v10179 = vunpack.c.l.s4 1934713408
      %v10180 = vunpack.c.0.s8 %v10179
      %v10181 = vlaneseq
      %v10182 = vshrl.u32 %v10181, 7
      %v10183 = vsub.s32 %v10180, %v10182
      %v10184 = vrot.slane %v10170, %v10183
      %v10185 = vcombine.low %v10161, %v10177
      %v10186 = vcombine.high %v10161, %v10177
      %v10187 = vcombine.low %v10168, %v10184
      %v10188 = vcombine.high %v10168, %v10184
      %v10189 = vcombine.low %v9141, %v9148
      %v10191 = vunpack.c.l.s4 1983009808
      %v10192 = vunpack.c.0.s8 %v10191
      %v10193 = vlaneseq
      %v10194 = vshrl.u32 %v10193, 7
      %v10195 = vsub.s32 %v10192, %v10194
      %v10196 = vrot.slane %v10189, %v10195
      %v10197 = vcombine.low %v9165, %v9166
      %v10199 = vunpack.c.l.s4 1983009808
      %v10200 = vunpack.c.0.s8 %v10199
      %v10201 = vlaneseq
      %v10202 = vshrl.u32 %v10201, 7
      %v10203 = vsub.s32 %v10200, %v10202
      %v10204 = vrot.slane %v10197, %v10203
      %v10205 = vcombine.low %v9157, %v9164
      %v10207 = vunpack.c.l.s4 1983009808
      %v10208 = vunpack.c.0.s8 %v10207
      %v10209 = vlaneseq
      %v10210 = vshrl.u32 %v10209, 7
      %v10211 = vsub.s32 %v10208, %v10210
      %v10212 = vrot.slane %v10205, %v10211
      %v10213 = vcombine.low %v9167, %v9168
      %v10215 = vunpack.c.l.s4 1983009808
      %v10216 = vunpack.c.0.s8 %v10215
      %v10217 = vlaneseq
      %v10218 = vshrl.u32 %v10217, 7
      %v10219 = vsub.s32 %v10216, %v10218
      %v10220 = vrot.slane %v10213, %v10219
      %v10221 = vcombine.low %v10196, %v10204
      %v10222 = vcombine.high %v10196, %v10204
      %v10224 = vunpack.c.l.s4 1934713408
      %v10225 = vunpack.c.0.s8 %v10224
      %v10226 = vlaneseq
      %v10227 = vshrl.u32 %v10226, 7
      %v10228 = vsub.s32 %v10225, %v10227
      %v10229 = vrot.slane %v10221, %v10228
      %v10231 = vunpack.c.l.s4 1934713408
      %v10232 = vunpack.c.0.s8 %v10231
      %v10233 = vlaneseq
      %v10234 = vshrl.u32 %v10233, 7
      %v10235 = vsub.s32 %v10232, %v10234
      %v10236 = vrot.slane %v10222, %v10235
      %v10237 = vcombine.low %v10212, %v10220
      %v10238 = vcombine.high %v10212, %v10220
      %v10240 = vunpack.c.l.s4 1934713408
      %v10241 = vunpack.c.0.s8 %v10240
      %v10242 = vlaneseq
      %v10243 = vshrl.u32 %v10242, 7
      %v10244 = vsub.s32 %v10241, %v10243
      %v10245 = vrot.slane %v10237, %v10244
      %v10247 = vunpack.c.l.s4 1934713408
      %v10248 = vunpack.c.0.s8 %v10247
      %v10249 = vlaneseq
      %v10250 = vshrl.u32 %v10249, 7
      %v10251 = vsub.s32 %v10248, %v10250
      %v10252 = vrot.slane %v10238, %v10251
      %v10253 = vcombine.low %v10229, %v10245
      %v10254 = vcombine.high %v10229, %v10245
      %v10255 = vcombine.low %v10236, %v10252
      %v10256 = vcombine.high %v10236, %v10252
      %v10257 = vcombine.low %v9209, %v9216
      %v10259 = vunpack.c.l.s4 1983009808
      %v10260 = vunpack.c.0.s8 %v10259
      %v10261 = vlaneseq
      %v10262 = vshrl.u32 %v10261, 7
      %v10263 = vsub.s32 %v10260, %v10262
      %v10264 = vrot.slane %v10257, %v10263
      %v10265 = vcombine.low %v9233, %v9234
      %v10267 = vunpack.c.l.s4 1983009808
      %v10268 = vunpack.c.0.s8 %v10267
      %v10269 = vlaneseq
      %v10270 = vshrl.u32 %v10269, 7
      %v10271 = vsub.s32 %v10268, %v10270
      %v10272 = vrot.slane %v10265, %v10271
      %v10273 = vcombine.low %v9225, %v9232
      %v10275 = vunpack.c.l.s4 1983009808
      %v10276 = vunpack.c.0.s8 %v10275
      %v10277 = vlaneseq
      %v10278 = vshrl.u32 %v10277, 7
      %v10279 = vsub.s32 %v10276, %v10278
      %v10280 = vrot.slane %v10273, %v10279
      %v10281 = vcombine.low %v9235, %v9236
      %v10283 = vunpack.c.l.s4 1983009808
      %v10284 = vunpack.c.0.s8 %v10283
      %v10285 = vlaneseq
      %v10286 = vshrl.u32 %v10285, 7
      %v10287 = vsub.s32 %v10284, %v10286
      %v10288 = vrot.slane %v10281, %v10287
      %v10289 = vcombine.low %v10264, %v10272
      %v10290 = vcombine.high %v10264, %v10272
      %v10292 = vunpack.c.l.s4 1934713408
      %v10293 = vunpack.c.0.s8 %v10292
      %v10294 = vlaneseq
      %v10295 = vshrl.u32 %v10294, 7
      %v10296 = vsub.s32 %v10293, %v10295
      %v10297 = vrot.slane %v10289, %v10296
      %v10299 = vunpack.c.l.s4 1934713408
      %v10300 = vunpack.c.0.s8 %v10299
      %v10301 = vlaneseq
      %v10302 = vshrl.u32 %v10301, 7
      %v10303 = vsub.s32 %v10300, %v10302
      %v10304 = vrot.slane %v10290, %v10303
      %v10305 = vcombine.low %v10280, %v10288
      %v10306 = vcombine.high %v10280, %v10288
      %v10308 = vunpack.c.l.s4 1934713408
      %v10309 = vunpack.c.0.s8 %v10308
      %v10310 = vlaneseq
      %v10311 = vshrl.u32 %v10310, 7
      %v10312 = vsub.s32 %v10309, %v10311
      %v10313 = vrot.slane %v10305, %v10312
      %v10315 = vunpack.c.l.s4 1934713408
      %v10316 = vunpack.c.0.s8 %v10315
      %v10317 = vlaneseq
      %v10318 = vshrl.u32 %v10317, 7
      %v10319 = vsub.s32 %v10316, %v10318
      %v10320 = vrot.slane %v10306, %v10319
      %v10321 = vcombine.low %v10297, %v10313
      %v10322 = vcombine.high %v10297, %v10313
      %v10323 = vcombine.low %v10304, %v10320
      %v10324 = vcombine.high %v10304, %v10320
      %v10325 = vcombine.low %v9277, %v9284
      %v10327 = vunpack.c.l.s4 1983009808
      %v10328 = vunpack.c.0.s8 %v10327
      %v10329 = vlaneseq
      %v10330 = vshrl.u32 %v10329, 7
      %v10331 = vsub.s32 %v10328, %v10330
      %v10332 = vrot.slane %v10325, %v10331
      %v10333 = vcombine.low %v9301, %v9302
      %v10335 = vunpack.c.l.s4 1983009808
      %v10336 = vunpack.c.0.s8 %v10335
      %v10337 = vlaneseq
      %v10338 = vshrl.u32 %v10337, 7
      %v10339 = vsub.s32 %v10336, %v10338
      %v10340 = vrot.slane %v10333, %v10339
      %v10341 = vcombine.low %v9293, %v9300
      %v10343 = vunpack.c.l.s4 1983009808
      %v10344 = vunpack.c.0.s8 %v10343
      %v10345 = vlaneseq
      %v10346 = vshrl.u32 %v10345, 7
      %v10347 = vsub.s32 %v10344, %v10346
      %v10348 = vrot.slane %v10341, %v10347
      %v10349 = vcombine.low %v9303, %v9304
      %v10351 = vunpack.c.l.s4 1983009808
      %v10352 = vunpack.c.0.s8 %v10351
      %v10353 = vlaneseq
      %v10354 = vshrl.u32 %v10353, 7
      %v10355 = vsub.s32 %v10352, %v10354
      %v10356 = vrot.slane %v10349, %v10355
      %v10357 = vcombine.low %v10332, %v10340
      %v10358 = vcombine.high %v10332, %v10340
      %v10360 = vunpack.c.l.s4 1934713408
      %v10361 = vunpack.c.0.s8 %v10360
      %v10362 = vlaneseq
      %v10363 = vshrl.u32 %v10362, 7
      %v10364 = vsub.s32 %v10361, %v10363
      %v10365 = vrot.slane %v10357, %v10364
      %v10367 = vunpack.c.l.s4 1934713408
      %v10368 = vunpack.c.0.s8 %v10367
      %v10369 = vlaneseq
      %v10370 = vshrl.u32 %v10369, 7
      %v10371 = vsub.s32 %v10368, %v10370
      %v10372 = vrot.slane %v10358, %v10371
      %v10373 = vcombine.low %v10348, %v10356
      %v10374 = vcombine.high %v10348, %v10356
      %v10376 = vunpack.c.l.s4 1934713408
      %v10377 = vunpack.c.0.s8 %v10376
      %v10378 = vlaneseq
      %v10379 = vshrl.u32 %v10378, 7
      %v10380 = vsub.s32 %v10377, %v10379
      %v10381 = vrot.slane %v10373, %v10380
      %v10383 = vunpack.c.l.s4 1934713408
      %v10384 = vunpack.c.0.s8 %v10383
      %v10385 = vlaneseq
      %v10386 = vshrl.u32 %v10385, 7
      %v10387 = vsub.s32 %v10384, %v10386
      %v10388 = vrot.slane %v10374, %v10387
      %v10389 = vcombine.low %v10365, %v10381
      %v10390 = vcombine.high %v10365, %v10381
      %v10391 = vcombine.low %v10372, %v10388
      %v10392 = vcombine.high %v10372, %v10388
      %v10393 = vcombine.low %v9345, %v9352
      %v10395 = vunpack.c.l.s4 1983009808
      %v10396 = vunpack.c.0.s8 %v10395
      %v10397 = vlaneseq
      %v10398 = vshrl.u32 %v10397, 7
      %v10399 = vsub.s32 %v10396, %v10398
      %v10400 = vrot.slane %v10393, %v10399
      %v10401 = vcombine.low %v9369, %v9370
      %v10403 = vunpack.c.l.s4 1983009808
      %v10404 = vunpack.c.0.s8 %v10403
      %v10405 = vlaneseq
      %v10406 = vshrl.u32 %v10405, 7
      %v10407 = vsub.s32 %v10404, %v10406
      %v10408 = vrot.slane %v10401, %v10407
      %v10409 = vcombine.low %v9361, %v9368
      %v10411 = vunpack.c.l.s4 1983009808
      %v10412 = vunpack.c.0.s8 %v10411
      %v10413 = vlaneseq
      %v10414 = vshrl.u32 %v10413, 7
      %v10415 = vsub.s32 %v10412, %v10414
      %v10416 = vrot.slane %v10409, %v10415
      %v10417 = vcombine.low %v9371, %v9372
      %v10419 = vunpack.c.l.s4 1983009808
      %v10420 = vunpack.c.0.s8 %v10419
      %v10421 = vlaneseq
      %v10422 = vshrl.u32 %v10421, 7
      %v10423 = vsub.s32 %v10420, %v10422
      %v10424 = vrot.slane %v10417, %v10423
      %v10425 = vcombine.low %v10400, %v10408
      %v10426 = vcombine.high %v10400, %v10408
      %v10428 = vunpack.c.l.s4 1934713408
      %v10429 = vunpack.c.0.s8 %v10428
      %v10430 = vlaneseq
      %v10431 = vshrl.u32 %v10430, 7
      %v10432 = vsub.s32 %v10429, %v10431
      %v10433 = vrot.slane %v10425, %v10432
      %v10435 = vunpack.c.l.s4 1934713408
      %v10436 = vunpack.c.0.s8 %v10435
      %v10437 = vlaneseq
      %v10438 = vshrl.u32 %v10437, 7
      %v10439 = vsub.s32 %v10436, %v10438
      %v10440 = vrot.slane %v10426, %v10439
      %v10441 = vcombine.low %v10416, %v10424
      %v10442 = vcombine.high %v10416, %v10424
      %v10444 = vunpack.c.l.s4 1934713408
      %v10445 = vunpack.c.0.s8 %v10444
      %v10446 = vlaneseq
      %v10447 = vshrl.u32 %v10446, 7
      %v10448 = vsub.s32 %v10445, %v10447
      %v10449 = vrot.slane %v10441, %v10448
      %v10451 = vunpack.c.l.s4 1934713408
      %v10452 = vunpack.c.0.s8 %v10451
      %v10453 = vlaneseq
      %v10454 = vshrl.u32 %v10453, 7
      %v10455 = vsub.s32 %v10452, %v10454
      %v10456 = vrot.slane %v10442, %v10455
      %v10457 = vcombine.low %v10433, %v10449
      %v10458 = vcombine.high %v10433, %v10449
      %v10459 = vcombine.low %v10440, %v10456
      %v10460 = vcombine.high %v10440, %v10456
      %v10461 = vcombine.low %v9413, %v9420
      %v10463 = vunpack.c.l.s4 1983009808
      %v10464 = vunpack.c.0.s8 %v10463
      %v10465 = vlaneseq
      %v10466 = vshrl.u32 %v10465, 7
      %v10467 = vsub.s32 %v10464, %v10466
      %v10468 = vrot.slane %v10461, %v10467
      %v10469 = vcombine.low %v9437, %v9438
      %v10471 = vunpack.c.l.s4 1983009808
      %v10472 = vunpack.c.0.s8 %v10471
      %v10473 = vlaneseq
      %v10474 = vshrl.u32 %v10473, 7
      %v10475 = vsub.s32 %v10472, %v10474
      %v10476 = vrot.slane %v10469, %v10475
      %v10477 = vcombine.low %v9429, %v9436
      %v10479 = vunpack.c.l.s4 1983009808
      %v10480 = vunpack.c.0.s8 %v10479
      %v10481 = vlaneseq
      %v10482 = vshrl.u32 %v10481, 7
      %v10483 = vsub.s32 %v10480, %v10482
      %v10484 = vrot.slane %v10477, %v10483
      %v10485 = vcombine.low %v9439, %v9440
      %v10487 = vunpack.c.l.s4 1983009808
      %v10488 = vunpack.c.0.s8 %v10487
      %v10489 = vlaneseq
      %v10490 = vshrl.u32 %v10489, 7
      %v10491 = vsub.s32 %v10488, %v10490
      %v10492 = vrot.slane %v10485, %v10491
      %v10493 = vcombine.low %v10468, %v10476
      %v10494 = vcombine.high %v10468, %v10476
      %v10496 = vunpack.c.l.s4 1934713408
      %v10497 = vunpack.c.0.s8 %v10496
      %v10498 = vlaneseq
      %v10499 = vshrl.u32 %v10498, 7
      %v10500 = vsub.s32 %v10497, %v10499
      %v10501 = vrot.slane %v10493, %v10500
      %v10503 = vunpack.c.l.s4 1934713408
      %v10504 = vunpack.c.0.s8 %v10503
      %v10505 = vlaneseq
      %v10506 = vshrl.u32 %v10505, 7
      %v10507 = vsub.s32 %v10504, %v10506
      %v10508 = vrot.slane %v10494, %v10507
      %v10509 = vcombine.low %v10484, %v10492
      %v10510 = vcombine.high %v10484, %v10492
      %v10512 = vunpack.c.l.s4 1934713408
      %v10513 = vunpack.c.0.s8 %v10512
      %v10514 = vlaneseq
      %v10515 = vshrl.u32 %v10514, 7
      %v10516 = vsub.s32 %v10513, %v10515
      %v10517 = vrot.slane %v10509, %v10516
      %v10519 = vunpack.c.l.s4 1934713408
      %v10520 = vunpack.c.0.s8 %v10519
      %v10521 = vlaneseq
      %v10522 = vshrl.u32 %v10521, 7
      %v10523 = vsub.s32 %v10520, %v10522
      %v10524 = vrot.slane %v10510, %v10523
      %v10525 = vcombine.low %v10501, %v10517
      %v10526 = vcombine.high %v10501, %v10517
      %v10527 = vcombine.low %v10508, %v10524
      %v10528 = vcombine.high %v10508, %v10524
      %v10529 = vcombine.low %v9481, %v9488
      %v10531 = vunpack.c.l.s4 1983009808
      %v10532 = vunpack.c.0.s8 %v10531
      %v10533 = vlaneseq
      %v10534 = vshrl.u32 %v10533, 7
      %v10535 = vsub.s32 %v10532, %v10534
      %v10536 = vrot.slane %v10529, %v10535
      %v10537 = vcombine.low %v9505, %v9506
      %v10539 = vunpack.c.l.s4 1983009808
      %v10540 = vunpack.c.0.s8 %v10539
      %v10541 = vlaneseq
      %v10542 = vshrl.u32 %v10541, 7
      %v10543 = vsub.s32 %v10540, %v10542
      %v10544 = vrot.slane %v10537, %v10543
      %v10545 = vcombine.low %v9497, %v9504
      %v10547 = vunpack.c.l.s4 1983009808
      %v10548 = vunpack.c.0.s8 %v10547
      %v10549 = vlaneseq
      %v10550 = vshrl.u32 %v10549, 7
      %v10551 = vsub.s32 %v10548, %v10550
      %v10552 = vrot.slane %v10545, %v10551
      %v10553 = vcombine.low %v9507, %v9508
      %v10555 = vunpack.c.l.s4 1983009808
      %v10556 = vunpack.c.0.s8 %v10555
      %v10557 = vlaneseq
      %v10558 = vshrl.u32 %v10557, 7
      %v10559 = vsub.s32 %v10556, %v10558
      %v10560 = vrot.slane %v10553, %v10559
      %v10561 = vcombine.low %v10536, %v10544
      %v10562 = vcombine.high %v10536, %v10544
      %v10564 = vunpack.c.l.s4 1934713408
      %v10565 = vunpack.c.0.s8 %v10564
      %v10566 = vlaneseq
      %v10567 = vshrl.u32 %v10566, 7
      %v10568 = vsub.s32 %v10565, %v10567
      %v10569 = vrot.slane %v10561, %v10568
      %v10571 = vunpack.c.l.s4 1934713408
      %v10572 = vunpack.c.0.s8 %v10571
      %v10573 = vlaneseq
      %v10574 = vshrl.u32 %v10573, 7
      %v10575 = vsub.s32 %v10572, %v10574
      %v10576 = vrot.slane %v10562, %v10575
      %v10577 = vcombine.low %v10552, %v10560
      %v10578 = vcombine.high %v10552, %v10560
      %v10580 = vunpack.c.l.s4 1934713408
      %v10581 = vunpack.c.0.s8 %v10580
      %v10582 = vlaneseq
      %v10583 = vshrl.u32 %v10582, 7
      %v10584 = vsub.s32 %v10581, %v10583
      %v10585 = vrot.slane %v10577, %v10584
      %v10587 = vunpack.c.l.s4 1934713408
      %v10588 = vunpack.c.0.s8 %v10587
      %v10589 = vlaneseq
      %v10590 = vshrl.u32 %v10589, 7
      %v10591 = vsub.s32 %v10588, %v10590
      %v10592 = vrot.slane %v10578, %v10591
      %v10593 = vcombine.low %v10569, %v10585
      %v10594 = vcombine.high %v10569, %v10585
      %v10595 = vcombine.low %v10576, %v10592
      %v10596 = vcombine.high %v10576, %v10592
      %v10597 = vcombine.low %v9549, %v9556
      %v10599 = vunpack.c.l.s4 1983009808
      %v10600 = vunpack.c.0.s8 %v10599
      %v10601 = vlaneseq
      %v10602 = vshrl.u32 %v10601, 7
      %v10603 = vsub.s32 %v10600, %v10602
      %v10604 = vrot.slane %v10597, %v10603
      %v10605 = vcombine.low %v9573, %v9574
      %v10607 = vunpack.c.l.s4 1983009808
      %v10608 = vunpack.c.0.s8 %v10607
      %v10609 = vlaneseq
      %v10610 = vshrl.u32 %v10609, 7
      %v10611 = vsub.s32 %v10608, %v10610
      %v10612 = vrot.slane %v10605, %v10611
      %v10613 = vcombine.low %v9565, %v9572
      %v10615 = vunpack.c.l.s4 1983009808
      %v10616 = vunpack.c.0.s8 %v10615
      %v10617 = vlaneseq
      %v10618 = vshrl.u32 %v10617, 7
      %v10619 = vsub.s32 %v10616, %v10618
      %v10620 = vrot.slane %v10613, %v10619
      %v10621 = vcombine.low %v9575, %v9576
      %v10623 = vunpack.c.l.s4 1983009808
      %v10624 = vunpack.c.0.s8 %v10623
      %v10625 = vlaneseq
      %v10626 = vshrl.u32 %v10625, 7
      %v10627 = vsub.s32 %v10624, %v10626
      %v10628 = vrot.slane %v10621, %v10627
      %v10629 = vcombine.low %v10604, %v10612
      %v10630 = vcombine.high %v10604, %v10612
      %v10632 = vunpack.c.l.s4 1934713408
      %v10633 = vunpack.c.0.s8 %v10632
      %v10634 = vlaneseq
      %v10635 = vshrl.u32 %v10634, 7
      %v10636 = vsub.s32 %v10633, %v10635
      %v10637 = vrot.slane %v10629, %v10636
      %v10639 = vunpack.c.l.s4 1934713408
      %v10640 = vunpack.c.0.s8 %v10639
      %v10641 = vlaneseq
      %v10642 = vshrl.u32 %v10641, 7
      %v10643 = vsub.s32 %v10640, %v10642
      %v10644 = vrot.slane %v10630, %v10643
      %v10645 = vcombine.low %v10620, %v10628
      %v10646 = vcombine.high %v10620, %v10628
      %v10648 = vunpack.c.l.s4 1934713408
      %v10649 = vunpack.c.0.s8 %v10648
      %v10650 = vlaneseq
      %v10651 = vshrl.u32 %v10650, 7
      %v10652 = vsub.s32 %v10649, %v10651
      %v10653 = vrot.slane %v10645, %v10652
      %v10655 = vunpack.c.l.s4 1934713408
      %v10656 = vunpack.c.0.s8 %v10655
      %v10657 = vlaneseq
      %v10658 = vshrl.u32 %v10657, 7
      %v10659 = vsub.s32 %v10656, %v10658
      %v10660 = vrot.slane %v10646, %v10659
      %v10661 = vcombine.low %v10637, %v10653
      %v10662 = vcombine.high %v10637, %v10653
      %v10663 = vcombine.low %v10644, %v10660
      %v10664 = vcombine.high %v10644, %v10660
      %v10665 = vcombine.low %v9617, %v9624
      %v10667 = vunpack.c.l.s4 1983009808
      %v10668 = vunpack.c.0.s8 %v10667
      %v10669 = vlaneseq
      %v10670 = vshrl.u32 %v10669, 7
      %v10671 = vsub.s32 %v10668, %v10670
      %v10672 = vrot.slane %v10665, %v10671
      %v10673 = vcombine.low %v9641, %v9642
      %v10675 = vunpack.c.l.s4 1983009808
      %v10676 = vunpack.c.0.s8 %v10675
      %v10677 = vlaneseq
      %v10678 = vshrl.u32 %v10677, 7
      %v10679 = vsub.s32 %v10676, %v10678
      %v10680 = vrot.slane %v10673, %v10679
      %v10681 = vcombine.low %v9633, %v9640
      %v10683 = vunpack.c.l.s4 1983009808
      %v10684 = vunpack.c.0.s8 %v10683
      %v10685 = vlaneseq
      %v10686 = vshrl.u32 %v10685, 7
      %v10687 = vsub.s32 %v10684, %v10686
      %v10688 = vrot.slane %v10681, %v10687
      %v10689 = vcombine.low %v9643, %v9644
      %v10691 = vunpack.c.l.s4 1983009808
      %v10692 = vunpack.c.0.s8 %v10691
      %v10693 = vlaneseq
      %v10694 = vshrl.u32 %v10693, 7
      %v10695 = vsub.s32 %v10692, %v10694
      %v10696 = vrot.slane %v10689, %v10695
      %v10697 = vcombine.low %v10672, %v10680
      %v10698 = vcombine.high %v10672, %v10680
      %v10700 = vunpack.c.l.s4 1934713408
      %v10701 = vunpack.c.0.s8 %v10700
      %v10702 = vlaneseq
      %v10703 = vshrl.u32 %v10702, 7
      %v10704 = vsub.s32 %v10701, %v10703
      %v10705 = vrot.slane %v10697, %v10704
      %v10707 = vunpack.c.l.s4 1934713408
      %v10708 = vunpack.c.0.s8 %v10707
      %v10709 = vlaneseq
      %v10710 = vshrl.u32 %v10709, 7
      %v10711 = vsub.s32 %v10708, %v10710
      %v10712 = vrot.slane %v10698, %v10711
      %v10713 = vcombine.low %v10688, %v10696
      %v10714 = vcombine.high %v10688, %v10696
      %v10716 = vunpack.c.l.s4 1934713408
      %v10717 = vunpack.c.0.s8 %v10716
      %v10718 = vlaneseq
      %v10719 = vshrl.u32 %v10718, 7
      %v10720 = vsub.s32 %v10717, %v10719
      %v10721 = vrot.slane %v10713, %v10720
      %v10723 = vunpack.c.l.s4 1934713408
      %v10724 = vunpack.c.0.s8 %v10723
      %v10725 = vlaneseq
      %v10726 = vshrl.u32 %v10725, 7
      %v10727 = vsub.s32 %v10724, %v10726
      %v10728 = vrot.slane %v10714, %v10727
      %v10729 = vcombine.low %v10705, %v10721
      %v10730 = vcombine.high %v10705, %v10721
      %v10731 = vcombine.low %v10712, %v10728
      %v10732 = vcombine.high %v10712, %v10728
      %v10733 = vcombine.low %v9685, %v9692
      %v10735 = vunpack.c.l.s4 1983009808
      %v10736 = vunpack.c.0.s8 %v10735
      %v10737 = vlaneseq
      %v10738 = vshrl.u32 %v10737, 7
      %v10739 = vsub.s32 %v10736, %v10738
      %v10740 = vrot.slane %v10733, %v10739
      %v10741 = vcombine.low %v9709, %v9710
      %v10743 = vunpack.c.l.s4 1983009808
      %v10744 = vunpack.c.0.s8 %v10743
      %v10745 = vlaneseq
      %v10746 = vshrl.u32 %v10745, 7
      %v10747 = vsub.s32 %v10744, %v10746
      %v10748 = vrot.slane %v10741, %v10747
      %v10749 = vcombine.low %v9701, %v9708
      %v10751 = vunpack.c.l.s4 1983009808
      %v10752 = vunpack.c.0.s8 %v10751
      %v10753 = vlaneseq
      %v10754 = vshrl.u32 %v10753, 7
      %v10755 = vsub.s32 %v10752, %v10754
      %v10756 = vrot.slane %v10749, %v10755
      %v10757 = vcombine.low %v9711, %v9712
      %v10759 = vunpack.c.l.s4 1983009808
      %v10760 = vunpack.c.0.s8 %v10759
      %v10761 = vlaneseq
      %v10762 = vshrl.u32 %v10761, 7
      %v10763 = vsub.s32 %v10760, %v10762
      %v10764 = vrot.slane %v10757, %v10763
      %v10765 = vcombine.low %v10740, %v10748
      %v10766 = vcombine.high %v10740, %v10748
      %v10768 = vunpack.c.l.s4 1934713408
      %v10769 = vunpack.c.0.s8 %v10768
      %v10770 = vlaneseq
      %v10771 = vshrl.u32 %v10770, 7
      %v10772 = vsub.s32 %v10769, %v10771
      %v10773 = vrot.slane %v10765, %v10772
      %v10775 = vunpack.c.l.s4 1934713408
      %v10776 = vunpack.c.0.s8 %v10775
      %v10777 = vlaneseq
      %v10778 = vshrl.u32 %v10777, 7
      %v10779 = vsub.s32 %v10776, %v10778
      %v10780 = vrot.slane %v10766, %v10779
      %v10781 = vcombine.low %v10756, %v10764
      %v10782 = vcombine.high %v10756, %v10764
      %v10784 = vunpack.c.l.s4 1934713408
      %v10785 = vunpack.c.0.s8 %v10784
      %v10786 = vlaneseq
      %v10787 = vshrl.u32 %v10786, 7
      %v10788 = vsub.s32 %v10785, %v10787
      %v10789 = vrot.slane %v10781, %v10788
      %v10791 = vunpack.c.l.s4 1934713408
      %v10792 = vunpack.c.0.s8 %v10791
      %v10793 = vlaneseq
      %v10794 = vshrl.u32 %v10793, 7
      %v10795 = vsub.s32 %v10792, %v10794
      %v10796 = vrot.slane %v10782, %v10795
      %v10797 = vcombine.low %v10773, %v10789
      %v10798 = vcombine.high %v10773, %v10789
      %v10799 = vcombine.low %v10780, %v10796
      %v10800 = vcombine.high %v10780, %v10796
      %v10801 = vcombine.low %v9753, %v9760
      %v10803 = vunpack.c.l.s4 1983009808
      %v10804 = vunpack.c.0.s8 %v10803
      %v10805 = vlaneseq
      %v10806 = vshrl.u32 %v10805, 7
      %v10807 = vsub.s32 %v10804, %v10806
      %v10808 = vrot.slane %v10801, %v10807
      %v10809 = vcombine.low %v9777, %v9778
      %v10811 = vunpack.c.l.s4 1983009808
      %v10812 = vunpack.c.0.s8 %v10811
      %v10813 = vlaneseq
      %v10814 = vshrl.u32 %v10813, 7
      %v10815 = vsub.s32 %v10812, %v10814
      %v10816 = vrot.slane %v10809, %v10815
      %v10817 = vcombine.low %v9769, %v9776
      %v10819 = vunpack.c.l.s4 1983009808
      %v10820 = vunpack.c.0.s8 %v10819
      %v10821 = vlaneseq
      %v10822 = vshrl.u32 %v10821, 7
      %v10823 = vsub.s32 %v10820, %v10822
      %v10824 = vrot.slane %v10817, %v10823
      %v10825 = vcombine.low %v9779, %v9780
      %v10827 = vunpack.c.l.s4 1983009808
      %v10828 = vunpack.c.0.s8 %v10827
      %v10829 = vlaneseq
      %v10830 = vshrl.u32 %v10829, 7
      %v10831 = vsub.s32 %v10828, %v10830
      %v10832 = vrot.slane %v10825, %v10831
      %v10833 = vcombine.low %v10808, %v10816
      %v10834 = vcombine.high %v10808, %v10816
      %v10836 = vunpack.c.l.s4 1934713408
      %v10837 = vunpack.c.0.s8 %v10836
      %v10838 = vlaneseq
      %v10839 = vshrl.u32 %v10838, 7
      %v10840 = vsub.s32 %v10837, %v10839
      %v10841 = vrot.slane %v10833, %v10840
      %v10843 = vunpack.c.l.s4 1934713408
      %v10844 = vunpack.c.0.s8 %v10843
      %v10845 = vlaneseq
      %v10846 = vshrl.u32 %v10845, 7
      %v10847 = vsub.s32 %v10844, %v10846
      %v10848 = vrot.slane %v10834, %v10847
      %v10849 = vcombine.low %v10824, %v10832
      %v10850 = vcombine.high %v10824, %v10832
      %v10852 = vunpack.c.l.s4 1934713408
      %v10853 = vunpack.c.0.s8 %v10852
      %v10854 = vlaneseq
      %v10855 = vshrl.u32 %v10854, 7
      %v10856 = vsub.s32 %v10853, %v10855
      %v10857 = vrot.slane %v10849, %v10856
      %v10859 = vunpack.c.l.s4 1934713408
      %v10860 = vunpack.c.0.s8 %v10859
      %v10861 = vlaneseq
      %v10862 = vshrl.u32 %v10861, 7
      %v10863 = vsub.s32 %v10860, %v10862
      %v10864 = vrot.slane %v10850, %v10863
      %v10865 = vcombine.low %v10841, %v10857
      %v10866 = vcombine.high %v10841, %v10857
      %v10867 = vcombine.low %v10848, %v10864
      %v10868 = vcombine.high %v10848, %v10864
      %v10869 = vcombine.low %v9821, %v9828
      %v10871 = vunpack.c.l.s4 1983009808
      %v10872 = vunpack.c.0.s8 %v10871
      %v10873 = vlaneseq
      %v10874 = vshrl.u32 %v10873, 7
      %v10875 = vsub.s32 %v10872, %v10874
      %v10876 = vrot.slane %v10869, %v10875
      %v10877 = vcombine.low %v9845, %v9846
      %v10879 = vunpack.c.l.s4 1983009808
      %v10880 = vunpack.c.0.s8 %v10879
      %v10881 = vlaneseq
      %v10882 = vshrl.u32 %v10881, 7
      %v10883 = vsub.s32 %v10880, %v10882
      %v10884 = vrot.slane %v10877, %v10883
      %v10885 = vcombine.low %v9837, %v9844
      %v10887 = vunpack.c.l.s4 1983009808
      %v10888 = vunpack.c.0.s8 %v10887
      %v10889 = vlaneseq
      %v10890 = vshrl.u32 %v10889, 7
      %v10891 = vsub.s32 %v10888, %v10890
      %v10892 = vrot.slane %v10885, %v10891
      %v10893 = vcombine.low %v9847, %v9848
      %v10895 = vunpack.c.l.s4 1983009808
      %v10896 = vunpack.c.0.s8 %v10895
      %v10897 = vlaneseq
      %v10898 = vshrl.u32 %v10897, 7
      %v10899 = vsub.s32 %v10896, %v10898
      %v10900 = vrot.slane %v10893, %v10899
      %v10901 = vcombine.low %v10876, %v10884
      %v10902 = vcombine.high %v10876, %v10884
      %v10904 = vunpack.c.l.s4 1934713408
      %v10905 = vunpack.c.0.s8 %v10904
      %v10906 = vlaneseq
      %v10907 = vshrl.u32 %v10906, 7
      %v10908 = vsub.s32 %v10905, %v10907
      %v10909 = vrot.slane %v10901, %v10908
      %v10911 = vunpack.c.l.s4 1934713408
      %v10912 = vunpack.c.0.s8 %v10911
      %v10913 = vlaneseq
      %v10914 = vshrl.u32 %v10913, 7
      %v10915 = vsub.s32 %v10912, %v10914
      %v10916 = vrot.slane %v10902, %v10915
      %v10917 = vcombine.low %v10892, %v10900
      %v10918 = vcombine.high %v10892, %v10900
      %v10920 = vunpack.c.l.s4 1934713408
      %v10921 = vunpack.c.0.s8 %v10920
      %v10922 = vlaneseq
      %v10923 = vshrl.u32 %v10922, 7
      %v10924 = vsub.s32 %v10921, %v10923
      %v10925 = vrot.slane %v10917, %v10924
      %v10927 = vunpack.c.l.s4 1934713408
      %v10928 = vunpack.c.0.s8 %v10927
      %v10929 = vlaneseq
      %v10930 = vshrl.u32 %v10929, 7
      %v10931 = vsub.s32 %v10928, %v10930
      %v10932 = vrot.slane %v10918, %v10931
      %v10933 = vcombine.low %v10909, %v10925
      %v10934 = vcombine.high %v10909, %v10925
      %v10935 = vcombine.low %v10916, %v10932
      %v10936 = vcombine.high %v10916, %v10932
      %v10937 = vcombine.low %v9889, %v9896
      %v10939 = vunpack.c.l.s4 1983009808
      %v10940 = vunpack.c.0.s8 %v10939
      %v10941 = vlaneseq
      %v10942 = vshrl.u32 %v10941, 7
      %v10943 = vsub.s32 %v10940, %v10942
      %v10944 = vrot.slane %v10937, %v10943
      %v10945 = vcombine.low %v9913, %v9914
      %v10947 = vunpack.c.l.s4 1983009808
      %v10948 = vunpack.c.0.s8 %v10947
      %v10949 = vlaneseq
      %v10950 = vshrl.u32 %v10949, 7
      %v10951 = vsub.s32 %v10948, %v10950
      %v10952 = vrot.slane %v10945, %v10951
      %v10953 = vcombine.low %v9905, %v9912
      %v10955 = vunpack.c.l.s4 1983009808
      %v10956 = vunpack.c.0.s8 %v10955
      %v10957 = vlaneseq
      %v10958 = vshrl.u32 %v10957, 7
      %v10959 = vsub.s32 %v10956, %v10958
      %v10960 = vrot.slane %v10953, %v10959
      %v10961 = vcombine.low %v9915, %v9916
      %v10963 = vunpack.c.l.s4 1983009808
      %v10964 = vunpack.c.0.s8 %v10963
      %v10965 = vlaneseq
      %v10966 = vshrl.u32 %v10965, 7
      %v10967 = vsub.s32 %v10964, %v10966
      %v10968 = vrot.slane %v10961, %v10967
      %v10969 = vcombine.low %v10944, %v10952
      %v10970 = vcombine.high %v10944, %v10952
      %v10972 = vunpack.c.l.s4 1934713408
      %v10973 = vunpack.c.0.s8 %v10972
      %v10974 = vlaneseq
      %v10975 = vshrl.u32 %v10974, 7
      %v10976 = vsub.s32 %v10973, %v10975
      %v10977 = vrot.slane %v10969, %v10976
      %v10979 = vunpack.c.l.s4 1934713408
      %v10980 = vunpack.c.0.s8 %v10979
      %v10981 = vlaneseq
      %v10982 = vshrl.u32 %v10981, 7
      %v10983 = vsub.s32 %v10980, %v10982
      %v10984 = vrot.slane %v10970, %v10983
      %v10985 = vcombine.low %v10960, %v10968
      %v10986 = vcombine.high %v10960, %v10968
      %v10988 = vunpack.c.l.s4 1934713408
      %v10989 = vunpack.c.0.s8 %v10988
      %v10990 = vlaneseq
      %v10991 = vshrl.u32 %v10990, 7
      %v10992 = vsub.s32 %v10989, %v10991
      %v10993 = vrot.slane %v10985, %v10992
      %v10995 = vunpack.c.l.s4 1934713408
      %v10996 = vunpack.c.0.s8 %v10995
      %v10997 = vlaneseq
      %v10998 = vshrl.u32 %v10997, 7
      %v10999 = vsub.s32 %v10996, %v10998
      %v11000 = vrot.slane %v10986, %v10999
      %v11001 = vcombine.low %v10977, %v10993
      %v11002 = vcombine.high %v10977, %v10993
      %v11003 = vcombine.low %v10984, %v11000
      %v11004 = vcombine.high %v10984, %v11000
      %v11005 = vcombine.low %v9957, %v9964
      %v11007 = vunpack.c.l.s4 1983009808
      %v11008 = vunpack.c.0.s8 %v11007
      %v11009 = vlaneseq
      %v11010 = vshrl.u32 %v11009, 7
      %v11011 = vsub.s32 %v11008, %v11010
      %v11012 = vrot.slane %v11005, %v11011
      %v11013 = vcombine.low %v9981, %v9982
      %v11015 = vunpack.c.l.s4 1983009808
      %v11016 = vunpack.c.0.s8 %v11015
      %v11017 = vlaneseq
      %v11018 = vshrl.u32 %v11017, 7
      %v11019 = vsub.s32 %v11016, %v11018
      %v11020 = vrot.slane %v11013, %v11019
      %v11021 = vcombine.low %v9973, %v9980
      %v11023 = vunpack.c.l.s4 1983009808
      %v11024 = vunpack.c.0.s8 %v11023
      %v11025 = vlaneseq
      %v11026 = vshrl.u32 %v11025, 7
      %v11027 = vsub.s32 %v11024, %v11026
      %v11028 = vrot.slane %v11021, %v11027
      %v11029 = vcombine.low %v9983, %v9984
      %v11031 = vunpack.c.l.s4 1983009808
      %v11032 = vunpack.c.0.s8 %v11031
      %v11033 = vlaneseq
      %v11034 = vshrl.u32 %v11033, 7
      %v11035 = vsub.s32 %v11032, %v11034
      %v11036 = vrot.slane %v11029, %v11035
      %v11037 = vcombine.low %v11012, %v11020
      %v11038 = vcombine.high %v11012, %v11020
      %v11040 = vunpack.c.l.s4 1934713408
      %v11041 = vunpack.c.0.s8 %v11040
      %v11042 = vlaneseq
      %v11043 = vshrl.u32 %v11042, 7
      %v11044 = vsub.s32 %v11041, %v11043
      %v11045 = vrot.slane %v11037, %v11044
      %v11047 = vunpack.c.l.s4 1934713408
      %v11048 = vunpack.c.0.s8 %v11047
      %v11049 = vlaneseq
      %v11050 = vshrl.u32 %v11049, 7
      %v11051 = vsub.s32 %v11048, %v11050
      %v11052 = vrot.slane %v11038, %v11051
      %v11053 = vcombine.low %v11028, %v11036
      %v11054 = vcombine.high %v11028, %v11036
      %v11056 = vunpack.c.l.s4 1934713408
      %v11057 = vunpack.c.0.s8 %v11056
      %v11058 = vlaneseq
      %v11059 = vshrl.u32 %v11058, 7
      %v11060 = vsub.s32 %v11057, %v11059
      %v11061 = vrot.slane %v11053, %v11060
      %v11063 = vunpack.c.l.s4 1934713408
      %v11064 = vunpack.c.0.s8 %v11063
      %v11065 = vlaneseq
      %v11066 = vshrl.u32 %v11065, 7
      %v11067 = vsub.s32 %v11064, %v11066
      %v11068 = vrot.slane %v11054, %v11067
      %v11069 = vcombine.low %v11045, %v11061
      %v11070 = vcombine.high %v11045, %v11061
      %v11071 = vcombine.low %v11052, %v11068
      %v11072 = vcombine.high %v11052, %v11068
      %11089 = vrot.lane.b32.xlu0 %v10050, 8
      %v11090 = vpop.permute.xlu0 %11089
      %11091 = vrot.lane.b32.xlu0 %v10118, 8
      %v11092 = vpop.permute.xlu0 %11091
      %11093 = vrot.lane.b32.xlu0 %v10186, 8
      %v11094 = vpop.permute.xlu0 %11093
      %11095 = vrot.lane.b32.xlu0 %v10254, 8
      %v11096 = vpop.permute.xlu0 %11095
      %11097 = vrot.lane.b32.xlu0 %v10322, 8
      %v11098 = vpop.permute.xlu0 %11097
      %11099 = vrot.lane.b32.xlu0 %v10390, 8
      %v11100 = vpop.permute.xlu0 %11099
      %11101 = vrot.lane.b32.xlu0 %v10458, 8
      %v11102 = vpop.permute.xlu0 %11101
      %11103 = vrot.lane.b32.xlu0 %v10526, 8
      %v11104 = vpop.permute.xlu0 %11103
      %11105 = vrot.lane.b32.xlu0 %v10594, 8
      %v11106 = vpop.permute.xlu0 %11105
      %11107 = vrot.lane.b32.xlu0 %v10662, 8
      %v11108 = vpop.permute.xlu0 %11107
      %11109 = vrot.lane.b32.xlu0 %v10730, 8
      %v11110 = vpop.permute.xlu0 %11109
      %11111 = vrot.lane.b32.xlu0 %v10798, 8
      %v11112 = vpop.permute.xlu0 %11111
      %11113 = vrot.lane.b32.xlu0 %v10866, 8
      %v11114 = vpop.permute.xlu0 %11113
      %11115 = vrot.lane.b32.xlu0 %v10934, 8
      %v11116 = vpop.permute.xlu0 %11115
      %11117 = vrot.lane.b32.xlu0 %v11002, 8
      %v11118 = vpop.permute.xlu0 %11117
      %11119 = vrot.lane.b32.xlu0 %v11070, 8
      %v11120 = vpop.permute.xlu0 %11119
      %11153 = vrot.lane.b32.xlu0 %v10051, 16
      %v11154 = vpop.permute.xlu0 %11153
      %11155 = vrot.lane.b32.xlu0 %v10119, 16
      %v11156 = vpop.permute.xlu0 %11155
      %11157 = vrot.lane.b32.xlu0 %v10187, 16
      %v11158 = vpop.permute.xlu0 %11157
      %11159 = vrot.lane.b32.xlu0 %v10255, 16
      %v11160 = vpop.permute.xlu0 %11159
      %11161 = vrot.lane.b32.xlu0 %v10323, 16
      %v11162 = vpop.permute.xlu0 %11161
      %11163 = vrot.lane.b32.xlu0 %v10391, 16
      %v11164 = vpop.permute.xlu0 %11163
      %11165 = vrot.lane.b32.xlu0 %v10459, 16
      %v11166 = vpop.permute.xlu0 %11165
      %11167 = vrot.lane.b32.xlu0 %v10527, 16
      %v11168 = vpop.permute.xlu0 %11167
      %11169 = vrot.lane.b32.xlu0 %v10595, 16
      %v11170 = vpop.permute.xlu0 %11169
      %11171 = vrot.lane.b32.xlu0 %v10663, 16
      %v11172 = vpop.permute.xlu0 %11171
      %11173 = vrot.lane.b32.xlu0 %v10731, 16
      %v11174 = vpop.permute.xlu0 %11173
      %11175 = vrot.lane.b32.xlu0 %v10799, 16
      %v11176 = vpop.permute.xlu0 %11175
      %11177 = vrot.lane.b32.xlu0 %v10867, 16
      %v11178 = vpop.permute.xlu0 %11177
      %11179 = vrot.lane.b32.xlu0 %v10935, 16
      %v11180 = vpop.permute.xlu0 %11179
      %11181 = vrot.lane.b32.xlu0 %v11003, 16
      %v11182 = vpop.permute.xlu0 %11181
      %11183 = vrot.lane.b32.xlu0 %v11071, 16
      %v11184 = vpop.permute.xlu0 %11183
      %11217 = vrot.lane.b32.xlu0 %v10052, 24
      %v11218 = vpop.permute.xlu0 %11217
      %11219 = vrot.lane.b32.xlu0 %v10120, 24
      %v11220 = vpop.permute.xlu0 %11219
      %11221 = vrot.lane.b32.xlu0 %v10188, 24
      %v11222 = vpop.permute.xlu0 %11221
      %11223 = vrot.lane.b32.xlu0 %v10256, 24
      %v11224 = vpop.permute.xlu0 %11223
      %11225 = vrot.lane.b32.xlu0 %v10324, 24
      %v11226 = vpop.permute.xlu0 %11225
      %11227 = vrot.lane.b32.xlu0 %v10392, 24
      %v11228 = vpop.permute.xlu0 %11227
      %11229 = vrot.lane.b32.xlu0 %v10460, 24
      %v11230 = vpop.permute.xlu0 %11229
      %11231 = vrot.lane.b32.xlu0 %v10528, 24
      %v11232 = vpop.permute.xlu0 %11231
      %11233 = vrot.lane.b32.xlu0 %v10596, 24
      %v11234 = vpop.permute.xlu0 %11233
      %11235 = vrot.lane.b32.xlu0 %v10664, 24
      %v11236 = vpop.permute.xlu0 %11235
      %11237 = vrot.lane.b32.xlu0 %v10732, 24
      %v11238 = vpop.permute.xlu0 %11237
      %11239 = vrot.lane.b32.xlu0 %v10800, 24
      %v11240 = vpop.permute.xlu0 %11239
      %11241 = vrot.lane.b32.xlu0 %v10868, 24
      %v11242 = vpop.permute.xlu0 %11241
      %11243 = vrot.lane.b32.xlu0 %v10936, 24
      %v11244 = vpop.permute.xlu0 %11243
      %11245 = vrot.lane.b32.xlu0 %v11004, 24
      %v11246 = vpop.permute.xlu0 %11245
      %11247 = vrot.lane.b32.xlu0 %v11072, 24
      %v11248 = vpop.permute.xlu0 %11247
      %v11265 = vsel %vm7251, %v10049, %v11090
      %v11266 = vsel %vm7251, %v10117, %v11092
      %v11267 = vsel %vm7251, %v10185, %v11094
      %v11268 = vsel %vm7251, %v10253, %v11096
      %v11269 = vsel %vm7251, %v10321, %v11098
      %v11270 = vsel %vm7251, %v10389, %v11100
      %v11271 = vsel %vm7251, %v10457, %v11102
      %v11272 = vsel %vm7251, %v10525, %v11104
      %v11273 = vsel %vm7251, %v10593, %v11106
      %v11274 = vsel %vm7251, %v10661, %v11108
      %v11275 = vsel %vm7251, %v10729, %v11110
      %v11276 = vsel %vm7251, %v10797, %v11112
      %v11277 = vsel %vm7251, %v10865, %v11114
      %v11278 = vsel %vm7251, %v10933, %v11116
      %v11279 = vsel %vm7251, %v11001, %v11118
      %v11280 = vsel %vm7251, %v11069, %v11120
      %vm11281 = vcmask 130048
      %v11282 = vsel %vm11281, %v11265, %v11154
      %v11283 = vsel %vm11281, %v11266, %v11156
      %v11284 = vsel %vm11281, %v11267, %v11158
      %v11285 = vsel %vm11281, %v11268, %v11160
      %v11286 = vsel %vm11281, %v11269, %v11162
      %v11287 = vsel %vm11281, %v11270, %v11164
      %v11288 = vsel %vm11281, %v11271, %v11166
      %v11289 = vsel %vm11281, %v11272, %v11168
      %v11290 = vsel %vm11281, %v11273, %v11170
      %v11291 = vsel %vm11281, %v11274, %v11172
      %v11292 = vsel %vm11281, %v11275, %v11174
      %v11293 = vsel %vm11281, %v11276, %v11176
      %v11294 = vsel %vm11281, %v11277, %v11178
      %v11295 = vsel %vm11281, %v11278, %v11180
      %v11296 = vsel %vm11281, %v11279, %v11182
      %v11297 = vsel %vm11281, %v11280, %v11184
      %vm11298 = vcmask 195584
      %v11299 = vsel %vm11298, %v11282, %v11218
      %v11300 = vsel %vm11298, %v11283, %v11220
      %v11301 = vsel %vm11298, %v11284, %v11222
      %v11302 = vsel %vm11298, %v11285, %v11224
      %v11303 = vsel %vm11298, %v11286, %v11226
      %v11304 = vsel %vm11298, %v11287, %v11228
      %v11305 = vsel %vm11298, %v11288, %v11230
      %v11306 = vsel %vm11298, %v11289, %v11232
      %v11307 = vsel %vm11298, %v11290, %v11234
      %v11308 = vsel %vm11298, %v11291, %v11236
      %v11309 = vsel %vm11298, %v11292, %v11238
      %v11310 = vsel %vm11298, %v11293, %v11240
      %v11311 = vsel %vm11298, %v11294, %v11242
      %v11312 = vsel %vm11298, %v11295, %v11244
      %v11313 = vsel %vm11298, %v11296, %v11246
      %v11314 = vsel %vm11298, %v11297, %v11248
      %v11315 = vpack.c.bf16 %v11300, %v11299
      %v11316 = vpack.c.bf16 %v11302, %v11301
      %v11317 = vpack.c.bf16 %v11304, %v11303
      %v11318 = vpack.c.bf16 %v11306, %v11305
      %v11319 = vpack.c.bf16 %v11308, %v11307
      %v11320 = vpack.c.bf16 %v11310, %v11309
      %v11321 = vpack.c.bf16 %v11312, %v11311
      %v11322 = vpack.c.bf16 %v11314, %v11313
      %v11323 = vld [vmem:[%s4] sm:$0xf]
      %v11324 = vld [vmem:[%s4 + $0x4] sm:$0xf]
      %v11325 = vld [vmem:[%s4 + $0x8] sm:$0xf]
      %v11326 = vld [vmem:[%s4 + $0xc] sm:$0xf]
      %v11327 = vld [vmem:[%s5] sm:$0x1]
      %v11329 = vlaneseq
      %v11330 = vshrl.u32 %v11329, 7
      %v11331 = vsub.s32 0, %v11330
      %v11332 = vrot.slane %v11327, %v11331
      %v11338 = vunpack.c.l.b16 %v11323
      %v11339 = vunpack.c.l.b16 %v11324
      %v11340 = vunpack.c.l.b16 %v11325
      %v11341 = vunpack.c.l.b16 %v11326
      %v11342 = vpack.c.b16 %v11339, %v11338
      %v11343 = vpack.c.b16 %v11341, %v11340
      %v11347 = vsel %vm369, %v11315, 0
      %v11350 = vsel %vm369, %v11316, 0
      %v11353 = vsel %vm369, %v11317, 0
      %v11356 = vsel %vm369, %v11318, 0
      %v11359 = vsel %vm369, %v11319, 0
      %v11362 = vsel %vm369, %v11320, 0
      %v11365 = vsel %vm369, %v11321, 0
      %v11368 = vsel %vm369, %v11322, 0
      %11370 = vmatprep.subr.bf16.mxu0 0
      %11371 = vmatpush1.bf16.msra.mxu0 %v11342
      %11372 = vmatprep.subr.bf16.mxu0 0
      %11373 = vmatpush1.bf16.msra.mxu0 %v11343
      %11374 = vmatprep.subr.bf16.mxu0 0
      %11375 = vmatpush1.bf16.msra.mxu0 0
      %11376 = vmatprep.subr.bf16.mxu0 0
      %11377 = vmatpush1.bf16.msra.mxu0 0
      %11378 = vmatprep.subr.bf16.mxu0 0
      %11379 = vmatpush1.bf16.msra.mxu0 0
      %11380 = vmatprep.subr.bf16.mxu0 0
      %11381 = vmatpush1.bf16.msra.mxu0 0
      %11382 = vmatprep.subr.bf16.mxu0 0
      %11383 = vmatpush1.bf16.msra.mxu0 0
      %11384 = vmatprep.subr.bf16.mxu0 0
      %11385 = vmatpush1.bf16.msra.mxu0 0
      %11386 = vmatprep.subr.bf16.mxu0 0
      %11387 = vmatpush1.bf16.msra.mxu0 0
      %11388 = vmatprep.subr.bf16.mxu0 0
      %11389 = vmatpush1.bf16.msra.mxu0 0
      %11390 = vmatprep.subr.bf16.mxu0 0
      %11391 = vmatpush1.bf16.msra.mxu0 0
      %11392 = vmatprep.subr.bf16.mxu0 0
      %11393 = vmatpush1.bf16.msra.mxu0 0
      %11394 = vmatprep.subr.bf16.mxu0 0
      %11395 = vmatpush1.bf16.msra.mxu0 0
      %11396 = vmatprep.subr.bf16.mxu0 0
      %11397 = vmatpush1.bf16.msra.mxu0 0
      %11398 = vmatprep.subr.bf16.mxu0 0
      %11399 = vmatpush1.bf16.msra.mxu0 0
      %11400 = vmatprep.subr.bf16.mxu0 0
      %11401 = vmatpush1.bf16.msra.mxu0 0
      %11402 = vmatprep.mubr.bf16.mxu0 0
      %11403 = vmatmul.mubr.bf16.gmra.mrb[0].mxu0 %v11347
      %v11404 = vpop.f32.mrb[0].mxu0
      %v11405 = vadd.f32 %v11332, %v11404
      %v11406 = vpop.f32.mrb[0].mxu0
      %v11407 = vpop.f32.mrb[0].mxu0
      %v11408 = vadd.f32 %v11332, %v11407
      %v11409 = vpop.f32.mrb[0].mxu0
      %11410 = vmatprep.mubr.bf16.mxu0 0
      %11411 = vmatmul.mubr.bf16.gmra.mrb[0].mxu0 %v11350
      %v11412 = vpop.f32.mrb[0].mxu0
      %v11413 = vadd.f32 %v11332, %v11412
      %v11414 = vpop.f32.mrb[0].mxu0
      %v11415 = vpop.f32.mrb[0].mxu0
      %v11416 = vadd.f32 %v11332, %v11415
      %v11417 = vpop.f32.mrb[0].mxu0
      %11418 = vmatprep.mubr.bf16.mxu0 0
      %11419 = vmatmul.mubr.bf16.gmra.mrb[0].mxu0 %v11353
      %v11420 = vpop.f32.mrb[0].mxu0
      %v11421 = vadd.f32 %v11332, %v11420
      %v11422 = vpop.f32.mrb[0].mxu0
      %v11423 = vpop.f32.mrb[0].mxu0
      %v11424 = vadd.f32 %v11332, %v11423
      %v11425 = vpop.f32.mrb[0].mxu0
      %11426 = vmatprep.mubr.bf16.mxu0 0
      %11427 = vmatmul.mubr.bf16.gmra.mrb[0].mxu0 %v11356
      %v11428 = vpop.f32.mrb[0].mxu0
      %v11429 = vadd.f32 %v11332, %v11428
      %v11430 = vpop.f32.mrb[0].mxu0
      %v11431 = vpop.f32.mrb[0].mxu0
      %v11432 = vadd.f32 %v11332, %v11431
      %v11433 = vpop.f32.mrb[0].mxu0
      %11434 = vmatprep.mubr.bf16.mxu0 0
      %11435 = vmatmul.mubr.bf16.gmra.mrb[0].mxu0 %v11359
      %v11436 = vpop.f32.mrb[0].mxu0
      %v11437 = vadd.f32 %v11332, %v11436
      %v11438 = vpop.f32.mrb[0].mxu0
      %v11439 = vpop.f32.mrb[0].mxu0
      %v11440 = vadd.f32 %v11332, %v11439
      %v11441 = vpop.f32.mrb[0].mxu0
      %11442 = vmatprep.mubr.bf16.mxu0 0
      %11443 = vmatmul.mubr.bf16.gmra.mrb[0].mxu0 %v11362
      %v11444 = vpop.f32.mrb[0].mxu0
      %v11445 = vadd.f32 %v11332, %v11444
      %v11446 = vpop.f32.mrb[0].mxu0
      %v11447 = vpop.f32.mrb[0].mxu0
      %v11448 = vadd.f32 %v11332, %v11447
      %v11449 = vpop.f32.mrb[0].mxu0
      %11450 = vmatprep.mubr.bf16.mxu0 0
      %11451 = vmatmul.mubr.bf16.gmra.mrb[0].mxu0 %v11365
      %v11452 = vpop.f32.mrb[0].mxu0
      %v11453 = vadd.f32 %v11332, %v11452
      %v11454 = vpop.f32.mrb[0].mxu0
      %v11455 = vpop.f32.mrb[0].mxu0
      %v11456 = vadd.f32 %v11332, %v11455
      %v11457 = vpop.f32.mrb[0].mxu0
      %11458 = vmatprep.mubr.bf16.mxu0 0
      %11459 = vmatmul.mubr.bf16.gmra.mrb[0].mxu0 %v11368
      %v11460 = vpop.f32.mrb[0].mxu0
      %v11461 = vadd.f32 %v11332, %v11460
      %v11462 = vpop.f32.mrb[0].mxu0
      %v11463 = vpop.f32.mrb[0].mxu0
      %v11464 = vadd.f32 %v11332, %v11463
      %v11465 = vpop.f32.mrb[0].mxu0
      %11466 = vdwg.mxu0
      %11467 = vst.msk [vmem:[%s273] sm:$0xff] %vm369, %v11405
      %11468 = vst.msk [vmem:[%s273 + $0x8] sm:$0xff] %vm369, %v11408
      %11469 = vst.msk [vmem:[%s273 + $0x10] sm:$0xff] %vm369, %v11413
      %11470 = vst.msk [vmem:[%s273 + $0x18] sm:$0xff] %vm369, %v11416
      %11471 = vst.msk [vmem:[%s273 + $0x20] sm:$0xff] %vm369, %v11421
      %11472 = vst.msk [vmem:[%s273 + $0x28] sm:$0xff] %vm369, %v11424
      %11473 = vst.msk [vmem:[%s273 + $0x30] sm:$0xff] %vm369, %v11429
      %11474 = vst.msk [vmem:[%s273 + $0x38] sm:$0xff] %vm369, %v11432
      %11475 = vst.msk [vmem:[%s273 + $0x40] sm:$0xff] %vm369, %v11437
      %11476 = vst.msk [vmem:[%s273 + $0x48] sm:$0xff] %vm369, %v11440
      %11477 = vst.msk [vmem:[%s273 + $0x50] sm:$0xff] %vm369, %v11445
      %11478 = vst.msk [vmem:[%s273 + $0x58] sm:$0xff] %vm369, %v11448
      %11479 = vst.msk [vmem:[%s273 + $0x60] sm:$0xff] %vm369, %v11453
      %11480 = vst.msk [vmem:[%s273 + $0x68] sm:$0xff] %vm369, %v11456
      %11481 = vst.msk [vmem:[%s273 + $0x70] sm:$0xff] %vm369, %v11461
      %11482 = vst.msk [vmem:[%s273 + $0x78] sm:$0xff] %vm369, %v11464
      %s11483 = smul.u32 16, %s22
      %p11484 = scmp.lt.s32.totalorder %s21, 1
      %s11485 = scalar_select %p11484, %s21, 1
      %p11486 = scmp.lt.s32.totalorder %s11483, 15
      %s11487 = scalar_select %p11486, %s11483, 15
      %s11488 = smul.addr %s11485, 16
      %s11489 = sadd.s32 %s11487, %s11488
      %s11490 = smul.addr %s11489, 8
      %s11491 = scalar_lea.vmem %s6, %s11490
      // Predicated region
      $region45: #{tpu_custom_call.1} parent=43 // pred_check
        %p11492 = pneg %p180
      $region46: #{tpu_custom_call.1} parent=43 // pred_check_branch
        %11494 = sbr.rel (%p11492) target = $region48
      $region47: #{tpu_custom_call.1} parent=43 // pred_region
        %s11495 = smul.u32 16, %s22
      $region48: #{tpu_custom_call.1} parent=43 // pred_fallthru
        _
    $region44: #{tpu_custom_call.1} parent=5 // pred_fallthru
      _
    %p11496 = scmp.le.s32.totalorder 2, %s12
    // Predicated region
    $region49: #{tpu_custom_call.1} parent=5 // pred_check
      %p11497 = pneg %p11496
    $region50: #{tpu_custom_call.1} parent=5 // pred_check_branch
      %11499 = sbr.rel (%p11497) target = $region52
    $region51: #{tpu_custom_call.1} parent=5 // pred_region
      %s11500 = ssub.s32 %s12, 2
      // Predicated region
      $region53: #{tpu_custom_call.1} parent=51 // pred_check
        %p11501 = pneg %p186
      $region54: #{tpu_custom_call.1} parent=51 // pred_check_branch
        %11503 = sbr.rel (%p11501) target = $region56
      $region55: #{tpu_custom_call.1} parent=51 // pred_region
        %s11504 = smul.u32 16, %s24
        %p11505 = scmp.lt.s32.totalorder %s23, 1
        %s11506 = scalar_select %p11505, %s23, 1
        %p11507 = scmp.lt.s32.totalorder %s11504, 15
        %s11508 = scalar_select %p11507, %s11504, 15
        %s11509 = smul.addr %s11506, 16
        %s11510 = sadd.s32 %s11508, %s11509
        %s11511 = smul.addr %s11510, 8
        %s11512 = scalar_lea.vmem %s6, %s11511
      $region56: #{tpu_custom_call.1} parent=51 // pred_fallthru
        _
    $region52: #{tpu_custom_call.1} parent=5 // pred_fallthru
      _
  $region6: #{tpu_custom_call.1} parent=0 // loop_footer
    %s16 = sadd.s32 1, %s12
  $region7: #{tpu_custom_call.1} parent=0 // loop_footer_branch
    %11 = sbr.rel target = $region3
  $region8: #{tpu_custom_call.1} parent=0 // loop_exit
    _

</llo_original>
